<compile_context>
chip_gen: v7x
topology: tpu7x:2x2x1
jax: 0.10.0
libtpu: 0.0.40
codegen_flags: <defaults>
</compile_context>

<pallas_src>
import functools
import math

import jax
import jax.numpy as jnp
from jax.experimental import pallas as pl
from jax.experimental.pallas import tpu as pltpu


# --------------------------------------------------------------------------- #
# Pallas kernel: one image per grid step, everything fused.
# --------------------------------------------------------------------------- #
def _mcrelu_kernel(xpad_ref, wred_ref, bred_ref, w3_ref, b3_ref,
                   sp_ref, tp_ref, sn_ref, tn_ref,
                   wep_ref, wen_ref, bexp_ref,
                   o_ref, acc_ref, *, H, W, WP, pre_act, last_act):
    n_pad_rows = xpad_ref.shape[0]           # (H+3) * WP
    n_out_rows = o_ref.shape[0]              # H * WP

    xpad = xpad_ref[...]                     # (HP*WP, Cin) bf16
    xr = jnp.maximum(xpad, 0) if pre_act else xpad

    # ---- reduce: 1x1 conv (bf16 matmul, f32 accumulate) + ReLU --------------
    red = jnp.dot(xr, wred_ref[...], preferred_element_type=jnp.float32)
    red = jnp.maximum(red + bred_ref[...], 0.0)

    # Zero the halo rows/cols (this is the conv3x3 zero padding).  The mask is
    # built in-kernel from an iota: row p is valid iff it lies in image rows
    # [1, H] and image cols [1, W] of the (HP, WP) padded slab.
    p = jax.lax.broadcasted_iota(jnp.int32, (n_pad_rows, 1), 0)
    col = p % WP
    valid = (p >= WP) & (p < (H + 1) * WP) & (col >= 1) & (col <= W)
    red = jnp.where(valid, red, 0.0).astype(jnp.bfloat16)

    # ---- 3x3 conv (padding=1) as 9 contiguous row-offset matmuls ------------
    # Output row q = h*WP + w needs padded row dy*WP + dx + q for tap (dy, dx);
    # rows with w in [W, WP) are junk and dropped by the wrapper.
    acc_ref[...] = jnp.zeros_like(acc_ref)
    for dy in range(3):
        for dx in range(3):
            off = dy * WP + dx
            win = red[off:off + n_out_rows]          # flat view, no reshape
            acc_ref[...] += jnp.dot(win, w3_ref[3 * dy + dx],
                                    preferred_element_type=jnp.float32)
    y = acc_ref[...] + b3_ref[...]

    # ---- CReLU as split pos/neg halves + BN affine + ReLU (no concat) -------
    pos = jnp.maximum(y * sp_ref[...] + tp_ref[...], 0.0).astype(jnp.bfloat16)
    neg = jnp.maximum(-y * sn_ref[...] + tn_ref[...], 0.0).astype(jnp.bfloat16)

    # ---- expand: 1x1 conv, optional last ReLU, identity residual ------------
    out = (jnp.dot(pos, wep_ref[...], preferred_element_type=jnp.float32)
           + jnp.dot(neg, wen_ref[...], preferred_element_type=jnp.float32)
           + bexp_ref[...])
    if last_act:
        out = jnp.maximum(out, 0.0)
    # identity shortcut: x(h, w) lives at padded row (h+1)*WP + (w+1) = q+WP+1
    out = out + xpad[WP + 1:WP + 1 + n_out_rows].astype(jnp.float32)

    o_ref[...] = out.astype(o_ref.dtype)


# --------------------------------------------------------------------------- #
# Wrapper (layout transposes, halo padding, BlockSpecs).
# --------------------------------------------------------------------------- #
def mcrelu_residual_forward(x_nchw, params, *, pre_act=False, last_act=True):
    N, Cin, H, W = x_nchw.shape
    Cred = params["w_red"].shape[-1]
    C3 = params["w3"].shape[-1]
    Cout = params["w_exp"].shape[-1]
    assert Cin == Cout, "proj=False identity shortcut requires n_in == n_out"

    HP, WP = H + 3, W + 2          # 1-px conv halo + 1 slack row for flat views
    n_out_rows = H * WP

    # Halo-padded, channels-last, flattened slab (bf16 for DMA / MXU).
    x_nhwc = jnp.transpose(x_nchw, (0, 2, 3, 1)).astype(jnp.bfloat16)
    xpad = jnp.zeros((N, HP, WP, Cin), jnp.bfloat16)
    xpad = xpad.at[:, 1:H + 1, 1:W + 1, :].set(x_nhwc)
    xpad = xpad.reshape(N, HP * WP, Cin)

    # bf16 matmul operands; f32 bias / BN affine.  Pre-split CReLU halves.
    w_red = params["w_red"].astype(jnp.bfloat16)
    b_red = params["b_red"].astype(jnp.float32)
    w3 = params["w3"].astype(jnp.bfloat16)
    b3 = params["b3"].astype(jnp.float32)
    scale = params["scale"].reshape(-1).astype(jnp.float32)
    shift = params["shift"].reshape(-1).astype(jnp.float32)
    sp, sn = scale[:C3].reshape(1, C3), scale[C3:].reshape(1, C3)
    tp, tn = shift[:C3].reshape(1, C3), shift[C3:].reshape(1, C3)
    w_exp = params["w_exp"].astype(jnp.bfloat16)
    wep, wen = w_exp[:C3], w_exp[C3:]
    b_exp = params["b_exp"].astype(jnp.float32)

    kern = functools.partial(_mcrelu_kernel, H=H, W=W, WP=WP,
                             pre_act=pre_act, last_act=last_act)

    def rep(arr):  # grid-invariant (replicated) operand, full-array block
        return pl.BlockSpec(arr.shape, lambda n, _nd=arr.ndim: (0,) * _nd)

    # Rough VMEM budget (double-buffered blocks + intermediates) with headroom.
    blk_bytes = HP * WP * Cin * 2 + n_out_rows * Cout * 4
    w_bytes = sum(int(a.size) * a.dtype.itemsize
                  for a in (w_red, b_red, w3, b3, sp, sn, tp, tn, wep, wen, b_exp))
    inter_bytes = (HP * WP * Cred * (4 + 2)
                   + n_out_rows * (C3 * 4 * 2 + C3 * 2 * 2 + Cout * 4)
                   + n_out_rows * C3 * 4)
    vmem_limit = int(min(64 << 20,
                         max(16 << 20, 3 * (2 * blk_bytes + 2 * w_bytes + inter_bytes))))

    out = pl.pallas_call(
        kern,
        out_shape=jax.ShapeDtypeStruct((N, n_out_rows, Cout), jnp.float32),
        grid=(N,),
        in_specs=[
            pl.BlockSpec((None, HP * WP, Cin), lambda n: (n, 0, 0)),   # xpad (batch squeezed)
            rep(w_red), rep(b_red), rep(w3), rep(b3),
            rep(sp), rep(tp), rep(sn), rep(tn),
            rep(wep), rep(wen), rep(b_exp),
        ],
        out_specs=pl.BlockSpec((None, n_out_rows, Cout), lambda n: (n, 0, 0)),
        scratch_shapes=[pltpu.VMEM((n_out_rows, C3), jnp.float32)],
        compiler_params=pltpu.CompilerParams(
            dimension_semantics=("parallel",),
            vmem_limit_bytes=vmem_limit),
    )(xpad, w_red, b_red, w3, b3, sp, tp, sn, tn, wep, wen, b_exp)

    out = out.reshape(N, H, WP, Cout)[:, :, :W, :]     # drop junk halo columns
    return jnp.transpose(out, (0, 3, 1, 2))


# --------------------------------------------------------------------------- #
# Deterministic parameter init (shapes from the PyTorch __init__).
# --------------------------------------------------------------------------- #
def init_params(key, n_in, n_red, n_3x3, n_out):
    ks = jax.random.split(key, 10)

    def u(k_, shape, fan_in):
        b = 1.0 / math.sqrt(fan_in)
        return jax.random.uniform(k_, shape, jnp.float32, -b, b)

    w_red = u(ks[0], (n_in, n_red), n_in)                 # 1x1 reduce
    b_red = u(ks[1], (1, n_red), n_in)
    w3 = u(ks[2], (9, n_red, n_3x3), 9 * n_red)           # 3x3, tap-major
    b3 = u(ks[3], (1, n_3x3), 9 * n_red)
    gamma = jax.random.uniform(ks[4], (2 * n_3x3,), jnp.float32, 0.5, 1.5)
    beta = jax.random.uniform(ks[5], (2 * n_3x3,), jnp.float32, -0.5, 0.5)
    rmean = jax.random.uniform(ks[6], (2 * n_3x3,), jnp.float32, -0.1, 0.1)
    rvar = jax.random.uniform(ks[7], (2 * n_3x3,), jnp.float32, 0.5, 1.5)
    eps = 1e-5
    scale = gamma * jax.lax.rsqrt(rvar + eps)
    shift = beta - rmean * scale
    w_exp = u(ks[8], (2 * n_3x3, n_out), 2 * n_3x3)       # 1x1 expand
    b_exp = u(ks[9], (1, n_out), 2 * n_3x3)
    return dict(w_red=w_red, b_red=b_red, w3=w3, b3=b3,
                scale=scale.reshape(1, -1), shift=shift.reshape(1, -1),
                w_exp=w_exp, b_exp=b_exp)


# --------------------------------------------------------------------------- #
# Pure-JAX reference (mirrors the kernel's bf16-operand / f32-accum precision).
# --------------------------------------------------------------------------- #
def reference_forward(x_nchw, p, *, pre_act=False, last_act=True):
    bf = jnp.bfloat16
    x = jnp.transpose(x_nchw, (0, 2, 3, 1)).astype(bf)    # NHWC
    N, H, W, _ = x.shape
    x_sc = x.astype(jnp.float32)
    h = jnp.maximum(x, 0) if pre_act else x
    red = jnp.einsum("nhwc,cd->nhwd", h, p["w_red"].astype(bf),
                     preferred_element_type=jnp.float32)
    red = jnp.maximum(red + p["b_red"][0], 0.0).astype(bf)
    rp = jnp.pad(red, ((0, 0), (1, 1), (1, 1), (0, 0)))
    C3 = p["w3"].shape[-1]
    y = jnp.zeros((N, H, W, C3), jnp.float32)
    for dy in range(3):
        for dx in range(3):
            y = y + jnp.einsum("nhwc,cf->nhwf",
                               rp[:, dy:dy + H, dx:dx + W, :],
                               p["w3"][3 * dy + dx].astype(bf),
                               preferred_element_type=jnp.float32)
    y = y + p["b3"][0]
    y = jnp.concatenate([y, -y], axis=-1)
    y = jnp.maximum(y * p["scale"][0] + p["shift"][0], 0.0).astype(bf)
    y = jnp.einsum("nhwc,cf->nhwf", y, p["w_exp"].astype(bf),
                   preferred_element_type=jnp.float32) + p["b_exp"][0]
    if last_act:
        y = jnp.maximum(y, 0.0)
    y = y + x_sc
    return jnp.transpose(y, (0, 3, 1, 2))


if __name__ == "__main__":
    key = jax.random.PRNGKey(0)
    k_x, k_p = jax.random.split(key)

    N, H, W = 2, 16, 16
    n_in, n_red, n_3x3, n_out = 8, 4, 4, 8   # proj=False -> n_in == n_out

    params = init_params(k_p, n_in, n_red, n_3x3, n_out)
    x = jax.random.normal(k_x, (N, n_in, H, W), jnp.float32)

    out = mcrelu_residual_forward(x, params)
    out = jax.block_until_ready(out)

    ref = reference_forward(x, params)
    assert out.shape == (N, n_out, H, W), out.shape
    max_err = float(jnp.max(jnp.abs(out - ref)))
    assert jnp.allclose(out, ref, atol=2e-3, rtol=2e-3), f"max_err={max_err}"

    print("KERNEL_OK")
</pallas_src>

<mosaic_0001>
module attributes {stable_mosaic.version = 11 : i64} {
  func.func @_mcrelu_kernel(%arg0: i32, %arg1: memref<1x342x8xbf16, #tpu.memory_space<vmem>>, %arg2: memref<8x4xbf16, #tpu.memory_space<vmem>>, %arg3: memref<1x4xf32, #tpu.memory_space<vmem>>, %arg4: memref<9x4x4xbf16, #tpu.memory_space<vmem>>, %arg5: memref<1x4xf32, #tpu.memory_space<vmem>>, %arg6: memref<1x4xf32, #tpu.memory_space<vmem>>, %arg7: memref<1x4xf32, #tpu.memory_space<vmem>>, %arg8: memref<1x4xf32, #tpu.memory_space<vmem>>, %arg9: memref<1x4xf32, #tpu.memory_space<vmem>>, %arg10: memref<4x8xbf16, #tpu.memory_space<vmem>>, %arg11: memref<4x8xbf16, #tpu.memory_space<vmem>>, %arg12: memref<1x8xf32, #tpu.memory_space<vmem>>, %arg13: memref<1x288x8xf32, #tpu.memory_space<vmem>>, %arg14: memref<288x4xf32, #tpu.memory_space<vmem>>) attributes {dimension_semantics = [#tpu.dimension_semantics<parallel>], iteration_bounds = array<i64: 2>, scalar_prefetch = 0 : i64, scratch_operands = 1 : i64, tpu.core_type = #tpu.core_type<tc>, window_params = [{transform_indices = @transform_0, window_bounds = array<i64: 1, 342, 8>}, {pipeline_mode = #tpu.pipeline_mode<synchronous>, transform_indices = @transform_1, window_bounds = array<i64: 8, 4>}, {pipeline_mode = #tpu.pipeline_mode<synchronous>, transform_indices = @transform_2, window_bounds = array<i64: 1, 4>}, {pipeline_mode = #tpu.pipeline_mode<synchronous>, transform_indices = @transform_3, window_bounds = array<i64: 9, 4, 4>}, {pipeline_mode = #tpu.pipeline_mode<synchronous>, transform_indices = @transform_4, window_bounds = array<i64: 1, 4>}, {pipeline_mode = #tpu.pipeline_mode<synchronous>, transform_indices = @transform_5, window_bounds = array<i64: 1, 4>}, {pipeline_mode = #tpu.pipeline_mode<synchronous>, transform_indices = @transform_6, window_bounds = array<i64: 1, 4>}, {pipeline_mode = #tpu.pipeline_mode<synchronous>, transform_indices = @transform_7, window_bounds = array<i64: 1, 4>}, {pipeline_mode = #tpu.pipeline_mode<synchronous>, transform_indices = @transform_8, window_bounds = array<i64: 1, 4>}, {pipeline_mode = #tpu.pipeline_mode<synchronous>, transform_indices = @transform_9, window_bounds = array<i64: 4, 8>}, {pipeline_mode = #tpu.pipeline_mode<synchronous>, transform_indices = @transform_10, window_bounds = array<i64: 4, 8>}, {pipeline_mode = #tpu.pipeline_mode<synchronous>, transform_indices = @transform_11, window_bounds = array<i64: 1, 8>}, {transform_indices = @transform_12, window_bounds = array<i64: 1, 288, 8>}]} {
    %c0 = arith.constant 0 : index
    %c0_0 = arith.constant 0 : index
    %c0_1 = arith.constant 0 : index
    %0 = vector.load %arg1[%c0, %c0_0, %c0_1] : memref<1x342x8xbf16, #tpu.memory_space<vmem>>, vector<1x342x8xbf16>
    %1 = vector.shape_cast %0 : vector<1x342x8xbf16> to vector<342x8xbf16>
    %c0_2 = arith.constant 0 : index
    %c0_3 = arith.constant 0 : index
    %2 = vector.load %arg2[%c0_2, %c0_3] : memref<8x4xbf16, #tpu.memory_space<vmem>>, vector<8x4xbf16>
    %cst = arith.constant dense<0.000000e+00> : vector<342x4xf32>
    %3 = tpu.matmul %1, %2, %cst {dimension_numbers = #tpu.dot_dimension_numbers<[1], [0], [0], [1], [0, 0, 1, 1], [], []>} : vector<342x8xbf16>, vector<8x4xbf16>, vector<342x4xf32> -> vector<342x4xf32>
    %c0_4 = arith.constant 0 : index
    %c0_5 = arith.constant 0 : index
    %4 = vector.load %arg3[%c0_4, %c0_5] : memref<1x4xf32, #tpu.memory_space<vmem>>, vector<1x4xf32>
    %5 = vector.broadcast %4 : vector<1x4xf32> to vector<342x4xf32>
    %6 = arith.addf %3, %5 : vector<342x4xf32>
    %cst_6 = arith.constant 0.000000e+00 : f32
    %7 = vector.broadcast %cst_6 : f32 to vector<342x4xf32>
    %8 = arith.maximumf %6, %7 : vector<342x4xf32>
    %9 = tpu.iota {dimensions = array<i32: 0>} : vector<342x1xi32>
    %c18_i32 = arith.constant 18 : i32
    %c0_i32 = arith.constant 0 : i32
    %10 = arith.cmpi eq, %c18_i32, %c0_i32 : i32
    %c1_i32 = arith.constant 1 : i32
    %11 = arith.select %10, %c1_i32, %c18_i32 : i32
    %12 = vector.broadcast %11 : i32 to vector<342x1xi32>
    %13 = arith.remsi %9, %12 : vector<342x1xi32>
    %c0_i32_7 = arith.constant 0 : i32
    %14 = vector.broadcast %c0_i32_7 : i32 to vector<342x1xi32>
    %15 = arith.cmpi ne, %13, %14 : vector<342x1xi32>
    %c0_i32_8 = arith.constant 0 : i32
    %16 = vector.broadcast %c0_i32_8 : i32 to vector<342x1xi32>
    %17 = arith.cmpi slt, %13, %16 : vector<342x1xi32>
    %c0_i32_9 = arith.constant 0 : i32
    %18 = arith.cmpi slt, %11, %c0_i32_9 : i32
    %19 = vector.broadcast %18 : i1 to vector<342x1xi1>
    %20 = vector.broadcast %19 : vector<342x1xi1> to vector<342x1xi1>
    %21 = arith.xori %17, %20 : vector<342x1xi1>
    %22 = arith.andi %21, %15 : vector<342x1xi1>
    %23 = vector.broadcast %11 : i32 to vector<342x1xi32>
    %24 = arith.addi %13, %23 : vector<342x1xi32>
    %25 = arith.select %22, %24, %13 : vector<342x1xi1>, vector<342x1xi32>
    %c18_i32_10 = arith.constant 18 : i32
    %26 = vector.broadcast %c18_i32_10 : i32 to vector<342x1xi32>
    %27 = arith.cmpi sge, %9, %26 : vector<342x1xi32>
    %c306_i32 = arith.constant 306 : i32
    %28 = vector.broadcast %c306_i32 : i32 to vector<342x1xi32>
    %29 = arith.cmpi slt, %9, %28 : vector<342x1xi32>
    %30 = arith.andi %27, %29 : vector<342x1xi1>
    %c1_i32_11 = arith.constant 1 : i32
    %31 = vector.broadcast %c1_i32_11 : i32 to vector<342x1xi32>
    %32 = arith.cmpi sge, %25, %31 : vector<342x1xi32>
    %33 = arith.andi %30, %32 : vector<342x1xi1>
    %c16_i32 = arith.constant 16 : i32
    %34 = vector.broadcast %c16_i32 : i32 to vector<342x1xi32>
    %35 = arith.cmpi sle, %25, %34 : vector<342x1xi32>
    %36 = arith.andi %33, %35 : vector<342x1xi1>
    %cst_12 = arith.constant 0.000000e+00 : f32
    %37 = vector.shape_cast %36 : vector<342x1xi1> to vector<342x1xi1>
    %38 = vector.broadcast %37 : vector<342x1xi1> to vector<342x4xi1>
    %39 = vector.broadcast %cst_12 : f32 to vector<342x4xf32>
    %40 = arith.select %38, %8, %39 : vector<342x4xi1>, vector<342x4xf32>
    %41 = arith.truncf %40 : vector<342x4xf32> to vector<342x4xbf16>
    %cst_13 = arith.constant 0.000000e+00 : f32
    %42 = vector.broadcast %cst_13 : f32 to vector<288x4xf32>
    %c0_14 = arith.constant 0 : index
    %c0_15 = arith.constant 0 : index
    %43 = vector.load %arg14[%c0_14, %c0_15] : memref<288x4xf32, #tpu.memory_space<vmem>>, vector<288x4xf32>
    tpu.vector_store %arg14[%c0_14, %c0_15], %42 {strides = array<i32>} : memref<288x4xf32, #tpu.memory_space<vmem>>, vector<288x4xf32>,
    %44 = vector.extract_strided_slice %41 {offsets = [0, 0], sizes = [288, 4], strides = [1, 1]} : vector<342x4xbf16> to vector<288x4xbf16>
    %c0_16 = arith.constant 0 : index
    %c0_17 = arith.constant 0 : index
    %45 = vector.load %arg14[%c0_16, %c0_17] : memref<288x4xf32, #tpu.memory_space<vmem>>, vector<288x4xf32>
    %c0_18 = arith.constant 0 : index
    %c0_19 = arith.constant 0 : index
    %c0_20 = arith.constant 0 : index
    %46 = vector.load %arg4[%c0_18, %c0_19, %c0_20] : memref<9x4x4xbf16, #tpu.memory_space<vmem>>, vector<1x4x4xbf16>
    %47 = vector.shape_cast %46 : vector<1x4x4xbf16> to vector<4x4xbf16>
    %cst_21 = arith.constant dense<0.000000e+00> : vector<288x4xf32>
    %48 = tpu.matmul %44, %47, %cst_21 {dimension_numbers = #tpu.dot_dimension_numbers<[1], [0], [0], [1], [0, 0, 1, 1], [], []>} : vector<288x4xbf16>, vector<4x4xbf16>, vector<288x4xf32> -> vector<288x4xf32>
    %49 = arith.addf %45, %48 : vector<288x4xf32>
    %c0_22 = arith.constant 0 : index
    %c0_23 = arith.constant 0 : index
    %50 = vector.load %arg14[%c0_22, %c0_23] : memref<288x4xf32, #tpu.memory_space<vmem>>, vector<288x4xf32>
    tpu.vector_store %arg14[%c0_22, %c0_23], %49 {strides = array<i32>} : memref<288x4xf32, #tpu.memory_space<vmem>>, vector<288x4xf32>,
    %51 = vector.extract_strided_slice %41 {offsets = [1, 0], sizes = [288, 4], strides = [1, 1]} : vector<342x4xbf16> to vector<288x4xbf16>
    %c0_24 = arith.constant 0 : index
    %c0_25 = arith.constant 0 : index
    %52 = vector.load %arg14[%c0_24, %c0_25] : memref<288x4xf32, #tpu.memory_space<vmem>>, vector<288x4xf32>
    %c1 = arith.constant 1 : index
    %c0_26 = arith.constant 0 : index
    %c0_27 = arith.constant 0 : index
    %53 = vector.load %arg4[%c1, %c0_26, %c0_27] : memref<9x4x4xbf16, #tpu.memory_space<vmem>>, vector<1x4x4xbf16>
    %54 = vector.shape_cast %53 : vector<1x4x4xbf16> to vector<4x4xbf16>
    %cst_28 = arith.constant dense<0.000000e+00> : vector<288x4xf32>
    %55 = tpu.matmul %51, %54, %cst_28 {dimension_numbers = #tpu.dot_dimension_numbers<[1], [0], [0], [1], [0, 0, 1, 1], [], []>} : vector<288x4xbf16>, vector<4x4xbf16>, vector<288x4xf32> -> vector<288x4xf32>
    %56 = arith.addf %52, %55 : vector<288x4xf32>
    %c0_29 = arith.constant 0 : index
    %c0_30 = arith.constant 0 : index
    %57 = vector.load %arg14[%c0_29, %c0_30] : memref<288x4xf32, #tpu.memory_space<vmem>>, vector<288x4xf32>
    tpu.vector_store %arg14[%c0_29, %c0_30], %56 {strides = array<i32>} : memref<288x4xf32, #tpu.memory_space<vmem>>, vector<288x4xf32>,
    %58 = vector.extract_strided_slice %41 {offsets = [2, 0], sizes = [288, 4], strides = [1, 1]} : vector<342x4xbf16> to vector<288x4xbf16>
    %c0_31 = arith.constant 0 : index
    %c0_32 = arith.constant 0 : index
    %59 = vector.load %arg14[%c0_31, %c0_32] : memref<288x4xf32, #tpu.memory_space<vmem>>, vector<288x4xf32>
    %c2 = arith.constant 2 : index
    %c0_33 = arith.constant 0 : index
    %c0_34 = arith.constant 0 : index
    %60 = vector.load %arg4[%c2, %c0_33, %c0_34] : memref<9x4x4xbf16, #tpu.memory_space<vmem>>, vector<1x4x4xbf16>
    %61 = vector.shape_cast %60 : vector<1x4x4xbf16> to vector<4x4xbf16>
    %cst_35 = arith.constant dense<0.000000e+00> : vector<288x4xf32>
    %62 = tpu.matmul %58, %61, %cst_35 {dimension_numbers = #tpu.dot_dimension_numbers<[1], [0], [0], [1], [0, 0, 1, 1], [], []>} : vector<288x4xbf16>, vector<4x4xbf16>, vector<288x4xf32> -> vector<288x4xf32>
    %63 = arith.addf %59, %62 : vector<288x4xf32>
    %c0_36 = arith.constant 0 : index
    %c0_37 = arith.constant 0 : index
    %64 = vector.load %arg14[%c0_36, %c0_37] : memref<288x4xf32, #tpu.memory_space<vmem>>, vector<288x4xf32>
    tpu.vector_store %arg14[%c0_36, %c0_37], %63 {strides = array<i32>} : memref<288x4xf32, #tpu.memory_space<vmem>>, vector<288x4xf32>,
    %65 = vector.extract_strided_slice %41 {offsets = [18, 0], sizes = [288, 4], strides = [1, 1]} : vector<342x4xbf16> to vector<288x4xbf16>
    %c0_38 = arith.constant 0 : index
    %c0_39 = arith.constant 0 : index
    %66 = vector.load %arg14[%c0_38, %c0_39] : memref<288x4xf32, #tpu.memory_space<vmem>>, vector<288x4xf32>
    %c3 = arith.constant 3 : index
    %c0_40 = arith.constant 0 : index
    %c0_41 = arith.constant 0 : index
    %67 = vector.load %arg4[%c3, %c0_40, %c0_41] : memref<9x4x4xbf16, #tpu.memory_space<vmem>>, vector<1x4x4xbf16>
    %68 = vector.shape_cast %67 : vector<1x4x4xbf16> to vector<4x4xbf16>
    %cst_42 = arith.constant dense<0.000000e+00> : vector<288x4xf32>
    %69 = tpu.matmul %65, %68, %cst_42 {dimension_numbers = #tpu.dot_dimension_numbers<[1], [0], [0], [1], [0, 0, 1, 1], [], []>} : vector<288x4xbf16>, vector<4x4xbf16>, vector<288x4xf32> -> vector<288x4xf32>
    %70 = arith.addf %66, %69 : vector<288x4xf32>
    %c0_43 = arith.constant 0 : index
    %c0_44 = arith.constant 0 : index
    %71 = vector.load %arg14[%c0_43, %c0_44] : memref<288x4xf32, #tpu.memory_space<vmem>>, vector<288x4xf32>
    tpu.vector_store %arg14[%c0_43, %c0_44], %70 {strides = array<i32>} : memref<288x4xf32, #tpu.memory_space<vmem>>, vector<288x4xf32>,
    %72 = vector.extract_strided_slice %41 {offsets = [19, 0], sizes = [288, 4], strides = [1, 1]} : vector<342x4xbf16> to vector<288x4xbf16>
    %c0_45 = arith.constant 0 : index
    %c0_46 = arith.constant 0 : index
    %73 = vector.load %arg14[%c0_45, %c0_46] : memref<288x4xf32, #tpu.memory_space<vmem>>, vector<288x4xf32>
    %c4 = arith.constant 4 : index
    %c0_47 = arith.constant 0 : index
    %c0_48 = arith.constant 0 : index
    %74 = vector.load %arg4[%c4, %c0_47, %c0_48] : memref<9x4x4xbf16, #tpu.memory_space<vmem>>, vector<1x4x4xbf16>
    %75 = vector.shape_cast %74 : vector<1x4x4xbf16> to vector<4x4xbf16>
    %cst_49 = arith.constant dense<0.000000e+00> : vector<288x4xf32>
    %76 = tpu.matmul %72, %75, %cst_49 {dimension_numbers = #tpu.dot_dimension_numbers<[1], [0], [0], [1], [0, 0, 1, 1], [], []>} : vector<288x4xbf16>, vector<4x4xbf16>, vector<288x4xf32> -> vector<288x4xf32>
    %77 = arith.addf %73, %76 : vector<288x4xf32>
    %c0_50 = arith.constant 0 : index
    %c0_51 = arith.constant 0 : index
    %78 = vector.load %arg14[%c0_50, %c0_51] : memref<288x4xf32, #tpu.memory_space<vmem>>, vector<288x4xf32>
    tpu.vector_store %arg14[%c0_50, %c0_51], %77 {strides = array<i32>} : memref<288x4xf32, #tpu.memory_space<vmem>>, vector<288x4xf32>,
    %79 = vector.extract_strided_slice %41 {offsets = [20, 0], sizes = [288, 4], strides = [1, 1]} : vector<342x4xbf16> to vector<288x4xbf16>
    %c0_52 = arith.constant 0 : index
    %c0_53 = arith.constant 0 : index
    %80 = vector.load %arg14[%c0_52, %c0_53] : memref<288x4xf32, #tpu.memory_space<vmem>>, vector<288x4xf32>
    %c5 = arith.constant 5 : index
    %c0_54 = arith.constant 0 : index
    %c0_55 = arith.constant 0 : index
    %81 = vector.load %arg4[%c5, %c0_54, %c0_55] : memref<9x4x4xbf16, #tpu.memory_space<vmem>>, vector<1x4x4xbf16>
    %82 = vector.shape_cast %81 : vector<1x4x4xbf16> to vector<4x4xbf16>
    %cst_56 = arith.constant dense<0.000000e+00> : vector<288x4xf32>
    %83 = tpu.matmul %79, %82, %cst_56 {dimension_numbers = #tpu.dot_dimension_numbers<[1], [0], [0], [1], [0, 0, 1, 1], [], []>} : vector<288x4xbf16>, vector<4x4xbf16>, vector<288x4xf32> -> vector<288x4xf32>
    %84 = arith.addf %80, %83 : vector<288x4xf32>
    %c0_57 = arith.constant 0 : index
    %c0_58 = arith.constant 0 : index
    %85 = vector.load %arg14[%c0_57, %c0_58] : memref<288x4xf32, #tpu.memory_space<vmem>>, vector<288x4xf32>
    tpu.vector_store %arg14[%c0_57, %c0_58], %84 {strides = array<i32>} : memref<288x4xf32, #tpu.memory_space<vmem>>, vector<288x4xf32>,
    %86 = vector.extract_strided_slice %41 {offsets = [36, 0], sizes = [288, 4], strides = [1, 1]} : vector<342x4xbf16> to vector<288x4xbf16>
    %c0_59 = arith.constant 0 : index
    %c0_60 = arith.constant 0 : index
    %87 = vector.load %arg14[%c0_59, %c0_60] : memref<288x4xf32, #tpu.memory_space<vmem>>, vector<288x4xf32>
    %c6 = arith.constant 6 : index
    %c0_61 = arith.constant 0 : index
    %c0_62 = arith.constant 0 : index
    %88 = vector.load %arg4[%c6, %c0_61, %c0_62] : memref<9x4x4xbf16, #tpu.memory_space<vmem>>, vector<1x4x4xbf16>
    %89 = vector.shape_cast %88 : vector<1x4x4xbf16> to vector<4x4xbf16>
    %cst_63 = arith.constant dense<0.000000e+00> : vector<288x4xf32>
    %90 = tpu.matmul %86, %89, %cst_63 {dimension_numbers = #tpu.dot_dimension_numbers<[1], [0], [0], [1], [0, 0, 1, 1], [], []>} : vector<288x4xbf16>, vector<4x4xbf16>, vector<288x4xf32> -> vector<288x4xf32>
    %91 = arith.addf %87, %90 : vector<288x4xf32>
    %c0_64 = arith.constant 0 : index
    %c0_65 = arith.constant 0 : index
    %92 = vector.load %arg14[%c0_64, %c0_65] : memref<288x4xf32, #tpu.memory_space<vmem>>, vector<288x4xf32>
    tpu.vector_store %arg14[%c0_64, %c0_65], %91 {strides = array<i32>} : memref<288x4xf32, #tpu.memory_space<vmem>>, vector<288x4xf32>,
    %93 = vector.extract_strided_slice %41 {offsets = [37, 0], sizes = [288, 4], strides = [1, 1]} : vector<342x4xbf16> to vector<288x4xbf16>
    %c0_66 = arith.constant 0 : index
    %c0_67 = arith.constant 0 : index
    %94 = vector.load %arg14[%c0_66, %c0_67] : memref<288x4xf32, #tpu.memory_space<vmem>>, vector<288x4xf32>
    %c7 = arith.constant 7 : index
    %c0_68 = arith.constant 0 : index
    %c0_69 = arith.constant 0 : index
    %95 = vector.load %arg4[%c7, %c0_68, %c0_69] : memref<9x4x4xbf16, #tpu.memory_space<vmem>>, vector<1x4x4xbf16>
    %96 = vector.shape_cast %95 : vector<1x4x4xbf16> to vector<4x4xbf16>
    %cst_70 = arith.constant dense<0.000000e+00> : vector<288x4xf32>
    %97 = tpu.matmul %93, %96, %cst_70 {dimension_numbers = #tpu.dot_dimension_numbers<[1], [0], [0], [1], [0, 0, 1, 1], [], []>} : vector<288x4xbf16>, vector<4x4xbf16>, vector<288x4xf32> -> vector<288x4xf32>
    %98 = arith.addf %94, %97 : vector<288x4xf32>
    %c0_71 = arith.constant 0 : index
    %c0_72 = arith.constant 0 : index
    %99 = vector.load %arg14[%c0_71, %c0_72] : memref<288x4xf32, #tpu.memory_space<vmem>>, vector<288x4xf32>
    tpu.vector_store %arg14[%c0_71, %c0_72], %98 {strides = array<i32>} : memref<288x4xf32, #tpu.memory_space<vmem>>, vector<288x4xf32>,
    %100 = vector.extract_strided_slice %41 {offsets = [38, 0], sizes = [288, 4], strides = [1, 1]} : vector<342x4xbf16> to vector<288x4xbf16>
    %c0_73 = arith.constant 0 : index
    %c0_74 = arith.constant 0 : index
    %101 = vector.load %arg14[%c0_73, %c0_74] : memref<288x4xf32, #tpu.memory_space<vmem>>, vector<288x4xf32>
    %c8 = arith.constant 8 : index
    %c0_75 = arith.constant 0 : index
    %c0_76 = arith.constant 0 : index
    %102 = vector.load %arg4[%c8, %c0_75, %c0_76] : memref<9x4x4xbf16, #tpu.memory_space<vmem>>, vector<1x4x4xbf16>
    %103 = vector.shape_cast %102 : vector<1x4x4xbf16> to vector<4x4xbf16>
    %cst_77 = arith.constant dense<0.000000e+00> : vector<288x4xf32>
    %104 = tpu.matmul %100, %103, %cst_77 {dimension_numbers = #tpu.dot_dimension_numbers<[1], [0], [0], [1], [0, 0, 1, 1], [], []>} : vector<288x4xbf16>, vector<4x4xbf16>, vector<288x4xf32> -> vector<288x4xf32>
    %105 = arith.addf %101, %104 : vector<288x4xf32>
    %c0_78 = arith.constant 0 : index
    %c0_79 = arith.constant 0 : index
    %106 = vector.load %arg14[%c0_78, %c0_79] : memref<288x4xf32, #tpu.memory_space<vmem>>, vector<288x4xf32>
    tpu.vector_store %arg14[%c0_78, %c0_79], %105 {strides = array<i32>} : memref<288x4xf32, #tpu.memory_space<vmem>>, vector<288x4xf32>,
    %c0_80 = arith.constant 0 : index
    %c0_81 = arith.constant 0 : index
    %107 = vector.load %arg14[%c0_80, %c0_81] : memref<288x4xf32, #tpu.memory_space<vmem>>, vector<288x4xf32>
    %c0_82 = arith.constant 0 : index
    %c0_83 = arith.constant 0 : index
    %108 = vector.load %arg5[%c0_82, %c0_83] : memref<1x4xf32, #tpu.memory_space<vmem>>, vector<1x4xf32>
    %109 = vector.broadcast %108 : vector<1x4xf32> to vector<288x4xf32>
    %110 = arith.addf %107, %109 : vector<288x4xf32>
    %c0_84 = arith.constant 0 : index
    %c0_85 = arith.constant 0 : index
    %111 = vector.load %arg6[%c0_84, %c0_85] : memref<1x4xf32, #tpu.memory_space<vmem>>, vector<1x4xf32>
    %112 = vector.broadcast %111 : vector<1x4xf32> to vector<288x4xf32>
    %113 = arith.mulf %110, %112 : vector<288x4xf32>
    %c0_86 = arith.constant 0 : index
    %c0_87 = arith.constant 0 : index
    %114 = vector.load %arg7[%c0_86, %c0_87] : memref<1x4xf32, #tpu.memory_space<vmem>>, vector<1x4xf32>
    %115 = vector.broadcast %114 : vector<1x4xf32> to vector<288x4xf32>
    %116 = arith.addf %113, %115 : vector<288x4xf32>
    %cst_88 = arith.constant 0.000000e+00 : f32
    %117 = vector.broadcast %cst_88 : f32 to vector<288x4xf32>
    %118 = arith.maximumf %116, %117 : vector<288x4xf32>
    %119 = arith.truncf %118 : vector<288x4xf32> to vector<288x4xbf16>
    %cst_89 = arith.constant 0.000000e+00 : f32
    %120 = vector.broadcast %cst_89 : f32 to vector<288x4xf32>
    %121 = arith.subf %120, %110 : vector<288x4xf32>
    %c0_90 = arith.constant 0 : index
    %c0_91 = arith.constant 0 : index
    %122 = vector.load %arg8[%c0_90, %c0_91] : memref<1x4xf32, #tpu.memory_space<vmem>>, vector<1x4xf32>
    %123 = vector.broadcast %122 : vector<1x4xf32> to vector<288x4xf32>
    %124 = arith.mulf %121, %123 : vector<288x4xf32>
    %c0_92 = arith.constant 0 : index
    %c0_93 = arith.constant 0 : index
    %125 = vector.load %arg9[%c0_92, %c0_93] : memref<1x4xf32, #tpu.memory_space<vmem>>, vector<1x4xf32>
    %126 = vector.broadcast %125 : vector<1x4xf32> to vector<288x4xf32>
    %127 = arith.addf %124, %126 : vector<288x4xf32>
    %cst_94 = arith.constant 0.000000e+00 : f32
    %128 = vector.broadcast %cst_94 : f32 to vector<288x4xf32>
    %129 = arith.maximumf %127, %128 : vector<288x4xf32>
    %130 = arith.truncf %129 : vector<288x4xf32> to vector<288x4xbf16>
    %c0_95 = arith.constant 0 : index
    %c0_96 = arith.constant 0 : index
    %131 = vector.load %arg10[%c0_95, %c0_96] : memref<4x8xbf16, #tpu.memory_space<vmem>>, vector<4x8xbf16>
    %cst_97 = arith.constant dense<0.000000e+00> : vector<288x8xf32>
    %132 = tpu.matmul %119, %131, %cst_97 {dimension_numbers = #tpu.dot_dimension_numbers<[1], [0], [0], [1], [0, 0, 1, 1], [], []>} : vector<288x4xbf16>, vector<4x8xbf16>, vector<288x8xf32> -> vector<288x8xf32>
    %c0_98 = arith.constant 0 : index
    %c0_99 = arith.constant 0 : index
    %133 = vector.load %arg11[%c0_98, %c0_99] : memref<4x8xbf16, #tpu.memory_space<vmem>>, vector<4x8xbf16>
    %cst_100 = arith.constant dense<0.000000e+00> : vector<288x8xf32>
    %134 = tpu.matmul %130, %133, %cst_100 {dimension_numbers = #tpu.dot_dimension_numbers<[1], [0], [0], [1], [0, 0, 1, 1], [], []>} : vector<288x4xbf16>, vector<4x8xbf16>, vector<288x8xf32> -> vector<288x8xf32>
    %135 = arith.addf %132, %134 : vector<288x8xf32>
    %c0_101 = arith.constant 0 : index
    %c0_102 = arith.constant 0 : index
    %136 = vector.load %arg12[%c0_101, %c0_102] : memref<1x8xf32, #tpu.memory_space<vmem>>, vector<1x8xf32>
    %137 = vector.broadcast %136 : vector<1x8xf32> to vector<288x8xf32>
    %138 = arith.addf %135, %137 : vector<288x8xf32>
    %cst_103 = arith.constant 0.000000e+00 : f32
    %139 = vector.broadcast %cst_103 : f32 to vector<288x8xf32>
    %140 = arith.maximumf %138, %139 : vector<288x8xf32>
    %141 = vector.extract_strided_slice %1 {offsets = [19, 0], sizes = [288, 8], strides = [1, 1]} : vector<342x8xbf16> to vector<288x8xbf16>
    %142 = arith.extf %141 : vector<288x8xbf16> to vector<288x8xf32>
    %143 = arith.addf %140, %142 : vector<288x8xf32>
    %c0_104 = arith.constant 0 : index
    %c0_105 = arith.constant 0 : index
    %c0_106 = arith.constant 0 : index
    %144 = vector.load %arg13[%c0_104, %c0_105, %c0_106] : memref<1x288x8xf32, #tpu.memory_space<vmem>>, vector<1x288x8xf32>
    %145 = vector.shape_cast %144 : vector<1x288x8xf32> to vector<288x8xf32>
    %146 = vector.shape_cast %143 : vector<288x8xf32> to vector<1x288x8xf32>
    tpu.vector_store %arg13[%c0_104, %c0_105, %c0_106], %146 {strides = array<i32>} : memref<1x288x8xf32, #tpu.memory_space<vmem>>, vector<1x288x8xf32>,
    return
  }
  func.func @transform_0(%arg0: i32) -> (i32, i32, i32) {
    %c0_i32 = arith.constant 0 : i32
    %c0_i32_0 = arith.constant 0 : i32
    %c0_i32_1 = arith.constant 0 : i32
    return %arg0, %c0_i32, %c0_i32_0 : i32, i32, i32
  }
  func.func @transform_1(%arg0: i32) -> (i32, i32) {
    %c0_i32 = arith.constant 0 : i32
    %c0_i32_0 = arith.constant 0 : i32
    %c0_i32_1 = arith.constant 0 : i32
    return %c0_i32, %c0_i32_0 : i32, i32
  }
  func.func @transform_2(%arg0: i32) -> (i32, i32) {
    %c0_i32 = arith.constant 0 : i32
    %c0_i32_0 = arith.constant 0 : i32
    %c0_i32_1 = arith.constant 0 : i32
    return %c0_i32, %c0_i32_0 : i32, i32
  }
  func.func @transform_3(%arg0: i32) -> (i32, i32, i32) {
    %c0_i32 = arith.constant 0 : i32
    %c0_i32_0 = arith.constant 0 : i32
    %c0_i32_1 = arith.constant 0 : i32
    %c0_i32_2 = arith.constant 0 : i32
    return %c0_i32, %c0_i32_0, %c0_i32_1 : i32, i32, i32
  }
  func.func @transform_4(%arg0: i32) -> (i32, i32) {
    %c0_i32 = arith.constant 0 : i32
    %c0_i32_0 = arith.constant 0 : i32
    %c0_i32_1 = arith.constant 0 : i32
    return %c0_i32, %c0_i32_0 : i32, i32
  }
  func.func @transform_5(%arg0: i32) -> (i32, i32) {
    %c0_i32 = arith.constant 0 : i32
    %c0_i32_0 = arith.constant 0 : i32
    %c0_i32_1 = arith.constant 0 : i32
    return %c0_i32, %c0_i32_0 : i32, i32
  }
  func.func @transform_6(%arg0: i32) -> (i32, i32) {
    %c0_i32 = arith.constant 0 : i32
    %c0_i32_0 = arith.constant 0 : i32
    %c0_i32_1 = arith.constant 0 : i32
    return %c0_i32, %c0_i32_0 : i32, i32
  }
  func.func @transform_7(%arg0: i32) -> (i32, i32) {
    %c0_i32 = arith.constant 0 : i32
    %c0_i32_0 = arith.constant 0 : i32
    %c0_i32_1 = arith.constant 0 : i32
    return %c0_i32, %c0_i32_0 : i32, i32
  }
  func.func @transform_8(%arg0: i32) -> (i32, i32) {
    %c0_i32 = arith.constant 0 : i32
    %c0_i32_0 = arith.constant 0 : i32
    %c0_i32_1 = arith.constant 0 : i32
    return %c0_i32, %c0_i32_0 : i32, i32
  }
  func.func @transform_9(%arg0: i32) -> (i32, i32) {
    %c0_i32 = arith.constant 0 : i32
    %c0_i32_0 = arith.constant 0 : i32
    %c0_i32_1 = arith.constant 0 : i32
    return %c0_i32, %c0_i32_0 : i32, i32
  }
  func.func @transform_10(%arg0: i32) -> (i32, i32) {
    %c0_i32 = arith.constant 0 : i32
    %c0_i32_0 = arith.constant 0 : i32
    %c0_i32_1 = arith.constant 0 : i32
    return %c0_i32, %c0_i32_0 : i32, i32
  }
  func.func @transform_11(%arg0: i32) -> (i32, i32) {
    %c0_i32 = arith.constant 0 : i32
    %c0_i32_0 = arith.constant 0 : i32
    %c0_i32_1 = arith.constant 0 : i32
    return %c0_i32, %c0_i32_0 : i32, i32
  }
  func.func @transform_12(%arg0: i32) -> (i32, i32, i32) {
    %c0_i32 = arith.constant 0 : i32
    %c0_i32_0 = arith.constant 0 : i32
    %c0_i32_1 = arith.constant 0 : i32
    return %arg0, %c0_i32, %c0_i32_0 : i32, i32, i32
  }
}

</mosaic_0001>

<llo_original>
// kernel: tpu_custom_call.1
$region0: #{tpu_custom_call.1}
  #allocation0 [shape = 'u32[]', space=smem, size = 0x4, offset = 0x4, fixed_abs, tag = 'smem constant byte address 0x4 - core index']
  #allocation1 [shape = 'u32[144,128]{1,0:T(1,128)}', space=vmem, size = 0x12000, scoped, tag = 'internal scratch']
  #allocation2 [shape = 'f32[288,4]{1,0:T(8,128)}', space=vmem, size = 0x24000, scoped, tag = 'scratch operand']
  %s0 = inlined_call_operand.vmem [shape: bf16[2,342,8], index: 0, kind: input, shape index: {}]
  %s1 = inlined_call_operand.vmem [shape: bf16[8,4], index: 1, kind: input, shape index: {}]
  %s2 = inlined_call_operand.vmem [shape: f32[1,4], index: 2, kind: input, shape index: {}]
  %s3 = inlined_call_operand.vmem [shape: bf16[9,4,4], index: 3, kind: input, shape index: {}]
  %s4 = inlined_call_operand.vmem [shape: f32[1,4], index: 4, kind: input, shape index: {}]
  %s5 = inlined_call_operand.vmem [shape: f32[1,4], index: 5, kind: input, shape index: {}]
  %s6 = inlined_call_operand.vmem [shape: f32[1,4], index: 6, kind: input, shape index: {}]
  %s7 = inlined_call_operand.vmem [shape: f32[1,4], index: 7, kind: input, shape index: {}]
  %s8 = inlined_call_operand.vmem [shape: f32[1,4], index: 8, kind: input, shape index: {}]
  %s9 = inlined_call_operand.vmem [shape: bf16[4,8], index: 9, kind: input, shape index: {}]
  %s10 = inlined_call_operand.vmem [shape: bf16[4,8], index: 10, kind: input, shape index: {}]
  %s11 = inlined_call_operand.vmem [shape: f32[1,8], index: 11, kind: input, shape index: {}]
  %s12 = inlined_call_operand.vmem [shape: f32[2,288,8], index: 12, kind: output, shape index: {}]
  %s13 = sld [smem:[#allocation0]]
  $region81: #{tpu_custom_call.1} parent=0
    _
  %s15 = ssub.s32 1, %s13
  %s16 = scalar_select 0, %s15, %s13
  loop: start=0, step=1, limit=4
  $region2: #{tpu_custom_call.1} parent=0 // loop_pre_header
    _
  $region3: #{tpu_custom_call.1} parent=0 // loop_header
    %s18 = sphi 0, %s22
    %p19 = scmp.ge.s32.totalorder %s18, 4
    %s28 = sphi 0, %s30
    %s31 = sphi 0, %s28
    %s32 = sphi 0, %s31
    %s48 = sphi 0, %s32
    %s52 = sphi 0, %s52
    %s54 = sphi 0, %s52
    %s55 = sphi 0, %s54
    %s69 = sphi 0, %s55
    %s73 = sphi 0, %s73
    %s75 = sphi 0, %s73
    %s76 = sphi 0, %s75
    %s90 = sphi 0, %s76
    %s94 = sphi 0, %s94
    %s96 = sphi 0, %s94
    %s97 = sphi 0, %s96
    %s111 = sphi 0, %s97
    %s115 = sphi 0, %s115
    %s117 = sphi 0, %s115
    %s118 = sphi 0, %s117
    %s132 = sphi 0, %s118
    %s136 = sphi 0, %s136
    %s138 = sphi 0, %s136
    %s139 = sphi 0, %s138
    %s153 = sphi 0, %s139
    %s157 = sphi 0, %s157
    %s159 = sphi 0, %s157
    %s160 = sphi 0, %s159
    %s174 = sphi 0, %s160
    %s178 = sphi 0, %s178
    %s180 = sphi 0, %s178
    %s181 = sphi 0, %s180
    %s195 = sphi 0, %s181
    %s199 = sphi 0, %s199
    %s201 = sphi 0, %s199
    %s202 = sphi 0, %s201
    %s216 = sphi 0, %s202
    %s220 = sphi 0, %s220
    %s222 = sphi 0, %s220
    %s223 = sphi 0, %s222
    %s237 = sphi 0, %s223
    %s241 = sphi 0, %s241
    %s243 = sphi 0, %s241
    %s244 = sphi 0, %s243
    %s258 = sphi 0, %s244
    %s262 = sphi 0, %s262
    %s264 = sphi 0, %s262
    %s265 = sphi 0, %s264
    %s279 = sphi 0, %s265
    %s285 = sphi 0, %s287
    %s288 = sphi 0, %s285
    %s289 = sphi 0, %s288
    %s305 = sphi 0, %s289
  $region4: #{tpu_custom_call.1} parent=0 // loop_header_branch
    %21 = sbr.rel (%p19) target = $region8
  $region5: #{tpu_custom_call.1} parent=0 // loop_body
    %s23 = ssub.s32 %s18, 1
    %s24 = ssub.s32 %s18, 2
    %s25 = sadd.s32 %s18, 1
    %s26 = ssub.s32 %s18, %s25
    %p27 = scmp.eq.s32.totalorder %s26, 0
    %s29 = sadd.s32 %s28, 1
    %s30 = scalar_select %p27, %s28, %s29
    %p33 = pneg %p27
    %p34 = scmp.eq.s32.totalorder %s18, 1
    %p35 = por %p33, %p34
    %p36 = scmp.ne.s32.totalorder %s28, %s31
    %p37 = scmp.eq.s32.totalorder %s18, 0
    %p38 = por %p36, %p37
    %p39 = scmp.ne.s32.totalorder %s28, %s31
    %p40 = scmp.eq.s32.totalorder %s23, 1
    %p41 = por %p39, %p40
    %p42 = scmp.ne.s32.totalorder %s31, %s32
    %p43 = scmp.eq.s32.totalorder %s23, 0
    %p44 = por %p42, %p43
    %p45 = scmp.ne.s32.totalorder %s31, %s32
    %p46 = scmp.eq.s32.totalorder %s24, 1
    %p47 = por %p45, %p46
    %p49 = scmp.ne.s32.totalorder %s32, %s48
    %p50 = scmp.eq.s32.totalorder %s24, 0
    %p51 = por %p49, %p50
    %s53 = sadd.s32 %s52, 1
    %p56 = scmp.eq.s32.totalorder %s18, 1
    %p57 = scmp.ne.s32.totalorder %s52, %s54
    %p58 = scmp.eq.s32.totalorder %s18, 0
    %p59 = por %p57, %p58
    %p60 = scmp.ne.s32.totalorder %s52, %s54
    %p61 = scmp.eq.s32.totalorder %s23, 1
    %p62 = por %p60, %p61
    %p63 = scmp.ne.s32.totalorder %s54, %s55
    %p64 = scmp.eq.s32.totalorder %s23, 0
    %p65 = por %p63, %p64
    %p66 = scmp.ne.s32.totalorder %s54, %s55
    %p67 = scmp.eq.s32.totalorder %s24, 1
    %p68 = por %p66, %p67
    %p70 = scmp.ne.s32.totalorder %s55, %s69
    %p71 = scmp.eq.s32.totalorder %s24, 0
    %p72 = por %p70, %p71
    %s74 = sadd.s32 %s73, 1
    %p77 = scmp.eq.s32.totalorder %s18, 1
    %p78 = scmp.ne.s32.totalorder %s73, %s75
    %p79 = scmp.eq.s32.totalorder %s18, 0
    %p80 = por %p78, %p79
    %p81 = scmp.ne.s32.totalorder %s73, %s75
    %p82 = scmp.eq.s32.totalorder %s23, 1
    %p83 = por %p81, %p82
    %p84 = scmp.ne.s32.totalorder %s75, %s76
    %p85 = scmp.eq.s32.totalorder %s23, 0
    %p86 = por %p84, %p85
    %p87 = scmp.ne.s32.totalorder %s75, %s76
    %p88 = scmp.eq.s32.totalorder %s24, 1
    %p89 = por %p87, %p88
    %p91 = scmp.ne.s32.totalorder %s76, %s90
    %p92 = scmp.eq.s32.totalorder %s24, 0
    %p93 = por %p91, %p92
    %s95 = sadd.s32 %s94, 1
    %p98 = scmp.eq.s32.totalorder %s18, 1
    %p99 = scmp.ne.s32.totalorder %s94, %s96
    %p100 = scmp.eq.s32.totalorder %s18, 0
    %p101 = por %p99, %p100
    %p102 = scmp.ne.s32.totalorder %s94, %s96
    %p103 = scmp.eq.s32.totalorder %s23, 1
    %p104 = por %p102, %p103
    %p105 = scmp.ne.s32.totalorder %s96, %s97
    %p106 = scmp.eq.s32.totalorder %s23, 0
    %p107 = por %p105, %p106
    %p108 = scmp.ne.s32.totalorder %s96, %s97
    %p109 = scmp.eq.s32.totalorder %s24, 1
    %p110 = por %p108, %p109
    %p112 = scmp.ne.s32.totalorder %s97, %s111
    %p113 = scmp.eq.s32.totalorder %s24, 0
    %p114 = por %p112, %p113
    %s116 = sadd.s32 %s115, 1
    %p119 = scmp.eq.s32.totalorder %s18, 1
    %p120 = scmp.ne.s32.totalorder %s115, %s117
    %p121 = scmp.eq.s32.totalorder %s18, 0
    %p122 = por %p120, %p121
    %p123 = scmp.ne.s32.totalorder %s115, %s117
    %p124 = scmp.eq.s32.totalorder %s23, 1
    %p125 = por %p123, %p124
    %p126 = scmp.ne.s32.totalorder %s117, %s118
    %p127 = scmp.eq.s32.totalorder %s23, 0
    %p128 = por %p126, %p127
    %p129 = scmp.ne.s32.totalorder %s117, %s118
    %p130 = scmp.eq.s32.totalorder %s24, 1
    %p131 = por %p129, %p130
    %p133 = scmp.ne.s32.totalorder %s118, %s132
    %p134 = scmp.eq.s32.totalorder %s24, 0
    %p135 = por %p133, %p134
    %s137 = sadd.s32 %s136, 1
    %p140 = scmp.eq.s32.totalorder %s18, 1
    %p141 = scmp.ne.s32.totalorder %s136, %s138
    %p142 = scmp.eq.s32.totalorder %s18, 0
    %p143 = por %p141, %p142
    %p144 = scmp.ne.s32.totalorder %s136, %s138
    %p145 = scmp.eq.s32.totalorder %s23, 1
    %p146 = por %p144, %p145
    %p147 = scmp.ne.s32.totalorder %s138, %s139
    %p148 = scmp.eq.s32.totalorder %s23, 0
    %p149 = por %p147, %p148
    %p150 = scmp.ne.s32.totalorder %s138, %s139
    %p151 = scmp.eq.s32.totalorder %s24, 1
    %p152 = por %p150, %p151
    %p154 = scmp.ne.s32.totalorder %s139, %s153
    %p155 = scmp.eq.s32.totalorder %s24, 0
    %p156 = por %p154, %p155
    %s158 = sadd.s32 %s157, 1
    %p161 = scmp.eq.s32.totalorder %s18, 1
    %p162 = scmp.ne.s32.totalorder %s157, %s159
    %p163 = scmp.eq.s32.totalorder %s18, 0
    %p164 = por %p162, %p163
    %p165 = scmp.ne.s32.totalorder %s157, %s159
    %p166 = scmp.eq.s32.totalorder %s23, 1
    %p167 = por %p165, %p166
    %p168 = scmp.ne.s32.totalorder %s159, %s160
    %p169 = scmp.eq.s32.totalorder %s23, 0
    %p170 = por %p168, %p169
    %p171 = scmp.ne.s32.totalorder %s159, %s160
    %p172 = scmp.eq.s32.totalorder %s24, 1
    %p173 = por %p171, %p172
    %p175 = scmp.ne.s32.totalorder %s160, %s174
    %p176 = scmp.eq.s32.totalorder %s24, 0
    %p177 = por %p175, %p176
    %s179 = sadd.s32 %s178, 1
    %p182 = scmp.eq.s32.totalorder %s18, 1
    %p183 = scmp.ne.s32.totalorder %s178, %s180
    %p184 = scmp.eq.s32.totalorder %s18, 0
    %p185 = por %p183, %p184
    %p186 = scmp.ne.s32.totalorder %s178, %s180
    %p187 = scmp.eq.s32.totalorder %s23, 1
    %p188 = por %p186, %p187
    %p189 = scmp.ne.s32.totalorder %s180, %s181
    %p190 = scmp.eq.s32.totalorder %s23, 0
    %p191 = por %p189, %p190
    %p192 = scmp.ne.s32.totalorder %s180, %s181
    %p193 = scmp.eq.s32.totalorder %s24, 1
    %p194 = por %p192, %p193
    %p196 = scmp.ne.s32.totalorder %s181, %s195
    %p197 = scmp.eq.s32.totalorder %s24, 0
    %p198 = por %p196, %p197
    %s200 = sadd.s32 %s199, 1
    %p203 = scmp.eq.s32.totalorder %s18, 1
    %p204 = scmp.ne.s32.totalorder %s199, %s201
    %p205 = scmp.eq.s32.totalorder %s18, 0
    %p206 = por %p204, %p205
    %p207 = scmp.ne.s32.totalorder %s199, %s201
    %p208 = scmp.eq.s32.totalorder %s23, 1
    %p209 = por %p207, %p208
    %p210 = scmp.ne.s32.totalorder %s201, %s202
    %p211 = scmp.eq.s32.totalorder %s23, 0
    %p212 = por %p210, %p211
    %p213 = scmp.ne.s32.totalorder %s201, %s202
    %p214 = scmp.eq.s32.totalorder %s24, 1
    %p215 = por %p213, %p214
    %p217 = scmp.ne.s32.totalorder %s202, %s216
    %p218 = scmp.eq.s32.totalorder %s24, 0
    %p219 = por %p217, %p218
    %s221 = sadd.s32 %s220, 1
    %p224 = scmp.eq.s32.totalorder %s18, 1
    %p225 = scmp.ne.s32.totalorder %s220, %s222
    %p226 = scmp.eq.s32.totalorder %s18, 0
    %p227 = por %p225, %p226
    %p228 = scmp.ne.s32.totalorder %s220, %s222
    %p229 = scmp.eq.s32.totalorder %s23, 1
    %p230 = por %p228, %p229
    %p231 = scmp.ne.s32.totalorder %s222, %s223
    %p232 = scmp.eq.s32.totalorder %s23, 0
    %p233 = por %p231, %p232
    %p234 = scmp.ne.s32.totalorder %s222, %s223
    %p235 = scmp.eq.s32.totalorder %s24, 1
    %p236 = por %p234, %p235
    %p238 = scmp.ne.s32.totalorder %s223, %s237
    %p239 = scmp.eq.s32.totalorder %s24, 0
    %p240 = por %p238, %p239
    %s242 = sadd.s32 %s241, 1
    %p245 = scmp.eq.s32.totalorder %s18, 1
    %p246 = scmp.ne.s32.totalorder %s241, %s243
    %p247 = scmp.eq.s32.totalorder %s18, 0
    %p248 = por %p246, %p247
    %p249 = scmp.ne.s32.totalorder %s241, %s243
    %p250 = scmp.eq.s32.totalorder %s23, 1
    %p251 = por %p249, %p250
    %p252 = scmp.ne.s32.totalorder %s243, %s244
    %p253 = scmp.eq.s32.totalorder %s23, 0
    %p254 = por %p252, %p253
    %p255 = scmp.ne.s32.totalorder %s243, %s244
    %p256 = scmp.eq.s32.totalorder %s24, 1
    %p257 = por %p255, %p256
    %p259 = scmp.ne.s32.totalorder %s244, %s258
    %p260 = scmp.eq.s32.totalorder %s24, 0
    %p261 = por %p259, %p260
    %s263 = sadd.s32 %s262, 1
    %p266 = scmp.eq.s32.totalorder %s18, 1
    %p267 = scmp.ne.s32.totalorder %s262, %s264
    %p268 = scmp.eq.s32.totalorder %s18, 0
    %p269 = por %p267, %p268
    %p270 = scmp.ne.s32.totalorder %s262, %s264
    %p271 = scmp.eq.s32.totalorder %s23, 1
    %p272 = por %p270, %p271
    %p273 = scmp.ne.s32.totalorder %s264, %s265
    %p274 = scmp.eq.s32.totalorder %s23, 0
    %p275 = por %p273, %p274
    %p276 = scmp.ne.s32.totalorder %s264, %s265
    %p277 = scmp.eq.s32.totalorder %s24, 1
    %p278 = por %p276, %p277
    %p280 = scmp.ne.s32.totalorder %s265, %s279
    %p281 = scmp.eq.s32.totalorder %s24, 0
    %p282 = por %p280, %p281
    %s283 = ssub.s32 %s18, %s25
    %p284 = scmp.eq.s32.totalorder %s283, 0
    %s286 = sadd.s32 %s285, 1
    %s287 = scalar_select %p284, %s285, %s286
    %p290 = pneg %p284
    %p291 = scmp.eq.s32.totalorder %s18, 1
    %p292 = por %p290, %p291
    %p293 = scmp.ne.s32.totalorder %s285, %s288
    %p294 = scmp.eq.s32.totalorder %s18, 0
    %p295 = por %p293, %p294
    %p296 = scmp.ne.s32.totalorder %s285, %s288
    %p297 = scmp.eq.s32.totalorder %s23, 1
    %p298 = por %p296, %p297
    %p299 = scmp.ne.s32.totalorder %s288, %s289
    %p300 = scmp.eq.s32.totalorder %s23, 0
    %p301 = por %p299, %p300
    %p302 = scmp.ne.s32.totalorder %s288, %s289
    %p303 = scmp.eq.s32.totalorder %s24, 1
    %p304 = por %p302, %p303
    %p306 = scmp.ne.s32.totalorder %s289, %s305
    %p307 = scmp.eq.s32.totalorder %s24, 0
    %p308 = por %p306, %p307
    %p309 = scmp.le.s32.totalorder 1, %s18
    %p310 = scmp.lt.s32.totalorder %s18, 3
    %p311 = pnand %p309, %p310
    %p312 = pneg %p311
    // Predicated region
    $region9: #{tpu_custom_call.1} parent=5 // pred_check
      _
    $region10: #{tpu_custom_call.1} parent=5 // pred_check_branch
      %314 = sbr.rel (%p311) target = $region12
    $region11: #{tpu_custom_call.1} parent=5 // pred_region
      %s315 = ssub.s32 %s18, 1
      // Predicated region
      $region13: #{tpu_custom_call.1} parent=11 // pred_check
        %p316 = pneg %p65
      $region14: #{tpu_custom_call.1} parent=11 // pred_check_branch
        %318 = sbr.rel (%p316) target = $region16
      $region15: #{tpu_custom_call.1} parent=11 // pred_region
        _
      $region16: #{tpu_custom_call.1} parent=11 // pred_fallthru
        _
      // Predicated region
      $region17: #{tpu_custom_call.1} parent=11 // pred_check
        %p319 = pneg %p86
      $region18: #{tpu_custom_call.1} parent=11 // pred_check_branch
        %321 = sbr.rel (%p319) target = $region20
      $region19: #{tpu_custom_call.1} parent=11 // pred_region
        _
      $region20: #{tpu_custom_call.1} parent=11 // pred_fallthru
        _
      // Predicated region
      $region21: #{tpu_custom_call.1} parent=11 // pred_check
        %p322 = pneg %p107
      $region22: #{tpu_custom_call.1} parent=11 // pred_check_branch
        %324 = sbr.rel (%p322) target = $region24
      $region23: #{tpu_custom_call.1} parent=11 // pred_region
        _
      $region24: #{tpu_custom_call.1} parent=11 // pred_fallthru
        _
      // Predicated region
      $region25: #{tpu_custom_call.1} parent=11 // pred_check
        %p325 = pneg %p128
      $region26: #{tpu_custom_call.1} parent=11 // pred_check_branch
        %327 = sbr.rel (%p325) target = $region28
      $region27: #{tpu_custom_call.1} parent=11 // pred_region
        _
      $region28: #{tpu_custom_call.1} parent=11 // pred_fallthru
        _
      // Predicated region
      $region29: #{tpu_custom_call.1} parent=11 // pred_check
        %p328 = pneg %p149
      $region30: #{tpu_custom_call.1} parent=11 // pred_check_branch
        %330 = sbr.rel (%p328) target = $region32
      $region31: #{tpu_custom_call.1} parent=11 // pred_region
        _
      $region32: #{tpu_custom_call.1} parent=11 // pred_fallthru
        _
      // Predicated region
      $region33: #{tpu_custom_call.1} parent=11 // pred_check
        %p331 = pneg %p170
      $region34: #{tpu_custom_call.1} parent=11 // pred_check_branch
        %333 = sbr.rel (%p331) target = $region36
      $region35: #{tpu_custom_call.1} parent=11 // pred_region
        _
      $region36: #{tpu_custom_call.1} parent=11 // pred_fallthru
        _
      // Predicated region
      $region37: #{tpu_custom_call.1} parent=11 // pred_check
        %p334 = pneg %p191
      $region38: #{tpu_custom_call.1} parent=11 // pred_check_branch
        %336 = sbr.rel (%p334) target = $region40
      $region39: #{tpu_custom_call.1} parent=11 // pred_region
        _
      $region40: #{tpu_custom_call.1} parent=11 // pred_fallthru
        _
      // Predicated region
      $region41: #{tpu_custom_call.1} parent=11 // pred_check
        %p337 = pneg %p212
      $region42: #{tpu_custom_call.1} parent=11 // pred_check_branch
        %339 = sbr.rel (%p337) target = $region44
      $region43: #{tpu_custom_call.1} parent=11 // pred_region
        _
      $region44: #{tpu_custom_call.1} parent=11 // pred_fallthru
        _
      // Predicated region
      $region45: #{tpu_custom_call.1} parent=11 // pred_check
        %p340 = pneg %p233
      $region46: #{tpu_custom_call.1} parent=11 // pred_check_branch
        %342 = sbr.rel (%p340) target = $region48
      $region47: #{tpu_custom_call.1} parent=11 // pred_region
        _
      $region48: #{tpu_custom_call.1} parent=11 // pred_fallthru
        _
      // Predicated region
      $region49: #{tpu_custom_call.1} parent=11 // pred_check
        %p343 = pneg %p254
      $region50: #{tpu_custom_call.1} parent=11 // pred_check_branch
        %345 = sbr.rel (%p343) target = $region52
      $region51: #{tpu_custom_call.1} parent=11 // pred_region
        _
      $region52: #{tpu_custom_call.1} parent=11 // pred_fallthru
        _
      // Predicated region
      $region53: #{tpu_custom_call.1} parent=11 // pred_check
        %p346 = pneg %p275
      $region54: #{tpu_custom_call.1} parent=11 // pred_check_branch
        %348 = sbr.rel (%p346) target = $region56
      $region55: #{tpu_custom_call.1} parent=11 // pred_region
        _
      $region56: #{tpu_custom_call.1} parent=11 // pred_fallthru
        _
    $region12: #{tpu_custom_call.1} parent=5 // pred_fallthru
      _
    %p349 = scmp.lt.s32.totalorder %s18, 2
    // Predicated region
    $region57: #{tpu_custom_call.1} parent=5 // pred_check
      %p350 = pneg %p349
    $region58: #{tpu_custom_call.1} parent=5 // pred_check_branch
      %352 = sbr.rel (%p350) target = $region60
    $region59: #{tpu_custom_call.1} parent=5 // pred_region
      // Predicated region
      $region61: #{tpu_custom_call.1} parent=59 // pred_check
        %p353 = pneg %p38
      $region62: #{tpu_custom_call.1} parent=59 // pred_check_branch
        %355 = sbr.rel (%p353) target = $region64
      $region63: #{tpu_custom_call.1} parent=59 // pred_region
        %p356 = scmp.lt.s32.totalorder %s18, 1
        %s357 = scalar_select %p356, %s18, 1
        %s358 = smul.addr %s357, 43
        %s359 = smul.addr %s358, 4
        %s360 = scalar_lea.vmem %s0, %s359
      $region64: #{tpu_custom_call.1} parent=59 // pred_fallthru
        _
    $region60: #{tpu_custom_call.1} parent=5 // pred_fallthru
      _
    %p361 = scmp.le.s32.totalorder 1, %s18
    %p362 = scmp.lt.s32.totalorder %s18, 3
    %p363 = pnand %p361, %p362
    %p364 = pneg %p363
    // Predicated region
    $region65: #{tpu_custom_call.1} parent=5 // pred_check
      _
    $region66: #{tpu_custom_call.1} parent=5 // pred_check_branch
      %366 = sbr.rel (%p363) target = $region68
    $region67: #{tpu_custom_call.1} parent=5 // pred_region
      %s367 = ssub.s32 %s18, 1
      %p368 = scmp.lt.s32.totalorder %s23, 1
      %s369 = scalar_select %p368, %s23, 1
      %s370 = smul.addr %s369, 43
      %s371 = smul.addr %s370, 4
      %s372 = scalar_lea.vmem %s0, %s371
      %p373 = pneg %p44
      %p374 = pneg %p41
      %p375 = pneg %p65
      %p376 = pneg %p62
      %p377 = pneg %p86
      %p378 = pneg %p83
      %p379 = pneg %p107
      %p380 = pneg %p104
      %p381 = pneg %p128
      %p382 = pneg %p125
      %p383 = pneg %p149
      %p384 = pneg %p146
      %p385 = pneg %p170
      %p386 = pneg %p167
      %p387 = pneg %p191
      %p388 = pneg %p188
      %p389 = pneg %p212
      %p390 = pneg %p209
      %p391 = pneg %p233
      %p392 = pneg %p230
      %p393 = pneg %p254
      %p394 = pneg %p251
      %p395 = pneg %p275
      %p396 = pneg %p272
      %p397 = pneg %p301
      %p398 = pneg %p298
      %p399 = scmp.lt.s32.totalorder %s23, 1
      %s400 = scalar_select %p399, %s23, 1
      %s401 = smul.addr %s400, 36
      %s402 = smul.addr %s401, 8
      %s403 = scalar_lea.vmem %s12, %s402
      %p404 = scmp.lt.s32.totalorder %s23, 1
      %s405 = scalar_select %p404, %s23, 1
      %s406 = smul.addr %s405, 43
      %s407 = smul.addr %s406, 4
      %s408 = scalar_lea.vmem %s0, %s407
      %p409 = scmp.lt.s32.totalorder %s23, 1
      %s410 = scalar_select %p409, %s23, 1
      %s411 = smul.addr %s410, 36
      %s412 = smul.addr %s411, 8
      %s413 = scalar_lea.vmem %s12, %s412
      %v415 = vld [vmem:[%s408] sm:$0xf]
      %v416 = vld [vmem:[%s408 + $0x4] sm:$0xf]
      %v417 = vld [vmem:[%s408 + $0x8] sm:$0xf]
      %v418 = vld [vmem:[%s408 + $0xc] sm:$0xf]
      %v419 = vld [vmem:[%s408 + $0x10] sm:$0xf]
      %v420 = vld [vmem:[%s408 + $0x14] sm:$0xf]
      %v421 = vld [vmem:[%s408 + $0x18] sm:$0xf]
      %v422 = vld [vmem:[%s408 + $0x1c] sm:$0xf]
      %v423 = vld [vmem:[%s408 + $0x20] sm:$0xf]
      %v424 = vld [vmem:[%s408 + $0x24] sm:$0xf]
      %v425 = vld [vmem:[%s408 + $0x28] sm:$0xf]
      %v426 = vld [vmem:[%s408 + $0x2c] sm:$0xf]
      %v427 = vld [vmem:[%s408 + $0x30] sm:$0xf]
      %v428 = vld [vmem:[%s408 + $0x34] sm:$0xf]
      %v429 = vld [vmem:[%s408 + $0x38] sm:$0xf]
      %v430 = vld [vmem:[%s408 + $0x3c] sm:$0xf]
      %v431 = vld [vmem:[%s408 + $0x40] sm:$0xf]
      %v432 = vld [vmem:[%s408 + $0x44] sm:$0xf]
      %v433 = vld [vmem:[%s408 + $0x48] sm:$0xf]
      %v434 = vld [vmem:[%s408 + $0x4c] sm:$0xf]
      %v435 = vld [vmem:[%s408 + $0x50] sm:$0xf]
      %v436 = vld [vmem:[%s408 + $0x54] sm:$0xf]
      %v437 = vld [vmem:[%s408 + $0x58] sm:$0xf]
      %v438 = vld [vmem:[%s408 + $0x5c] sm:$0xf]
      %v439 = vld [vmem:[%s408 + $0x60] sm:$0xf]
      %v440 = vld [vmem:[%s408 + $0x64] sm:$0xf]
      %v441 = vld [vmem:[%s408 + $0x68] sm:$0xf]
      %v442 = vld [vmem:[%s408 + $0x6c] sm:$0xf]
      %v443 = vld [vmem:[%s408 + $0x70] sm:$0xf]
      %v444 = vld [vmem:[%s408 + $0x74] sm:$0xf]
      %v445 = vld [vmem:[%s408 + $0x78] sm:$0xf]
      %v446 = vld [vmem:[%s408 + $0x7c] sm:$0xf]
      %v447 = vld [vmem:[%s408 + $0x80] sm:$0xf]
      %v448 = vld [vmem:[%s408 + $0x84] sm:$0xf]
      %v449 = vld [vmem:[%s408 + $0x88] sm:$0xf]
      %v450 = vld [vmem:[%s408 + $0x8c] sm:$0xf]
      %v451 = vld [vmem:[%s408 + $0x90] sm:$0xf]
      %v452 = vld [vmem:[%s408 + $0x94] sm:$0xf]
      %v453 = vld [vmem:[%s408 + $0x98] sm:$0xf]
      %v454 = vld [vmem:[%s408 + $0x9c] sm:$0xf]
      %v455 = vld [vmem:[%s408 + $0xa0] sm:$0xf]
      %v456 = vld [vmem:[%s408 + $0xa4] sm:$0xf]
      %v457 = vld [vmem:[%s408 + $0xa8] sm:$0x7]
      %v458 = vld [vmem:[%s1] sm:$0xf]
      %v459 = vld [vmem:[%s2] sm:$0x1]
      %v461 = vlaneseq
      %v462 = vshrl.u32 %v461, 7
      %v463 = vsub.s32 0, %v462
      %v464 = vrot.slane %v459, %v463
      %v509 = vunpack.c.l.b16 %v415
      %v510 = vunpack.c.l.b16 %v416
      %v511 = vunpack.c.l.b16 %v417
      %v512 = vunpack.c.l.b16 %v418
      %v513 = vunpack.c.l.b16 %v419
      %v514 = vunpack.c.l.b16 %v420
      %v515 = vunpack.c.l.b16 %v421
      %v516 = vunpack.c.l.b16 %v422
      %v517 = vunpack.c.l.b16 %v423
      %v518 = vunpack.c.l.b16 %v424
      %v519 = vunpack.c.l.b16 %v425
      %v520 = vunpack.c.l.b16 %v426
      %v521 = vunpack.c.l.b16 %v427
      %v522 = vunpack.c.l.b16 %v428
      %v523 = vunpack.c.l.b16 %v429
      %v524 = vunpack.c.l.b16 %v430
      %v525 = vunpack.c.l.b16 %v431
      %v526 = vunpack.c.l.b16 %v432
      %v527 = vunpack.c.l.b16 %v433
      %v528 = vunpack.c.l.b16 %v434
      %v529 = vunpack.c.l.b16 %v435
      %v530 = vunpack.c.l.b16 %v436
      %v531 = vunpack.c.l.b16 %v437
      %v532 = vunpack.c.l.b16 %v438
      %v533 = vunpack.c.l.b16 %v439
      %v534 = vunpack.c.l.b16 %v440
      %v535 = vunpack.c.l.b16 %v441
      %v536 = vunpack.c.l.b16 %v442
      %v537 = vunpack.c.l.b16 %v443
      %v538 = vunpack.c.l.b16 %v444
      %v539 = vunpack.c.l.b16 %v445
      %v540 = vunpack.c.l.b16 %v446
      %v541 = vunpack.c.l.b16 %v447
      %v542 = vunpack.c.l.b16 %v448
      %v543 = vunpack.c.l.b16 %v449
      %v544 = vunpack.c.l.b16 %v450
      %v545 = vunpack.c.l.b16 %v451
      %v546 = vunpack.c.l.b16 %v452
      %v547 = vunpack.c.l.b16 %v453
      %v548 = vunpack.c.l.b16 %v454
      %v549 = vunpack.c.l.b16 %v455
      %v550 = vunpack.c.l.b16 %v456
      %v551 = vunpack.c.l.b16 %v457
      %v552 = vpack.c.b16 %v510, %v509
      %v553 = vpack.c.b16 %v512, %v511
      %v554 = vpack.c.b16 %v514, %v513
      %v555 = vpack.c.b16 %v516, %v515
      %v556 = vpack.c.b16 %v518, %v517
      %v557 = vpack.c.b16 %v520, %v519
      %v558 = vpack.c.b16 %v522, %v521
      %v559 = vpack.c.b16 %v524, %v523
      %v560 = vpack.c.b16 %v526, %v525
      %v561 = vpack.c.b16 %v528, %v527
      %v562 = vpack.c.b16 %v530, %v529
      %v563 = vpack.c.b16 %v532, %v531
      %v564 = vpack.c.b16 %v534, %v533
      %v565 = vpack.c.b16 %v536, %v535
      %v566 = vpack.c.b16 %v538, %v537
      %v567 = vpack.c.b16 %v540, %v539
      %v568 = vpack.c.b16 %v542, %v541
      %v569 = vpack.c.b16 %v544, %v543
      %v570 = vpack.c.b16 %v546, %v545
      %v571 = vpack.c.b16 %v548, %v547
      %v572 = vpack.c.b16 %v550, %v549
      %v573 = vpack.c.b16 %v551, %v551
      %vm574 = vcmask 64512
      %v576 = vsel %vm574, %v552, 0
      %v579 = vsel %vm574, %v553, 0
      %v582 = vsel %vm574, %v554, 0
      %v585 = vsel %vm574, %v555, 0
      %v588 = vsel %vm574, %v556, 0
      %v591 = vsel %vm574, %v557, 0
      %v594 = vsel %vm574, %v558, 0
      %v597 = vsel %vm574, %v559, 0
      %v600 = vsel %vm574, %v560, 0
      %v603 = vsel %vm574, %v561, 0
      %v606 = vsel %vm574, %v562, 0
      %v609 = vsel %vm574, %v563, 0
      %v612 = vsel %vm574, %v564, 0
      %v615 = vsel %vm574, %v565, 0
      %v618 = vsel %vm574, %v566, 0
      %v621 = vsel %vm574, %v567, 0
      %v624 = vsel %vm574, %v568, 0
      %v627 = vsel %vm574, %v569, 0
      %v630 = vsel %vm574, %v570, 0
      %v633 = vsel %vm574, %v571, 0
      %v636 = vsel %vm574, %v572, 0
      %v639 = vsel %vm574, %v573, 0
      %vm641 = vcmask 1043456
      %v643 = vsel %vm641, %v458, 0
      %645 = vmatprep.subr.bf16.mxu0 0
      %646 = vmatpush1.bf16.msra.mxu0 %v643
      %647 = vmatprep.subr.bf16.mxu0 0
      %648 = vmatpush1.bf16.msra.mxu0 0
      %649 = vmatprep.subr.bf16.mxu0 0
      %650 = vmatpush1.bf16.msra.mxu0 0
      %651 = vmatprep.subr.bf16.mxu0 0
      %652 = vmatpush1.bf16.msra.mxu0 0
      %653 = vmatprep.subr.bf16.mxu0 0
      %654 = vmatpush1.bf16.msra.mxu0 0
      %655 = vmatprep.subr.bf16.mxu0 0
      %656 = vmatpush1.bf16.msra.mxu0 0
      %657 = vmatprep.subr.bf16.mxu0 0
      %658 = vmatpush1.bf16.msra.mxu0 0
      %659 = vmatprep.subr.bf16.mxu0 0
      %660 = vmatpush1.bf16.msra.mxu0 0
      %661 = vmatprep.subr.bf16.mxu0 0
      %662 = vmatpush1.bf16.msra.mxu0 0
      %663 = vmatprep.subr.bf16.mxu0 0
      %664 = vmatpush1.bf16.msra.mxu0 0
      %665 = vmatprep.subr.bf16.mxu0 0
      %666 = vmatpush1.bf16.msra.mxu0 0
      %667 = vmatprep.subr.bf16.mxu0 0
      %668 = vmatpush1.bf16.msra.mxu0 0
      %669 = vmatprep.subr.bf16.mxu0 0
      %670 = vmatpush1.bf16.msra.mxu0 0
      %671 = vmatprep.subr.bf16.mxu0 0
      %672 = vmatpush1.bf16.msra.mxu0 0
      %673 = vmatprep.subr.bf16.mxu0 0
      %674 = vmatpush1.bf16.msra.mxu0 0
      %675 = vmatprep.subr.bf16.mxu0 0
      %676 = vmatpush1.bf16.msra.mxu0 0
      %677 = vmatprep.mubr.bf16.mxu0 0
      %678 = vmatmul.mubr.bf16.gmra.mrb[0].mxu0 %v576
      %v679 = vpop.f32.mrb[0].mxu0
      %v680 = vadd.f32 %v464, %v679
      %v681 = vpop.f32.mrb[0].mxu0
      %v682 = vpop.f32.mrb[0].mxu0
      %v683 = vadd.f32 %v464, %v682
      %v684 = vpop.f32.mrb[0].mxu0
      %685 = vmatprep.mubr.bf16.mxu0 0
      %686 = vmatmul.mubr.bf16.gmra.mrb[0].mxu0 %v579
      %v687 = vpop.f32.mrb[0].mxu0
      %v688 = vadd.f32 %v464, %v687
      %v689 = vpop.f32.mrb[0].mxu0
      %v690 = vpop.f32.mrb[0].mxu0
      %v691 = vadd.f32 %v464, %v690
      %v692 = vpop.f32.mrb[0].mxu0
      %693 = vmatprep.mubr.bf16.mxu0 0
      %694 = vmatmul.mubr.bf16.gmra.mrb[0].mxu0 %v582
      %v695 = vpop.f32.mrb[0].mxu0
      %v696 = vadd.f32 %v464, %v695
      %v697 = vpop.f32.mrb[0].mxu0
      %v698 = vpop.f32.mrb[0].mxu0
      %v699 = vadd.f32 %v464, %v698
      %v700 = vpop.f32.mrb[0].mxu0
      %701 = vmatprep.mubr.bf16.mxu0 0
      %702 = vmatmul.mubr.bf16.gmra.mrb[0].mxu0 %v585
      %v703 = vpop.f32.mrb[0].mxu0
      %v704 = vadd.f32 %v464, %v703
      %v705 = vpop.f32.mrb[0].mxu0
      %v706 = vpop.f32.mrb[0].mxu0
      %v707 = vadd.f32 %v464, %v706
      %v708 = vpop.f32.mrb[0].mxu0
      %709 = vmatprep.mubr.bf16.mxu0 0
      %710 = vmatmul.mubr.bf16.gmra.mrb[0].mxu0 %v588
      %v711 = vpop.f32.mrb[0].mxu0
      %v712 = vadd.f32 %v464, %v711
      %v713 = vpop.f32.mrb[0].mxu0
      %v714 = vpop.f32.mrb[0].mxu0
      %v715 = vadd.f32 %v464, %v714
      %v716 = vpop.f32.mrb[0].mxu0
      %717 = vmatprep.mubr.bf16.mxu0 0
      %718 = vmatmul.mubr.bf16.gmra.mrb[0].mxu0 %v591
      %v719 = vpop.f32.mrb[0].mxu0
      %v720 = vadd.f32 %v464, %v719
      %v721 = vpop.f32.mrb[0].mxu0
      %v722 = vpop.f32.mrb[0].mxu0
      %v723 = vadd.f32 %v464, %v722
      %v724 = vpop.f32.mrb[0].mxu0
      %725 = vmatprep.mubr.bf16.mxu0 0
      %726 = vmatmul.mubr.bf16.gmra.mrb[0].mxu0 %v594
      %v727 = vpop.f32.mrb[0].mxu0
      %v728 = vadd.f32 %v464, %v727
      %v729 = vpop.f32.mrb[0].mxu0
      %v730 = vpop.f32.mrb[0].mxu0
      %v731 = vadd.f32 %v464, %v730
      %v732 = vpop.f32.mrb[0].mxu0
      %733 = vmatprep.mubr.bf16.mxu0 0
      %734 = vmatmul.mubr.bf16.gmra.mrb[0].mxu0 %v597
      %v735 = vpop.f32.mrb[0].mxu0
      %v736 = vadd.f32 %v464, %v735
      %v737 = vpop.f32.mrb[0].mxu0
      %v738 = vpop.f32.mrb[0].mxu0
      %v739 = vadd.f32 %v464, %v738
      %v740 = vpop.f32.mrb[0].mxu0
      %741 = vmatprep.mubr.bf16.mxu0 0
      %742 = vmatmul.mubr.bf16.gmra.mrb[0].mxu0 %v600
      %v743 = vpop.f32.mrb[0].mxu0
      %v744 = vadd.f32 %v464, %v743
      %v745 = vpop.f32.mrb[0].mxu0
      %v746 = vpop.f32.mrb[0].mxu0
      %v747 = vadd.f32 %v464, %v746
      %v748 = vpop.f32.mrb[0].mxu0
      %749 = vmatprep.mubr.bf16.mxu0 0
      %750 = vmatmul.mubr.bf16.gmra.mrb[0].mxu0 %v603
      %v751 = vpop.f32.mrb[0].mxu0
      %v752 = vadd.f32 %v464, %v751
      %v753 = vpop.f32.mrb[0].mxu0
      %v754 = vpop.f32.mrb[0].mxu0
      %v755 = vadd.f32 %v464, %v754
      %v756 = vpop.f32.mrb[0].mxu0
      %757 = vmatprep.mubr.bf16.mxu0 0
      %758 = vmatmul.mubr.bf16.gmra.mrb[0].mxu0 %v606
      %v759 = vpop.f32.mrb[0].mxu0
      %v760 = vadd.f32 %v464, %v759
      %v761 = vpop.f32.mrb[0].mxu0
      %v762 = vpop.f32.mrb[0].mxu0
      %v763 = vadd.f32 %v464, %v762
      %v764 = vpop.f32.mrb[0].mxu0
      %765 = vmatprep.mubr.bf16.mxu0 0
      %766 = vmatmul.mubr.bf16.gmra.mrb[0].mxu0 %v609
      %v767 = vpop.f32.mrb[0].mxu0
      %v768 = vadd.f32 %v464, %v767
      %v769 = vpop.f32.mrb[0].mxu0
      %v770 = vpop.f32.mrb[0].mxu0
      %v771 = vadd.f32 %v464, %v770
      %v772 = vpop.f32.mrb[0].mxu0
      %773 = vmatprep.mubr.bf16.mxu0 0
      %774 = vmatmul.mubr.bf16.gmra.mrb[0].mxu0 %v612
      %v775 = vpop.f32.mrb[0].mxu0
      %v776 = vadd.f32 %v464, %v775
      %v777 = vpop.f32.mrb[0].mxu0
      %v778 = vpop.f32.mrb[0].mxu0
      %v779 = vadd.f32 %v464, %v778
      %v780 = vpop.f32.mrb[0].mxu0
      %781 = vmatprep.mubr.bf16.mxu0 0
      %782 = vmatmul.mubr.bf16.gmra.mrb[0].mxu0 %v615
      %v783 = vpop.f32.mrb[0].mxu0
      %v784 = vadd.f32 %v464, %v783
      %v785 = vpop.f32.mrb[0].mxu0
      %v786 = vpop.f32.mrb[0].mxu0
      %v787 = vadd.f32 %v464, %v786
      %v788 = vpop.f32.mrb[0].mxu0
      %789 = vmatprep.mubr.bf16.mxu0 0
      %790 = vmatmul.mubr.bf16.gmra.mrb[0].mxu0 %v618
      %v791 = vpop.f32.mrb[0].mxu0
      %v792 = vadd.f32 %v464, %v791
      %v793 = vpop.f32.mrb[0].mxu0
      %v794 = vpop.f32.mrb[0].mxu0
      %v795 = vadd.f32 %v464, %v794
      %v796 = vpop.f32.mrb[0].mxu0
      %797 = vmatprep.mubr.bf16.mxu0 0
      %798 = vmatmul.mubr.bf16.gmra.mrb[0].mxu0 %v621
      %v799 = vpop.f32.mrb[0].mxu0
      %v800 = vadd.f32 %v464, %v799
      %v801 = vpop.f32.mrb[0].mxu0
      %v802 = vpop.f32.mrb[0].mxu0
      %v803 = vadd.f32 %v464, %v802
      %v804 = vpop.f32.mrb[0].mxu0
      %805 = vmatprep.mubr.bf16.mxu0 0
      %806 = vmatmul.mubr.bf16.gmra.mrb[0].mxu0 %v624
      %v807 = vpop.f32.mrb[0].mxu0
      %v808 = vadd.f32 %v464, %v807
      %v809 = vpop.f32.mrb[0].mxu0
      %v810 = vpop.f32.mrb[0].mxu0
      %v811 = vadd.f32 %v464, %v810
      %v812 = vpop.f32.mrb[0].mxu0
      %813 = vmatprep.mubr.bf16.mxu0 0
      %814 = vmatmul.mubr.bf16.gmra.mrb[0].mxu0 %v627
      %v815 = vpop.f32.mrb[0].mxu0
      %v816 = vadd.f32 %v464, %v815
      %v817 = vpop.f32.mrb[0].mxu0
      %v818 = vpop.f32.mrb[0].mxu0
      %v819 = vadd.f32 %v464, %v818
      %v820 = vpop.f32.mrb[0].mxu0
      %821 = vmatprep.mubr.bf16.mxu0 0
      %822 = vmatmul.mubr.bf16.gmra.mrb[0].mxu0 %v630
      %v823 = vpop.f32.mrb[0].mxu0
      %v824 = vadd.f32 %v464, %v823
      %v825 = vpop.f32.mrb[0].mxu0
      %v826 = vpop.f32.mrb[0].mxu0
      %v827 = vadd.f32 %v464, %v826
      %v828 = vpop.f32.mrb[0].mxu0
      %829 = vmatprep.mubr.bf16.mxu0 0
      %830 = vmatmul.mubr.bf16.gmra.mrb[0].mxu0 %v633
      %v831 = vpop.f32.mrb[0].mxu0
      %v832 = vadd.f32 %v464, %v831
      %v833 = vpop.f32.mrb[0].mxu0
      %v834 = vpop.f32.mrb[0].mxu0
      %v835 = vadd.f32 %v464, %v834
      %v836 = vpop.f32.mrb[0].mxu0
      %837 = vmatprep.mubr.bf16.mxu0 0
      %838 = vmatmul.mubr.bf16.gmra.mrb[0].mxu0 %v636
      %v839 = vpop.f32.mrb[0].mxu0
      %v840 = vadd.f32 %v464, %v839
      %v841 = vpop.f32.mrb[0].mxu0
      %v842 = vpop.f32.mrb[0].mxu0
      %v843 = vadd.f32 %v464, %v842
      %v844 = vpop.f32.mrb[0].mxu0
      %845 = vmatprep.mubr.bf16.mxu0 0
      %846 = vmatmul.mubr.bf16.gmra.mrb[0].mxu0 %v639
      %v847 = vpop.f32.mrb[0].mxu0
      %v848 = vpop.f32.mrb[0].mxu0
      %v849 = vpop.f32.mrb[0].mxu0
      %v850 = vpop.f32.mrb[0].mxu0
      %851 = vdwg.mxu0
      %v852 = vmax.f32 %v680, 0.0
      %v853 = vmax.f32 %v683, 0.0
      %v854 = vmax.f32 %v688, 0.0
      %v855 = vmax.f32 %v691, 0.0
      %v856 = vmax.f32 %v696, 0.0
      %v857 = vmax.f32 %v699, 0.0
      %v858 = vmax.f32 %v704, 0.0
      %v859 = vmax.f32 %v707, 0.0
      %v860 = vmax.f32 %v712, 0.0
      %v861 = vmax.f32 %v715, 0.0
      %v862 = vmax.f32 %v720, 0.0
      %v863 = vmax.f32 %v723, 0.0
      %v864 = vmax.f32 %v728, 0.0
      %v865 = vmax.f32 %v731, 0.0
      %v866 = vmax.f32 %v736, 0.0
      %v867 = vmax.f32 %v739, 0.0
      %v868 = vmax.f32 %v744, 0.0
      %v869 = vmax.f32 %v747, 0.0
      %v870 = vmax.f32 %v752, 0.0
      %v871 = vmax.f32 %v755, 0.0
      %v872 = vmax.f32 %v760, 0.0
      %v873 = vmax.f32 %v763, 0.0
      %v874 = vmax.f32 %v768, 0.0
      %v875 = vmax.f32 %v771, 0.0
      %v876 = vmax.f32 %v776, 0.0
      %v877 = vmax.f32 %v779, 0.0
      %v878 = vmax.f32 %v784, 0.0
      %v879 = vmax.f32 %v787, 0.0
      %v880 = vmax.f32 %v792, 0.0
      %v881 = vmax.f32 %v795, 0.0
      %v882 = vmax.f32 %v800, 0.0
      %v883 = vmax.f32 %v803, 0.0
      %v884 = vmax.f32 %v808, 0.0
      %v885 = vmax.f32 %v811, 0.0
      %v886 = vmax.f32 %v816, 0.0
      %v887 = vmax.f32 %v819, 0.0
      %v888 = vmax.f32 %v824, 0.0
      %v889 = vmax.f32 %v827, 0.0
      %v890 = vmax.f32 %v832, 0.0
      %v891 = vmax.f32 %v835, 0.0
      %v892 = vmax.f32 %v840, 0.0
      %v893 = vmax.f32 %v843, 0.0
      %v894 = vlaneseq
      %v895 = vshrl.u32 %v894, 7
      %v896 = vadd.s32 %v895, 8
      %v897 = vadd.s32 %v895, 16
      %v898 = vadd.s32 %v895, 24
      %v899 = vadd.s32 %v895, 32
      %v900 = vadd.s32 %v895, 40
      %v901 = vadd.s32 %v895, 48
      %v902 = vadd.s32 %v895, 56
      %v903 = vadd.s32 %v895, 64
      %v904 = vadd.s32 %v895, 72
      %v905 = vadd.s32 %v895, 80
      %v906 = vadd.s32 %v895, 88
      %v907 = vadd.s32 %v895, 96
      %v908 = vadd.s32 %v895, 104
      %v909 = vadd.s32 %v895, 112
      %v910 = vadd.s32 %v895, 120
      %v911 = vadd.s32 %v895, 128
      %v912 = vadd.s32 %v895, 136
      %v913 = vadd.s32 %v895, 144
      %v914 = vadd.s32 %v895, 152
      %v915 = vadd.s32 %v895, 160
      %v916 = vadd.s32 %v895, 168
      %v917 = vadd.s32 %v895, 176
      %v918 = vadd.s32 %v895, 184
      %v919 = vadd.s32 %v895, 192
      %v920 = vadd.s32 %v895, 200
      %v921 = vadd.s32 %v895, 208
      %v922 = vadd.s32 %v895, 216
      %v923 = vadd.s32 %v895, 224
      %v924 = vadd.s32 %v895, 232
      %v925 = vadd.s32 %v895, 240
      %v926 = vadd.s32 %v895, 248
      %v927 = vadd.s32 %v895, 256
      %v928 = vadd.s32 %v895, 264
      %v929 = vadd.s32 %v895, 272
      %v930 = vadd.s32 %v895, 280
      %v931 = vadd.s32 %v895, 288
      %v932 = vadd.s32 %v895, 296
      %v933 = vadd.s32 %v895, 304
      %v934 = vadd.s32 %v895, 312
      %v935 = vadd.s32 %v895, 320
      %v936 = vadd.s32 %v895, 328
      %vm937 = vcmp.lt.s32.totalorder %v895, 0
      %v938 = vsub.s32 0, %v895
      %v939 = vsel %vm937, %v938, %v895
      %v940 = vmul.u32.u64.compose %v939, 3817748708
      %v941 = vextract.low.u32 %v940
      %v942 = vextract.high.u32 %v940
      %v943 = vshrl.u32 %v942, 4
      %v944 = vmul.u32 %v943, 18
      %v945 = vsub.s32 %v939, %v944
      %v946 = vsub.s32 0, %v945
      %v947 = vsel %vm937, %v946, %v945
      %vm948 = vcmp.lt.s32.totalorder %v896, 0
      %v949 = vsub.s32 0, %v896
      %v950 = vsel %vm948, %v949, %v896
      %v951 = vmul.u32.u64.compose %v950, 3817748708
      %v952 = vextract.low.u32 %v951
      %v953 = vextract.high.u32 %v951
      %v954 = vshrl.u32 %v953, 4
      %v955 = vmul.u32 %v954, 18
      %v956 = vsub.s32 %v950, %v955
      %v957 = vsub.s32 0, %v956
      %v958 = vsel %vm948, %v957, %v956
      %vm959 = vcmp.lt.s32.totalorder %v897, 0
      %v960 = vsub.s32 0, %v897
      %v961 = vsel %vm959, %v960, %v897
      %v962 = vmul.u32.u64.compose %v961, 3817748708
      %v963 = vextract.low.u32 %v962
      %v964 = vextract.high.u32 %v962
      %v965 = vshrl.u32 %v964, 4
      %v966 = vmul.u32 %v965, 18
      %v967 = vsub.s32 %v961, %v966
      %v968 = vsub.s32 0, %v967
      %v969 = vsel %vm959, %v968, %v967
      %vm970 = vcmp.lt.s32.totalorder %v898, 0
      %v971 = vsub.s32 0, %v898
      %v972 = vsel %vm970, %v971, %v898
      %v973 = vmul.u32.u64.compose %v972, 3817748708
      %v974 = vextract.low.u32 %v973
      %v975 = vextract.high.u32 %v973
      %v976 = vshrl.u32 %v975, 4
      %v977 = vmul.u32 %v976, 18
      %v978 = vsub.s32 %v972, %v977
      %v979 = vsub.s32 0, %v978
      %v980 = vsel %vm970, %v979, %v978
      %vm981 = vcmp.lt.s32.totalorder %v899, 0
      %v982 = vsub.s32 0, %v899
      %v983 = vsel %vm981, %v982, %v899
      %v984 = vmul.u32.u64.compose %v983, 3817748708
      %v985 = vextract.low.u32 %v984
      %v986 = vextract.high.u32 %v984
      %v987 = vshrl.u32 %v986, 4
      %v988 = vmul.u32 %v987, 18
      %v989 = vsub.s32 %v983, %v988
      %v990 = vsub.s32 0, %v989
      %v991 = vsel %vm981, %v990, %v989
      %vm992 = vcmp.lt.s32.totalorder %v900, 0
      %v993 = vsub.s32 0, %v900
      %v994 = vsel %vm992, %v993, %v900
      %v995 = vmul.u32.u64.compose %v994, 3817748708
      %v996 = vextract.low.u32 %v995
      %v997 = vextract.high.u32 %v995
      %v998 = vshrl.u32 %v997, 4
      %v999 = vmul.u32 %v998, 18
      %v1000 = vsub.s32 %v994, %v999
      %v1001 = vsub.s32 0, %v1000
      %v1002 = vsel %vm992, %v1001, %v1000
      %vm1003 = vcmp.lt.s32.totalorder %v901, 0
      %v1004 = vsub.s32 0, %v901
      %v1005 = vsel %vm1003, %v1004, %v901
      %v1006 = vmul.u32.u64.compose %v1005, 3817748708
      %v1007 = vextract.low.u32 %v1006
      %v1008 = vextract.high.u32 %v1006
      %v1009 = vshrl.u32 %v1008, 4
      %v1010 = vmul.u32 %v1009, 18
      %v1011 = vsub.s32 %v1005, %v1010
      %v1012 = vsub.s32 0, %v1011
      %v1013 = vsel %vm1003, %v1012, %v1011
      %vm1014 = vcmp.lt.s32.totalorder %v902, 0
      %v1015 = vsub.s32 0, %v902
      %v1016 = vsel %vm1014, %v1015, %v902
      %v1017 = vmul.u32.u64.compose %v1016, 3817748708
      %v1018 = vextract.low.u32 %v1017
      %v1019 = vextract.high.u32 %v1017
      %v1020 = vshrl.u32 %v1019, 4
      %v1021 = vmul.u32 %v1020, 18
      %v1022 = vsub.s32 %v1016, %v1021
      %v1023 = vsub.s32 0, %v1022
      %v1024 = vsel %vm1014, %v1023, %v1022
      %vm1025 = vcmp.lt.s32.totalorder %v903, 0
      %v1026 = vsub.s32 0, %v903
      %v1027 = vsel %vm1025, %v1026, %v903
      %v1028 = vmul.u32.u64.compose %v1027, 3817748708
      %v1029 = vextract.low.u32 %v1028
      %v1030 = vextract.high.u32 %v1028
      %v1031 = vshrl.u32 %v1030, 4
      %v1032 = vmul.u32 %v1031, 18
      %v1033 = vsub.s32 %v1027, %v1032
      %v1034 = vsub.s32 0, %v1033
      %v1035 = vsel %vm1025, %v1034, %v1033
      %vm1036 = vcmp.lt.s32.totalorder %v904, 0
      %v1037 = vsub.s32 0, %v904
      %v1038 = vsel %vm1036, %v1037, %v904
      %v1039 = vmul.u32.u64.compose %v1038, 3817748708
      %v1040 = vextract.low.u32 %v1039
      %v1041 = vextract.high.u32 %v1039
      %v1042 = vshrl.u32 %v1041, 4
      %v1043 = vmul.u32 %v1042, 18
      %v1044 = vsub.s32 %v1038, %v1043
      %v1045 = vsub.s32 0, %v1044
      %v1046 = vsel %vm1036, %v1045, %v1044
      %vm1047 = vcmp.lt.s32.totalorder %v905, 0
      %v1048 = vsub.s32 0, %v905
      %v1049 = vsel %vm1047, %v1048, %v905
      %v1050 = vmul.u32.u64.compose %v1049, 3817748708
      %v1051 = vextract.low.u32 %v1050
      %v1052 = vextract.high.u32 %v1050
      %v1053 = vshrl.u32 %v1052, 4
      %v1054 = vmul.u32 %v1053, 18
      %v1055 = vsub.s32 %v1049, %v1054
      %v1056 = vsub.s32 0, %v1055
      %v1057 = vsel %vm1047, %v1056, %v1055
      %vm1058 = vcmp.lt.s32.totalorder %v906, 0
      %v1059 = vsub.s32 0, %v906
      %v1060 = vsel %vm1058, %v1059, %v906
      %v1061 = vmul.u32.u64.compose %v1060, 3817748708
      %v1062 = vextract.low.u32 %v1061
      %v1063 = vextract.high.u32 %v1061
      %v1064 = vshrl.u32 %v1063, 4
      %v1065 = vmul.u32 %v1064, 18
      %v1066 = vsub.s32 %v1060, %v1065
      %v1067 = vsub.s32 0, %v1066
      %v1068 = vsel %vm1058, %v1067, %v1066
      %vm1069 = vcmp.lt.s32.totalorder %v907, 0
      %v1070 = vsub.s32 0, %v907
      %v1071 = vsel %vm1069, %v1070, %v907
      %v1072 = vmul.u32.u64.compose %v1071, 3817748708
      %v1073 = vextract.low.u32 %v1072
      %v1074 = vextract.high.u32 %v1072
      %v1075 = vshrl.u32 %v1074, 4
      %v1076 = vmul.u32 %v1075, 18
      %v1077 = vsub.s32 %v1071, %v1076
      %v1078 = vsub.s32 0, %v1077
      %v1079 = vsel %vm1069, %v1078, %v1077
      %vm1080 = vcmp.lt.s32.totalorder %v908, 0
      %v1081 = vsub.s32 0, %v908
      %v1082 = vsel %vm1080, %v1081, %v908
      %v1083 = vmul.u32.u64.compose %v1082, 3817748708
      %v1084 = vextract.low.u32 %v1083
      %v1085 = vextract.high.u32 %v1083
      %v1086 = vshrl.u32 %v1085, 4
      %v1087 = vmul.u32 %v1086, 18
      %v1088 = vsub.s32 %v1082, %v1087
      %v1089 = vsub.s32 0, %v1088
      %v1090 = vsel %vm1080, %v1089, %v1088
      %vm1091 = vcmp.lt.s32.totalorder %v909, 0
      %v1092 = vsub.s32 0, %v909
      %v1093 = vsel %vm1091, %v1092, %v909
      %v1094 = vmul.u32.u64.compose %v1093, 3817748708
      %v1095 = vextract.low.u32 %v1094
      %v1096 = vextract.high.u32 %v1094
      %v1097 = vshrl.u32 %v1096, 4
      %v1098 = vmul.u32 %v1097, 18
      %v1099 = vsub.s32 %v1093, %v1098
      %v1100 = vsub.s32 0, %v1099
      %v1101 = vsel %vm1091, %v1100, %v1099
      %vm1102 = vcmp.lt.s32.totalorder %v910, 0
      %v1103 = vsub.s32 0, %v910
      %v1104 = vsel %vm1102, %v1103, %v910
      %v1105 = vmul.u32.u64.compose %v1104, 3817748708
      %v1106 = vextract.low.u32 %v1105
      %v1107 = vextract.high.u32 %v1105
      %v1108 = vshrl.u32 %v1107, 4
      %v1109 = vmul.u32 %v1108, 18
      %v1110 = vsub.s32 %v1104, %v1109
      %v1111 = vsub.s32 0, %v1110
      %v1112 = vsel %vm1102, %v1111, %v1110
      %vm1113 = vcmp.lt.s32.totalorder %v911, 0
      %v1114 = vsub.s32 0, %v911
      %v1115 = vsel %vm1113, %v1114, %v911
      %v1116 = vmul.u32.u64.compose %v1115, 3817748708
      %v1117 = vextract.low.u32 %v1116
      %v1118 = vextract.high.u32 %v1116
      %v1119 = vshrl.u32 %v1118, 4
      %v1120 = vmul.u32 %v1119, 18
      %v1121 = vsub.s32 %v1115, %v1120
      %v1122 = vsub.s32 0, %v1121
      %v1123 = vsel %vm1113, %v1122, %v1121
      %vm1124 = vcmp.lt.s32.totalorder %v912, 0
      %v1125 = vsub.s32 0, %v912
      %v1126 = vsel %vm1124, %v1125, %v912
      %v1127 = vmul.u32.u64.compose %v1126, 3817748708
      %v1128 = vextract.low.u32 %v1127
      %v1129 = vextract.high.u32 %v1127
      %v1130 = vshrl.u32 %v1129, 4
      %v1131 = vmul.u32 %v1130, 18
      %v1132 = vsub.s32 %v1126, %v1131
      %v1133 = vsub.s32 0, %v1132
      %v1134 = vsel %vm1124, %v1133, %v1132
      %vm1135 = vcmp.lt.s32.totalorder %v913, 0
      %v1136 = vsub.s32 0, %v913
      %v1137 = vsel %vm1135, %v1136, %v913
      %v1138 = vmul.u32.u64.compose %v1137, 3817748708
      %v1139 = vextract.low.u32 %v1138
      %v1140 = vextract.high.u32 %v1138
      %v1141 = vshrl.u32 %v1140, 4
      %v1142 = vmul.u32 %v1141, 18
      %v1143 = vsub.s32 %v1137, %v1142
      %v1144 = vsub.s32 0, %v1143
      %v1145 = vsel %vm1135, %v1144, %v1143
      %vm1146 = vcmp.lt.s32.totalorder %v914, 0
      %v1147 = vsub.s32 0, %v914
      %v1148 = vsel %vm1146, %v1147, %v914
      %v1149 = vmul.u32.u64.compose %v1148, 3817748708
      %v1150 = vextract.low.u32 %v1149
      %v1151 = vextract.high.u32 %v1149
      %v1152 = vshrl.u32 %v1151, 4
      %v1153 = vmul.u32 %v1152, 18
      %v1154 = vsub.s32 %v1148, %v1153
      %v1155 = vsub.s32 0, %v1154
      %v1156 = vsel %vm1146, %v1155, %v1154
      %vm1157 = vcmp.lt.s32.totalorder %v915, 0
      %v1158 = vsub.s32 0, %v915
      %v1159 = vsel %vm1157, %v1158, %v915
      %v1160 = vmul.u32.u64.compose %v1159, 3817748708
      %v1161 = vextract.low.u32 %v1160
      %v1162 = vextract.high.u32 %v1160
      %v1163 = vshrl.u32 %v1162, 4
      %v1164 = vmul.u32 %v1163, 18
      %v1165 = vsub.s32 %v1159, %v1164
      %v1166 = vsub.s32 0, %v1165
      %v1167 = vsel %vm1157, %v1166, %v1165
      %vm1168 = vcmp.lt.s32.totalorder %v916, 0
      %v1169 = vsub.s32 0, %v916
      %v1170 = vsel %vm1168, %v1169, %v916
      %v1171 = vmul.u32.u64.compose %v1170, 3817748708
      %v1172 = vextract.low.u32 %v1171
      %v1173 = vextract.high.u32 %v1171
      %v1174 = vshrl.u32 %v1173, 4
      %v1175 = vmul.u32 %v1174, 18
      %v1176 = vsub.s32 %v1170, %v1175
      %v1177 = vsub.s32 0, %v1176
      %v1178 = vsel %vm1168, %v1177, %v1176
      %vm1179 = vcmp.lt.s32.totalorder %v917, 0
      %v1180 = vsub.s32 0, %v917
      %v1181 = vsel %vm1179, %v1180, %v917
      %v1182 = vmul.u32.u64.compose %v1181, 3817748708
      %v1183 = vextract.low.u32 %v1182
      %v1184 = vextract.high.u32 %v1182
      %v1185 = vshrl.u32 %v1184, 4
      %v1186 = vmul.u32 %v1185, 18
      %v1187 = vsub.s32 %v1181, %v1186
      %v1188 = vsub.s32 0, %v1187
      %v1189 = vsel %vm1179, %v1188, %v1187
      %vm1190 = vcmp.lt.s32.totalorder %v918, 0
      %v1191 = vsub.s32 0, %v918
      %v1192 = vsel %vm1190, %v1191, %v918
      %v1193 = vmul.u32.u64.compose %v1192, 3817748708
      %v1194 = vextract.low.u32 %v1193
      %v1195 = vextract.high.u32 %v1193
      %v1196 = vshrl.u32 %v1195, 4
      %v1197 = vmul.u32 %v1196, 18
      %v1198 = vsub.s32 %v1192, %v1197
      %v1199 = vsub.s32 0, %v1198
      %v1200 = vsel %vm1190, %v1199, %v1198
      %vm1201 = vcmp.lt.s32.totalorder %v919, 0
      %v1202 = vsub.s32 0, %v919
      %v1203 = vsel %vm1201, %v1202, %v919
      %v1204 = vmul.u32.u64.compose %v1203, 3817748708
      %v1205 = vextract.low.u32 %v1204
      %v1206 = vextract.high.u32 %v1204
      %v1207 = vshrl.u32 %v1206, 4
      %v1208 = vmul.u32 %v1207, 18
      %v1209 = vsub.s32 %v1203, %v1208
      %v1210 = vsub.s32 0, %v1209
      %v1211 = vsel %vm1201, %v1210, %v1209
      %vm1212 = vcmp.lt.s32.totalorder %v920, 0
      %v1213 = vsub.s32 0, %v920
      %v1214 = vsel %vm1212, %v1213, %v920
      %v1215 = vmul.u32.u64.compose %v1214, 3817748708
      %v1216 = vextract.low.u32 %v1215
      %v1217 = vextract.high.u32 %v1215
      %v1218 = vshrl.u32 %v1217, 4
      %v1219 = vmul.u32 %v1218, 18
      %v1220 = vsub.s32 %v1214, %v1219
      %v1221 = vsub.s32 0, %v1220
      %v1222 = vsel %vm1212, %v1221, %v1220
      %vm1223 = vcmp.lt.s32.totalorder %v921, 0
      %v1224 = vsub.s32 0, %v921
      %v1225 = vsel %vm1223, %v1224, %v921
      %v1226 = vmul.u32.u64.compose %v1225, 3817748708
      %v1227 = vextract.low.u32 %v1226
      %v1228 = vextract.high.u32 %v1226
      %v1229 = vshrl.u32 %v1228, 4
      %v1230 = vmul.u32 %v1229, 18
      %v1231 = vsub.s32 %v1225, %v1230
      %v1232 = vsub.s32 0, %v1231
      %v1233 = vsel %vm1223, %v1232, %v1231
      %vm1234 = vcmp.lt.s32.totalorder %v922, 0
      %v1235 = vsub.s32 0, %v922
      %v1236 = vsel %vm1234, %v1235, %v922
      %v1237 = vmul.u32.u64.compose %v1236, 3817748708
      %v1238 = vextract.low.u32 %v1237
      %v1239 = vextract.high.u32 %v1237
      %v1240 = vshrl.u32 %v1239, 4
      %v1241 = vmul.u32 %v1240, 18
      %v1242 = vsub.s32 %v1236, %v1241
      %v1243 = vsub.s32 0, %v1242
      %v1244 = vsel %vm1234, %v1243, %v1242
      %vm1245 = vcmp.lt.s32.totalorder %v923, 0
      %v1246 = vsub.s32 0, %v923
      %v1247 = vsel %vm1245, %v1246, %v923
      %v1248 = vmul.u32.u64.compose %v1247, 3817748708
      %v1249 = vextract.low.u32 %v1248
      %v1250 = vextract.high.u32 %v1248
      %v1251 = vshrl.u32 %v1250, 4
      %v1252 = vmul.u32 %v1251, 18
      %v1253 = vsub.s32 %v1247, %v1252
      %v1254 = vsub.s32 0, %v1253
      %v1255 = vsel %vm1245, %v1254, %v1253
      %vm1256 = vcmp.lt.s32.totalorder %v924, 0
      %v1257 = vsub.s32 0, %v924
      %v1258 = vsel %vm1256, %v1257, %v924
      %v1259 = vmul.u32.u64.compose %v1258, 3817748708
      %v1260 = vextract.low.u32 %v1259
      %v1261 = vextract.high.u32 %v1259
      %v1262 = vshrl.u32 %v1261, 4
      %v1263 = vmul.u32 %v1262, 18
      %v1264 = vsub.s32 %v1258, %v1263
      %v1265 = vsub.s32 0, %v1264
      %v1266 = vsel %vm1256, %v1265, %v1264
      %vm1267 = vcmp.lt.s32.totalorder %v925, 0
      %v1268 = vsub.s32 0, %v925
      %v1269 = vsel %vm1267, %v1268, %v925
      %v1270 = vmul.u32.u64.compose %v1269, 3817748708
      %v1271 = vextract.low.u32 %v1270
      %v1272 = vextract.high.u32 %v1270
      %v1273 = vshrl.u32 %v1272, 4
      %v1274 = vmul.u32 %v1273, 18
      %v1275 = vsub.s32 %v1269, %v1274
      %v1276 = vsub.s32 0, %v1275
      %v1277 = vsel %vm1267, %v1276, %v1275
      %vm1278 = vcmp.lt.s32.totalorder %v926, 0
      %v1279 = vsub.s32 0, %v926
      %v1280 = vsel %vm1278, %v1279, %v926
      %v1281 = vmul.u32.u64.compose %v1280, 3817748708
      %v1282 = vextract.low.u32 %v1281
      %v1283 = vextract.high.u32 %v1281
      %v1284 = vshrl.u32 %v1283, 4
      %v1285 = vmul.u32 %v1284, 18
      %v1286 = vsub.s32 %v1280, %v1285
      %v1287 = vsub.s32 0, %v1286
      %v1288 = vsel %vm1278, %v1287, %v1286
      %vm1289 = vcmp.lt.s32.totalorder %v927, 0
      %v1290 = vsub.s32 0, %v927
      %v1291 = vsel %vm1289, %v1290, %v927
      %v1292 = vmul.u32.u64.compose %v1291, 3817748708
      %v1293 = vextract.low.u32 %v1292
      %v1294 = vextract.high.u32 %v1292
      %v1295 = vshrl.u32 %v1294, 4
      %v1296 = vmul.u32 %v1295, 18
      %v1297 = vsub.s32 %v1291, %v1296
      %v1298 = vsub.s32 0, %v1297
      %v1299 = vsel %vm1289, %v1298, %v1297
      %vm1300 = vcmp.lt.s32.totalorder %v928, 0
      %v1301 = vsub.s32 0, %v928
      %v1302 = vsel %vm1300, %v1301, %v928
      %v1303 = vmul.u32.u64.compose %v1302, 3817748708
      %v1304 = vextract.low.u32 %v1303
      %v1305 = vextract.high.u32 %v1303
      %v1306 = vshrl.u32 %v1305, 4
      %v1307 = vmul.u32 %v1306, 18
      %v1308 = vsub.s32 %v1302, %v1307
      %v1309 = vsub.s32 0, %v1308
      %v1310 = vsel %vm1300, %v1309, %v1308
      %vm1311 = vcmp.lt.s32.totalorder %v929, 0
      %v1312 = vsub.s32 0, %v929
      %v1313 = vsel %vm1311, %v1312, %v929
      %v1314 = vmul.u32.u64.compose %v1313, 3817748708
      %v1315 = vextract.low.u32 %v1314
      %v1316 = vextract.high.u32 %v1314
      %v1317 = vshrl.u32 %v1316, 4
      %v1318 = vmul.u32 %v1317, 18
      %v1319 = vsub.s32 %v1313, %v1318
      %v1320 = vsub.s32 0, %v1319
      %v1321 = vsel %vm1311, %v1320, %v1319
      %vm1322 = vcmp.lt.s32.totalorder %v930, 0
      %v1323 = vsub.s32 0, %v930
      %v1324 = vsel %vm1322, %v1323, %v930
      %v1325 = vmul.u32.u64.compose %v1324, 3817748708
      %v1326 = vextract.low.u32 %v1325
      %v1327 = vextract.high.u32 %v1325
      %v1328 = vshrl.u32 %v1327, 4
      %v1329 = vmul.u32 %v1328, 18
      %v1330 = vsub.s32 %v1324, %v1329
      %v1331 = vsub.s32 0, %v1330
      %v1332 = vsel %vm1322, %v1331, %v1330
      %vm1333 = vcmp.lt.s32.totalorder %v931, 0
      %v1334 = vsub.s32 0, %v931
      %v1335 = vsel %vm1333, %v1334, %v931
      %v1336 = vmul.u32.u64.compose %v1335, 3817748708
      %v1337 = vextract.low.u32 %v1336
      %v1338 = vextract.high.u32 %v1336
      %v1339 = vshrl.u32 %v1338, 4
      %v1340 = vmul.u32 %v1339, 18
      %v1341 = vsub.s32 %v1335, %v1340
      %v1342 = vsub.s32 0, %v1341
      %v1343 = vsel %vm1333, %v1342, %v1341
      %vm1344 = vcmp.lt.s32.totalorder %v932, 0
      %v1345 = vsub.s32 0, %v932
      %v1346 = vsel %vm1344, %v1345, %v932
      %v1347 = vmul.u32.u64.compose %v1346, 3817748708
      %v1348 = vextract.low.u32 %v1347
      %v1349 = vextract.high.u32 %v1347
      %v1350 = vshrl.u32 %v1349, 4
      %v1351 = vmul.u32 %v1350, 18
      %v1352 = vsub.s32 %v1346, %v1351
      %v1353 = vsub.s32 0, %v1352
      %v1354 = vsel %vm1344, %v1353, %v1352
      %vm1355 = vcmp.lt.s32.totalorder %v933, 0
      %v1356 = vsub.s32 0, %v933
      %v1357 = vsel %vm1355, %v1356, %v933
      %v1358 = vmul.u32.u64.compose %v1357, 3817748708
      %v1359 = vextract.low.u32 %v1358
      %v1360 = vextract.high.u32 %v1358
      %v1361 = vshrl.u32 %v1360, 4
      %v1362 = vmul.u32 %v1361, 18
      %v1363 = vsub.s32 %v1357, %v1362
      %v1364 = vsub.s32 0, %v1363
      %v1365 = vsel %vm1355, %v1364, %v1363
      %vm1366 = vcmp.lt.s32.totalorder %v934, 0
      %v1367 = vsub.s32 0, %v934
      %v1368 = vsel %vm1366, %v1367, %v934
      %v1369 = vmul.u32.u64.compose %v1368, 3817748708
      %v1370 = vextract.low.u32 %v1369
      %v1371 = vextract.high.u32 %v1369
      %v1372 = vshrl.u32 %v1371, 4
      %v1373 = vmul.u32 %v1372, 18
      %v1374 = vsub.s32 %v1368, %v1373
      %v1375 = vsub.s32 0, %v1374
      %v1376 = vsel %vm1366, %v1375, %v1374
      %vm1377 = vcmp.lt.s32.totalorder %v935, 0
      %v1378 = vsub.s32 0, %v935
      %v1379 = vsel %vm1377, %v1378, %v935
      %v1380 = vmul.u32.u64.compose %v1379, 3817748708
      %v1381 = vextract.low.u32 %v1380
      %v1382 = vextract.high.u32 %v1380
      %v1383 = vshrl.u32 %v1382, 4
      %v1384 = vmul.u32 %v1383, 18
      %v1385 = vsub.s32 %v1379, %v1384
      %v1386 = vsub.s32 0, %v1385
      %v1387 = vsel %vm1377, %v1386, %v1385
      %vm1388 = vcmp.lt.s32.totalorder %v936, 0
      %v1389 = vsub.s32 0, %v936
      %v1390 = vsel %vm1388, %v1389, %v936
      %v1391 = vmul.u32.u64.compose %v1390, 3817748708
      %v1392 = vextract.low.u32 %v1391
      %v1393 = vextract.high.u32 %v1391
      %v1394 = vshrl.u32 %v1393, 4
      %v1395 = vmul.u32 %v1394, 18
      %v1396 = vsub.s32 %v1390, %v1395
      %v1397 = vsub.s32 0, %v1396
      %v1398 = vsel %vm1388, %v1397, %v1396
      %vm1399 = vcmp.ne.s32.totalorder %v947, 0
      %vm1400 = vcmp.ne.s32.totalorder %v958, 0
      %vm1401 = vcmp.ne.s32.totalorder %v969, 0
      %vm1402 = vcmp.ne.s32.totalorder %v980, 0
      %vm1403 = vcmp.ne.s32.totalorder %v991, 0
      %vm1404 = vcmp.ne.s32.totalorder %v1002, 0
      %vm1405 = vcmp.ne.s32.totalorder %v1013, 0
      %vm1406 = vcmp.ne.s32.totalorder %v1024, 0
      %vm1407 = vcmp.ne.s32.totalorder %v1035, 0
      %vm1408 = vcmp.ne.s32.totalorder %v1046, 0
      %vm1409 = vcmp.ne.s32.totalorder %v1057, 0
      %vm1410 = vcmp.ne.s32.totalorder %v1068, 0
      %vm1411 = vcmp.ne.s32.totalorder %v1079, 0
      %vm1412 = vcmp.ne.s32.totalorder %v1090, 0
      %vm1413 = vcmp.ne.s32.totalorder %v1101, 0
      %vm1414 = vcmp.ne.s32.totalorder %v1112, 0
      %vm1415 = vcmp.ne.s32.totalorder %v1123, 0
      %vm1416 = vcmp.ne.s32.totalorder %v1134, 0
      %vm1417 = vcmp.ne.s32.totalorder %v1145, 0
      %vm1418 = vcmp.ne.s32.totalorder %v1156, 0
      %vm1419 = vcmp.ne.s32.totalorder %v1167, 0
      %vm1420 = vcmp.ne.s32.totalorder %v1178, 0
      %vm1421 = vcmp.ne.s32.totalorder %v1189, 0
      %vm1422 = vcmp.ne.s32.totalorder %v1200, 0
      %vm1423 = vcmp.ne.s32.totalorder %v1211, 0
      %vm1424 = vcmp.ne.s32.totalorder %v1222, 0
      %vm1425 = vcmp.ne.s32.totalorder %v1233, 0
      %vm1426 = vcmp.ne.s32.totalorder %v1244, 0
      %vm1427 = vcmp.ne.s32.totalorder %v1255, 0
      %vm1428 = vcmp.ne.s32.totalorder %v1266, 0
      %vm1429 = vcmp.ne.s32.totalorder %v1277, 0
      %vm1430 = vcmp.ne.s32.totalorder %v1288, 0
      %vm1431 = vcmp.ne.s32.totalorder %v1299, 0
      %vm1432 = vcmp.ne.s32.totalorder %v1310, 0
      %vm1433 = vcmp.ne.s32.totalorder %v1321, 0
      %vm1434 = vcmp.ne.s32.totalorder %v1332, 0
      %vm1435 = vcmp.ne.s32.totalorder %v1343, 0
      %vm1436 = vcmp.ne.s32.totalorder %v1354, 0
      %vm1437 = vcmp.ne.s32.totalorder %v1365, 0
      %vm1438 = vcmp.ne.s32.totalorder %v1376, 0
      %vm1439 = vcmp.ne.s32.totalorder %v1387, 0
      %vm1440 = vcmp.ne.s32.totalorder %v1398, 0
      %vm1441 = vcmp.lt.s32.totalorder %v947, 0
      %vm1442 = vcmp.lt.s32.totalorder %v958, 0
      %vm1443 = vcmp.lt.s32.totalorder %v969, 0
      %vm1444 = vcmp.lt.s32.totalorder %v980, 0
      %vm1445 = vcmp.lt.s32.totalorder %v991, 0
      %vm1446 = vcmp.lt.s32.totalorder %v1002, 0
      %vm1447 = vcmp.lt.s32.totalorder %v1013, 0
      %vm1448 = vcmp.lt.s32.totalorder %v1024, 0
      %vm1449 = vcmp.lt.s32.totalorder %v1035, 0
      %vm1450 = vcmp.lt.s32.totalorder %v1046, 0
      %vm1451 = vcmp.lt.s32.totalorder %v1057, 0
      %vm1452 = vcmp.lt.s32.totalorder %v1068, 0
      %vm1453 = vcmp.lt.s32.totalorder %v1079, 0
      %vm1454 = vcmp.lt.s32.totalorder %v1090, 0
      %vm1455 = vcmp.lt.s32.totalorder %v1101, 0
      %vm1456 = vcmp.lt.s32.totalorder %v1112, 0
      %vm1457 = vcmp.lt.s32.totalorder %v1123, 0
      %vm1458 = vcmp.lt.s32.totalorder %v1134, 0
      %vm1459 = vcmp.lt.s32.totalorder %v1145, 0
      %vm1460 = vcmp.lt.s32.totalorder %v1156, 0
      %vm1461 = vcmp.lt.s32.totalorder %v1167, 0
      %vm1462 = vcmp.lt.s32.totalorder %v1178, 0
      %vm1463 = vcmp.lt.s32.totalorder %v1189, 0
      %vm1464 = vcmp.lt.s32.totalorder %v1200, 0
      %vm1465 = vcmp.lt.s32.totalorder %v1211, 0
      %vm1466 = vcmp.lt.s32.totalorder %v1222, 0
      %vm1467 = vcmp.lt.s32.totalorder %v1233, 0
      %vm1468 = vcmp.lt.s32.totalorder %v1244, 0
      %vm1469 = vcmp.lt.s32.totalorder %v1255, 0
      %vm1470 = vcmp.lt.s32.totalorder %v1266, 0
      %vm1471 = vcmp.lt.s32.totalorder %v1277, 0
      %vm1472 = vcmp.lt.s32.totalorder %v1288, 0
      %vm1473 = vcmp.lt.s32.totalorder %v1299, 0
      %vm1474 = vcmp.lt.s32.totalorder %v1310, 0
      %vm1475 = vcmp.lt.s32.totalorder %v1321, 0
      %vm1476 = vcmp.lt.s32.totalorder %v1332, 0
      %vm1477 = vcmp.lt.s32.totalorder %v1343, 0
      %vm1478 = vcmp.lt.s32.totalorder %v1354, 0
      %vm1479 = vcmp.lt.s32.totalorder %v1365, 0
      %vm1480 = vcmp.lt.s32.totalorder %v1376, 0
      %vm1481 = vcmp.lt.s32.totalorder %v1387, 0
      %vm1482 = vcmp.lt.s32.totalorder %v1398, 0
      %vm1483 = vmand %vm1441, %vm1399
      %vm1484 = vmand %vm1442, %vm1400
      %vm1485 = vmand %vm1443, %vm1401
      %vm1486 = vmand %vm1444, %vm1402
      %vm1487 = vmand %vm1445, %vm1403
      %vm1488 = vmand %vm1446, %vm1404
      %vm1489 = vmand %vm1447, %vm1405
      %vm1490 = vmand %vm1448, %vm1406
      %vm1491 = vmand %vm1449, %vm1407
      %vm1492 = vmand %vm1450, %vm1408
      %vm1493 = vmand %vm1451, %vm1409
      %vm1494 = vmand %vm1452, %vm1410
      %vm1495 = vmand %vm1453, %vm1411
      %vm1496 = vmand %vm1454, %vm1412
      %vm1497 = vmand %vm1455, %vm1413
      %vm1498 = vmand %vm1456, %vm1414
      %vm1499 = vmand %vm1457, %vm1415
      %vm1500 = vmand %vm1458, %vm1416
      %vm1501 = vmand %vm1459, %vm1417
      %vm1502 = vmand %vm1460, %vm1418
      %vm1503 = vmand %vm1461, %vm1419
      %vm1504 = vmand %vm1462, %vm1420
      %vm1505 = vmand %vm1463, %vm1421
      %vm1506 = vmand %vm1464, %vm1422
      %vm1507 = vmand %vm1465, %vm1423
      %vm1508 = vmand %vm1466, %vm1424
      %vm1509 = vmand %vm1467, %vm1425
      %vm1510 = vmand %vm1468, %vm1426
      %vm1511 = vmand %vm1469, %vm1427
      %vm1512 = vmand %vm1470, %vm1428
      %vm1513 = vmand %vm1471, %vm1429
      %vm1514 = vmand %vm1472, %vm1430
      %vm1515 = vmand %vm1473, %vm1431
      %vm1516 = vmand %vm1474, %vm1432
      %vm1517 = vmand %vm1475, %vm1433
      %vm1518 = vmand %vm1476, %vm1434
      %vm1519 = vmand %vm1477, %vm1435
      %vm1520 = vmand %vm1478, %vm1436
      %vm1521 = vmand %vm1479, %vm1437
      %vm1522 = vmand %vm1480, %vm1438
      %vm1523 = vmand %vm1481, %vm1439
      %vm1524 = vmand %vm1482, %vm1440
      %v1525 = vadd.s32 %v947, 18
      %v1526 = vadd.s32 %v958, 18
      %v1527 = vadd.s32 %v969, 18
      %v1528 = vadd.s32 %v980, 18
      %v1529 = vadd.s32 %v991, 18
      %v1530 = vadd.s32 %v1002, 18
      %v1531 = vadd.s32 %v1013, 18
      %v1532 = vadd.s32 %v1024, 18
      %v1533 = vadd.s32 %v1035, 18
      %v1534 = vadd.s32 %v1046, 18
      %v1535 = vadd.s32 %v1057, 18
      %v1536 = vadd.s32 %v1068, 18
      %v1537 = vadd.s32 %v1079, 18
      %v1538 = vadd.s32 %v1090, 18
      %v1539 = vadd.s32 %v1101, 18
      %v1540 = vadd.s32 %v1112, 18
      %v1541 = vadd.s32 %v1123, 18
      %v1542 = vadd.s32 %v1134, 18
      %v1543 = vadd.s32 %v1145, 18
      %v1544 = vadd.s32 %v1156, 18
      %v1545 = vadd.s32 %v1167, 18
      %v1546 = vadd.s32 %v1178, 18
      %v1547 = vadd.s32 %v1189, 18
      %v1548 = vadd.s32 %v1200, 18
      %v1549 = vadd.s32 %v1211, 18
      %v1550 = vadd.s32 %v1222, 18
      %v1551 = vadd.s32 %v1233, 18
      %v1552 = vadd.s32 %v1244, 18
      %v1553 = vadd.s32 %v1255, 18
      %v1554 = vadd.s32 %v1266, 18
      %v1555 = vadd.s32 %v1277, 18
      %v1556 = vadd.s32 %v1288, 18
      %v1557 = vadd.s32 %v1299, 18
      %v1558 = vadd.s32 %v1310, 18
      %v1559 = vadd.s32 %v1321, 18
      %v1560 = vadd.s32 %v1332, 18
      %v1561 = vadd.s32 %v1343, 18
      %v1562 = vadd.s32 %v1354, 18
      %v1563 = vadd.s32 %v1365, 18
      %v1564 = vadd.s32 %v1376, 18
      %v1565 = vadd.s32 %v1387, 18
      %v1566 = vadd.s32 %v1398, 18
      %v1567 = vsel %vm1483, %v1525, %v947
      %v1568 = vsel %vm1484, %v1526, %v958
      %v1569 = vsel %vm1485, %v1527, %v969
      %v1570 = vsel %vm1486, %v1528, %v980
      %v1571 = vsel %vm1487, %v1529, %v991
      %v1572 = vsel %vm1488, %v1530, %v1002
      %v1573 = vsel %vm1489, %v1531, %v1013
      %v1574 = vsel %vm1490, %v1532, %v1024
      %v1575 = vsel %vm1491, %v1533, %v1035
      %v1576 = vsel %vm1492, %v1534, %v1046
      %v1577 = vsel %vm1493, %v1535, %v1057
      %v1578 = vsel %vm1494, %v1536, %v1068
      %v1579 = vsel %vm1495, %v1537, %v1079
      %v1580 = vsel %vm1496, %v1538, %v1090
      %v1581 = vsel %vm1497, %v1539, %v1101
      %v1582 = vsel %vm1498, %v1540, %v1112
      %v1583 = vsel %vm1499, %v1541, %v1123
      %v1584 = vsel %vm1500, %v1542, %v1134
      %v1585 = vsel %vm1501, %v1543, %v1145
      %v1586 = vsel %vm1502, %v1544, %v1156
      %v1587 = vsel %vm1503, %v1545, %v1167
      %v1588 = vsel %vm1504, %v1546, %v1178
      %v1589 = vsel %vm1505, %v1547, %v1189
      %v1590 = vsel %vm1506, %v1548, %v1200
      %v1591 = vsel %vm1507, %v1549, %v1211
      %v1592 = vsel %vm1508, %v1550, %v1222
      %v1593 = vsel %vm1509, %v1551, %v1233
      %v1594 = vsel %vm1510, %v1552, %v1244
      %v1595 = vsel %vm1511, %v1553, %v1255
      %v1596 = vsel %vm1512, %v1554, %v1266
      %v1597 = vsel %vm1513, %v1555, %v1277
      %v1598 = vsel %vm1514, %v1556, %v1288
      %v1599 = vsel %vm1515, %v1557, %v1299
      %v1600 = vsel %vm1516, %v1558, %v1310
      %v1601 = vsel %vm1517, %v1559, %v1321
      %v1602 = vsel %vm1518, %v1560, %v1332
      %v1603 = vsel %vm1519, %v1561, %v1343
      %v1604 = vsel %vm1520, %v1562, %v1354
      %v1605 = vsel %vm1521, %v1563, %v1365
      %v1606 = vsel %vm1522, %v1564, %v1376
      %v1607 = vsel %vm1523, %v1565, %v1387
      %v1608 = vsel %vm1524, %v1566, %v1398
      %vm1609 = vcmp.ge.s32.totalorder %v895, 18
      %vm1610 = vcmp.ge.s32.totalorder %v896, 18
      %vm1611 = vcmp.ge.s32.totalorder %v897, 18
      %vm1612 = vcmp.ge.s32.totalorder %v898, 18
      %vm1613 = vcmp.ge.s32.totalorder %v899, 18
      %vm1614 = vcmp.ge.s32.totalorder %v900, 18
      %vm1615 = vcmp.ge.s32.totalorder %v901, 18
      %vm1616 = vcmp.ge.s32.totalorder %v902, 18
      %vm1617 = vcmp.ge.s32.totalorder %v903, 18
      %vm1618 = vcmp.ge.s32.totalorder %v904, 18
      %vm1619 = vcmp.ge.s32.totalorder %v905, 18
      %vm1620 = vcmp.ge.s32.totalorder %v906, 18
      %vm1621 = vcmp.ge.s32.totalorder %v907, 18
      %vm1622 = vcmp.ge.s32.totalorder %v908, 18
      %vm1623 = vcmp.ge.s32.totalorder %v909, 18
      %vm1624 = vcmp.ge.s32.totalorder %v910, 18
      %vm1625 = vcmp.ge.s32.totalorder %v911, 18
      %vm1626 = vcmp.ge.s32.totalorder %v912, 18
      %vm1627 = vcmp.ge.s32.totalorder %v913, 18
      %vm1628 = vcmp.ge.s32.totalorder %v914, 18
      %vm1629 = vcmp.ge.s32.totalorder %v915, 18
      %vm1630 = vcmp.ge.s32.totalorder %v916, 18
      %vm1631 = vcmp.ge.s32.totalorder %v917, 18
      %vm1632 = vcmp.ge.s32.totalorder %v918, 18
      %vm1633 = vcmp.ge.s32.totalorder %v919, 18
      %vm1634 = vcmp.ge.s32.totalorder %v920, 18
      %vm1635 = vcmp.ge.s32.totalorder %v921, 18
      %vm1636 = vcmp.ge.s32.totalorder %v922, 18
      %vm1637 = vcmp.ge.s32.totalorder %v923, 18
      %vm1638 = vcmp.ge.s32.totalorder %v924, 18
      %vm1639 = vcmp.ge.s32.totalorder %v925, 18
      %vm1640 = vcmp.ge.s32.totalorder %v926, 18
      %vm1641 = vcmp.ge.s32.totalorder %v927, 18
      %vm1642 = vcmp.ge.s32.totalorder %v928, 18
      %vm1643 = vcmp.ge.s32.totalorder %v929, 18
      %vm1644 = vcmp.ge.s32.totalorder %v930, 18
      %vm1645 = vcmp.ge.s32.totalorder %v931, 18
      %vm1646 = vcmp.ge.s32.totalorder %v932, 18
      %vm1647 = vcmp.ge.s32.totalorder %v933, 18
      %vm1648 = vcmp.ge.s32.totalorder %v934, 18
      %vm1649 = vcmp.ge.s32.totalorder %v935, 18
      %vm1650 = vcmp.ge.s32.totalorder %v936, 18
      %vm1651 = vcmp.lt.s32.totalorder %v895, 306
      %vm1652 = vcmp.lt.s32.totalorder %v896, 306
      %vm1653 = vcmp.lt.s32.totalorder %v897, 306
      %vm1654 = vcmp.lt.s32.totalorder %v898, 306
      %vm1655 = vcmp.lt.s32.totalorder %v899, 306
      %vm1656 = vcmp.lt.s32.totalorder %v900, 306
      %vm1657 = vcmp.lt.s32.totalorder %v901, 306
      %vm1658 = vcmp.lt.s32.totalorder %v902, 306
      %vm1659 = vcmp.lt.s32.totalorder %v903, 306
      %vm1660 = vcmp.lt.s32.totalorder %v904, 306
      %vm1661 = vcmp.lt.s32.totalorder %v905, 306
      %vm1662 = vcmp.lt.s32.totalorder %v906, 306
      %vm1663 = vcmp.lt.s32.totalorder %v907, 306
      %vm1664 = vcmp.lt.s32.totalorder %v908, 306
      %vm1665 = vcmp.lt.s32.totalorder %v909, 306
      %vm1666 = vcmp.lt.s32.totalorder %v910, 306
      %vm1667 = vcmp.lt.s32.totalorder %v911, 306
      %vm1668 = vcmp.lt.s32.totalorder %v912, 306
      %vm1669 = vcmp.lt.s32.totalorder %v913, 306
      %vm1670 = vcmp.lt.s32.totalorder %v914, 306
      %vm1671 = vcmp.lt.s32.totalorder %v915, 306
      %vm1672 = vcmp.lt.s32.totalorder %v916, 306
      %vm1673 = vcmp.lt.s32.totalorder %v917, 306
      %vm1674 = vcmp.lt.s32.totalorder %v918, 306
      %vm1675 = vcmp.lt.s32.totalorder %v919, 306
      %vm1676 = vcmp.lt.s32.totalorder %v920, 306
      %vm1677 = vcmp.lt.s32.totalorder %v921, 306
      %vm1678 = vcmp.lt.s32.totalorder %v922, 306
      %vm1679 = vcmp.lt.s32.totalorder %v923, 306
      %vm1680 = vcmp.lt.s32.totalorder %v924, 306
      %vm1681 = vcmp.lt.s32.totalorder %v925, 306
      %vm1682 = vcmp.lt.s32.totalorder %v926, 306
      %vm1683 = vcmp.lt.s32.totalorder %v927, 306
      %vm1684 = vcmp.lt.s32.totalorder %v928, 306
      %vm1685 = vcmp.lt.s32.totalorder %v929, 306
      %vm1686 = vcmp.lt.s32.totalorder %v930, 306
      %vm1687 = vcmp.lt.s32.totalorder %v931, 306
      %vm1688 = vcmp.lt.s32.totalorder %v932, 306
      %vm1689 = vcmp.lt.s32.totalorder %v933, 306
      %vm1690 = vcmp.lt.s32.totalorder %v934, 306
      %vm1691 = vcmp.lt.s32.totalorder %v935, 306
      %vm1692 = vcmp.lt.s32.totalorder %v936, 306
      %vm1693 = vmand %vm1609, %vm1651
      %vm1694 = vmand %vm1610, %vm1652
      %vm1695 = vmand %vm1611, %vm1653
      %vm1696 = vmand %vm1612, %vm1654
      %vm1697 = vmand %vm1613, %vm1655
      %vm1698 = vmand %vm1614, %vm1656
      %vm1699 = vmand %vm1615, %vm1657
      %vm1700 = vmand %vm1616, %vm1658
      %vm1701 = vmand %vm1617, %vm1659
      %vm1702 = vmand %vm1618, %vm1660
      %vm1703 = vmand %vm1619, %vm1661
      %vm1704 = vmand %vm1620, %vm1662
      %vm1705 = vmand %vm1621, %vm1663
      %vm1706 = vmand %vm1622, %vm1664
      %vm1707 = vmand %vm1623, %vm1665
      %vm1708 = vmand %vm1624, %vm1666
      %vm1709 = vmand %vm1625, %vm1667
      %vm1710 = vmand %vm1626, %vm1668
      %vm1711 = vmand %vm1627, %vm1669
      %vm1712 = vmand %vm1628, %vm1670
      %vm1713 = vmand %vm1629, %vm1671
      %vm1714 = vmand %vm1630, %vm1672
      %vm1715 = vmand %vm1631, %vm1673
      %vm1716 = vmand %vm1632, %vm1674
      %vm1717 = vmand %vm1633, %vm1675
      %vm1718 = vmand %vm1634, %vm1676
      %vm1719 = vmand %vm1635, %vm1677
      %vm1720 = vmand %vm1636, %vm1678
      %vm1721 = vmand %vm1637, %vm1679
      %vm1722 = vmand %vm1638, %vm1680
      %vm1723 = vmand %vm1639, %vm1681
      %vm1724 = vmand %vm1640, %vm1682
      %vm1725 = vmand %vm1641, %vm1683
      %vm1726 = vmand %vm1642, %vm1684
      %vm1727 = vmand %vm1643, %vm1685
      %vm1728 = vmand %vm1644, %vm1686
      %vm1729 = vmand %vm1645, %vm1687
      %vm1730 = vmand %vm1646, %vm1688
      %vm1731 = vmand %vm1647, %vm1689
      %vm1732 = vmand %vm1648, %vm1690
      %vm1733 = vmand %vm1649, %vm1691
      %vm1734 = vmand %vm1650, %vm1692
      %vm1735 = vcmp.ge.s32.totalorder %v1567, 1
      %vm1736 = vcmp.ge.s32.totalorder %v1568, 1
      %vm1737 = vcmp.ge.s32.totalorder %v1569, 1
      %vm1738 = vcmp.ge.s32.totalorder %v1570, 1
      %vm1739 = vcmp.ge.s32.totalorder %v1571, 1
      %vm1740 = vcmp.ge.s32.totalorder %v1572, 1
      %vm1741 = vcmp.ge.s32.totalorder %v1573, 1
      %vm1742 = vcmp.ge.s32.totalorder %v1574, 1
      %vm1743 = vcmp.ge.s32.totalorder %v1575, 1
      %vm1744 = vcmp.ge.s32.totalorder %v1576, 1
      %vm1745 = vcmp.ge.s32.totalorder %v1577, 1
      %vm1746 = vcmp.ge.s32.totalorder %v1578, 1
      %vm1747 = vcmp.ge.s32.totalorder %v1579, 1
      %vm1748 = vcmp.ge.s32.totalorder %v1580, 1
      %vm1749 = vcmp.ge.s32.totalorder %v1581, 1
      %vm1750 = vcmp.ge.s32.totalorder %v1582, 1
      %vm1751 = vcmp.ge.s32.totalorder %v1583, 1
      %vm1752 = vcmp.ge.s32.totalorder %v1584, 1
      %vm1753 = vcmp.ge.s32.totalorder %v1585, 1
      %vm1754 = vcmp.ge.s32.totalorder %v1586, 1
      %vm1755 = vcmp.ge.s32.totalorder %v1587, 1
      %vm1756 = vcmp.ge.s32.totalorder %v1588, 1
      %vm1757 = vcmp.ge.s32.totalorder %v1589, 1
      %vm1758 = vcmp.ge.s32.totalorder %v1590, 1
      %vm1759 = vcmp.ge.s32.totalorder %v1591, 1
      %vm1760 = vcmp.ge.s32.totalorder %v1592, 1
      %vm1761 = vcmp.ge.s32.totalorder %v1593, 1
      %vm1762 = vcmp.ge.s32.totalorder %v1594, 1
      %vm1763 = vcmp.ge.s32.totalorder %v1595, 1
      %vm1764 = vcmp.ge.s32.totalorder %v1596, 1
      %vm1765 = vcmp.ge.s32.totalorder %v1597, 1
      %vm1766 = vcmp.ge.s32.totalorder %v1598, 1
      %vm1767 = vcmp.ge.s32.totalorder %v1599, 1
      %vm1768 = vcmp.ge.s32.totalorder %v1600, 1
      %vm1769 = vcmp.ge.s32.totalorder %v1601, 1
      %vm1770 = vcmp.ge.s32.totalorder %v1602, 1
      %vm1771 = vcmp.ge.s32.totalorder %v1603, 1
      %vm1772 = vcmp.ge.s32.totalorder %v1604, 1
      %vm1773 = vcmp.ge.s32.totalorder %v1605, 1
      %vm1774 = vcmp.ge.s32.totalorder %v1606, 1
      %vm1775 = vcmp.ge.s32.totalorder %v1607, 1
      %vm1776 = vcmp.ge.s32.totalorder %v1608, 1
      %vm1777 = vmand %vm1693, %vm1735
      %vm1778 = vmand %vm1694, %vm1736
      %vm1779 = vmand %vm1695, %vm1737
      %vm1780 = vmand %vm1696, %vm1738
      %vm1781 = vmand %vm1697, %vm1739
      %vm1782 = vmand %vm1698, %vm1740
      %vm1783 = vmand %vm1699, %vm1741
      %vm1784 = vmand %vm1700, %vm1742
      %vm1785 = vmand %vm1701, %vm1743
      %vm1786 = vmand %vm1702, %vm1744
      %vm1787 = vmand %vm1703, %vm1745
      %vm1788 = vmand %vm1704, %vm1746
      %vm1789 = vmand %vm1705, %vm1747
      %vm1790 = vmand %vm1706, %vm1748
      %vm1791 = vmand %vm1707, %vm1749
      %vm1792 = vmand %vm1708, %vm1750
      %vm1793 = vmand %vm1709, %vm1751
      %vm1794 = vmand %vm1710, %vm1752
      %vm1795 = vmand %vm1711, %vm1753
      %vm1796 = vmand %vm1712, %vm1754
      %vm1797 = vmand %vm1713, %vm1755
      %vm1798 = vmand %vm1714, %vm1756
      %vm1799 = vmand %vm1715, %vm1757
      %vm1800 = vmand %vm1716, %vm1758
      %vm1801 = vmand %vm1717, %vm1759
      %vm1802 = vmand %vm1718, %vm1760
      %vm1803 = vmand %vm1719, %vm1761
      %vm1804 = vmand %vm1720, %vm1762
      %vm1805 = vmand %vm1721, %vm1763
      %vm1806 = vmand %vm1722, %vm1764
      %vm1807 = vmand %vm1723, %vm1765
      %vm1808 = vmand %vm1724, %vm1766
      %vm1809 = vmand %vm1725, %vm1767
      %vm1810 = vmand %vm1726, %vm1768
      %vm1811 = vmand %vm1727, %vm1769
      %vm1812 = vmand %vm1728, %vm1770
      %vm1813 = vmand %vm1729, %vm1771
      %vm1814 = vmand %vm1730, %vm1772
      %vm1815 = vmand %vm1731, %vm1773
      %vm1816 = vmand %vm1732, %vm1774
      %vm1817 = vmand %vm1733, %vm1775
      %vm1818 = vmand %vm1734, %vm1776
      %vm1819 = vcmp.le.s32.totalorder %v1567, 16
      %vm1820 = vcmp.le.s32.totalorder %v1568, 16
      %vm1821 = vcmp.le.s32.totalorder %v1569, 16
      %vm1822 = vcmp.le.s32.totalorder %v1570, 16
      %vm1823 = vcmp.le.s32.totalorder %v1571, 16
      %vm1824 = vcmp.le.s32.totalorder %v1572, 16
      %vm1825 = vcmp.le.s32.totalorder %v1573, 16
      %vm1826 = vcmp.le.s32.totalorder %v1574, 16
      %vm1827 = vcmp.le.s32.totalorder %v1575, 16
      %vm1828 = vcmp.le.s32.totalorder %v1576, 16
      %vm1829 = vcmp.le.s32.totalorder %v1577, 16
      %vm1830 = vcmp.le.s32.totalorder %v1578, 16
      %vm1831 = vcmp.le.s32.totalorder %v1579, 16
      %vm1832 = vcmp.le.s32.totalorder %v1580, 16
      %vm1833 = vcmp.le.s32.totalorder %v1581, 16
      %vm1834 = vcmp.le.s32.totalorder %v1582, 16
      %vm1835 = vcmp.le.s32.totalorder %v1583, 16
      %vm1836 = vcmp.le.s32.totalorder %v1584, 16
      %vm1837 = vcmp.le.s32.totalorder %v1585, 16
      %vm1838 = vcmp.le.s32.totalorder %v1586, 16
      %vm1839 = vcmp.le.s32.totalorder %v1587, 16
      %vm1840 = vcmp.le.s32.totalorder %v1588, 16
      %vm1841 = vcmp.le.s32.totalorder %v1589, 16
      %vm1842 = vcmp.le.s32.totalorder %v1590, 16
      %vm1843 = vcmp.le.s32.totalorder %v1591, 16
      %vm1844 = vcmp.le.s32.totalorder %v1592, 16
      %vm1845 = vcmp.le.s32.totalorder %v1593, 16
      %vm1846 = vcmp.le.s32.totalorder %v1594, 16
      %vm1847 = vcmp.le.s32.totalorder %v1595, 16
      %vm1848 = vcmp.le.s32.totalorder %v1596, 16
      %vm1849 = vcmp.le.s32.totalorder %v1597, 16
      %vm1850 = vcmp.le.s32.totalorder %v1598, 16
      %vm1851 = vcmp.le.s32.totalorder %v1599, 16
      %vm1852 = vcmp.le.s32.totalorder %v1600, 16
      %vm1853 = vcmp.le.s32.totalorder %v1601, 16
      %vm1854 = vcmp.le.s32.totalorder %v1602, 16
      %vm1855 = vcmp.le.s32.totalorder %v1603, 16
      %vm1856 = vcmp.le.s32.totalorder %v1604, 16
      %vm1857 = vcmp.le.s32.totalorder %v1605, 16
      %vm1858 = vcmp.le.s32.totalorder %v1606, 16
      %vm1859 = vcmp.le.s32.totalorder %v1607, 16
      %vm1860 = vcmp.le.s32.totalorder %v1608, 16
      %vm1861 = vmand %vm1777, %vm1819
      %vm1862 = vmand %vm1778, %vm1820
      %vm1863 = vmand %vm1779, %vm1821
      %vm1864 = vmand %vm1780, %vm1822
      %vm1865 = vmand %vm1781, %vm1823
      %vm1866 = vmand %vm1782, %vm1824
      %vm1867 = vmand %vm1783, %vm1825
      %vm1868 = vmand %vm1784, %vm1826
      %vm1869 = vmand %vm1785, %vm1827
      %vm1870 = vmand %vm1786, %vm1828
      %vm1871 = vmand %vm1787, %vm1829
      %vm1872 = vmand %vm1788, %vm1830
      %vm1873 = vmand %vm1789, %vm1831
      %vm1874 = vmand %vm1790, %vm1832
      %vm1875 = vmand %vm1791, %vm1833
      %vm1876 = vmand %vm1792, %vm1834
      %vm1877 = vmand %vm1793, %vm1835
      %vm1878 = vmand %vm1794, %vm1836
      %vm1879 = vmand %vm1795, %vm1837
      %vm1880 = vmand %vm1796, %vm1838
      %vm1881 = vmand %vm1797, %vm1839
      %vm1882 = vmand %vm1798, %vm1840
      %vm1883 = vmand %vm1799, %vm1841
      %vm1884 = vmand %vm1800, %vm1842
      %vm1885 = vmand %vm1801, %vm1843
      %vm1886 = vmand %vm1802, %vm1844
      %vm1887 = vmand %vm1803, %vm1845
      %vm1888 = vmand %vm1804, %vm1846
      %vm1889 = vmand %vm1805, %vm1847
      %vm1890 = vmand %vm1806, %vm1848
      %vm1891 = vmand %vm1807, %vm1849
      %vm1892 = vmand %vm1808, %vm1850
      %vm1893 = vmand %vm1809, %vm1851
      %vm1894 = vmand %vm1810, %vm1852
      %vm1895 = vmand %vm1811, %vm1853
      %vm1896 = vmand %vm1812, %vm1854
      %vm1897 = vmand %vm1813, %vm1855
      %vm1898 = vmand %vm1814, %vm1856
      %vm1899 = vmand %vm1815, %vm1857
      %vm1900 = vmand %vm1816, %vm1858
      %vm1901 = vmand %vm1817, %vm1859
      %vm1902 = vmand %vm1818, %vm1860
      %v1903 = vsel %vm1861, 1, 0
      %v1904 = vsel %vm1862, 1, 0
      %v1905 = vsel %vm1863, 1, 0
      %v1906 = vsel %vm1864, 1, 0
      %v1907 = vsel %vm1865, 1, 0
      %v1908 = vsel %vm1866, 1, 0
      %v1909 = vsel %vm1867, 1, 0
      %v1910 = vsel %vm1868, 1, 0
      %v1911 = vsel %vm1869, 1, 0
      %v1912 = vsel %vm1870, 1, 0
      %v1913 = vsel %vm1871, 1, 0
      %v1914 = vsel %vm1872, 1, 0
      %v1915 = vsel %vm1873, 1, 0
      %v1916 = vsel %vm1874, 1, 0
      %v1917 = vsel %vm1875, 1, 0
      %v1918 = vsel %vm1876, 1, 0
      %v1919 = vsel %vm1877, 1, 0
      %v1920 = vsel %vm1878, 1, 0
      %v1921 = vsel %vm1879, 1, 0
      %v1922 = vsel %vm1880, 1, 0
      %v1923 = vsel %vm1881, 1, 0
      %v1924 = vsel %vm1882, 1, 0
      %v1925 = vsel %vm1883, 1, 0
      %v1926 = vsel %vm1884, 1, 0
      %v1927 = vsel %vm1885, 1, 0
      %v1928 = vsel %vm1886, 1, 0
      %v1929 = vsel %vm1887, 1, 0
      %v1930 = vsel %vm1888, 1, 0
      %v1931 = vsel %vm1889, 1, 0
      %v1932 = vsel %vm1890, 1, 0
      %v1933 = vsel %vm1891, 1, 0
      %v1934 = vsel %vm1892, 1, 0
      %v1935 = vsel %vm1893, 1, 0
      %v1936 = vsel %vm1894, 1, 0
      %v1937 = vsel %vm1895, 1, 0
      %v1938 = vsel %vm1896, 1, 0
      %v1939 = vsel %vm1897, 1, 0
      %v1940 = vsel %vm1898, 1, 0
      %v1941 = vsel %vm1899, 1, 0
      %v1942 = vsel %vm1900, 1, 0
      %v1943 = vsel %vm1901, 1, 0
      %v1944 = vsel %vm1902, 1, 0
      %vm1945 = vcmp.eq.s32.totalorder %v1903, 1
      %vm1946 = vcmp.eq.s32.totalorder %v1904, 1
      %vm1947 = vcmp.eq.s32.totalorder %v1905, 1
      %vm1948 = vcmp.eq.s32.totalorder %v1906, 1
      %vm1949 = vcmp.eq.s32.totalorder %v1907, 1
      %vm1950 = vcmp.eq.s32.totalorder %v1908, 1
      %vm1951 = vcmp.eq.s32.totalorder %v1909, 1
      %vm1952 = vcmp.eq.s32.totalorder %v1910, 1
      %vm1953 = vcmp.eq.s32.totalorder %v1911, 1
      %vm1954 = vcmp.eq.s32.totalorder %v1912, 1
      %vm1955 = vcmp.eq.s32.totalorder %v1913, 1
      %vm1956 = vcmp.eq.s32.totalorder %v1914, 1
      %vm1957 = vcmp.eq.s32.totalorder %v1915, 1
      %vm1958 = vcmp.eq.s32.totalorder %v1916, 1
      %vm1959 = vcmp.eq.s32.totalorder %v1917, 1
      %vm1960 = vcmp.eq.s32.totalorder %v1918, 1
      %vm1961 = vcmp.eq.s32.totalorder %v1919, 1
      %vm1962 = vcmp.eq.s32.totalorder %v1920, 1
      %vm1963 = vcmp.eq.s32.totalorder %v1921, 1
      %vm1964 = vcmp.eq.s32.totalorder %v1922, 1
      %vm1965 = vcmp.eq.s32.totalorder %v1923, 1
      %vm1966 = vcmp.eq.s32.totalorder %v1924, 1
      %vm1967 = vcmp.eq.s32.totalorder %v1925, 1
      %vm1968 = vcmp.eq.s32.totalorder %v1926, 1
      %vm1969 = vcmp.eq.s32.totalorder %v1927, 1
      %vm1970 = vcmp.eq.s32.totalorder %v1928, 1
      %vm1971 = vcmp.eq.s32.totalorder %v1929, 1
      %vm1972 = vcmp.eq.s32.totalorder %v1930, 1
      %vm1973 = vcmp.eq.s32.totalorder %v1931, 1
      %vm1974 = vcmp.eq.s32.totalorder %v1932, 1
      %vm1975 = vcmp.eq.s32.totalorder %v1933, 1
      %vm1976 = vcmp.eq.s32.totalorder %v1934, 1
      %vm1977 = vcmp.eq.s32.totalorder %v1935, 1
      %vm1978 = vcmp.eq.s32.totalorder %v1936, 1
      %vm1979 = vcmp.eq.s32.totalorder %v1937, 1
      %vm1980 = vcmp.eq.s32.totalorder %v1938, 1
      %vm1981 = vcmp.eq.s32.totalorder %v1939, 1
      %vm1982 = vcmp.eq.s32.totalorder %v1940, 1
      %vm1983 = vcmp.eq.s32.totalorder %v1941, 1
      %vm1984 = vcmp.eq.s32.totalorder %v1942, 1
      %vm1985 = vcmp.eq.s32.totalorder %v1943, 1
      %vm1986 = vcmp.eq.s32.totalorder %v1944, 1
      %v1987 = vsel %vm1945, %v852, 0.0
      %v1988 = vsel %vm1946, %v853, 0.0
      %v1989 = vsel %vm1947, %v854, 0.0
      %v1990 = vsel %vm1948, %v855, 0.0
      %v1991 = vsel %vm1949, %v856, 0.0
      %v1992 = vsel %vm1950, %v857, 0.0
      %v1993 = vsel %vm1951, %v858, 0.0
      %v1994 = vsel %vm1952, %v859, 0.0
      %v1995 = vsel %vm1953, %v860, 0.0
      %v1996 = vsel %vm1954, %v861, 0.0
      %v1997 = vsel %vm1955, %v862, 0.0
      %v1998 = vsel %vm1956, %v863, 0.0
      %v1999 = vsel %vm1957, %v864, 0.0
      %v2000 = vsel %vm1958, %v865, 0.0
      %v2001 = vsel %vm1959, %v866, 0.0
      %v2002 = vsel %vm1960, %v867, 0.0
      %v2003 = vsel %vm1961, %v868, 0.0
      %v2004 = vsel %vm1962, %v869, 0.0
      %v2005 = vsel %vm1963, %v870, 0.0
      %v2006 = vsel %vm1964, %v871, 0.0
      %v2007 = vsel %vm1965, %v872, 0.0
      %v2008 = vsel %vm1966, %v873, 0.0
      %v2009 = vsel %vm1967, %v874, 0.0
      %v2010 = vsel %vm1968, %v875, 0.0
      %v2011 = vsel %vm1969, %v876, 0.0
      %v2012 = vsel %vm1970, %v877, 0.0
      %v2013 = vsel %vm1971, %v878, 0.0
      %v2014 = vsel %vm1972, %v879, 0.0
      %v2015 = vsel %vm1973, %v880, 0.0
      %v2016 = vsel %vm1974, %v881, 0.0
      %v2017 = vsel %vm1975, %v882, 0.0
      %v2018 = vsel %vm1976, %v883, 0.0
      %v2019 = vsel %vm1977, %v884, 0.0
      %v2020 = vsel %vm1978, %v885, 0.0
      %v2021 = vsel %vm1979, %v886, 0.0
      %v2022 = vsel %vm1980, %v887, 0.0
      %v2023 = vsel %vm1981, %v888, 0.0
      %v2024 = vsel %vm1982, %v889, 0.0
      %v2025 = vsel %vm1983, %v890, 0.0
      %v2026 = vsel %vm1984, %v891, 0.0
      %v2027 = vsel %vm1985, %v892, 0.0
      %v2028 = vsel %vm1986, %v893, 0.0
      %v2029 = vpack.c.bf16 %v1988, %v1987
      %v2030 = vpack.c.bf16 %v1990, %v1989
      %v2031 = vpack.c.bf16 %v1992, %v1991
      %v2032 = vpack.c.bf16 %v1994, %v1993
      %v2033 = vpack.c.bf16 %v1996, %v1995
      %v2034 = vpack.c.bf16 %v1998, %v1997
      %v2035 = vpack.c.bf16 %v2000, %v1999
      %v2036 = vpack.c.bf16 %v2002, %v2001
      %v2037 = vpack.c.bf16 %v2004, %v2003
      %v2038 = vpack.c.bf16 %v2006, %v2005
      %v2039 = vpack.c.bf16 %v2008, %v2007
      %v2040 = vpack.c.bf16 %v2010, %v2009
      %v2041 = vpack.c.bf16 %v2012, %v2011
      %v2042 = vpack.c.bf16 %v2014, %v2013
      %v2043 = vpack.c.bf16 %v2016, %v2015
      %v2044 = vpack.c.bf16 %v2018, %v2017
      %v2045 = vpack.c.bf16 %v2020, %v2019
      %v2046 = vpack.c.bf16 %v2022, %v2021
      %v2047 = vpack.c.bf16 %v2024, %v2023
      %v2048 = vpack.c.bf16 %v2026, %v2025
      %v2049 = vpack.c.bf16 %v2028, %v2027
      %vm2050 = vcmask 31744
      %2051 = vst.msk [vmem:[#allocation2] sm:$0xff] %vm2050, 0.0
      %2052 = vst.msk [vmem:[#allocation2 + $0x8] sm:$0xff] %vm2050, 0.0
      %2053 = vst.msk [vmem:[#allocation2 + $0x10] sm:$0xff] %vm2050, 0.0
      %2054 = vst.msk [vmem:[#allocation2 + $0x18] sm:$0xff] %vm2050, 0.0
      %2055 = vst.msk [vmem:[#allocation2 + $0x20] sm:$0xff] %vm2050, 0.0
      %2056 = vst.msk [vmem:[#allocation2 + $0x28] sm:$0xff] %vm2050, 0.0
      %2057 = vst.msk [vmem:[#allocation2 + $0x30] sm:$0xff] %vm2050, 0.0
      %2058 = vst.msk [vmem:[#allocation2 + $0x38] sm:$0xff] %vm2050, 0.0
      %2059 = vst.msk [vmem:[#allocation2 + $0x40] sm:$0xff] %vm2050, 0.0
      %2060 = vst.msk [vmem:[#allocation2 + $0x48] sm:$0xff] %vm2050, 0.0
      %2061 = vst.msk [vmem:[#allocation2 + $0x50] sm:$0xff] %vm2050, 0.0
      %2062 = vst.msk [vmem:[#allocation2 + $0x58] sm:$0xff] %vm2050, 0.0
      %2063 = vst.msk [vmem:[#allocation2 + $0x60] sm:$0xff] %vm2050, 0.0
      %2064 = vst.msk [vmem:[#allocation2 + $0x68] sm:$0xff] %vm2050, 0.0
      %2065 = vst.msk [vmem:[#allocation2 + $0x70] sm:$0xff] %vm2050, 0.0
      %2066 = vst.msk [vmem:[#allocation2 + $0x78] sm:$0xff] %vm2050, 0.0
      %2067 = vst.msk [vmem:[#allocation2 + $0x80] sm:$0xff] %vm2050, 0.0
      %2068 = vst.msk [vmem:[#allocation2 + $0x88] sm:$0xff] %vm2050, 0.0
      %2069 = vst.msk [vmem:[#allocation2 + $0x90] sm:$0xff] %vm2050, 0.0
      %2070 = vst.msk [vmem:[#allocation2 + $0x98] sm:$0xff] %vm2050, 0.0
      %2071 = vst.msk [vmem:[#allocation2 + $0xa0] sm:$0xff] %vm2050, 0.0
      %2072 = vst.msk [vmem:[#allocation2 + $0xa8] sm:$0xff] %vm2050, 0.0
      %2073 = vst.msk [vmem:[#allocation2 + $0xb0] sm:$0xff] %vm2050, 0.0
      %2074 = vst.msk [vmem:[#allocation2 + $0xb8] sm:$0xff] %vm2050, 0.0
      %2075 = vst.msk [vmem:[#allocation2 + $0xc0] sm:$0xff] %vm2050, 0.0
      %2076 = vst.msk [vmem:[#allocation2 + $0xc8] sm:$0xff] %vm2050, 0.0
      %2077 = vst.msk [vmem:[#allocation2 + $0xd0] sm:$0xff] %vm2050, 0.0
      %2078 = vst.msk [vmem:[#allocation2 + $0xd8] sm:$0xff] %vm2050, 0.0
      %2079 = vst.msk [vmem:[#allocation2 + $0xe0] sm:$0xff] %vm2050, 0.0
      %2080 = vst.msk [vmem:[#allocation2 + $0xe8] sm:$0xff] %vm2050, 0.0
      %2081 = vst.msk [vmem:[#allocation2 + $0xf0] sm:$0xff] %vm2050, 0.0
      %2082 = vst.msk [vmem:[#allocation2 + $0xf8] sm:$0xff] %vm2050, 0.0
      %2083 = vst.msk [vmem:[#allocation2 + $0x100] sm:$0xff] %vm2050, 0.0
      %2084 = vst.msk [vmem:[#allocation2 + $0x108] sm:$0xff] %vm2050, 0.0
      %2085 = vst.msk [vmem:[#allocation2 + $0x110] sm:$0xff] %vm2050, 0.0
      %2086 = vst.msk [vmem:[#allocation2 + $0x118] sm:$0xff] %vm2050, 0.0
      %v2087 = vld [vmem:[#allocation2] sm:$0xff]
      %v2088 = vld [vmem:[#allocation2 + $0x8] sm:$0xff]
      %v2089 = vld [vmem:[#allocation2 + $0x10] sm:$0xff]
      %v2090 = vld [vmem:[#allocation2 + $0x18] sm:$0xff]
      %v2091 = vld [vmem:[#allocation2 + $0x20] sm:$0xff]
      %v2092 = vld [vmem:[#allocation2 + $0x28] sm:$0xff]
      %v2093 = vld [vmem:[#allocation2 + $0x30] sm:$0xff]
      %v2094 = vld [vmem:[#allocation2 + $0x38] sm:$0xff]
      %v2095 = vld [vmem:[#allocation2 + $0x40] sm:$0xff]
      %v2096 = vld [vmem:[#allocation2 + $0x48] sm:$0xff]
      %v2097 = vld [vmem:[#allocation2 + $0x50] sm:$0xff]
      %v2098 = vld [vmem:[#allocation2 + $0x58] sm:$0xff]
      %v2099 = vld [vmem:[#allocation2 + $0x60] sm:$0xff]
      %v2100 = vld [vmem:[#allocation2 + $0x68] sm:$0xff]
      %v2101 = vld [vmem:[#allocation2 + $0x70] sm:$0xff]
      %v2102 = vld [vmem:[#allocation2 + $0x78] sm:$0xff]
      %v2103 = vld [vmem:[#allocation2 + $0x80] sm:$0xff]
      %v2104 = vld [vmem:[#allocation2 + $0x88] sm:$0xff]
      %v2105 = vld [vmem:[#allocation2 + $0x90] sm:$0xff]
      %v2106 = vld [vmem:[#allocation2 + $0x98] sm:$0xff]
      %v2107 = vld [vmem:[#allocation2 + $0xa0] sm:$0xff]
      %v2108 = vld [vmem:[#allocation2 + $0xa8] sm:$0xff]
      %v2109 = vld [vmem:[#allocation2 + $0xb0] sm:$0xff]
      %v2110 = vld [vmem:[#allocation2 + $0xb8] sm:$0xff]
      %v2111 = vld [vmem:[#allocation2 + $0xc0] sm:$0xff]
      %v2112 = vld [vmem:[#allocation2 + $0xc8] sm:$0xff]
      %v2113 = vld [vmem:[#allocation2 + $0xd0] sm:$0xff]
      %v2114 = vld [vmem:[#allocation2 + $0xd8] sm:$0xff]
      %v2115 = vld [vmem:[#allocation2 + $0xe0] sm:$0xff]
      %v2116 = vld [vmem:[#allocation2 + $0xe8] sm:$0xff]
      %v2117 = vld [vmem:[#allocation2 + $0xf0] sm:$0xff]
      %v2118 = vld [vmem:[#allocation2 + $0xf8] sm:$0xff]
      %v2119 = vld [vmem:[#allocation2 + $0x100] sm:$0xff]
      %v2120 = vld [vmem:[#allocation2 + $0x108] sm:$0xff]
      %v2121 = vld [vmem:[#allocation2 + $0x110] sm:$0xff]
      %v2122 = vld [vmem:[#allocation2 + $0x118] sm:$0xff]
      %v2123 = vld [vmem:[%s3] sm:$0x3]
      %v2125 = vsel %vm2050, %v2029, 0
      %v2128 = vsel %vm2050, %v2030, 0
      %v2131 = vsel %vm2050, %v2031, 0
      %v2134 = vsel %vm2050, %v2032, 0
      %v2137 = vsel %vm2050, %v2033, 0
      %v2140 = vsel %vm2050, %v2034, 0
      %v2143 = vsel %vm2050, %v2035, 0
      %v2146 = vsel %vm2050, %v2036, 0
      %v2149 = vsel %vm2050, %v2037, 0
      %v2152 = vsel %vm2050, %v2038, 0
      %v2155 = vsel %vm2050, %v2039, 0
      %v2158 = vsel %vm2050, %v2040, 0
      %v2161 = vsel %vm2050, %v2041, 0
      %v2164 = vsel %vm2050, %v2042, 0
      %v2167 = vsel %vm2050, %v2043, 0
      %v2170 = vsel %vm2050, %v2044, 0
      %v2173 = vsel %vm2050, %v2045, 0
      %v2176 = vsel %vm2050, %v2046, 0
      %vm2178 = vcmask 1041408
      %v2180 = vsel %vm2178, %v2123, 0
      %2182 = vmatprep.subr.bf16.mxu0 0
      %2183 = vmatpush1.bf16.msra.mxu0 %v2180
      %2184 = vmatprep.subr.bf16.mxu0 0
      %2185 = vmatpush1.bf16.msra.mxu0 0
      %2186 = vmatprep.subr.bf16.mxu0 0
      %2187 = vmatpush1.bf16.msra.mxu0 0
      %2188 = vmatprep.subr.bf16.mxu0 0
      %2189 = vmatpush1.bf16.msra.mxu0 0
      %2190 = vmatprep.subr.bf16.mxu0 0
      %2191 = vmatpush1.bf16.msra.mxu0 0
      %2192 = vmatprep.subr.bf16.mxu0 0
      %2193 = vmatpush1.bf16.msra.mxu0 0
      %2194 = vmatprep.subr.bf16.mxu0 0
      %2195 = vmatpush1.bf16.msra.mxu0 0
      %2196 = vmatprep.subr.bf16.mxu0 0
      %2197 = vmatpush1.bf16.msra.mxu0 0
      %2198 = vmatprep.subr.bf16.mxu0 0
      %2199 = vmatpush1.bf16.msra.mxu0 0
      %2200 = vmatprep.subr.bf16.mxu0 0
      %2201 = vmatpush1.bf16.msra.mxu0 0
      %2202 = vmatprep.subr.bf16.mxu0 0
      %2203 = vmatpush1.bf16.msra.mxu0 0
      %2204 = vmatprep.subr.bf16.mxu0 0
      %2205 = vmatpush1.bf16.msra.mxu0 0
      %2206 = vmatprep.subr.bf16.mxu0 0
      %2207 = vmatpush1.bf16.msra.mxu0 0
      %2208 = vmatprep.subr.bf16.mxu0 0
      %2209 = vmatpush1.bf16.msra.mxu0 0
      %2210 = vmatprep.subr.bf16.mxu0 0
      %2211 = vmatpush1.bf16.msra.mxu0 0
      %2212 = vmatprep.subr.bf16.mxu0 0
      %2213 = vmatpush1.bf16.msra.mxu0 0
      %2214 = vmatprep.mubr.bf16.mxu0 0
      %2215 = vmatmul.mubr.bf16.gmra.mrb[0].mxu0 %v2125
      %v2216 = vpop.f32.mrb[0].mxu0
      %v2217 = vadd.f32 0.0, %v2216
      %v2218 = vpop.f32.mrb[0].mxu0
      %v2219 = vpop.f32.mrb[0].mxu0
      %v2220 = vadd.f32 0.0, %v2219
      %v2221 = vpop.f32.mrb[0].mxu0
      %2222 = vmatprep.mubr.bf16.mxu0 0
      %2223 = vmatmul.mubr.bf16.gmra.mrb[0].mxu0 %v2128
      %v2224 = vpop.f32.mrb[0].mxu0
      %v2225 = vadd.f32 0.0, %v2224
      %v2226 = vpop.f32.mrb[0].mxu0
      %v2227 = vpop.f32.mrb[0].mxu0
      %v2228 = vadd.f32 0.0, %v2227
      %v2229 = vpop.f32.mrb[0].mxu0
      %2230 = vmatprep.mubr.bf16.mxu0 0
      %2231 = vmatmul.mubr.bf16.gmra.mrb[0].mxu0 %v2131
      %v2232 = vpop.f32.mrb[0].mxu0
      %v2233 = vadd.f32 0.0, %v2232
      %v2234 = vpop.f32.mrb[0].mxu0
      %v2235 = vpop.f32.mrb[0].mxu0
      %v2236 = vadd.f32 0.0, %v2235
      %v2237 = vpop.f32.mrb[0].mxu0
      %2238 = vmatprep.mubr.bf16.mxu0 0
      %2239 = vmatmul.mubr.bf16.gmra.mrb[0].mxu0 %v2134
      %v2240 = vpop.f32.mrb[0].mxu0
      %v2241 = vadd.f32 0.0, %v2240
      %v2242 = vpop.f32.mrb[0].mxu0
      %v2243 = vpop.f32.mrb[0].mxu0
      %v2244 = vadd.f32 0.0, %v2243
      %v2245 = vpop.f32.mrb[0].mxu0
      %2246 = vmatprep.mubr.bf16.mxu0 0
      %2247 = vmatmul.mubr.bf16.gmra.mrb[0].mxu0 %v2137
      %v2248 = vpop.f32.mrb[0].mxu0
      %v2249 = vadd.f32 0.0, %v2248
      %v2250 = vpop.f32.mrb[0].mxu0
      %v2251 = vpop.f32.mrb[0].mxu0
      %v2252 = vadd.f32 0.0, %v2251
      %v2253 = vpop.f32.mrb[0].mxu0
      %2254 = vmatprep.mubr.bf16.mxu0 0
      %2255 = vmatmul.mubr.bf16.gmra.mrb[0].mxu0 %v2140
      %v2256 = vpop.f32.mrb[0].mxu0
      %v2257 = vadd.f32 0.0, %v2256
      %v2258 = vpop.f32.mrb[0].mxu0
      %v2259 = vpop.f32.mrb[0].mxu0
      %v2260 = vadd.f32 0.0, %v2259
      %v2261 = vpop.f32.mrb[0].mxu0
      %2262 = vmatprep.mubr.bf16.mxu0 0
      %2263 = vmatmul.mubr.bf16.gmra.mrb[0].mxu0 %v2143
      %v2264 = vpop.f32.mrb[0].mxu0
      %v2265 = vadd.f32 0.0, %v2264
      %v2266 = vpop.f32.mrb[0].mxu0
      %v2267 = vpop.f32.mrb[0].mxu0
      %v2268 = vadd.f32 0.0, %v2267
      %v2269 = vpop.f32.mrb[0].mxu0
      %2270 = vmatprep.mubr.bf16.mxu0 0
      %2271 = vmatmul.mubr.bf16.gmra.mrb[0].mxu0 %v2146
      %v2272 = vpop.f32.mrb[0].mxu0
      %v2273 = vadd.f32 0.0, %v2272
      %v2274 = vpop.f32.mrb[0].mxu0
      %v2275 = vpop.f32.mrb[0].mxu0
      %v2276 = vadd.f32 0.0, %v2275
      %v2277 = vpop.f32.mrb[0].mxu0
      %2278 = vmatprep.mubr.bf16.mxu0 0
      %2279 = vmatmul.mubr.bf16.gmra.mrb[0].mxu0 %v2149
      %v2280 = vpop.f32.mrb[0].mxu0
      %v2281 = vadd.f32 0.0, %v2280
      %v2282 = vpop.f32.mrb[0].mxu0
      %v2283 = vpop.f32.mrb[0].mxu0
      %v2284 = vadd.f32 0.0, %v2283
      %v2285 = vpop.f32.mrb[0].mxu0
      %2286 = vmatprep.mubr.bf16.mxu0 0
      %2287 = vmatmul.mubr.bf16.gmra.mrb[0].mxu0 %v2152
      %v2288 = vpop.f32.mrb[0].mxu0
      %v2289 = vadd.f32 0.0, %v2288
      %v2290 = vpop.f32.mrb[0].mxu0
      %v2291 = vpop.f32.mrb[0].mxu0
      %v2292 = vadd.f32 0.0, %v2291
      %v2293 = vpop.f32.mrb[0].mxu0
      %2294 = vmatprep.mubr.bf16.mxu0 0
      %2295 = vmatmul.mubr.bf16.gmra.mrb[0].mxu0 %v2155
      %v2296 = vpop.f32.mrb[0].mxu0
      %v2297 = vadd.f32 0.0, %v2296
      %v2298 = vpop.f32.mrb[0].mxu0
      %v2299 = vpop.f32.mrb[0].mxu0
      %v2300 = vadd.f32 0.0, %v2299
      %v2301 = vpop.f32.mrb[0].mxu0
      %2302 = vmatprep.mubr.bf16.mxu0 0
      %2303 = vmatmul.mubr.bf16.gmra.mrb[0].mxu0 %v2158
      %v2304 = vpop.f32.mrb[0].mxu0
      %v2305 = vadd.f32 0.0, %v2304
      %v2306 = vpop.f32.mrb[0].mxu0
      %v2307 = vpop.f32.mrb[0].mxu0
      %v2308 = vadd.f32 0.0, %v2307
      %v2309 = vpop.f32.mrb[0].mxu0
      %2310 = vmatprep.mubr.bf16.mxu0 0
      %2311 = vmatmul.mubr.bf16.gmra.mrb[0].mxu0 %v2161
      %v2312 = vpop.f32.mrb[0].mxu0
      %v2313 = vadd.f32 0.0, %v2312
      %v2314 = vpop.f32.mrb[0].mxu0
      %v2315 = vpop.f32.mrb[0].mxu0
      %v2316 = vadd.f32 0.0, %v2315
      %v2317 = vpop.f32.mrb[0].mxu0
      %2318 = vmatprep.mubr.bf16.mxu0 0
      %2319 = vmatmul.mubr.bf16.gmra.mrb[0].mxu0 %v2164
      %v2320 = vpop.f32.mrb[0].mxu0
      %v2321 = vadd.f32 0.0, %v2320
      %v2322 = vpop.f32.mrb[0].mxu0
      %v2323 = vpop.f32.mrb[0].mxu0
      %v2324 = vadd.f32 0.0, %v2323
      %v2325 = vpop.f32.mrb[0].mxu0
      %2326 = vmatprep.mubr.bf16.mxu0 0
      %2327 = vmatmul.mubr.bf16.gmra.mrb[0].mxu0 %v2167
      %v2328 = vpop.f32.mrb[0].mxu0
      %v2329 = vadd.f32 0.0, %v2328
      %v2330 = vpop.f32.mrb[0].mxu0
      %v2331 = vpop.f32.mrb[0].mxu0
      %v2332 = vadd.f32 0.0, %v2331
      %v2333 = vpop.f32.mrb[0].mxu0
      %2334 = vmatprep.mubr.bf16.mxu0 0
      %2335 = vmatmul.mubr.bf16.gmra.mrb[0].mxu0 %v2170
      %v2336 = vpop.f32.mrb[0].mxu0
      %v2337 = vadd.f32 0.0, %v2336
      %v2338 = vpop.f32.mrb[0].mxu0
      %v2339 = vpop.f32.mrb[0].mxu0
      %v2340 = vadd.f32 0.0, %v2339
      %v2341 = vpop.f32.mrb[0].mxu0
      %2342 = vmatprep.mubr.bf16.mxu0 0
      %2343 = vmatmul.mubr.bf16.gmra.mrb[0].mxu0 %v2173
      %v2344 = vpop.f32.mrb[0].mxu0
      %v2345 = vadd.f32 0.0, %v2344
      %v2346 = vpop.f32.mrb[0].mxu0
      %v2347 = vpop.f32.mrb[0].mxu0
      %v2348 = vadd.f32 0.0, %v2347
      %v2349 = vpop.f32.mrb[0].mxu0
      %2350 = vmatprep.mubr.bf16.mxu0 0
      %2351 = vmatmul.mubr.bf16.gmra.mrb[0].mxu0 %v2176
      %v2352 = vpop.f32.mrb[0].mxu0
      %v2353 = vadd.f32 0.0, %v2352
      %v2354 = vpop.f32.mrb[0].mxu0
      %v2355 = vpop.f32.mrb[0].mxu0
      %v2356 = vadd.f32 0.0, %v2355
      %v2357 = vpop.f32.mrb[0].mxu0
      %2358 = vdwg.mxu0
      %v2359 = vadd.f32 %v2087, %v2217
      %v2360 = vadd.f32 %v2088, %v2220
      %v2361 = vadd.f32 %v2089, %v2225
      %v2362 = vadd.f32 %v2090, %v2228
      %v2363 = vadd.f32 %v2091, %v2233
      %v2364 = vadd.f32 %v2092, %v2236
      %v2365 = vadd.f32 %v2093, %v2241
      %v2366 = vadd.f32 %v2094, %v2244
      %v2367 = vadd.f32 %v2095, %v2249
      %v2368 = vadd.f32 %v2096, %v2252
      %v2369 = vadd.f32 %v2097, %v2257
      %v2370 = vadd.f32 %v2098, %v2260
      %v2371 = vadd.f32 %v2099, %v2265
      %v2372 = vadd.f32 %v2100, %v2268
      %v2373 = vadd.f32 %v2101, %v2273
      %v2374 = vadd.f32 %v2102, %v2276
      %v2375 = vadd.f32 %v2103, %v2281
      %v2376 = vadd.f32 %v2104, %v2284
      %v2377 = vadd.f32 %v2105, %v2289
      %v2378 = vadd.f32 %v2106, %v2292
      %v2379 = vadd.f32 %v2107, %v2297
      %v2380 = vadd.f32 %v2108, %v2300
      %v2381 = vadd.f32 %v2109, %v2305
      %v2382 = vadd.f32 %v2110, %v2308
      %v2383 = vadd.f32 %v2111, %v2313
      %v2384 = vadd.f32 %v2112, %v2316
      %v2385 = vadd.f32 %v2113, %v2321
      %v2386 = vadd.f32 %v2114, %v2324
      %v2387 = vadd.f32 %v2115, %v2329
      %v2388 = vadd.f32 %v2116, %v2332
      %v2389 = vadd.f32 %v2117, %v2337
      %v2390 = vadd.f32 %v2118, %v2340
      %v2391 = vadd.f32 %v2119, %v2345
      %v2392 = vadd.f32 %v2120, %v2348
      %v2393 = vadd.f32 %v2121, %v2353
      %v2394 = vadd.f32 %v2122, %v2356
      %2395 = vst.msk [vmem:[#allocation2] sm:$0xff] %vm2050, %v2359
      %2396 = vst.msk [vmem:[#allocation2 + $0x8] sm:$0xff] %vm2050, %v2360
      %2397 = vst.msk [vmem:[#allocation2 + $0x10] sm:$0xff] %vm2050, %v2361
      %2398 = vst.msk [vmem:[#allocation2 + $0x18] sm:$0xff] %vm2050, %v2362
      %2399 = vst.msk [vmem:[#allocation2 + $0x20] sm:$0xff] %vm2050, %v2363
      %2400 = vst.msk [vmem:[#allocation2 + $0x28] sm:$0xff] %vm2050, %v2364
      %2401 = vst.msk [vmem:[#allocation2 + $0x30] sm:$0xff] %vm2050, %v2365
      %2402 = vst.msk [vmem:[#allocation2 + $0x38] sm:$0xff] %vm2050, %v2366
      %2403 = vst.msk [vmem:[#allocation2 + $0x40] sm:$0xff] %vm2050, %v2367
      %2404 = vst.msk [vmem:[#allocation2 + $0x48] sm:$0xff] %vm2050, %v2368
      %2405 = vst.msk [vmem:[#allocation2 + $0x50] sm:$0xff] %vm2050, %v2369
      %2406 = vst.msk [vmem:[#allocation2 + $0x58] sm:$0xff] %vm2050, %v2370
      %2407 = vst.msk [vmem:[#allocation2 + $0x60] sm:$0xff] %vm2050, %v2371
      %2408 = vst.msk [vmem:[#allocation2 + $0x68] sm:$0xff] %vm2050, %v2372
      %2409 = vst.msk [vmem:[#allocation2 + $0x70] sm:$0xff] %vm2050, %v2373
      %2410 = vst.msk [vmem:[#allocation2 + $0x78] sm:$0xff] %vm2050, %v2374
      %2411 = vst.msk [vmem:[#allocation2 + $0x80] sm:$0xff] %vm2050, %v2375
      %2412 = vst.msk [vmem:[#allocation2 + $0x88] sm:$0xff] %vm2050, %v2376
      %2413 = vst.msk [vmem:[#allocation2 + $0x90] sm:$0xff] %vm2050, %v2377
      %2414 = vst.msk [vmem:[#allocation2 + $0x98] sm:$0xff] %vm2050, %v2378
      %2415 = vst.msk [vmem:[#allocation2 + $0xa0] sm:$0xff] %vm2050, %v2379
      %2416 = vst.msk [vmem:[#allocation2 + $0xa8] sm:$0xff] %vm2050, %v2380
      %2417 = vst.msk [vmem:[#allocation2 + $0xb0] sm:$0xff] %vm2050, %v2381
      %2418 = vst.msk [vmem:[#allocation2 + $0xb8] sm:$0xff] %vm2050, %v2382
      %2419 = vst.msk [vmem:[#allocation2 + $0xc0] sm:$0xff] %vm2050, %v2383
      %2420 = vst.msk [vmem:[#allocation2 + $0xc8] sm:$0xff] %vm2050, %v2384
      %2421 = vst.msk [vmem:[#allocation2 + $0xd0] sm:$0xff] %vm2050, %v2385
      %2422 = vst.msk [vmem:[#allocation2 + $0xd8] sm:$0xff] %vm2050, %v2386
      %2423 = vst.msk [vmem:[#allocation2 + $0xe0] sm:$0xff] %vm2050, %v2387
      %2424 = vst.msk [vmem:[#allocation2 + $0xe8] sm:$0xff] %vm2050, %v2388
      %2425 = vst.msk [vmem:[#allocation2 + $0xf0] sm:$0xff] %vm2050, %v2389
      %2426 = vst.msk [vmem:[#allocation2 + $0xf8] sm:$0xff] %vm2050, %v2390
      %2427 = vst.msk [vmem:[#allocation2 + $0x100] sm:$0xff] %vm2050, %v2391
      %2428 = vst.msk [vmem:[#allocation2 + $0x108] sm:$0xff] %vm2050, %v2392
      %2429 = vst.msk [vmem:[#allocation2 + $0x110] sm:$0xff] %vm2050, %v2393
      %2430 = vst.msk [vmem:[#allocation2 + $0x118] sm:$0xff] %vm2050, %v2394
      %v2431 = vld [vmem:[#allocation2] sm:$0xff]
      %v2432 = vld [vmem:[#allocation2 + $0x8] sm:$0xff]
      %v2433 = vld [vmem:[#allocation2 + $0x10] sm:$0xff]
      %v2434 = vld [vmem:[#allocation2 + $0x18] sm:$0xff]
      %v2435 = vld [vmem:[#allocation2 + $0x20] sm:$0xff]
      %v2436 = vld [vmem:[#allocation2 + $0x28] sm:$0xff]
      %v2437 = vld [vmem:[#allocation2 + $0x30] sm:$0xff]
      %v2438 = vld [vmem:[#allocation2 + $0x38] sm:$0xff]
      %v2439 = vld [vmem:[#allocation2 + $0x40] sm:$0xff]
      %v2440 = vld [vmem:[#allocation2 + $0x48] sm:$0xff]
      %v2441 = vld [vmem:[#allocation2 + $0x50] sm:$0xff]
      %v2442 = vld [vmem:[#allocation2 + $0x58] sm:$0xff]
      %v2443 = vld [vmem:[#allocation2 + $0x60] sm:$0xff]
      %v2444 = vld [vmem:[#allocation2 + $0x68] sm:$0xff]
      %v2445 = vld [vmem:[#allocation2 + $0x70] sm:$0xff]
      %v2446 = vld [vmem:[#allocation2 + $0x78] sm:$0xff]
      %v2447 = vld [vmem:[#allocation2 + $0x80] sm:$0xff]
      %v2448 = vld [vmem:[#allocation2 + $0x88] sm:$0xff]
      %v2449 = vld [vmem:[#allocation2 + $0x90] sm:$0xff]
      %v2450 = vld [vmem:[#allocation2 + $0x98] sm:$0xff]
      %v2451 = vld [vmem:[#allocation2 + $0xa0] sm:$0xff]
      %v2452 = vld [vmem:[#allocation2 + $0xa8] sm:$0xff]
      %v2453 = vld [vmem:[#allocation2 + $0xb0] sm:$0xff]
      %v2454 = vld [vmem:[#allocation2 + $0xb8] sm:$0xff]
      %v2455 = vld [vmem:[#allocation2 + $0xc0] sm:$0xff]
      %v2456 = vld [vmem:[#allocation2 + $0xc8] sm:$0xff]
      %v2457 = vld [vmem:[#allocation2 + $0xd0] sm:$0xff]
      %v2458 = vld [vmem:[#allocation2 + $0xd8] sm:$0xff]
      %v2459 = vld [vmem:[#allocation2 + $0xe0] sm:$0xff]
      %v2460 = vld [vmem:[#allocation2 + $0xe8] sm:$0xff]
      %v2461 = vld [vmem:[#allocation2 + $0xf0] sm:$0xff]
      %v2462 = vld [vmem:[#allocation2 + $0xf8] sm:$0xff]
      %v2463 = vld [vmem:[#allocation2 + $0x100] sm:$0xff]
      %v2464 = vld [vmem:[#allocation2 + $0x108] sm:$0xff]
      %v2465 = vld [vmem:[#allocation2 + $0x110] sm:$0xff]
      %v2466 = vld [vmem:[#allocation2 + $0x118] sm:$0xff]
      %s2467 = scalar_lea.vmem %s3, 2
      %v2468 = vld [vmem:[%s2467] sm:$0x3]
      %vm2469 = vsmask.f32 7424
      %v2470 = vshrl.u32 %v2029, 16
      %v2472 = vshll.u32 %v2029, 16
      %v2474 = vrot.slane %v2472, 1
      %v2475 = vor.u32 %v2470, %v2474
      %v2476 = vshll.u32 %v2030, 16
      %v2478 = vrot.slane %v2476, 1
      %v2479 = vsel %vm2469, %v2475, %v2478
      %v2480 = vshrl.u32 %v2030, 16
      %v2482 = vor.u32 %v2480, %v2478
      %v2483 = vshll.u32 %v2031, 16
      %v2485 = vrot.slane %v2483, 1
      %v2486 = vsel %vm2469, %v2482, %v2485
      %v2487 = vshrl.u32 %v2031, 16
      %v2489 = vor.u32 %v2487, %v2485
      %v2490 = vshll.u32 %v2032, 16
      %v2492 = vrot.slane %v2490, 1
      %v2493 = vsel %vm2469, %v2489, %v2492
      %v2494 = vshrl.u32 %v2032, 16
      %v2496 = vor.u32 %v2494, %v2492
      %v2497 = vshll.u32 %v2033, 16
      %v2499 = vrot.slane %v2497, 1
      %v2500 = vsel %vm2469, %v2496, %v2499
      %v2501 = vshrl.u32 %v2033, 16
      %v2503 = vor.u32 %v2501, %v2499
      %v2504 = vshll.u32 %v2034, 16
      %v2506 = vrot.slane %v2504, 1
      %v2507 = vsel %vm2469, %v2503, %v2506
      %v2508 = vshrl.u32 %v2034, 16
      %v2510 = vor.u32 %v2508, %v2506
      %v2511 = vshll.u32 %v2035, 16
      %v2513 = vrot.slane %v2511, 1
      %v2514 = vsel %vm2469, %v2510, %v2513
      %v2515 = vshrl.u32 %v2035, 16
      %v2517 = vor.u32 %v2515, %v2513
      %v2518 = vshll.u32 %v2036, 16
      %v2520 = vrot.slane %v2518, 1
      %v2521 = vsel %vm2469, %v2517, %v2520
      %v2522 = vshrl.u32 %v2036, 16
      %v2524 = vor.u32 %v2522, %v2520
      %v2525 = vshll.u32 %v2037, 16
      %v2527 = vrot.slane %v2525, 1
      %v2528 = vsel %vm2469, %v2524, %v2527
      %v2529 = vshrl.u32 %v2037, 16
      %v2531 = vor.u32 %v2529, %v2527
      %v2532 = vshll.u32 %v2038, 16
      %v2534 = vrot.slane %v2532, 1
      %v2535 = vsel %vm2469, %v2531, %v2534
      %v2536 = vshrl.u32 %v2038, 16
      %v2538 = vor.u32 %v2536, %v2534
      %v2539 = vshll.u32 %v2039, 16
      %v2541 = vrot.slane %v2539, 1
      %v2542 = vsel %vm2469, %v2538, %v2541
      %v2543 = vshrl.u32 %v2039, 16
      %v2545 = vor.u32 %v2543, %v2541
      %v2546 = vshll.u32 %v2040, 16
      %v2548 = vrot.slane %v2546, 1
      %v2549 = vsel %vm2469, %v2545, %v2548
      %v2550 = vshrl.u32 %v2040, 16
      %v2552 = vor.u32 %v2550, %v2548
      %v2553 = vshll.u32 %v2041, 16
      %v2555 = vrot.slane %v2553, 1
      %v2556 = vsel %vm2469, %v2552, %v2555
      %v2557 = vshrl.u32 %v2041, 16
      %v2559 = vor.u32 %v2557, %v2555
      %v2560 = vshll.u32 %v2042, 16
      %v2562 = vrot.slane %v2560, 1
      %v2563 = vsel %vm2469, %v2559, %v2562
      %v2564 = vshrl.u32 %v2042, 16
      %v2566 = vor.u32 %v2564, %v2562
      %v2567 = vshll.u32 %v2043, 16
      %v2569 = vrot.slane %v2567, 1
      %v2570 = vsel %vm2469, %v2566, %v2569
      %v2571 = vshrl.u32 %v2043, 16
      %v2573 = vor.u32 %v2571, %v2569
      %v2574 = vshll.u32 %v2044, 16
      %v2576 = vrot.slane %v2574, 1
      %v2577 = vsel %vm2469, %v2573, %v2576
      %v2578 = vshrl.u32 %v2044, 16
      %v2580 = vor.u32 %v2578, %v2576
      %v2581 = vshll.u32 %v2045, 16
      %v2583 = vrot.slane %v2581, 1
      %v2584 = vsel %vm2469, %v2580, %v2583
      %v2585 = vshrl.u32 %v2045, 16
      %v2587 = vor.u32 %v2585, %v2583
      %v2588 = vshll.u32 %v2046, 16
      %v2590 = vrot.slane %v2588, 1
      %v2591 = vsel %vm2469, %v2587, %v2590
      %v2592 = vshrl.u32 %v2046, 16
      %v2594 = vor.u32 %v2592, %v2590
      %v2596 = vshll.u32 %v2047, 16
      %v2598 = vrot.slane %v2596, 1
      %v2599 = vsel %vm2469, %v2594, %v2598
      %v2601 = vsel %vm2050, %v2479, 0
      %v2604 = vsel %vm2050, %v2486, 0
      %v2607 = vsel %vm2050, %v2493, 0
      %v2610 = vsel %vm2050, %v2500, 0
      %v2613 = vsel %vm2050, %v2507, 0
      %v2616 = vsel %vm2050, %v2514, 0
      %v2619 = vsel %vm2050, %v2521, 0
      %v2622 = vsel %vm2050, %v2528, 0
      %v2625 = vsel %vm2050, %v2535, 0
      %v2628 = vsel %vm2050, %v2542, 0
      %v2631 = vsel %vm2050, %v2549, 0
      %v2634 = vsel %vm2050, %v2556, 0
      %v2637 = vsel %vm2050, %v2563, 0
      %v2640 = vsel %vm2050, %v2570, 0
      %v2643 = vsel %vm2050, %v2577, 0
      %v2646 = vsel %vm2050, %v2584, 0
      %v2649 = vsel %vm2050, %v2591, 0
      %v2652 = vsel %vm2050, %v2599, 0
      %v2655 = vsel %vm2178, %v2468, 0
      %2657 = vmatprep.subr.bf16.mxu0 0
      %2658 = vmatpush1.bf16.msra.mxu0 %v2655
      %2659 = vmatprep.subr.bf16.mxu0 0
      %2660 = vmatpush1.bf16.msra.mxu0 0
      %2661 = vmatprep.subr.bf16.mxu0 0
      %2662 = vmatpush1.bf16.msra.mxu0 0
      %2663 = vmatprep.subr.bf16.mxu0 0
      %2664 = vmatpush1.bf16.msra.mxu0 0
      %2665 = vmatprep.subr.bf16.mxu0 0
      %2666 = vmatpush1.bf16.msra.mxu0 0
      %2667 = vmatprep.subr.bf16.mxu0 0
      %2668 = vmatpush1.bf16.msra.mxu0 0
      %2669 = vmatprep.subr.bf16.mxu0 0
      %2670 = vmatpush1.bf16.msra.mxu0 0
      %2671 = vmatprep.subr.bf16.mxu0 0
      %2672 = vmatpush1.bf16.msra.mxu0 0
      %2673 = vmatprep.subr.bf16.mxu0 0
      %2674 = vmatpush1.bf16.msra.mxu0 0
      %2675 = vmatprep.subr.bf16.mxu0 0
      %2676 = vmatpush1.bf16.msra.mxu0 0
      %2677 = vmatprep.subr.bf16.mxu0 0
      %2678 = vmatpush1.bf16.msra.mxu0 0
      %2679 = vmatprep.subr.bf16.mxu0 0
      %2680 = vmatpush1.bf16.msra.mxu0 0
      %2681 = vmatprep.subr.bf16.mxu0 0
      %2682 = vmatpush1.bf16.msra.mxu0 0
      %2683 = vmatprep.subr.bf16.mxu0 0
      %2684 = vmatpush1.bf16.msra.mxu0 0
      %2685 = vmatprep.subr.bf16.mxu0 0
      %2686 = vmatpush1.bf16.msra.mxu0 0
      %2687 = vmatprep.subr.bf16.mxu0 0
      %2688 = vmatpush1.bf16.msra.mxu0 0
      %2689 = vmatprep.mubr.bf16.mxu0 0
      %2690 = vmatmul.mubr.bf16.gmra.mrb[0].mxu0 %v2601
      %v2691 = vpop.f32.mrb[0].mxu0
      %v2692 = vadd.f32 0.0, %v2691
      %v2693 = vpop.f32.mrb[0].mxu0
      %v2694 = vpop.f32.mrb[0].mxu0
      %v2695 = vadd.f32 0.0, %v2694
      %v2696 = vpop.f32.mrb[0].mxu0
      %2697 = vmatprep.mubr.bf16.mxu0 0
      %2698 = vmatmul.mubr.bf16.gmra.mrb[0].mxu0 %v2604
      %v2699 = vpop.f32.mrb[0].mxu0
      %v2700 = vadd.f32 0.0, %v2699
      %v2701 = vpop.f32.mrb[0].mxu0
      %v2702 = vpop.f32.mrb[0].mxu0
      %v2703 = vadd.f32 0.0, %v2702
      %v2704 = vpop.f32.mrb[0].mxu0
      %2705 = vmatprep.mubr.bf16.mxu0 0
      %2706 = vmatmul.mubr.bf16.gmra.mrb[0].mxu0 %v2607
      %v2707 = vpop.f32.mrb[0].mxu0
      %v2708 = vadd.f32 0.0, %v2707
      %v2709 = vpop.f32.mrb[0].mxu0
      %v2710 = vpop.f32.mrb[0].mxu0
      %v2711 = vadd.f32 0.0, %v2710
      %v2712 = vpop.f32.mrb[0].mxu0
      %2713 = vmatprep.mubr.bf16.mxu0 0
      %2714 = vmatmul.mubr.bf16.gmra.mrb[0].mxu0 %v2610
      %v2715 = vpop.f32.mrb[0].mxu0
      %v2716 = vadd.f32 0.0, %v2715
      %v2717 = vpop.f32.mrb[0].mxu0
      %v2718 = vpop.f32.mrb[0].mxu0
      %v2719 = vadd.f32 0.0, %v2718
      %v2720 = vpop.f32.mrb[0].mxu0
      %2721 = vmatprep.mubr.bf16.mxu0 0
      %2722 = vmatmul.mubr.bf16.gmra.mrb[0].mxu0 %v2613
      %v2723 = vpop.f32.mrb[0].mxu0
      %v2724 = vadd.f32 0.0, %v2723
      %v2725 = vpop.f32.mrb[0].mxu0
      %v2726 = vpop.f32.mrb[0].mxu0
      %v2727 = vadd.f32 0.0, %v2726
      %v2728 = vpop.f32.mrb[0].mxu0
      %2729 = vmatprep.mubr.bf16.mxu0 0
      %2730 = vmatmul.mubr.bf16.gmra.mrb[0].mxu0 %v2616
      %v2731 = vpop.f32.mrb[0].mxu0
      %v2732 = vadd.f32 0.0, %v2731
      %v2733 = vpop.f32.mrb[0].mxu0
      %v2734 = vpop.f32.mrb[0].mxu0
      %v2735 = vadd.f32 0.0, %v2734
      %v2736 = vpop.f32.mrb[0].mxu0
      %2737 = vmatprep.mubr.bf16.mxu0 0
      %2738 = vmatmul.mubr.bf16.gmra.mrb[0].mxu0 %v2619
      %v2739 = vpop.f32.mrb[0].mxu0
      %v2740 = vadd.f32 0.0, %v2739
      %v2741 = vpop.f32.mrb[0].mxu0
      %v2742 = vpop.f32.mrb[0].mxu0
      %v2743 = vadd.f32 0.0, %v2742
      %v2744 = vpop.f32.mrb[0].mxu0
      %2745 = vmatprep.mubr.bf16.mxu0 0
      %2746 = vmatmul.mubr.bf16.gmra.mrb[0].mxu0 %v2622
      %v2747 = vpop.f32.mrb[0].mxu0
      %v2748 = vadd.f32 0.0, %v2747
      %v2749 = vpop.f32.mrb[0].mxu0
      %v2750 = vpop.f32.mrb[0].mxu0
      %v2751 = vadd.f32 0.0, %v2750
      %v2752 = vpop.f32.mrb[0].mxu0
      %2753 = vmatprep.mubr.bf16.mxu0 0
      %2754 = vmatmul.mubr.bf16.gmra.mrb[0].mxu0 %v2625
      %v2755 = vpop.f32.mrb[0].mxu0
      %v2756 = vadd.f32 0.0, %v2755
      %v2757 = vpop.f32.mrb[0].mxu0
      %v2758 = vpop.f32.mrb[0].mxu0
      %v2759 = vadd.f32 0.0, %v2758
      %v2760 = vpop.f32.mrb[0].mxu0
      %2761 = vmatprep.mubr.bf16.mxu0 0
      %2762 = vmatmul.mubr.bf16.gmra.mrb[0].mxu0 %v2628
      %v2763 = vpop.f32.mrb[0].mxu0
      %v2764 = vadd.f32 0.0, %v2763
      %v2765 = vpop.f32.mrb[0].mxu0
      %v2766 = vpop.f32.mrb[0].mxu0
      %v2767 = vadd.f32 0.0, %v2766
      %v2768 = vpop.f32.mrb[0].mxu0
      %2769 = vmatprep.mubr.bf16.mxu0 0
      %2770 = vmatmul.mubr.bf16.gmra.mrb[0].mxu0 %v2631
      %v2771 = vpop.f32.mrb[0].mxu0
      %v2772 = vadd.f32 0.0, %v2771
      %v2773 = vpop.f32.mrb[0].mxu0
      %v2774 = vpop.f32.mrb[0].mxu0
      %v2775 = vadd.f32 0.0, %v2774
      %v2776 = vpop.f32.mrb[0].mxu0
      %2777 = vmatprep.mubr.bf16.mxu0 0
      %2778 = vmatmul.mubr.bf16.gmra.mrb[0].mxu0 %v2634
      %v2779 = vpop.f32.mrb[0].mxu0
      %v2780 = vadd.f32 0.0, %v2779
      %v2781 = vpop.f32.mrb[0].mxu0
      %v2782 = vpop.f32.mrb[0].mxu0
      %v2783 = vadd.f32 0.0, %v2782
      %v2784 = vpop.f32.mrb[0].mxu0
      %2785 = vmatprep.mubr.bf16.mxu0 0
      %2786 = vmatmul.mubr.bf16.gmra.mrb[0].mxu0 %v2637
      %v2787 = vpop.f32.mrb[0].mxu0
      %v2788 = vadd.f32 0.0, %v2787
      %v2789 = vpop.f32.mrb[0].mxu0
      %v2790 = vpop.f32.mrb[0].mxu0
      %v2791 = vadd.f32 0.0, %v2790
      %v2792 = vpop.f32.mrb[0].mxu0
      %2793 = vmatprep.mubr.bf16.mxu0 0
      %2794 = vmatmul.mubr.bf16.gmra.mrb[0].mxu0 %v2640
      %v2795 = vpop.f32.mrb[0].mxu0
      %v2796 = vadd.f32 0.0, %v2795
      %v2797 = vpop.f32.mrb[0].mxu0
      %v2798 = vpop.f32.mrb[0].mxu0
      %v2799 = vadd.f32 0.0, %v2798
      %v2800 = vpop.f32.mrb[0].mxu0
      %2801 = vmatprep.mubr.bf16.mxu0 0
      %2802 = vmatmul.mubr.bf16.gmra.mrb[0].mxu0 %v2643
      %v2803 = vpop.f32.mrb[0].mxu0
      %v2804 = vadd.f32 0.0, %v2803
      %v2805 = vpop.f32.mrb[0].mxu0
      %v2806 = vpop.f32.mrb[0].mxu0
      %v2807 = vadd.f32 0.0, %v2806
      %v2808 = vpop.f32.mrb[0].mxu0
      %2809 = vmatprep.mubr.bf16.mxu0 0
      %2810 = vmatmul.mubr.bf16.gmra.mrb[0].mxu0 %v2646
      %v2811 = vpop.f32.mrb[0].mxu0
      %v2812 = vadd.f32 0.0, %v2811
      %v2813 = vpop.f32.mrb[0].mxu0
      %v2814 = vpop.f32.mrb[0].mxu0
      %v2815 = vadd.f32 0.0, %v2814
      %v2816 = vpop.f32.mrb[0].mxu0
      %2817 = vmatprep.mubr.bf16.mxu0 0
      %2818 = vmatmul.mubr.bf16.gmra.mrb[0].mxu0 %v2649
      %v2819 = vpop.f32.mrb[0].mxu0
      %v2820 = vadd.f32 0.0, %v2819
      %v2821 = vpop.f32.mrb[0].mxu0
      %v2822 = vpop.f32.mrb[0].mxu0
      %v2823 = vadd.f32 0.0, %v2822
      %v2824 = vpop.f32.mrb[0].mxu0
      %2825 = vmatprep.mubr.bf16.mxu0 0
      %2826 = vmatmul.mubr.bf16.gmra.mrb[0].mxu0 %v2652
      %v2827 = vpop.f32.mrb[0].mxu0
      %v2828 = vadd.f32 0.0, %v2827
      %v2829 = vpop.f32.mrb[0].mxu0
      %v2830 = vpop.f32.mrb[0].mxu0
      %v2831 = vadd.f32 0.0, %v2830
      %v2832 = vpop.f32.mrb[0].mxu0
      %2833 = vdwg.mxu0
      %v2834 = vadd.f32 %v2431, %v2692
      %v2835 = vadd.f32 %v2432, %v2695
      %v2836 = vadd.f32 %v2433, %v2700
      %v2837 = vadd.f32 %v2434, %v2703
      %v2838 = vadd.f32 %v2435, %v2708
      %v2839 = vadd.f32 %v2436, %v2711
      %v2840 = vadd.f32 %v2437, %v2716
      %v2841 = vadd.f32 %v2438, %v2719
      %v2842 = vadd.f32 %v2439, %v2724
      %v2843 = vadd.f32 %v2440, %v2727
      %v2844 = vadd.f32 %v2441, %v2732
      %v2845 = vadd.f32 %v2442, %v2735
      %v2846 = vadd.f32 %v2443, %v2740
      %v2847 = vadd.f32 %v2444, %v2743
      %v2848 = vadd.f32 %v2445, %v2748
      %v2849 = vadd.f32 %v2446, %v2751
      %v2850 = vadd.f32 %v2447, %v2756
      %v2851 = vadd.f32 %v2448, %v2759
      %v2852 = vadd.f32 %v2449, %v2764
      %v2853 = vadd.f32 %v2450, %v2767
      %v2854 = vadd.f32 %v2451, %v2772
      %v2855 = vadd.f32 %v2452, %v2775
      %v2856 = vadd.f32 %v2453, %v2780
      %v2857 = vadd.f32 %v2454, %v2783
      %v2858 = vadd.f32 %v2455, %v2788
      %v2859 = vadd.f32 %v2456, %v2791
      %v2860 = vadd.f32 %v2457, %v2796
      %v2861 = vadd.f32 %v2458, %v2799
      %v2862 = vadd.f32 %v2459, %v2804
      %v2863 = vadd.f32 %v2460, %v2807
      %v2864 = vadd.f32 %v2461, %v2812
      %v2865 = vadd.f32 %v2462, %v2815
      %v2866 = vadd.f32 %v2463, %v2820
      %v2867 = vadd.f32 %v2464, %v2823
      %v2868 = vadd.f32 %v2465, %v2828
      %v2869 = vadd.f32 %v2466, %v2831
      %2870 = vst.msk [vmem:[#allocation2] sm:$0xff] %vm2050, %v2834
      %2871 = vst.msk [vmem:[#allocation2 + $0x8] sm:$0xff] %vm2050, %v2835
      %2872 = vst.msk [vmem:[#allocation2 + $0x10] sm:$0xff] %vm2050, %v2836
      %2873 = vst.msk [vmem:[#allocation2 + $0x18] sm:$0xff] %vm2050, %v2837
      %2874 = vst.msk [vmem:[#allocation2 + $0x20] sm:$0xff] %vm2050, %v2838
      %2875 = vst.msk [vmem:[#allocation2 + $0x28] sm:$0xff] %vm2050, %v2839
      %2876 = vst.msk [vmem:[#allocation2 + $0x30] sm:$0xff] %vm2050, %v2840
      %2877 = vst.msk [vmem:[#allocation2 + $0x38] sm:$0xff] %vm2050, %v2841
      %2878 = vst.msk [vmem:[#allocation2 + $0x40] sm:$0xff] %vm2050, %v2842
      %2879 = vst.msk [vmem:[#allocation2 + $0x48] sm:$0xff] %vm2050, %v2843
      %2880 = vst.msk [vmem:[#allocation2 + $0x50] sm:$0xff] %vm2050, %v2844
      %2881 = vst.msk [vmem:[#allocation2 + $0x58] sm:$0xff] %vm2050, %v2845
      %2882 = vst.msk [vmem:[#allocation2 + $0x60] sm:$0xff] %vm2050, %v2846
      %2883 = vst.msk [vmem:[#allocation2 + $0x68] sm:$0xff] %vm2050, %v2847
      %2884 = vst.msk [vmem:[#allocation2 + $0x70] sm:$0xff] %vm2050, %v2848
      %2885 = vst.msk [vmem:[#allocation2 + $0x78] sm:$0xff] %vm2050, %v2849
      %2886 = vst.msk [vmem:[#allocation2 + $0x80] sm:$0xff] %vm2050, %v2850
      %2887 = vst.msk [vmem:[#allocation2 + $0x88] sm:$0xff] %vm2050, %v2851
      %2888 = vst.msk [vmem:[#allocation2 + $0x90] sm:$0xff] %vm2050, %v2852
      %2889 = vst.msk [vmem:[#allocation2 + $0x98] sm:$0xff] %vm2050, %v2853
      %2890 = vst.msk [vmem:[#allocation2 + $0xa0] sm:$0xff] %vm2050, %v2854
      %2891 = vst.msk [vmem:[#allocation2 + $0xa8] sm:$0xff] %vm2050, %v2855
      %2892 = vst.msk [vmem:[#allocation2 + $0xb0] sm:$0xff] %vm2050, %v2856
      %2893 = vst.msk [vmem:[#allocation2 + $0xb8] sm:$0xff] %vm2050, %v2857
      %2894 = vst.msk [vmem:[#allocation2 + $0xc0] sm:$0xff] %vm2050, %v2858
      %2895 = vst.msk [vmem:[#allocation2 + $0xc8] sm:$0xff] %vm2050, %v2859
      %2896 = vst.msk [vmem:[#allocation2 + $0xd0] sm:$0xff] %vm2050, %v2860
      %2897 = vst.msk [vmem:[#allocation2 + $0xd8] sm:$0xff] %vm2050, %v2861
      %2898 = vst.msk [vmem:[#allocation2 + $0xe0] sm:$0xff] %vm2050, %v2862
      %2899 = vst.msk [vmem:[#allocation2 + $0xe8] sm:$0xff] %vm2050, %v2863
      %2900 = vst.msk [vmem:[#allocation2 + $0xf0] sm:$0xff] %vm2050, %v2864
      %2901 = vst.msk [vmem:[#allocation2 + $0xf8] sm:$0xff] %vm2050, %v2865
      %2902 = vst.msk [vmem:[#allocation2 + $0x100] sm:$0xff] %vm2050, %v2866
      %2903 = vst.msk [vmem:[#allocation2 + $0x108] sm:$0xff] %vm2050, %v2867
      %2904 = vst.msk [vmem:[#allocation2 + $0x110] sm:$0xff] %vm2050, %v2868
      %2905 = vst.msk [vmem:[#allocation2 + $0x118] sm:$0xff] %vm2050, %v2869
      %v2906 = vld [vmem:[#allocation2] sm:$0xff]
      %v2907 = vld [vmem:[#allocation2 + $0x8] sm:$0xff]
      %v2908 = vld [vmem:[#allocation2 + $0x10] sm:$0xff]
      %v2909 = vld [vmem:[#allocation2 + $0x18] sm:$0xff]
      %v2910 = vld [vmem:[#allocation2 + $0x20] sm:$0xff]
      %v2911 = vld [vmem:[#allocation2 + $0x28] sm:$0xff]
      %v2912 = vld [vmem:[#allocation2 + $0x30] sm:$0xff]
      %v2913 = vld [vmem:[#allocation2 + $0x38] sm:$0xff]
      %v2914 = vld [vmem:[#allocation2 + $0x40] sm:$0xff]
      %v2915 = vld [vmem:[#allocation2 + $0x48] sm:$0xff]
      %v2916 = vld [vmem:[#allocation2 + $0x50] sm:$0xff]
      %v2917 = vld [vmem:[#allocation2 + $0x58] sm:$0xff]
      %v2918 = vld [vmem:[#allocation2 + $0x60] sm:$0xff]
      %v2919 = vld [vmem:[#allocation2 + $0x68] sm:$0xff]
      %v2920 = vld [vmem:[#allocation2 + $0x70] sm:$0xff]
      %v2921 = vld [vmem:[#allocation2 + $0x78] sm:$0xff]
      %v2922 = vld [vmem:[#allocation2 + $0x80] sm:$0xff]
      %v2923 = vld [vmem:[#allocation2 + $0x88] sm:$0xff]
      %v2924 = vld [vmem:[#allocation2 + $0x90] sm:$0xff]
      %v2925 = vld [vmem:[#allocation2 + $0x98] sm:$0xff]
      %v2926 = vld [vmem:[#allocation2 + $0xa0] sm:$0xff]
      %v2927 = vld [vmem:[#allocation2 + $0xa8] sm:$0xff]
      %v2928 = vld [vmem:[#allocation2 + $0xb0] sm:$0xff]
      %v2929 = vld [vmem:[#allocation2 + $0xb8] sm:$0xff]
      %v2930 = vld [vmem:[#allocation2 + $0xc0] sm:$0xff]
      %v2931 = vld [vmem:[#allocation2 + $0xc8] sm:$0xff]
      %v2932 = vld [vmem:[#allocation2 + $0xd0] sm:$0xff]
      %v2933 = vld [vmem:[#allocation2 + $0xd8] sm:$0xff]
      %v2934 = vld [vmem:[#allocation2 + $0xe0] sm:$0xff]
      %v2935 = vld [vmem:[#allocation2 + $0xe8] sm:$0xff]
      %v2936 = vld [vmem:[#allocation2 + $0xf0] sm:$0xff]
      %v2937 = vld [vmem:[#allocation2 + $0xf8] sm:$0xff]
      %v2938 = vld [vmem:[#allocation2 + $0x100] sm:$0xff]
      %v2939 = vld [vmem:[#allocation2 + $0x108] sm:$0xff]
      %v2940 = vld [vmem:[#allocation2 + $0x110] sm:$0xff]
      %v2941 = vld [vmem:[#allocation2 + $0x118] sm:$0xff]
      %s2942 = scalar_lea.vmem %s3, 4
      %v2943 = vld [vmem:[%s2942] sm:$0x3]
      %vm2963 = vcmask 1046528
      %v2964 = vrot.slane %v2029, 1
      %v2965 = vrot.slane %v2030, 1
      %v2966 = vsel %vm2963, %v2964, %v2965
      %v2967 = vrot.slane %v2031, 1
      %v2968 = vsel %vm2963, %v2965, %v2967
      %v2969 = vrot.slane %v2032, 1
      %v2970 = vsel %vm2963, %v2967, %v2969
      %v2971 = vrot.slane %v2033, 1
      %v2972 = vsel %vm2963, %v2969, %v2971
      %v2973 = vrot.slane %v2034, 1
      %v2974 = vsel %vm2963, %v2971, %v2973
      %v2975 = vrot.slane %v2035, 1
      %v2976 = vsel %vm2963, %v2973, %v2975
      %v2977 = vrot.slane %v2036, 1
      %v2978 = vsel %vm2963, %v2975, %v2977
      %v2979 = vrot.slane %v2037, 1
      %v2980 = vsel %vm2963, %v2977, %v2979
      %v2981 = vrot.slane %v2038, 1
      %v2982 = vsel %vm2963, %v2979, %v2981
      %v2983 = vrot.slane %v2039, 1
      %v2984 = vsel %vm2963, %v2981, %v2983
      %v2985 = vrot.slane %v2040, 1
      %v2986 = vsel %vm2963, %v2983, %v2985
      %v2987 = vrot.slane %v2041, 1
      %v2988 = vsel %vm2963, %v2985, %v2987
      %v2989 = vrot.slane %v2042, 1
      %v2990 = vsel %vm2963, %v2987, %v2989
      %v2991 = vrot.slane %v2043, 1
      %v2992 = vsel %vm2963, %v2989, %v2991
      %v2993 = vrot.slane %v2044, 1
      %v2994 = vsel %vm2963, %v2991, %v2993
      %v2995 = vrot.slane %v2045, 1
      %v2996 = vsel %vm2963, %v2993, %v2995
      %v2997 = vrot.slane %v2046, 1
      %v2998 = vsel %vm2963, %v2995, %v2997
      %v2999 = vrot.slane %v2047, 1
      %v3000 = vsel %vm2963, %v2997, %v2999
      %v3002 = vsel %vm2050, %v2966, 0
      %v3005 = vsel %vm2050, %v2968, 0
      %v3008 = vsel %vm2050, %v2970, 0
      %v3011 = vsel %vm2050, %v2972, 0
      %v3014 = vsel %vm2050, %v2974, 0
      %v3017 = vsel %vm2050, %v2976, 0
      %v3020 = vsel %vm2050, %v2978, 0
      %v3023 = vsel %vm2050, %v2980, 0
      %v3026 = vsel %vm2050, %v2982, 0
      %v3029 = vsel %vm2050, %v2984, 0
      %v3032 = vsel %vm2050, %v2986, 0
      %v3035 = vsel %vm2050, %v2988, 0
      %v3038 = vsel %vm2050, %v2990, 0
      %v3041 = vsel %vm2050, %v2992, 0
      %v3044 = vsel %vm2050, %v2994, 0
      %v3047 = vsel %vm2050, %v2996, 0
      %v3050 = vsel %vm2050, %v2998, 0
      %v3053 = vsel %vm2050, %v3000, 0
      %v3056 = vsel %vm2178, %v2943, 0
      %3058 = vmatprep.subr.bf16.mxu0 0
      %3059 = vmatpush1.bf16.msra.mxu0 %v3056
      %3060 = vmatprep.subr.bf16.mxu0 0
      %3061 = vmatpush1.bf16.msra.mxu0 0
      %3062 = vmatprep.subr.bf16.mxu0 0
      %3063 = vmatpush1.bf16.msra.mxu0 0
      %3064 = vmatprep.subr.bf16.mxu0 0
      %3065 = vmatpush1.bf16.msra.mxu0 0
      %3066 = vmatprep.subr.bf16.mxu0 0
      %3067 = vmatpush1.bf16.msra.mxu0 0
      %3068 = vmatprep.subr.bf16.mxu0 0
      %3069 = vmatpush1.bf16.msra.mxu0 0
      %3070 = vmatprep.subr.bf16.mxu0 0
      %3071 = vmatpush1.bf16.msra.mxu0 0
      %3072 = vmatprep.subr.bf16.mxu0 0
      %3073 = vmatpush1.bf16.msra.mxu0 0
      %3074 = vmatprep.subr.bf16.mxu0 0
      %3075 = vmatpush1.bf16.msra.mxu0 0
      %3076 = vmatprep.subr.bf16.mxu0 0
      %3077 = vmatpush1.bf16.msra.mxu0 0
      %3078 = vmatprep.subr.bf16.mxu0 0
      %3079 = vmatpush1.bf16.msra.mxu0 0
      %3080 = vmatprep.subr.bf16.mxu0 0
      %3081 = vmatpush1.bf16.msra.mxu0 0
      %3082 = vmatprep.subr.bf16.mxu0 0
      %3083 = vmatpush1.bf16.msra.mxu0 0
      %3084 = vmatprep.subr.bf16.mxu0 0
      %3085 = vmatpush1.bf16.msra.mxu0 0
      %3086 = vmatprep.subr.bf16.mxu0 0
      %3087 = vmatpush1.bf16.msra.mxu0 0
      %3088 = vmatprep.subr.bf16.mxu0 0
      %3089 = vmatpush1.bf16.msra.mxu0 0
      %3090 = vmatprep.mubr.bf16.mxu0 0
      %3091 = vmatmul.mubr.bf16.gmra.mrb[0].mxu0 %v3002
      %v3092 = vpop.f32.mrb[0].mxu0
      %v3093 = vadd.f32 0.0, %v3092
      %v3094 = vpop.f32.mrb[0].mxu0
      %v3095 = vpop.f32.mrb[0].mxu0
      %v3096 = vadd.f32 0.0, %v3095
      %v3097 = vpop.f32.mrb[0].mxu0
      %3098 = vmatprep.mubr.bf16.mxu0 0
      %3099 = vmatmul.mubr.bf16.gmra.mrb[0].mxu0 %v3005
      %v3100 = vpop.f32.mrb[0].mxu0
      %v3101 = vadd.f32 0.0, %v3100
      %v3102 = vpop.f32.mrb[0].mxu0
      %v3103 = vpop.f32.mrb[0].mxu0
      %v3104 = vadd.f32 0.0, %v3103
      %v3105 = vpop.f32.mrb[0].mxu0
      %3106 = vmatprep.mubr.bf16.mxu0 0
      %3107 = vmatmul.mubr.bf16.gmra.mrb[0].mxu0 %v3008
      %v3108 = vpop.f32.mrb[0].mxu0
      %v3109 = vadd.f32 0.0, %v3108
      %v3110 = vpop.f32.mrb[0].mxu0
      %v3111 = vpop.f32.mrb[0].mxu0
      %v3112 = vadd.f32 0.0, %v3111
      %v3113 = vpop.f32.mrb[0].mxu0
      %3114 = vmatprep.mubr.bf16.mxu0 0
      %3115 = vmatmul.mubr.bf16.gmra.mrb[0].mxu0 %v3011
      %v3116 = vpop.f32.mrb[0].mxu0
      %v3117 = vadd.f32 0.0, %v3116
      %v3118 = vpop.f32.mrb[0].mxu0
      %v3119 = vpop.f32.mrb[0].mxu0
      %v3120 = vadd.f32 0.0, %v3119
      %v3121 = vpop.f32.mrb[0].mxu0
      %3122 = vmatprep.mubr.bf16.mxu0 0
      %3123 = vmatmul.mubr.bf16.gmra.mrb[0].mxu0 %v3014
      %v3124 = vpop.f32.mrb[0].mxu0
      %v3125 = vadd.f32 0.0, %v3124
      %v3126 = vpop.f32.mrb[0].mxu0
      %v3127 = vpop.f32.mrb[0].mxu0
      %v3128 = vadd.f32 0.0, %v3127
      %v3129 = vpop.f32.mrb[0].mxu0
      %3130 = vmatprep.mubr.bf16.mxu0 0
      %3131 = vmatmul.mubr.bf16.gmra.mrb[0].mxu0 %v3017
      %v3132 = vpop.f32.mrb[0].mxu0
      %v3133 = vadd.f32 0.0, %v3132
      %v3134 = vpop.f32.mrb[0].mxu0
      %v3135 = vpop.f32.mrb[0].mxu0
      %v3136 = vadd.f32 0.0, %v3135
      %v3137 = vpop.f32.mrb[0].mxu0
      %3138 = vmatprep.mubr.bf16.mxu0 0
      %3139 = vmatmul.mubr.bf16.gmra.mrb[0].mxu0 %v3020
      %v3140 = vpop.f32.mrb[0].mxu0
      %v3141 = vadd.f32 0.0, %v3140
      %v3142 = vpop.f32.mrb[0].mxu0
      %v3143 = vpop.f32.mrb[0].mxu0
      %v3144 = vadd.f32 0.0, %v3143
      %v3145 = vpop.f32.mrb[0].mxu0
      %3146 = vmatprep.mubr.bf16.mxu0 0
      %3147 = vmatmul.mubr.bf16.gmra.mrb[0].mxu0 %v3023
      %v3148 = vpop.f32.mrb[0].mxu0
      %v3149 = vadd.f32 0.0, %v3148
      %v3150 = vpop.f32.mrb[0].mxu0
      %v3151 = vpop.f32.mrb[0].mxu0
      %v3152 = vadd.f32 0.0, %v3151
      %v3153 = vpop.f32.mrb[0].mxu0
      %3154 = vmatprep.mubr.bf16.mxu0 0
      %3155 = vmatmul.mubr.bf16.gmra.mrb[0].mxu0 %v3026
      %v3156 = vpop.f32.mrb[0].mxu0
      %v3157 = vadd.f32 0.0, %v3156
      %v3158 = vpop.f32.mrb[0].mxu0
      %v3159 = vpop.f32.mrb[0].mxu0
      %v3160 = vadd.f32 0.0, %v3159
      %v3161 = vpop.f32.mrb[0].mxu0
      %3162 = vmatprep.mubr.bf16.mxu0 0
      %3163 = vmatmul.mubr.bf16.gmra.mrb[0].mxu0 %v3029
      %v3164 = vpop.f32.mrb[0].mxu0
      %v3165 = vadd.f32 0.0, %v3164
      %v3166 = vpop.f32.mrb[0].mxu0
      %v3167 = vpop.f32.mrb[0].mxu0
      %v3168 = vadd.f32 0.0, %v3167
      %v3169 = vpop.f32.mrb[0].mxu0
      %3170 = vmatprep.mubr.bf16.mxu0 0
      %3171 = vmatmul.mubr.bf16.gmra.mrb[0].mxu0 %v3032
      %v3172 = vpop.f32.mrb[0].mxu0
      %v3173 = vadd.f32 0.0, %v3172
      %v3174 = vpop.f32.mrb[0].mxu0
      %v3175 = vpop.f32.mrb[0].mxu0
      %v3176 = vadd.f32 0.0, %v3175
      %v3177 = vpop.f32.mrb[0].mxu0
      %3178 = vmatprep.mubr.bf16.mxu0 0
      %3179 = vmatmul.mubr.bf16.gmra.mrb[0].mxu0 %v3035
      %v3180 = vpop.f32.mrb[0].mxu0
      %v3181 = vadd.f32 0.0, %v3180
      %v3182 = vpop.f32.mrb[0].mxu0
      %v3183 = vpop.f32.mrb[0].mxu0
      %v3184 = vadd.f32 0.0, %v3183
      %v3185 = vpop.f32.mrb[0].mxu0
      %3186 = vmatprep.mubr.bf16.mxu0 0
      %3187 = vmatmul.mubr.bf16.gmra.mrb[0].mxu0 %v3038
      %v3188 = vpop.f32.mrb[0].mxu0
      %v3189 = vadd.f32 0.0, %v3188
      %v3190 = vpop.f32.mrb[0].mxu0
      %v3191 = vpop.f32.mrb[0].mxu0
      %v3192 = vadd.f32 0.0, %v3191
      %v3193 = vpop.f32.mrb[0].mxu0
      %3194 = vmatprep.mubr.bf16.mxu0 0
      %3195 = vmatmul.mubr.bf16.gmra.mrb[0].mxu0 %v3041
      %v3196 = vpop.f32.mrb[0].mxu0
      %v3197 = vadd.f32 0.0, %v3196
      %v3198 = vpop.f32.mrb[0].mxu0
      %v3199 = vpop.f32.mrb[0].mxu0
      %v3200 = vadd.f32 0.0, %v3199
      %v3201 = vpop.f32.mrb[0].mxu0
      %3202 = vmatprep.mubr.bf16.mxu0 0
      %3203 = vmatmul.mubr.bf16.gmra.mrb[0].mxu0 %v3044
      %v3204 = vpop.f32.mrb[0].mxu0
      %v3205 = vadd.f32 0.0, %v3204
      %v3206 = vpop.f32.mrb[0].mxu0
      %v3207 = vpop.f32.mrb[0].mxu0
      %v3208 = vadd.f32 0.0, %v3207
      %v3209 = vpop.f32.mrb[0].mxu0
      %3210 = vmatprep.mubr.bf16.mxu0 0
      %3211 = vmatmul.mubr.bf16.gmra.mrb[0].mxu0 %v3047
      %v3212 = vpop.f32.mrb[0].mxu0
      %v3213 = vadd.f32 0.0, %v3212
      %v3214 = vpop.f32.mrb[0].mxu0
      %v3215 = vpop.f32.mrb[0].mxu0
      %v3216 = vadd.f32 0.0, %v3215
      %v3217 = vpop.f32.mrb[0].mxu0
      %3218 = vmatprep.mubr.bf16.mxu0 0
      %3219 = vmatmul.mubr.bf16.gmra.mrb[0].mxu0 %v3050
      %v3220 = vpop.f32.mrb[0].mxu0
      %v3221 = vadd.f32 0.0, %v3220
      %v3222 = vpop.f32.mrb[0].mxu0
      %v3223 = vpop.f32.mrb[0].mxu0
      %v3224 = vadd.f32 0.0, %v3223
      %v3225 = vpop.f32.mrb[0].mxu0
      %3226 = vmatprep.mubr.bf16.mxu0 0
      %3227 = vmatmul.mubr.bf16.gmra.mrb[0].mxu0 %v3053
      %v3228 = vpop.f32.mrb[0].mxu0
      %v3229 = vadd.f32 0.0, %v3228
      %v3230 = vpop.f32.mrb[0].mxu0
      %v3231 = vpop.f32.mrb[0].mxu0
      %v3232 = vadd.f32 0.0, %v3231
      %v3233 = vpop.f32.mrb[0].mxu0
      %3234 = vdwg.mxu0
      %v3235 = vadd.f32 %v2906, %v3093
      %v3236 = vadd.f32 %v2907, %v3096
      %v3237 = vadd.f32 %v2908, %v3101
      %v3238 = vadd.f32 %v2909, %v3104
      %v3239 = vadd.f32 %v2910, %v3109
      %v3240 = vadd.f32 %v2911, %v3112
      %v3241 = vadd.f32 %v2912, %v3117
      %v3242 = vadd.f32 %v2913, %v3120
      %v3243 = vadd.f32 %v2914, %v3125
      %v3244 = vadd.f32 %v2915, %v3128
      %v3245 = vadd.f32 %v2916, %v3133
      %v3246 = vadd.f32 %v2917, %v3136
      %v3247 = vadd.f32 %v2918, %v3141
      %v3248 = vadd.f32 %v2919, %v3144
      %v3249 = vadd.f32 %v2920, %v3149
      %v3250 = vadd.f32 %v2921, %v3152
      %v3251 = vadd.f32 %v2922, %v3157
      %v3252 = vadd.f32 %v2923, %v3160
      %v3253 = vadd.f32 %v2924, %v3165
      %v3254 = vadd.f32 %v2925, %v3168
      %v3255 = vadd.f32 %v2926, %v3173
      %v3256 = vadd.f32 %v2927, %v3176
      %v3257 = vadd.f32 %v2928, %v3181
      %v3258 = vadd.f32 %v2929, %v3184
      %v3259 = vadd.f32 %v2930, %v3189
      %v3260 = vadd.f32 %v2931, %v3192
      %v3261 = vadd.f32 %v2932, %v3197
      %v3262 = vadd.f32 %v2933, %v3200
      %v3263 = vadd.f32 %v2934, %v3205
      %v3264 = vadd.f32 %v2935, %v3208
      %v3265 = vadd.f32 %v2936, %v3213
      %v3266 = vadd.f32 %v2937, %v3216
      %v3267 = vadd.f32 %v2938, %v3221
      %v3268 = vadd.f32 %v2939, %v3224
      %v3269 = vadd.f32 %v2940, %v3229
      %v3270 = vadd.f32 %v2941, %v3232
      %3271 = vst.msk [vmem:[#allocation2] sm:$0xff] %vm2050, %v3235
      %3272 = vst.msk [vmem:[#allocation2 + $0x8] sm:$0xff] %vm2050, %v3236
      %3273 = vst.msk [vmem:[#allocation2 + $0x10] sm:$0xff] %vm2050, %v3237
      %3274 = vst.msk [vmem:[#allocation2 + $0x18] sm:$0xff] %vm2050, %v3238
      %3275 = vst.msk [vmem:[#allocation2 + $0x20] sm:$0xff] %vm2050, %v3239
      %3276 = vst.msk [vmem:[#allocation2 + $0x28] sm:$0xff] %vm2050, %v3240
      %3277 = vst.msk [vmem:[#allocation2 + $0x30] sm:$0xff] %vm2050, %v3241
      %3278 = vst.msk [vmem:[#allocation2 + $0x38] sm:$0xff] %vm2050, %v3242
      %3279 = vst.msk [vmem:[#allocation2 + $0x40] sm:$0xff] %vm2050, %v3243
      %3280 = vst.msk [vmem:[#allocation2 + $0x48] sm:$0xff] %vm2050, %v3244
      %3281 = vst.msk [vmem:[#allocation2 + $0x50] sm:$0xff] %vm2050, %v3245
      %3282 = vst.msk [vmem:[#allocation2 + $0x58] sm:$0xff] %vm2050, %v3246
      %3283 = vst.msk [vmem:[#allocation2 + $0x60] sm:$0xff] %vm2050, %v3247
      %3284 = vst.msk [vmem:[#allocation2 + $0x68] sm:$0xff] %vm2050, %v3248
      %3285 = vst.msk [vmem:[#allocation2 + $0x70] sm:$0xff] %vm2050, %v3249
      %3286 = vst.msk [vmem:[#allocation2 + $0x78] sm:$0xff] %vm2050, %v3250
      %3287 = vst.msk [vmem:[#allocation2 + $0x80] sm:$0xff] %vm2050, %v3251
      %3288 = vst.msk [vmem:[#allocation2 + $0x88] sm:$0xff] %vm2050, %v3252
      %3289 = vst.msk [vmem:[#allocation2 + $0x90] sm:$0xff] %vm2050, %v3253
      %3290 = vst.msk [vmem:[#allocation2 + $0x98] sm:$0xff] %vm2050, %v3254
      %3291 = vst.msk [vmem:[#allocation2 + $0xa0] sm:$0xff] %vm2050, %v3255
      %3292 = vst.msk [vmem:[#allocation2 + $0xa8] sm:$0xff] %vm2050, %v3256
      %3293 = vst.msk [vmem:[#allocation2 + $0xb0] sm:$0xff] %vm2050, %v3257
      %3294 = vst.msk [vmem:[#allocation2 + $0xb8] sm:$0xff] %vm2050, %v3258
      %3295 = vst.msk [vmem:[#allocation2 + $0xc0] sm:$0xff] %vm2050, %v3259
      %3296 = vst.msk [vmem:[#allocation2 + $0xc8] sm:$0xff] %vm2050, %v3260
      %3297 = vst.msk [vmem:[#allocation2 + $0xd0] sm:$0xff] %vm2050, %v3261
      %3298 = vst.msk [vmem:[#allocation2 + $0xd8] sm:$0xff] %vm2050, %v3262
      %3299 = vst.msk [vmem:[#allocation2 + $0xe0] sm:$0xff] %vm2050, %v3263
      %3300 = vst.msk [vmem:[#allocation2 + $0xe8] sm:$0xff] %vm2050, %v3264
      %3301 = vst.msk [vmem:[#allocation2 + $0xf0] sm:$0xff] %vm2050, %v3265
      %3302 = vst.msk [vmem:[#allocation2 + $0xf8] sm:$0xff] %vm2050, %v3266
      %3303 = vst.msk [vmem:[#allocation2 + $0x100] sm:$0xff] %vm2050, %v3267
      %3304 = vst.msk [vmem:[#allocation2 + $0x108] sm:$0xff] %vm2050, %v3268
      %3305 = vst.msk [vmem:[#allocation2 + $0x110] sm:$0xff] %vm2050, %v3269
      %3306 = vst.msk [vmem:[#allocation2 + $0x118] sm:$0xff] %vm2050, %v3270
      %v3307 = vld [vmem:[#allocation2] sm:$0xff]
      %v3308 = vld [vmem:[#allocation2 + $0x8] sm:$0xff]
      %v3309 = vld [vmem:[#allocation2 + $0x10] sm:$0xff]
      %v3310 = vld [vmem:[#allocation2 + $0x18] sm:$0xff]
      %v3311 = vld [vmem:[#allocation2 + $0x20] sm:$0xff]
      %v3312 = vld [vmem:[#allocation2 + $0x28] sm:$0xff]
      %v3313 = vld [vmem:[#allocation2 + $0x30] sm:$0xff]
      %v3314 = vld [vmem:[#allocation2 + $0x38] sm:$0xff]
      %v3315 = vld [vmem:[#allocation2 + $0x40] sm:$0xff]
      %v3316 = vld [vmem:[#allocation2 + $0x48] sm:$0xff]
      %v3317 = vld [vmem:[#allocation2 + $0x50] sm:$0xff]
      %v3318 = vld [vmem:[#allocation2 + $0x58] sm:$0xff]
      %v3319 = vld [vmem:[#allocation2 + $0x60] sm:$0xff]
      %v3320 = vld [vmem:[#allocation2 + $0x68] sm:$0xff]
      %v3321 = vld [vmem:[#allocation2 + $0x70] sm:$0xff]
      %v3322 = vld [vmem:[#allocation2 + $0x78] sm:$0xff]
      %v3323 = vld [vmem:[#allocation2 + $0x80] sm:$0xff]
      %v3324 = vld [vmem:[#allocation2 + $0x88] sm:$0xff]
      %v3325 = vld [vmem:[#allocation2 + $0x90] sm:$0xff]
      %v3326 = vld [vmem:[#allocation2 + $0x98] sm:$0xff]
      %v3327 = vld [vmem:[#allocation2 + $0xa0] sm:$0xff]
      %v3328 = vld [vmem:[#allocation2 + $0xa8] sm:$0xff]
      %v3329 = vld [vmem:[#allocation2 + $0xb0] sm:$0xff]
      %v3330 = vld [vmem:[#allocation2 + $0xb8] sm:$0xff]
      %v3331 = vld [vmem:[#allocation2 + $0xc0] sm:$0xff]
      %v3332 = vld [vmem:[#allocation2 + $0xc8] sm:$0xff]
      %v3333 = vld [vmem:[#allocation2 + $0xd0] sm:$0xff]
      %v3334 = vld [vmem:[#allocation2 + $0xd8] sm:$0xff]
      %v3335 = vld [vmem:[#allocation2 + $0xe0] sm:$0xff]
      %v3336 = vld [vmem:[#allocation2 + $0xe8] sm:$0xff]
      %v3337 = vld [vmem:[#allocation2 + $0xf0] sm:$0xff]
      %v3338 = vld [vmem:[#allocation2 + $0xf8] sm:$0xff]
      %v3339 = vld [vmem:[#allocation2 + $0x100] sm:$0xff]
      %v3340 = vld [vmem:[#allocation2 + $0x108] sm:$0xff]
      %v3341 = vld [vmem:[#allocation2 + $0x110] sm:$0xff]
      %v3342 = vld [vmem:[#allocation2 + $0x118] sm:$0xff]
      %s3343 = scalar_lea.vmem %s3, 6
      %v3344 = vld [vmem:[%s3343] sm:$0x3]
      %v3346 = vrot.slane %v2048, 1
      %v3347 = vsel %vm2963, %v2999, %v3346
      %v3349 = vsel %vm2050, %v3347, 0
      %v3352 = vsel %vm2178, %v3344, 0
      %3354 = vmatprep.subr.bf16.mxu0 0
      %3355 = vmatpush1.bf16.msra.mxu0 %v3352
      %3356 = vmatprep.subr.bf16.mxu0 0
      %3357 = vmatpush1.bf16.msra.mxu0 0
      %3358 = vmatprep.subr.bf16.mxu0 0
      %3359 = vmatpush1.bf16.msra.mxu0 0
      %3360 = vmatprep.subr.bf16.mxu0 0
      %3361 = vmatpush1.bf16.msra.mxu0 0
      %3362 = vmatprep.subr.bf16.mxu0 0
      %3363 = vmatpush1.bf16.msra.mxu0 0
      %3364 = vmatprep.subr.bf16.mxu0 0
      %3365 = vmatpush1.bf16.msra.mxu0 0
      %3366 = vmatprep.subr.bf16.mxu0 0
      %3367 = vmatpush1.bf16.msra.mxu0 0
      %3368 = vmatprep.subr.bf16.mxu0 0
      %3369 = vmatpush1.bf16.msra.mxu0 0
      %3370 = vmatprep.subr.bf16.mxu0 0
      %3371 = vmatpush1.bf16.msra.mxu0 0
      %3372 = vmatprep.subr.bf16.mxu0 0
      %3373 = vmatpush1.bf16.msra.mxu0 0
      %3374 = vmatprep.subr.bf16.mxu0 0
      %3375 = vmatpush1.bf16.msra.mxu0 0
      %3376 = vmatprep.subr.bf16.mxu0 0
      %3377 = vmatpush1.bf16.msra.mxu0 0
      %3378 = vmatprep.subr.bf16.mxu0 0
      %3379 = vmatpush1.bf16.msra.mxu0 0
      %3380 = vmatprep.subr.bf16.mxu0 0
      %3381 = vmatpush1.bf16.msra.mxu0 0
      %3382 = vmatprep.subr.bf16.mxu0 0
      %3383 = vmatpush1.bf16.msra.mxu0 0
      %3384 = vmatprep.subr.bf16.mxu0 0
      %3385 = vmatpush1.bf16.msra.mxu0 0
      %3386 = vmatprep.mubr.bf16.mxu0 0
      %3387 = vmatmul.mubr.bf16.gmra.mrb[0].mxu0 %v3005
      %v3388 = vpop.f32.mrb[0].mxu0
      %v3389 = vadd.f32 0.0, %v3388
      %v3390 = vpop.f32.mrb[0].mxu0
      %v3391 = vpop.f32.mrb[0].mxu0
      %v3392 = vadd.f32 0.0, %v3391
      %v3393 = vpop.f32.mrb[0].mxu0
      %3394 = vmatprep.mubr.bf16.mxu0 0
      %3395 = vmatmul.mubr.bf16.gmra.mrb[0].mxu0 %v3008
      %v3396 = vpop.f32.mrb[0].mxu0
      %v3397 = vadd.f32 0.0, %v3396
      %v3398 = vpop.f32.mrb[0].mxu0
      %v3399 = vpop.f32.mrb[0].mxu0
      %v3400 = vadd.f32 0.0, %v3399
      %v3401 = vpop.f32.mrb[0].mxu0
      %3402 = vmatprep.mubr.bf16.mxu0 0
      %3403 = vmatmul.mubr.bf16.gmra.mrb[0].mxu0 %v3011
      %v3404 = vpop.f32.mrb[0].mxu0
      %v3405 = vadd.f32 0.0, %v3404
      %v3406 = vpop.f32.mrb[0].mxu0
      %v3407 = vpop.f32.mrb[0].mxu0
      %v3408 = vadd.f32 0.0, %v3407
      %v3409 = vpop.f32.mrb[0].mxu0
      %3410 = vmatprep.mubr.bf16.mxu0 0
      %3411 = vmatmul.mubr.bf16.gmra.mrb[0].mxu0 %v3014
      %v3412 = vpop.f32.mrb[0].mxu0
      %v3413 = vadd.f32 0.0, %v3412
      %v3414 = vpop.f32.mrb[0].mxu0
      %v3415 = vpop.f32.mrb[0].mxu0
      %v3416 = vadd.f32 0.0, %v3415
      %v3417 = vpop.f32.mrb[0].mxu0
      %3418 = vmatprep.mubr.bf16.mxu0 0
      %3419 = vmatmul.mubr.bf16.gmra.mrb[0].mxu0 %v3017
      %v3420 = vpop.f32.mrb[0].mxu0
      %v3421 = vadd.f32 0.0, %v3420
      %v3422 = vpop.f32.mrb[0].mxu0
      %v3423 = vpop.f32.mrb[0].mxu0
      %v3424 = vadd.f32 0.0, %v3423
      %v3425 = vpop.f32.mrb[0].mxu0
      %3426 = vmatprep.mubr.bf16.mxu0 0
      %3427 = vmatmul.mubr.bf16.gmra.mrb[0].mxu0 %v3020
      %v3428 = vpop.f32.mrb[0].mxu0
      %v3429 = vadd.f32 0.0, %v3428
      %v3430 = vpop.f32.mrb[0].mxu0
      %v3431 = vpop.f32.mrb[0].mxu0
      %v3432 = vadd.f32 0.0, %v3431
      %v3433 = vpop.f32.mrb[0].mxu0
      %3434 = vmatprep.mubr.bf16.mxu0 0
      %3435 = vmatmul.mubr.bf16.gmra.mrb[0].mxu0 %v3023
      %v3436 = vpop.f32.mrb[0].mxu0
      %v3437 = vadd.f32 0.0, %v3436
      %v3438 = vpop.f32.mrb[0].mxu0
      %v3439 = vpop.f32.mrb[0].mxu0
      %v3440 = vadd.f32 0.0, %v3439
      %v3441 = vpop.f32.mrb[0].mxu0
      %3442 = vmatprep.mubr.bf16.mxu0 0
      %3443 = vmatmul.mubr.bf16.gmra.mrb[0].mxu0 %v3026
      %v3444 = vpop.f32.mrb[0].mxu0
      %v3445 = vadd.f32 0.0, %v3444
      %v3446 = vpop.f32.mrb[0].mxu0
      %v3447 = vpop.f32.mrb[0].mxu0
      %v3448 = vadd.f32 0.0, %v3447
      %v3449 = vpop.f32.mrb[0].mxu0
      %3450 = vmatprep.mubr.bf16.mxu0 0
      %3451 = vmatmul.mubr.bf16.gmra.mrb[0].mxu0 %v3029
      %v3452 = vpop.f32.mrb[0].mxu0
      %v3453 = vadd.f32 0.0, %v3452
      %v3454 = vpop.f32.mrb[0].mxu0
      %v3455 = vpop.f32.mrb[0].mxu0
      %v3456 = vadd.f32 0.0, %v3455
      %v3457 = vpop.f32.mrb[0].mxu0
      %3458 = vmatprep.mubr.bf16.mxu0 0
      %3459 = vmatmul.mubr.bf16.gmra.mrb[0].mxu0 %v3032
      %v3460 = vpop.f32.mrb[0].mxu0
      %v3461 = vadd.f32 0.0, %v3460
      %v3462 = vpop.f32.mrb[0].mxu0
      %v3463 = vpop.f32.mrb[0].mxu0
      %v3464 = vadd.f32 0.0, %v3463
      %v3465 = vpop.f32.mrb[0].mxu0
      %3466 = vmatprep.mubr.bf16.mxu0 0
      %3467 = vmatmul.mubr.bf16.gmra.mrb[0].mxu0 %v3035
      %v3468 = vpop.f32.mrb[0].mxu0
      %v3469 = vadd.f32 0.0, %v3468
      %v3470 = vpop.f32.mrb[0].mxu0
      %v3471 = vpop.f32.mrb[0].mxu0
      %v3472 = vadd.f32 0.0, %v3471
      %v3473 = vpop.f32.mrb[0].mxu0
      %3474 = vmatprep.mubr.bf16.mxu0 0
      %3475 = vmatmul.mubr.bf16.gmra.mrb[0].mxu0 %v3038
      %v3476 = vpop.f32.mrb[0].mxu0
      %v3477 = vadd.f32 0.0, %v3476
      %v3478 = vpop.f32.mrb[0].mxu0
      %v3479 = vpop.f32.mrb[0].mxu0
      %v3480 = vadd.f32 0.0, %v3479
      %v3481 = vpop.f32.mrb[0].mxu0
      %3482 = vmatprep.mubr.bf16.mxu0 0
      %3483 = vmatmul.mubr.bf16.gmra.mrb[0].mxu0 %v3041
      %v3484 = vpop.f32.mrb[0].mxu0
      %v3485 = vadd.f32 0.0, %v3484
      %v3486 = vpop.f32.mrb[0].mxu0
      %v3487 = vpop.f32.mrb[0].mxu0
      %v3488 = vadd.f32 0.0, %v3487
      %v3489 = vpop.f32.mrb[0].mxu0
      %3490 = vmatprep.mubr.bf16.mxu0 0
      %3491 = vmatmul.mubr.bf16.gmra.mrb[0].mxu0 %v3044
      %v3492 = vpop.f32.mrb[0].mxu0
      %v3493 = vadd.f32 0.0, %v3492
      %v3494 = vpop.f32.mrb[0].mxu0
      %v3495 = vpop.f32.mrb[0].mxu0
      %v3496 = vadd.f32 0.0, %v3495
      %v3497 = vpop.f32.mrb[0].mxu0
      %3498 = vmatprep.mubr.bf16.mxu0 0
      %3499 = vmatmul.mubr.bf16.gmra.mrb[0].mxu0 %v3047
      %v3500 = vpop.f32.mrb[0].mxu0
      %v3501 = vadd.f32 0.0, %v3500
      %v3502 = vpop.f32.mrb[0].mxu0
      %v3503 = vpop.f32.mrb[0].mxu0
      %v3504 = vadd.f32 0.0, %v3503
      %v3505 = vpop.f32.mrb[0].mxu0
      %3506 = vmatprep.mubr.bf16.mxu0 0
      %3507 = vmatmul.mubr.bf16.gmra.mrb[0].mxu0 %v3050
      %v3508 = vpop.f32.mrb[0].mxu0
      %v3509 = vadd.f32 0.0, %v3508
      %v3510 = vpop.f32.mrb[0].mxu0
      %v3511 = vpop.f32.mrb[0].mxu0
      %v3512 = vadd.f32 0.0, %v3511
      %v3513 = vpop.f32.mrb[0].mxu0
      %3514 = vmatprep.mubr.bf16.mxu0 0
      %3515 = vmatmul.mubr.bf16.gmra.mrb[0].mxu0 %v3053
      %v3516 = vpop.f32.mrb[0].mxu0
      %v3517 = vadd.f32 0.0, %v3516
      %v3518 = vpop.f32.mrb[0].mxu0
      %v3519 = vpop.f32.mrb[0].mxu0
      %v3520 = vadd.f32 0.0, %v3519
      %v3521 = vpop.f32.mrb[0].mxu0
      %3522 = vmatprep.mubr.bf16.mxu0 0
      %3523 = vmatmul.mubr.bf16.gmra.mrb[0].mxu0 %v3349
      %v3524 = vpop.f32.mrb[0].mxu0
      %v3525 = vadd.f32 0.0, %v3524
      %v3526 = vpop.f32.mrb[0].mxu0
      %v3527 = vpop.f32.mrb[0].mxu0
      %v3528 = vadd.f32 0.0, %v3527
      %v3529 = vpop.f32.mrb[0].mxu0
      %3530 = vdwg.mxu0
      %v3531 = vadd.f32 %v3307, %v3389
      %v3532 = vadd.f32 %v3308, %v3392
      %v3533 = vadd.f32 %v3309, %v3397
      %v3534 = vadd.f32 %v3310, %v3400
      %v3535 = vadd.f32 %v3311, %v3405
      %v3536 = vadd.f32 %v3312, %v3408
      %v3537 = vadd.f32 %v3313, %v3413
      %v3538 = vadd.f32 %v3314, %v3416
      %v3539 = vadd.f32 %v3315, %v3421
      %v3540 = vadd.f32 %v3316, %v3424
      %v3541 = vadd.f32 %v3317, %v3429
      %v3542 = vadd.f32 %v3318, %v3432
      %v3543 = vadd.f32 %v3319, %v3437
      %v3544 = vadd.f32 %v3320, %v3440
      %v3545 = vadd.f32 %v3321, %v3445
      %v3546 = vadd.f32 %v3322, %v3448
      %v3547 = vadd.f32 %v3323, %v3453
      %v3548 = vadd.f32 %v3324, %v3456
      %v3549 = vadd.f32 %v3325, %v3461
      %v3550 = vadd.f32 %v3326, %v3464
      %v3551 = vadd.f32 %v3327, %v3469
      %v3552 = vadd.f32 %v3328, %v3472
      %v3553 = vadd.f32 %v3329, %v3477
      %v3554 = vadd.f32 %v3330, %v3480
      %v3555 = vadd.f32 %v3331, %v3485
      %v3556 = vadd.f32 %v3332, %v3488
      %v3557 = vadd.f32 %v3333, %v3493
      %v3558 = vadd.f32 %v3334, %v3496
      %v3559 = vadd.f32 %v3335, %v3501
      %v3560 = vadd.f32 %v3336, %v3504
      %v3561 = vadd.f32 %v3337, %v3509
      %v3562 = vadd.f32 %v3338, %v3512
      %v3563 = vadd.f32 %v3339, %v3517
      %v3564 = vadd.f32 %v3340, %v3520
      %v3565 = vadd.f32 %v3341, %v3525
      %v3566 = vadd.f32 %v3342, %v3528
      %3567 = vst.msk [vmem:[#allocation2] sm:$0xff] %vm2050, %v3531
      %3568 = vst.msk [vmem:[#allocation2 + $0x8] sm:$0xff] %vm2050, %v3532
      %3569 = vst.msk [vmem:[#allocation2 + $0x10] sm:$0xff] %vm2050, %v3533
      %3570 = vst.msk [vmem:[#allocation2 + $0x18] sm:$0xff] %vm2050, %v3534
      %3571 = vst.msk [vmem:[#allocation2 + $0x20] sm:$0xff] %vm2050, %v3535
      %3572 = vst.msk [vmem:[#allocation2 + $0x28] sm:$0xff] %vm2050, %v3536
      %3573 = vst.msk [vmem:[#allocation2 + $0x30] sm:$0xff] %vm2050, %v3537
      %3574 = vst.msk [vmem:[#allocation2 + $0x38] sm:$0xff] %vm2050, %v3538
      %3575 = vst.msk [vmem:[#allocation2 + $0x40] sm:$0xff] %vm2050, %v3539
      %3576 = vst.msk [vmem:[#allocation2 + $0x48] sm:$0xff] %vm2050, %v3540
      %3577 = vst.msk [vmem:[#allocation2 + $0x50] sm:$0xff] %vm2050, %v3541
      %3578 = vst.msk [vmem:[#allocation2 + $0x58] sm:$0xff] %vm2050, %v3542
      %3579 = vst.msk [vmem:[#allocation2 + $0x60] sm:$0xff] %vm2050, %v3543
      %3580 = vst.msk [vmem:[#allocation2 + $0x68] sm:$0xff] %vm2050, %v3544
      %3581 = vst.msk [vmem:[#allocation2 + $0x70] sm:$0xff] %vm2050, %v3545
      %3582 = vst.msk [vmem:[#allocation2 + $0x78] sm:$0xff] %vm2050, %v3546
      %3583 = vst.msk [vmem:[#allocation2 + $0x80] sm:$0xff] %vm2050, %v3547
      %3584 = vst.msk [vmem:[#allocation2 + $0x88] sm:$0xff] %vm2050, %v3548
      %3585 = vst.msk [vmem:[#allocation2 + $0x90] sm:$0xff] %vm2050, %v3549
      %3586 = vst.msk [vmem:[#allocation2 + $0x98] sm:$0xff] %vm2050, %v3550
      %3587 = vst.msk [vmem:[#allocation2 + $0xa0] sm:$0xff] %vm2050, %v3551
      %3588 = vst.msk [vmem:[#allocation2 + $0xa8] sm:$0xff] %vm2050, %v3552
      %3589 = vst.msk [vmem:[#allocation2 + $0xb0] sm:$0xff] %vm2050, %v3553
      %3590 = vst.msk [vmem:[#allocation2 + $0xb8] sm:$0xff] %vm2050, %v3554
      %3591 = vst.msk [vmem:[#allocation2 + $0xc0] sm:$0xff] %vm2050, %v3555
      %3592 = vst.msk [vmem:[#allocation2 + $0xc8] sm:$0xff] %vm2050, %v3556
      %3593 = vst.msk [vmem:[#allocation2 + $0xd0] sm:$0xff] %vm2050, %v3557
      %3594 = vst.msk [vmem:[#allocation2 + $0xd8] sm:$0xff] %vm2050, %v3558
      %3595 = vst.msk [vmem:[#allocation2 + $0xe0] sm:$0xff] %vm2050, %v3559
      %3596 = vst.msk [vmem:[#allocation2 + $0xe8] sm:$0xff] %vm2050, %v3560
      %3597 = vst.msk [vmem:[#allocation2 + $0xf0] sm:$0xff] %vm2050, %v3561
      %3598 = vst.msk [vmem:[#allocation2 + $0xf8] sm:$0xff] %vm2050, %v3562
      %3599 = vst.msk [vmem:[#allocation2 + $0x100] sm:$0xff] %vm2050, %v3563
      %3600 = vst.msk [vmem:[#allocation2 + $0x108] sm:$0xff] %vm2050, %v3564
      %3601 = vst.msk [vmem:[#allocation2 + $0x110] sm:$0xff] %vm2050, %v3565
      %3602 = vst.msk [vmem:[#allocation2 + $0x118] sm:$0xff] %vm2050, %v3566
      %v3603 = vld [vmem:[#allocation2] sm:$0xff]
      %v3604 = vld [vmem:[#allocation2 + $0x8] sm:$0xff]
      %v3605 = vld [vmem:[#allocation2 + $0x10] sm:$0xff]
      %v3606 = vld [vmem:[#allocation2 + $0x18] sm:$0xff]
      %v3607 = vld [vmem:[#allocation2 + $0x20] sm:$0xff]
      %v3608 = vld [vmem:[#allocation2 + $0x28] sm:$0xff]
      %v3609 = vld [vmem:[#allocation2 + $0x30] sm:$0xff]
      %v3610 = vld [vmem:[#allocation2 + $0x38] sm:$0xff]
      %v3611 = vld [vmem:[#allocation2 + $0x40] sm:$0xff]
      %v3612 = vld [vmem:[#allocation2 + $0x48] sm:$0xff]
      %v3613 = vld [vmem:[#allocation2 + $0x50] sm:$0xff]
      %v3614 = vld [vmem:[#allocation2 + $0x58] sm:$0xff]
      %v3615 = vld [vmem:[#allocation2 + $0x60] sm:$0xff]
      %v3616 = vld [vmem:[#allocation2 + $0x68] sm:$0xff]
      %v3617 = vld [vmem:[#allocation2 + $0x70] sm:$0xff]
      %v3618 = vld [vmem:[#allocation2 + $0x78] sm:$0xff]
      %v3619 = vld [vmem:[#allocation2 + $0x80] sm:$0xff]
      %v3620 = vld [vmem:[#allocation2 + $0x88] sm:$0xff]
      %v3621 = vld [vmem:[#allocation2 + $0x90] sm:$0xff]
      %v3622 = vld [vmem:[#allocation2 + $0x98] sm:$0xff]
      %v3623 = vld [vmem:[#allocation2 + $0xa0] sm:$0xff]
      %v3624 = vld [vmem:[#allocation2 + $0xa8] sm:$0xff]
      %v3625 = vld [vmem:[#allocation2 + $0xb0] sm:$0xff]
      %v3626 = vld [vmem:[#allocation2 + $0xb8] sm:$0xff]
      %v3627 = vld [vmem:[#allocation2 + $0xc0] sm:$0xff]
      %v3628 = vld [vmem:[#allocation2 + $0xc8] sm:$0xff]
      %v3629 = vld [vmem:[#allocation2 + $0xd0] sm:$0xff]
      %v3630 = vld [vmem:[#allocation2 + $0xd8] sm:$0xff]
      %v3631 = vld [vmem:[#allocation2 + $0xe0] sm:$0xff]
      %v3632 = vld [vmem:[#allocation2 + $0xe8] sm:$0xff]
      %v3633 = vld [vmem:[#allocation2 + $0xf0] sm:$0xff]
      %v3634 = vld [vmem:[#allocation2 + $0xf8] sm:$0xff]
      %v3635 = vld [vmem:[#allocation2 + $0x100] sm:$0xff]
      %v3636 = vld [vmem:[#allocation2 + $0x108] sm:$0xff]
      %v3637 = vld [vmem:[#allocation2 + $0x110] sm:$0xff]
      %v3638 = vld [vmem:[#allocation2 + $0x118] sm:$0xff]
      %s3639 = scalar_lea.vmem %s3, 8
      %v3640 = vld [vmem:[%s3639] sm:$0x3]
      %vm3641 = vsmask.f32 6400
      %v3642 = vrot.slane %v2480, 1
      %v3643 = vrot.slane %v2476, 2
      %v3644 = vor.u32 %v3642, %v3643
      %v3645 = vrot.slane %v2487, 1
      %v3646 = vrot.slane %v2483, 2
      %v3647 = vor.u32 %v3645, %v3646
      %v3648 = vsel %vm3641, %v3644, %v3647
      %v3649 = vrot.slane %v2494, 1
      %v3650 = vrot.slane %v2490, 2
      %v3651 = vor.u32 %v3649, %v3650
      %v3652 = vsel %vm3641, %v3647, %v3651
      %v3653 = vrot.slane %v2501, 1
      %v3654 = vrot.slane %v2497, 2
      %v3655 = vor.u32 %v3653, %v3654
      %v3656 = vsel %vm3641, %v3651, %v3655
      %v3657 = vrot.slane %v2508, 1
      %v3658 = vrot.slane %v2504, 2
      %v3659 = vor.u32 %v3657, %v3658
      %v3660 = vsel %vm3641, %v3655, %v3659
      %v3661 = vrot.slane %v2515, 1
      %v3662 = vrot.slane %v2511, 2
      %v3663 = vor.u32 %v3661, %v3662
      %v3664 = vsel %vm3641, %v3659, %v3663
      %v3665 = vrot.slane %v2522, 1
      %v3666 = vrot.slane %v2518, 2
      %v3667 = vor.u32 %v3665, %v3666
      %v3668 = vsel %vm3641, %v3663, %v3667
      %v3669 = vrot.slane %v2529, 1
      %v3670 = vrot.slane %v2525, 2
      %v3671 = vor.u32 %v3669, %v3670
      %v3672 = vsel %vm3641, %v3667, %v3671
      %v3673 = vrot.slane %v2536, 1
      %v3674 = vrot.slane %v2532, 2
      %v3675 = vor.u32 %v3673, %v3674
      %v3676 = vsel %vm3641, %v3671, %v3675
      %v3677 = vrot.slane %v2543, 1
      %v3678 = vrot.slane %v2539, 2
      %v3679 = vor.u32 %v3677, %v3678
      %v3680 = vsel %vm3641, %v3675, %v3679
      %v3681 = vrot.slane %v2550, 1
      %v3682 = vrot.slane %v2546, 2
      %v3683 = vor.u32 %v3681, %v3682
      %v3684 = vsel %vm3641, %v3679, %v3683
      %v3685 = vrot.slane %v2557, 1
      %v3686 = vrot.slane %v2553, 2
      %v3687 = vor.u32 %v3685, %v3686
      %v3688 = vsel %vm3641, %v3683, %v3687
      %v3689 = vrot.slane %v2564, 1
      %v3690 = vrot.slane %v2560, 2
      %v3691 = vor.u32 %v3689, %v3690
      %v3692 = vsel %vm3641, %v3687, %v3691
      %v3693 = vrot.slane %v2571, 1
      %v3694 = vrot.slane %v2567, 2
      %v3695 = vor.u32 %v3693, %v3694
      %v3696 = vsel %vm3641, %v3691, %v3695
      %v3697 = vrot.slane %v2578, 1
      %v3698 = vrot.slane %v2574, 2
      %v3699 = vor.u32 %v3697, %v3698
      %v3700 = vsel %vm3641, %v3695, %v3699
      %v3701 = vrot.slane %v2585, 1
      %v3702 = vrot.slane %v2581, 2
      %v3703 = vor.u32 %v3701, %v3702
      %v3704 = vsel %vm3641, %v3699, %v3703
      %v3705 = vrot.slane %v2592, 1
      %v3706 = vrot.slane %v2588, 2
      %v3707 = vor.u32 %v3705, %v3706
      %v3708 = vsel %vm3641, %v3703, %v3707
      %v3709 = vshrl.u32 %v2047, 16
      %v3711 = vrot.slane %v3709, 1
      %v3712 = vrot.slane %v2596, 2
      %v3713 = vor.u32 %v3711, %v3712
      %v3714 = vsel %vm3641, %v3707, %v3713
      %v3716 = vshrl.u32 %v2048, 16
      %v3718 = vrot.slane %v3716, 1
      %v3719 = vshll.u32 %v2048, 16
      %v3721 = vrot.slane %v3719, 2
      %v3722 = vor.u32 %v3718, %v3721
      %v3723 = vsel %vm3641, %v3713, %v3722
      %v3725 = vsel %vm2050, %v3648, 0
      %v3728 = vsel %vm2050, %v3652, 0
      %v3731 = vsel %vm2050, %v3656, 0
      %v3734 = vsel %vm2050, %v3660, 0
      %v3737 = vsel %vm2050, %v3664, 0
      %v3740 = vsel %vm2050, %v3668, 0
      %v3743 = vsel %vm2050, %v3672, 0
      %v3746 = vsel %vm2050, %v3676, 0
      %v3749 = vsel %vm2050, %v3680, 0
      %v3752 = vsel %vm2050, %v3684, 0
      %v3755 = vsel %vm2050, %v3688, 0
      %v3758 = vsel %vm2050, %v3692, 0
      %v3761 = vsel %vm2050, %v3696, 0
      %v3764 = vsel %vm2050, %v3700, 0
      %v3767 = vsel %vm2050, %v3704, 0
      %v3770 = vsel %vm2050, %v3708, 0
      %v3773 = vsel %vm2050, %v3714, 0
      %v3776 = vsel %vm2050, %v3723, 0
      %v3779 = vsel %vm2178, %v3640, 0
      %3781 = vmatprep.subr.bf16.mxu0 0
      %3782 = vmatpush1.bf16.msra.mxu0 %v3779
      %3783 = vmatprep.subr.bf16.mxu0 0
      %3784 = vmatpush1.bf16.msra.mxu0 0
      %3785 = vmatprep.subr.bf16.mxu0 0
      %3786 = vmatpush1.bf16.msra.mxu0 0
      %3787 = vmatprep.subr.bf16.mxu0 0
      %3788 = vmatpush1.bf16.msra.mxu0 0
      %3789 = vmatprep.subr.bf16.mxu0 0
      %3790 = vmatpush1.bf16.msra.mxu0 0
      %3791 = vmatprep.subr.bf16.mxu0 0
      %3792 = vmatpush1.bf16.msra.mxu0 0
      %3793 = vmatprep.subr.bf16.mxu0 0
      %3794 = vmatpush1.bf16.msra.mxu0 0
      %3795 = vmatprep.subr.bf16.mxu0 0
      %3796 = vmatpush1.bf16.msra.mxu0 0
      %3797 = vmatprep.subr.bf16.mxu0 0
      %3798 = vmatpush1.bf16.msra.mxu0 0
      %3799 = vmatprep.subr.bf16.mxu0 0
      %3800 = vmatpush1.bf16.msra.mxu0 0
      %3801 = vmatprep.subr.bf16.mxu0 0
      %3802 = vmatpush1.bf16.msra.mxu0 0
      %3803 = vmatprep.subr.bf16.mxu0 0
      %3804 = vmatpush1.bf16.msra.mxu0 0
      %3805 = vmatprep.subr.bf16.mxu0 0
      %3806 = vmatpush1.bf16.msra.mxu0 0
      %3807 = vmatprep.subr.bf16.mxu0 0
      %3808 = vmatpush1.bf16.msra.mxu0 0
      %3809 = vmatprep.subr.bf16.mxu0 0
      %3810 = vmatpush1.bf16.msra.mxu0 0
      %3811 = vmatprep.subr.bf16.mxu0 0
      %3812 = vmatpush1.bf16.msra.mxu0 0
      %3813 = vmatprep.mubr.bf16.mxu0 0
      %3814 = vmatmul.mubr.bf16.gmra.mrb[0].mxu0 %v3725
      %v3815 = vpop.f32.mrb[0].mxu0
      %v3816 = vadd.f32 0.0, %v3815
      %v3817 = vpop.f32.mrb[0].mxu0
      %v3818 = vpop.f32.mrb[0].mxu0
      %v3819 = vadd.f32 0.0, %v3818
      %v3820 = vpop.f32.mrb[0].mxu0
      %3821 = vmatprep.mubr.bf16.mxu0 0
      %3822 = vmatmul.mubr.bf16.gmra.mrb[0].mxu0 %v3728
      %v3823 = vpop.f32.mrb[0].mxu0
      %v3824 = vadd.f32 0.0, %v3823
      %v3825 = vpop.f32.mrb[0].mxu0
      %v3826 = vpop.f32.mrb[0].mxu0
      %v3827 = vadd.f32 0.0, %v3826
      %v3828 = vpop.f32.mrb[0].mxu0
      %3829 = vmatprep.mubr.bf16.mxu0 0
      %3830 = vmatmul.mubr.bf16.gmra.mrb[0].mxu0 %v3731
      %v3831 = vpop.f32.mrb[0].mxu0
      %v3832 = vadd.f32 0.0, %v3831
      %v3833 = vpop.f32.mrb[0].mxu0
      %v3834 = vpop.f32.mrb[0].mxu0
      %v3835 = vadd.f32 0.0, %v3834
      %v3836 = vpop.f32.mrb[0].mxu0
      %3837 = vmatprep.mubr.bf16.mxu0 0
      %3838 = vmatmul.mubr.bf16.gmra.mrb[0].mxu0 %v3734
      %v3839 = vpop.f32.mrb[0].mxu0
      %v3840 = vadd.f32 0.0, %v3839
      %v3841 = vpop.f32.mrb[0].mxu0
      %v3842 = vpop.f32.mrb[0].mxu0
      %v3843 = vadd.f32 0.0, %v3842
      %v3844 = vpop.f32.mrb[0].mxu0
      %3845 = vmatprep.mubr.bf16.mxu0 0
      %3846 = vmatmul.mubr.bf16.gmra.mrb[0].mxu0 %v3737
      %v3847 = vpop.f32.mrb[0].mxu0
      %v3848 = vadd.f32 0.0, %v3847
      %v3849 = vpop.f32.mrb[0].mxu0
      %v3850 = vpop.f32.mrb[0].mxu0
      %v3851 = vadd.f32 0.0, %v3850
      %v3852 = vpop.f32.mrb[0].mxu0
      %3853 = vmatprep.mubr.bf16.mxu0 0
      %3854 = vmatmul.mubr.bf16.gmra.mrb[0].mxu0 %v3740
      %v3855 = vpop.f32.mrb[0].mxu0
      %v3856 = vadd.f32 0.0, %v3855
      %v3857 = vpop.f32.mrb[0].mxu0
      %v3858 = vpop.f32.mrb[0].mxu0
      %v3859 = vadd.f32 0.0, %v3858
      %v3860 = vpop.f32.mrb[0].mxu0
      %3861 = vmatprep.mubr.bf16.mxu0 0
      %3862 = vmatmul.mubr.bf16.gmra.mrb[0].mxu0 %v3743
      %v3863 = vpop.f32.mrb[0].mxu0
      %v3864 = vadd.f32 0.0, %v3863
      %v3865 = vpop.f32.mrb[0].mxu0
      %v3866 = vpop.f32.mrb[0].mxu0
      %v3867 = vadd.f32 0.0, %v3866
      %v3868 = vpop.f32.mrb[0].mxu0
      %3869 = vmatprep.mubr.bf16.mxu0 0
      %3870 = vmatmul.mubr.bf16.gmra.mrb[0].mxu0 %v3746
      %v3871 = vpop.f32.mrb[0].mxu0
      %v3872 = vadd.f32 0.0, %v3871
      %v3873 = vpop.f32.mrb[0].mxu0
      %v3874 = vpop.f32.mrb[0].mxu0
      %v3875 = vadd.f32 0.0, %v3874
      %v3876 = vpop.f32.mrb[0].mxu0
      %3877 = vmatprep.mubr.bf16.mxu0 0
      %3878 = vmatmul.mubr.bf16.gmra.mrb[0].mxu0 %v3749
      %v3879 = vpop.f32.mrb[0].mxu0
      %v3880 = vadd.f32 0.0, %v3879
      %v3881 = vpop.f32.mrb[0].mxu0
      %v3882 = vpop.f32.mrb[0].mxu0
      %v3883 = vadd.f32 0.0, %v3882
      %v3884 = vpop.f32.mrb[0].mxu0
      %3885 = vmatprep.mubr.bf16.mxu0 0
      %3886 = vmatmul.mubr.bf16.gmra.mrb[0].mxu0 %v3752
      %v3887 = vpop.f32.mrb[0].mxu0
      %v3888 = vadd.f32 0.0, %v3887
      %v3889 = vpop.f32.mrb[0].mxu0
      %v3890 = vpop.f32.mrb[0].mxu0
      %v3891 = vadd.f32 0.0, %v3890
      %v3892 = vpop.f32.mrb[0].mxu0
      %3893 = vmatprep.mubr.bf16.mxu0 0
      %3894 = vmatmul.mubr.bf16.gmra.mrb[0].mxu0 %v3755
      %v3895 = vpop.f32.mrb[0].mxu0
      %v3896 = vadd.f32 0.0, %v3895
      %v3897 = vpop.f32.mrb[0].mxu0
      %v3898 = vpop.f32.mrb[0].mxu0
      %v3899 = vadd.f32 0.0, %v3898
      %v3900 = vpop.f32.mrb[0].mxu0
      %3901 = vmatprep.mubr.bf16.mxu0 0
      %3902 = vmatmul.mubr.bf16.gmra.mrb[0].mxu0 %v3758
      %v3903 = vpop.f32.mrb[0].mxu0
      %v3904 = vadd.f32 0.0, %v3903
      %v3905 = vpop.f32.mrb[0].mxu0
      %v3906 = vpop.f32.mrb[0].mxu0
      %v3907 = vadd.f32 0.0, %v3906
      %v3908 = vpop.f32.mrb[0].mxu0
      %3909 = vmatprep.mubr.bf16.mxu0 0
      %3910 = vmatmul.mubr.bf16.gmra.mrb[0].mxu0 %v3761
      %v3911 = vpop.f32.mrb[0].mxu0
      %v3912 = vadd.f32 0.0, %v3911
      %v3913 = vpop.f32.mrb[0].mxu0
      %v3914 = vpop.f32.mrb[0].mxu0
      %v3915 = vadd.f32 0.0, %v3914
      %v3916 = vpop.f32.mrb[0].mxu0
      %3917 = vmatprep.mubr.bf16.mxu0 0
      %3918 = vmatmul.mubr.bf16.gmra.mrb[0].mxu0 %v3764
      %v3919 = vpop.f32.mrb[0].mxu0
      %v3920 = vadd.f32 0.0, %v3919
      %v3921 = vpop.f32.mrb[0].mxu0
      %v3922 = vpop.f32.mrb[0].mxu0
      %v3923 = vadd.f32 0.0, %v3922
      %v3924 = vpop.f32.mrb[0].mxu0
      %3925 = vmatprep.mubr.bf16.mxu0 0
      %3926 = vmatmul.mubr.bf16.gmra.mrb[0].mxu0 %v3767
      %v3927 = vpop.f32.mrb[0].mxu0
      %v3928 = vadd.f32 0.0, %v3927
      %v3929 = vpop.f32.mrb[0].mxu0
      %v3930 = vpop.f32.mrb[0].mxu0
      %v3931 = vadd.f32 0.0, %v3930
      %v3932 = vpop.f32.mrb[0].mxu0
      %3933 = vmatprep.mubr.bf16.mxu0 0
      %3934 = vmatmul.mubr.bf16.gmra.mrb[0].mxu0 %v3770
      %v3935 = vpop.f32.mrb[0].mxu0
      %v3936 = vadd.f32 0.0, %v3935
      %v3937 = vpop.f32.mrb[0].mxu0
      %v3938 = vpop.f32.mrb[0].mxu0
      %v3939 = vadd.f32 0.0, %v3938
      %v3940 = vpop.f32.mrb[0].mxu0
      %3941 = vmatprep.mubr.bf16.mxu0 0
      %3942 = vmatmul.mubr.bf16.gmra.mrb[0].mxu0 %v3773
      %v3943 = vpop.f32.mrb[0].mxu0
      %v3944 = vadd.f32 0.0, %v3943
      %v3945 = vpop.f32.mrb[0].mxu0
      %v3946 = vpop.f32.mrb[0].mxu0
      %v3947 = vadd.f32 0.0, %v3946
      %v3948 = vpop.f32.mrb[0].mxu0
      %3949 = vmatprep.mubr.bf16.mxu0 0
      %3950 = vmatmul.mubr.bf16.gmra.mrb[0].mxu0 %v3776
      %v3951 = vpop.f32.mrb[0].mxu0
      %v3952 = vadd.f32 0.0, %v3951
      %v3953 = vpop.f32.mrb[0].mxu0
      %v3954 = vpop.f32.mrb[0].mxu0
      %v3955 = vadd.f32 0.0, %v3954
      %v3956 = vpop.f32.mrb[0].mxu0
      %3957 = vdwg.mxu0
      %v3958 = vadd.f32 %v3603, %v3816
      %v3959 = vadd.f32 %v3604, %v3819
      %v3960 = vadd.f32 %v3605, %v3824
      %v3961 = vadd.f32 %v3606, %v3827
      %v3962 = vadd.f32 %v3607, %v3832
      %v3963 = vadd.f32 %v3608, %v3835
      %v3964 = vadd.f32 %v3609, %v3840
      %v3965 = vadd.f32 %v3610, %v3843
      %v3966 = vadd.f32 %v3611, %v3848
      %v3967 = vadd.f32 %v3612, %v3851
      %v3968 = vadd.f32 %v3613, %v3856
      %v3969 = vadd.f32 %v3614, %v3859
      %v3970 = vadd.f32 %v3615, %v3864
      %v3971 = vadd.f32 %v3616, %v3867
      %v3972 = vadd.f32 %v3617, %v3872
      %v3973 = vadd.f32 %v3618, %v3875
      %v3974 = vadd.f32 %v3619, %v3880
      %v3975 = vadd.f32 %v3620, %v3883
      %v3976 = vadd.f32 %v3621, %v3888
      %v3977 = vadd.f32 %v3622, %v3891
      %v3978 = vadd.f32 %v3623, %v3896
      %v3979 = vadd.f32 %v3624, %v3899
      %v3980 = vadd.f32 %v3625, %v3904
      %v3981 = vadd.f32 %v3626, %v3907
      %v3982 = vadd.f32 %v3627, %v3912
      %v3983 = vadd.f32 %v3628, %v3915
      %v3984 = vadd.f32 %v3629, %v3920
      %v3985 = vadd.f32 %v3630, %v3923
      %v3986 = vadd.f32 %v3631, %v3928
      %v3987 = vadd.f32 %v3632, %v3931
      %v3988 = vadd.f32 %v3633, %v3936
      %v3989 = vadd.f32 %v3634, %v3939
      %v3990 = vadd.f32 %v3635, %v3944
      %v3991 = vadd.f32 %v3636, %v3947
      %v3992 = vadd.f32 %v3637, %v3952
      %v3993 = vadd.f32 %v3638, %v3955
      %3994 = vst.msk [vmem:[#allocation2] sm:$0xff] %vm2050, %v3958
      %3995 = vst.msk [vmem:[#allocation2 + $0x8] sm:$0xff] %vm2050, %v3959
      %3996 = vst.msk [vmem:[#allocation2 + $0x10] sm:$0xff] %vm2050, %v3960
      %3997 = vst.msk [vmem:[#allocation2 + $0x18] sm:$0xff] %vm2050, %v3961
      %3998 = vst.msk [vmem:[#allocation2 + $0x20] sm:$0xff] %vm2050, %v3962
      %3999 = vst.msk [vmem:[#allocation2 + $0x28] sm:$0xff] %vm2050, %v3963
      %4000 = vst.msk [vmem:[#allocation2 + $0x30] sm:$0xff] %vm2050, %v3964
      %4001 = vst.msk [vmem:[#allocation2 + $0x38] sm:$0xff] %vm2050, %v3965
      %4002 = vst.msk [vmem:[#allocation2 + $0x40] sm:$0xff] %vm2050, %v3966
      %4003 = vst.msk [vmem:[#allocation2 + $0x48] sm:$0xff] %vm2050, %v3967
      %4004 = vst.msk [vmem:[#allocation2 + $0x50] sm:$0xff] %vm2050, %v3968
      %4005 = vst.msk [vmem:[#allocation2 + $0x58] sm:$0xff] %vm2050, %v3969
      %4006 = vst.msk [vmem:[#allocation2 + $0x60] sm:$0xff] %vm2050, %v3970
      %4007 = vst.msk [vmem:[#allocation2 + $0x68] sm:$0xff] %vm2050, %v3971
      %4008 = vst.msk [vmem:[#allocation2 + $0x70] sm:$0xff] %vm2050, %v3972
      %4009 = vst.msk [vmem:[#allocation2 + $0x78] sm:$0xff] %vm2050, %v3973
      %4010 = vst.msk [vmem:[#allocation2 + $0x80] sm:$0xff] %vm2050, %v3974
      %4011 = vst.msk [vmem:[#allocation2 + $0x88] sm:$0xff] %vm2050, %v3975
      %4012 = vst.msk [vmem:[#allocation2 + $0x90] sm:$0xff] %vm2050, %v3976
      %4013 = vst.msk [vmem:[#allocation2 + $0x98] sm:$0xff] %vm2050, %v3977
      %4014 = vst.msk [vmem:[#allocation2 + $0xa0] sm:$0xff] %vm2050, %v3978
      %4015 = vst.msk [vmem:[#allocation2 + $0xa8] sm:$0xff] %vm2050, %v3979
      %4016 = vst.msk [vmem:[#allocation2 + $0xb0] sm:$0xff] %vm2050, %v3980
      %4017 = vst.msk [vmem:[#allocation2 + $0xb8] sm:$0xff] %vm2050, %v3981
      %4018 = vst.msk [vmem:[#allocation2 + $0xc0] sm:$0xff] %vm2050, %v3982
      %4019 = vst.msk [vmem:[#allocation2 + $0xc8] sm:$0xff] %vm2050, %v3983
      %4020 = vst.msk [vmem:[#allocation2 + $0xd0] sm:$0xff] %vm2050, %v3984
      %4021 = vst.msk [vmem:[#allocation2 + $0xd8] sm:$0xff] %vm2050, %v3985
      %4022 = vst.msk [vmem:[#allocation2 + $0xe0] sm:$0xff] %vm2050, %v3986
      %4023 = vst.msk [vmem:[#allocation2 + $0xe8] sm:$0xff] %vm2050, %v3987
      %4024 = vst.msk [vmem:[#allocation2 + $0xf0] sm:$0xff] %vm2050, %v3988
      %4025 = vst.msk [vmem:[#allocation2 + $0xf8] sm:$0xff] %vm2050, %v3989
      %4026 = vst.msk [vmem:[#allocation2 + $0x100] sm:$0xff] %vm2050, %v3990
      %4027 = vst.msk [vmem:[#allocation2 + $0x108] sm:$0xff] %vm2050, %v3991
      %4028 = vst.msk [vmem:[#allocation2 + $0x110] sm:$0xff] %vm2050, %v3992
      %4029 = vst.msk [vmem:[#allocation2 + $0x118] sm:$0xff] %vm2050, %v3993
      %v4030 = vld [vmem:[#allocation2] sm:$0xff]
      %v4031 = vld [vmem:[#allocation2 + $0x8] sm:$0xff]
      %v4032 = vld [vmem:[#allocation2 + $0x10] sm:$0xff]
      %v4033 = vld [vmem:[#allocation2 + $0x18] sm:$0xff]
      %v4034 = vld [vmem:[#allocation2 + $0x20] sm:$0xff]
      %v4035 = vld [vmem:[#allocation2 + $0x28] sm:$0xff]
      %v4036 = vld [vmem:[#allocation2 + $0x30] sm:$0xff]
      %v4037 = vld [vmem:[#allocation2 + $0x38] sm:$0xff]
      %v4038 = vld [vmem:[#allocation2 + $0x40] sm:$0xff]
      %v4039 = vld [vmem:[#allocation2 + $0x48] sm:$0xff]
      %v4040 = vld [vmem:[#allocation2 + $0x50] sm:$0xff]
      %v4041 = vld [vmem:[#allocation2 + $0x58] sm:$0xff]
      %v4042 = vld [vmem:[#allocation2 + $0x60] sm:$0xff]
      %v4043 = vld [vmem:[#allocation2 + $0x68] sm:$0xff]
      %v4044 = vld [vmem:[#allocation2 + $0x70] sm:$0xff]
      %v4045 = vld [vmem:[#allocation2 + $0x78] sm:$0xff]
      %v4046 = vld [vmem:[#allocation2 + $0x80] sm:$0xff]
      %v4047 = vld [vmem:[#allocation2 + $0x88] sm:$0xff]
      %v4048 = vld [vmem:[#allocation2 + $0x90] sm:$0xff]
      %v4049 = vld [vmem:[#allocation2 + $0x98] sm:$0xff]
      %v4050 = vld [vmem:[#allocation2 + $0xa0] sm:$0xff]
      %v4051 = vld [vmem:[#allocation2 + $0xa8] sm:$0xff]
      %v4052 = vld [vmem:[#allocation2 + $0xb0] sm:$0xff]
      %v4053 = vld [vmem:[#allocation2 + $0xb8] sm:$0xff]
      %v4054 = vld [vmem:[#allocation2 + $0xc0] sm:$0xff]
      %v4055 = vld [vmem:[#allocation2 + $0xc8] sm:$0xff]
      %v4056 = vld [vmem:[#allocation2 + $0xd0] sm:$0xff]
      %v4057 = vld [vmem:[#allocation2 + $0xd8] sm:$0xff]
      %v4058 = vld [vmem:[#allocation2 + $0xe0] sm:$0xff]
      %v4059 = vld [vmem:[#allocation2 + $0xe8] sm:$0xff]
      %v4060 = vld [vmem:[#allocation2 + $0xf0] sm:$0xff]
      %v4061 = vld [vmem:[#allocation2 + $0xf8] sm:$0xff]
      %v4062 = vld [vmem:[#allocation2 + $0x100] sm:$0xff]
      %v4063 = vld [vmem:[#allocation2 + $0x108] sm:$0xff]
      %v4064 = vld [vmem:[#allocation2 + $0x110] sm:$0xff]
      %v4065 = vld [vmem:[#allocation2 + $0x118] sm:$0xff]
      %s4066 = scalar_lea.vmem %s3, 10
      %v4067 = vld [vmem:[%s4066] sm:$0x3]
      %vm4068 = vcmask 1045504
      %v4069 = vrot.slane %v2030, 2
      %v4070 = vrot.slane %v2031, 2
      %v4071 = vsel %vm4068, %v4069, %v4070
      %v4072 = vrot.slane %v2032, 2
      %v4073 = vsel %vm4068, %v4070, %v4072
      %v4074 = vrot.slane %v2033, 2
      %v4075 = vsel %vm4068, %v4072, %v4074
      %v4076 = vrot.slane %v2034, 2
      %v4077 = vsel %vm4068, %v4074, %v4076
      %v4078 = vrot.slane %v2035, 2
      %v4079 = vsel %vm4068, %v4076, %v4078
      %v4080 = vrot.slane %v2036, 2
      %v4081 = vsel %vm4068, %v4078, %v4080
      %v4082 = vrot.slane %v2037, 2
      %v4083 = vsel %vm4068, %v4080, %v4082
      %v4084 = vrot.slane %v2038, 2
      %v4085 = vsel %vm4068, %v4082, %v4084
      %v4086 = vrot.slane %v2039, 2
      %v4087 = vsel %vm4068, %v4084, %v4086
      %v4088 = vrot.slane %v2040, 2
      %v4089 = vsel %vm4068, %v4086, %v4088
      %v4090 = vrot.slane %v2041, 2
      %v4091 = vsel %vm4068, %v4088, %v4090
      %v4092 = vrot.slane %v2042, 2
      %v4093 = vsel %vm4068, %v4090, %v4092
      %v4094 = vrot.slane %v2043, 2
      %v4095 = vsel %vm4068, %v4092, %v4094
      %v4096 = vrot.slane %v2044, 2
      %v4097 = vsel %vm4068, %v4094, %v4096
      %v4098 = vrot.slane %v2045, 2
      %v4099 = vsel %vm4068, %v4096, %v4098
      %v4100 = vrot.slane %v2046, 2
      %v4101 = vsel %vm4068, %v4098, %v4100
      %v4102 = vrot.slane %v2047, 2
      %v4103 = vsel %vm4068, %v4100, %v4102
      %v4104 = vrot.slane %v2048, 2
      %v4105 = vsel %vm4068, %v4102, %v4104
      %v4107 = vsel %vm2050, %v4071, 0
      %v4110 = vsel %vm2050, %v4073, 0
      %v4113 = vsel %vm2050, %v4075, 0
      %v4116 = vsel %vm2050, %v4077, 0
      %v4119 = vsel %vm2050, %v4079, 0
      %v4122 = vsel %vm2050, %v4081, 0
      %v4125 = vsel %vm2050, %v4083, 0
      %v4128 = vsel %vm2050, %v4085, 0
      %v4131 = vsel %vm2050, %v4087, 0
      %v4134 = vsel %vm2050, %v4089, 0
      %v4137 = vsel %vm2050, %v4091, 0
      %v4140 = vsel %vm2050, %v4093, 0
      %v4143 = vsel %vm2050, %v4095, 0
      %v4146 = vsel %vm2050, %v4097, 0
      %v4149 = vsel %vm2050, %v4099, 0
      %v4152 = vsel %vm2050, %v4101, 0
      %v4155 = vsel %vm2050, %v4103, 0
      %v4158 = vsel %vm2050, %v4105, 0
      %v4161 = vsel %vm2178, %v4067, 0
      %4163 = vmatprep.subr.bf16.mxu0 0
      %4164 = vmatpush1.bf16.msra.mxu0 %v4161
      %4165 = vmatprep.subr.bf16.mxu0 0
      %4166 = vmatpush1.bf16.msra.mxu0 0
      %4167 = vmatprep.subr.bf16.mxu0 0
      %4168 = vmatpush1.bf16.msra.mxu0 0
      %4169 = vmatprep.subr.bf16.mxu0 0
      %4170 = vmatpush1.bf16.msra.mxu0 0
      %4171 = vmatprep.subr.bf16.mxu0 0
      %4172 = vmatpush1.bf16.msra.mxu0 0
      %4173 = vmatprep.subr.bf16.mxu0 0
      %4174 = vmatpush1.bf16.msra.mxu0 0
      %4175 = vmatprep.subr.bf16.mxu0 0
      %4176 = vmatpush1.bf16.msra.mxu0 0
      %4177 = vmatprep.subr.bf16.mxu0 0
      %4178 = vmatpush1.bf16.msra.mxu0 0
      %4179 = vmatprep.subr.bf16.mxu0 0
      %4180 = vmatpush1.bf16.msra.mxu0 0
      %4181 = vmatprep.subr.bf16.mxu0 0
      %4182 = vmatpush1.bf16.msra.mxu0 0
      %4183 = vmatprep.subr.bf16.mxu0 0
      %4184 = vmatpush1.bf16.msra.mxu0 0
      %4185 = vmatprep.subr.bf16.mxu0 0
      %4186 = vmatpush1.bf16.msra.mxu0 0
      %4187 = vmatprep.subr.bf16.mxu0 0
      %4188 = vmatpush1.bf16.msra.mxu0 0
      %4189 = vmatprep.subr.bf16.mxu0 0
      %4190 = vmatpush1.bf16.msra.mxu0 0
      %4191 = vmatprep.subr.bf16.mxu0 0
      %4192 = vmatpush1.bf16.msra.mxu0 0
      %4193 = vmatprep.subr.bf16.mxu0 0
      %4194 = vmatpush1.bf16.msra.mxu0 0
      %4195 = vmatprep.mubr.bf16.mxu0 0
      %4196 = vmatmul.mubr.bf16.gmra.mrb[0].mxu0 %v4107
      %v4197 = vpop.f32.mrb[0].mxu0
      %v4198 = vadd.f32 0.0, %v4197
      %v4199 = vpop.f32.mrb[0].mxu0
      %v4200 = vpop.f32.mrb[0].mxu0
      %v4201 = vadd.f32 0.0, %v4200
      %v4202 = vpop.f32.mrb[0].mxu0
      %4203 = vmatprep.mubr.bf16.mxu0 0
      %4204 = vmatmul.mubr.bf16.gmra.mrb[0].mxu0 %v4110
      %v4205 = vpop.f32.mrb[0].mxu0
      %v4206 = vadd.f32 0.0, %v4205
      %v4207 = vpop.f32.mrb[0].mxu0
      %v4208 = vpop.f32.mrb[0].mxu0
      %v4209 = vadd.f32 0.0, %v4208
      %v4210 = vpop.f32.mrb[0].mxu0
      %4211 = vmatprep.mubr.bf16.mxu0 0
      %4212 = vmatmul.mubr.bf16.gmra.mrb[0].mxu0 %v4113
      %v4213 = vpop.f32.mrb[0].mxu0
      %v4214 = vadd.f32 0.0, %v4213
      %v4215 = vpop.f32.mrb[0].mxu0
      %v4216 = vpop.f32.mrb[0].mxu0
      %v4217 = vadd.f32 0.0, %v4216
      %v4218 = vpop.f32.mrb[0].mxu0
      %4219 = vmatprep.mubr.bf16.mxu0 0
      %4220 = vmatmul.mubr.bf16.gmra.mrb[0].mxu0 %v4116
      %v4221 = vpop.f32.mrb[0].mxu0
      %v4222 = vadd.f32 0.0, %v4221
      %v4223 = vpop.f32.mrb[0].mxu0
      %v4224 = vpop.f32.mrb[0].mxu0
      %v4225 = vadd.f32 0.0, %v4224
      %v4226 = vpop.f32.mrb[0].mxu0
      %4227 = vmatprep.mubr.bf16.mxu0 0
      %4228 = vmatmul.mubr.bf16.gmra.mrb[0].mxu0 %v4119
      %v4229 = vpop.f32.mrb[0].mxu0
      %v4230 = vadd.f32 0.0, %v4229
      %v4231 = vpop.f32.mrb[0].mxu0
      %v4232 = vpop.f32.mrb[0].mxu0
      %v4233 = vadd.f32 0.0, %v4232
      %v4234 = vpop.f32.mrb[0].mxu0
      %4235 = vmatprep.mubr.bf16.mxu0 0
      %4236 = vmatmul.mubr.bf16.gmra.mrb[0].mxu0 %v4122
      %v4237 = vpop.f32.mrb[0].mxu0
      %v4238 = vadd.f32 0.0, %v4237
      %v4239 = vpop.f32.mrb[0].mxu0
      %v4240 = vpop.f32.mrb[0].mxu0
      %v4241 = vadd.f32 0.0, %v4240
      %v4242 = vpop.f32.mrb[0].mxu0
      %4243 = vmatprep.mubr.bf16.mxu0 0
      %4244 = vmatmul.mubr.bf16.gmra.mrb[0].mxu0 %v4125
      %v4245 = vpop.f32.mrb[0].mxu0
      %v4246 = vadd.f32 0.0, %v4245
      %v4247 = vpop.f32.mrb[0].mxu0
      %v4248 = vpop.f32.mrb[0].mxu0
      %v4249 = vadd.f32 0.0, %v4248
      %v4250 = vpop.f32.mrb[0].mxu0
      %4251 = vmatprep.mubr.bf16.mxu0 0
      %4252 = vmatmul.mubr.bf16.gmra.mrb[0].mxu0 %v4128
      %v4253 = vpop.f32.mrb[0].mxu0
      %v4254 = vadd.f32 0.0, %v4253
      %v4255 = vpop.f32.mrb[0].mxu0
      %v4256 = vpop.f32.mrb[0].mxu0
      %v4257 = vadd.f32 0.0, %v4256
      %v4258 = vpop.f32.mrb[0].mxu0
      %4259 = vmatprep.mubr.bf16.mxu0 0
      %4260 = vmatmul.mubr.bf16.gmra.mrb[0].mxu0 %v4131
      %v4261 = vpop.f32.mrb[0].mxu0
      %v4262 = vadd.f32 0.0, %v4261
      %v4263 = vpop.f32.mrb[0].mxu0
      %v4264 = vpop.f32.mrb[0].mxu0
      %v4265 = vadd.f32 0.0, %v4264
      %v4266 = vpop.f32.mrb[0].mxu0
      %4267 = vmatprep.mubr.bf16.mxu0 0
      %4268 = vmatmul.mubr.bf16.gmra.mrb[0].mxu0 %v4134
      %v4269 = vpop.f32.mrb[0].mxu0
      %v4270 = vadd.f32 0.0, %v4269
      %v4271 = vpop.f32.mrb[0].mxu0
      %v4272 = vpop.f32.mrb[0].mxu0
      %v4273 = vadd.f32 0.0, %v4272
      %v4274 = vpop.f32.mrb[0].mxu0
      %4275 = vmatprep.mubr.bf16.mxu0 0
      %4276 = vmatmul.mubr.bf16.gmra.mrb[0].mxu0 %v4137
      %v4277 = vpop.f32.mrb[0].mxu0
      %v4278 = vadd.f32 0.0, %v4277
      %v4279 = vpop.f32.mrb[0].mxu0
      %v4280 = vpop.f32.mrb[0].mxu0
      %v4281 = vadd.f32 0.0, %v4280
      %v4282 = vpop.f32.mrb[0].mxu0
      %4283 = vmatprep.mubr.bf16.mxu0 0
      %4284 = vmatmul.mubr.bf16.gmra.mrb[0].mxu0 %v4140
      %v4285 = vpop.f32.mrb[0].mxu0
      %v4286 = vadd.f32 0.0, %v4285
      %v4287 = vpop.f32.mrb[0].mxu0
      %v4288 = vpop.f32.mrb[0].mxu0
      %v4289 = vadd.f32 0.0, %v4288
      %v4290 = vpop.f32.mrb[0].mxu0
      %4291 = vmatprep.mubr.bf16.mxu0 0
      %4292 = vmatmul.mubr.bf16.gmra.mrb[0].mxu0 %v4143
      %v4293 = vpop.f32.mrb[0].mxu0
      %v4294 = vadd.f32 0.0, %v4293
      %v4295 = vpop.f32.mrb[0].mxu0
      %v4296 = vpop.f32.mrb[0].mxu0
      %v4297 = vadd.f32 0.0, %v4296
      %v4298 = vpop.f32.mrb[0].mxu0
      %4299 = vmatprep.mubr.bf16.mxu0 0
      %4300 = vmatmul.mubr.bf16.gmra.mrb[0].mxu0 %v4146
      %v4301 = vpop.f32.mrb[0].mxu0
      %v4302 = vadd.f32 0.0, %v4301
      %v4303 = vpop.f32.mrb[0].mxu0
      %v4304 = vpop.f32.mrb[0].mxu0
      %v4305 = vadd.f32 0.0, %v4304
      %v4306 = vpop.f32.mrb[0].mxu0
      %4307 = vmatprep.mubr.bf16.mxu0 0
      %4308 = vmatmul.mubr.bf16.gmra.mrb[0].mxu0 %v4149
      %v4309 = vpop.f32.mrb[0].mxu0
      %v4310 = vadd.f32 0.0, %v4309
      %v4311 = vpop.f32.mrb[0].mxu0
      %v4312 = vpop.f32.mrb[0].mxu0
      %v4313 = vadd.f32 0.0, %v4312
      %v4314 = vpop.f32.mrb[0].mxu0
      %4315 = vmatprep.mubr.bf16.mxu0 0
      %4316 = vmatmul.mubr.bf16.gmra.mrb[0].mxu0 %v4152
      %v4317 = vpop.f32.mrb[0].mxu0
      %v4318 = vadd.f32 0.0, %v4317
      %v4319 = vpop.f32.mrb[0].mxu0
      %v4320 = vpop.f32.mrb[0].mxu0
      %v4321 = vadd.f32 0.0, %v4320
      %v4322 = vpop.f32.mrb[0].mxu0
      %4323 = vmatprep.mubr.bf16.mxu0 0
      %4324 = vmatmul.mubr.bf16.gmra.mrb[0].mxu0 %v4155
      %v4325 = vpop.f32.mrb[0].mxu0
      %v4326 = vadd.f32 0.0, %v4325
      %v4327 = vpop.f32.mrb[0].mxu0
      %v4328 = vpop.f32.mrb[0].mxu0
      %v4329 = vadd.f32 0.0, %v4328
      %v4330 = vpop.f32.mrb[0].mxu0
      %4331 = vmatprep.mubr.bf16.mxu0 0
      %4332 = vmatmul.mubr.bf16.gmra.mrb[0].mxu0 %v4158
      %v4333 = vpop.f32.mrb[0].mxu0
      %v4334 = vadd.f32 0.0, %v4333
      %v4335 = vpop.f32.mrb[0].mxu0
      %v4336 = vpop.f32.mrb[0].mxu0
      %v4337 = vadd.f32 0.0, %v4336
      %v4338 = vpop.f32.mrb[0].mxu0
      %4339 = vdwg.mxu0
      %v4340 = vadd.f32 %v4030, %v4198
      %v4341 = vadd.f32 %v4031, %v4201
      %v4342 = vadd.f32 %v4032, %v4206
      %v4343 = vadd.f32 %v4033, %v4209
      %v4344 = vadd.f32 %v4034, %v4214
      %v4345 = vadd.f32 %v4035, %v4217
      %v4346 = vadd.f32 %v4036, %v4222
      %v4347 = vadd.f32 %v4037, %v4225
      %v4348 = vadd.f32 %v4038, %v4230
      %v4349 = vadd.f32 %v4039, %v4233
      %v4350 = vadd.f32 %v4040, %v4238
      %v4351 = vadd.f32 %v4041, %v4241
      %v4352 = vadd.f32 %v4042, %v4246
      %v4353 = vadd.f32 %v4043, %v4249
      %v4354 = vadd.f32 %v4044, %v4254
      %v4355 = vadd.f32 %v4045, %v4257
      %v4356 = vadd.f32 %v4046, %v4262
      %v4357 = vadd.f32 %v4047, %v4265
      %v4358 = vadd.f32 %v4048, %v4270
      %v4359 = vadd.f32 %v4049, %v4273
      %v4360 = vadd.f32 %v4050, %v4278
      %v4361 = vadd.f32 %v4051, %v4281
      %v4362 = vadd.f32 %v4052, %v4286
      %v4363 = vadd.f32 %v4053, %v4289
      %v4364 = vadd.f32 %v4054, %v4294
      %v4365 = vadd.f32 %v4055, %v4297
      %v4366 = vadd.f32 %v4056, %v4302
      %v4367 = vadd.f32 %v4057, %v4305
      %v4368 = vadd.f32 %v4058, %v4310
      %v4369 = vadd.f32 %v4059, %v4313
      %v4370 = vadd.f32 %v4060, %v4318
      %v4371 = vadd.f32 %v4061, %v4321
      %v4372 = vadd.f32 %v4062, %v4326
      %v4373 = vadd.f32 %v4063, %v4329
      %v4374 = vadd.f32 %v4064, %v4334
      %v4375 = vadd.f32 %v4065, %v4337
      %4376 = vst.msk [vmem:[#allocation2] sm:$0xff] %vm2050, %v4340
      %4377 = vst.msk [vmem:[#allocation2 + $0x8] sm:$0xff] %vm2050, %v4341
      %4378 = vst.msk [vmem:[#allocation2 + $0x10] sm:$0xff] %vm2050, %v4342
      %4379 = vst.msk [vmem:[#allocation2 + $0x18] sm:$0xff] %vm2050, %v4343
      %4380 = vst.msk [vmem:[#allocation2 + $0x20] sm:$0xff] %vm2050, %v4344
      %4381 = vst.msk [vmem:[#allocation2 + $0x28] sm:$0xff] %vm2050, %v4345
      %4382 = vst.msk [vmem:[#allocation2 + $0x30] sm:$0xff] %vm2050, %v4346
      %4383 = vst.msk [vmem:[#allocation2 + $0x38] sm:$0xff] %vm2050, %v4347
      %4384 = vst.msk [vmem:[#allocation2 + $0x40] sm:$0xff] %vm2050, %v4348
      %4385 = vst.msk [vmem:[#allocation2 + $0x48] sm:$0xff] %vm2050, %v4349
      %4386 = vst.msk [vmem:[#allocation2 + $0x50] sm:$0xff] %vm2050, %v4350
      %4387 = vst.msk [vmem:[#allocation2 + $0x58] sm:$0xff] %vm2050, %v4351
      %4388 = vst.msk [vmem:[#allocation2 + $0x60] sm:$0xff] %vm2050, %v4352
      %4389 = vst.msk [vmem:[#allocation2 + $0x68] sm:$0xff] %vm2050, %v4353
      %4390 = vst.msk [vmem:[#allocation2 + $0x70] sm:$0xff] %vm2050, %v4354
      %4391 = vst.msk [vmem:[#allocation2 + $0x78] sm:$0xff] %vm2050, %v4355
      %4392 = vst.msk [vmem:[#allocation2 + $0x80] sm:$0xff] %vm2050, %v4356
      %4393 = vst.msk [vmem:[#allocation2 + $0x88] sm:$0xff] %vm2050, %v4357
      %4394 = vst.msk [vmem:[#allocation2 + $0x90] sm:$0xff] %vm2050, %v4358
      %4395 = vst.msk [vmem:[#allocation2 + $0x98] sm:$0xff] %vm2050, %v4359
      %4396 = vst.msk [vmem:[#allocation2 + $0xa0] sm:$0xff] %vm2050, %v4360
      %4397 = vst.msk [vmem:[#allocation2 + $0xa8] sm:$0xff] %vm2050, %v4361
      %4398 = vst.msk [vmem:[#allocation2 + $0xb0] sm:$0xff] %vm2050, %v4362
      %4399 = vst.msk [vmem:[#allocation2 + $0xb8] sm:$0xff] %vm2050, %v4363
      %4400 = vst.msk [vmem:[#allocation2 + $0xc0] sm:$0xff] %vm2050, %v4364
      %4401 = vst.msk [vmem:[#allocation2 + $0xc8] sm:$0xff] %vm2050, %v4365
      %4402 = vst.msk [vmem:[#allocation2 + $0xd0] sm:$0xff] %vm2050, %v4366
      %4403 = vst.msk [vmem:[#allocation2 + $0xd8] sm:$0xff] %vm2050, %v4367
      %4404 = vst.msk [vmem:[#allocation2 + $0xe0] sm:$0xff] %vm2050, %v4368
      %4405 = vst.msk [vmem:[#allocation2 + $0xe8] sm:$0xff] %vm2050, %v4369
      %4406 = vst.msk [vmem:[#allocation2 + $0xf0] sm:$0xff] %vm2050, %v4370
      %4407 = vst.msk [vmem:[#allocation2 + $0xf8] sm:$0xff] %vm2050, %v4371
      %4408 = vst.msk [vmem:[#allocation2 + $0x100] sm:$0xff] %vm2050, %v4372
      %4409 = vst.msk [vmem:[#allocation2 + $0x108] sm:$0xff] %vm2050, %v4373
      %4410 = vst.msk [vmem:[#allocation2 + $0x110] sm:$0xff] %vm2050, %v4374
      %4411 = vst.msk [vmem:[#allocation2 + $0x118] sm:$0xff] %vm2050, %v4375
      %v4412 = vld [vmem:[#allocation2] sm:$0xff]
      %v4413 = vld [vmem:[#allocation2 + $0x8] sm:$0xff]
      %v4414 = vld [vmem:[#allocation2 + $0x10] sm:$0xff]
      %v4415 = vld [vmem:[#allocation2 + $0x18] sm:$0xff]
      %v4416 = vld [vmem:[#allocation2 + $0x20] sm:$0xff]
      %v4417 = vld [vmem:[#allocation2 + $0x28] sm:$0xff]
      %v4418 = vld [vmem:[#allocation2 + $0x30] sm:$0xff]
      %v4419 = vld [vmem:[#allocation2 + $0x38] sm:$0xff]
      %v4420 = vld [vmem:[#allocation2 + $0x40] sm:$0xff]
      %v4421 = vld [vmem:[#allocation2 + $0x48] sm:$0xff]
      %v4422 = vld [vmem:[#allocation2 + $0x50] sm:$0xff]
      %v4423 = vld [vmem:[#allocation2 + $0x58] sm:$0xff]
      %v4424 = vld [vmem:[#allocation2 + $0x60] sm:$0xff]
      %v4425 = vld [vmem:[#allocation2 + $0x68] sm:$0xff]
      %v4426 = vld [vmem:[#allocation2 + $0x70] sm:$0xff]
      %v4427 = vld [vmem:[#allocation2 + $0x78] sm:$0xff]
      %v4428 = vld [vmem:[#allocation2 + $0x80] sm:$0xff]
      %v4429 = vld [vmem:[#allocation2 + $0x88] sm:$0xff]
      %v4430 = vld [vmem:[#allocation2 + $0x90] sm:$0xff]
      %v4431 = vld [vmem:[#allocation2 + $0x98] sm:$0xff]
      %v4432 = vld [vmem:[#allocation2 + $0xa0] sm:$0xff]
      %v4433 = vld [vmem:[#allocation2 + $0xa8] sm:$0xff]
      %v4434 = vld [vmem:[#allocation2 + $0xb0] sm:$0xff]
      %v4435 = vld [vmem:[#allocation2 + $0xb8] sm:$0xff]
      %v4436 = vld [vmem:[#allocation2 + $0xc0] sm:$0xff]
      %v4437 = vld [vmem:[#allocation2 + $0xc8] sm:$0xff]
      %v4438 = vld [vmem:[#allocation2 + $0xd0] sm:$0xff]
      %v4439 = vld [vmem:[#allocation2 + $0xd8] sm:$0xff]
      %v4440 = vld [vmem:[#allocation2 + $0xe0] sm:$0xff]
      %v4441 = vld [vmem:[#allocation2 + $0xe8] sm:$0xff]
      %v4442 = vld [vmem:[#allocation2 + $0xf0] sm:$0xff]
      %v4443 = vld [vmem:[#allocation2 + $0xf8] sm:$0xff]
      %v4444 = vld [vmem:[#allocation2 + $0x100] sm:$0xff]
      %v4445 = vld [vmem:[#allocation2 + $0x108] sm:$0xff]
      %v4446 = vld [vmem:[#allocation2 + $0x110] sm:$0xff]
      %v4447 = vld [vmem:[#allocation2 + $0x118] sm:$0xff]
      %s4448 = scalar_lea.vmem %s3, 12
      %v4449 = vld [vmem:[%s4448] sm:$0x3]
      %v4451 = vrot.slane %v2049, 2
      %v4452 = vsel %vm4068, %v4104, %v4451
      %v4454 = vsel %vm2050, %v4452, 0
      %v4457 = vsel %vm2178, %v4449, 0
      %4459 = vmatprep.subr.bf16.mxu0 0
      %4460 = vmatpush1.bf16.msra.mxu0 %v4457
      %4461 = vmatprep.subr.bf16.mxu0 0
      %4462 = vmatpush1.bf16.msra.mxu0 0
      %4463 = vmatprep.subr.bf16.mxu0 0
      %4464 = vmatpush1.bf16.msra.mxu0 0
      %4465 = vmatprep.subr.bf16.mxu0 0
      %4466 = vmatpush1.bf16.msra.mxu0 0
      %4467 = vmatprep.subr.bf16.mxu0 0
      %4468 = vmatpush1.bf16.msra.mxu0 0
      %4469 = vmatprep.subr.bf16.mxu0 0
      %4470 = vmatpush1.bf16.msra.mxu0 0
      %4471 = vmatprep.subr.bf16.mxu0 0
      %4472 = vmatpush1.bf16.msra.mxu0 0
      %4473 = vmatprep.subr.bf16.mxu0 0
      %4474 = vmatpush1.bf16.msra.mxu0 0
      %4475 = vmatprep.subr.bf16.mxu0 0
      %4476 = vmatpush1.bf16.msra.mxu0 0
      %4477 = vmatprep.subr.bf16.mxu0 0
      %4478 = vmatpush1.bf16.msra.mxu0 0
      %4479 = vmatprep.subr.bf16.mxu0 0
      %4480 = vmatpush1.bf16.msra.mxu0 0
      %4481 = vmatprep.subr.bf16.mxu0 0
      %4482 = vmatpush1.bf16.msra.mxu0 0
      %4483 = vmatprep.subr.bf16.mxu0 0
      %4484 = vmatpush1.bf16.msra.mxu0 0
      %4485 = vmatprep.subr.bf16.mxu0 0
      %4486 = vmatpush1.bf16.msra.mxu0 0
      %4487 = vmatprep.subr.bf16.mxu0 0
      %4488 = vmatpush1.bf16.msra.mxu0 0
      %4489 = vmatprep.subr.bf16.mxu0 0
      %4490 = vmatpush1.bf16.msra.mxu0 0
      %4491 = vmatprep.mubr.bf16.mxu0 0
      %4492 = vmatmul.mubr.bf16.gmra.mrb[0].mxu0 %v4110
      %v4493 = vpop.f32.mrb[0].mxu0
      %v4494 = vadd.f32 0.0, %v4493
      %v4495 = vpop.f32.mrb[0].mxu0
      %v4496 = vpop.f32.mrb[0].mxu0
      %v4497 = vadd.f32 0.0, %v4496
      %v4498 = vpop.f32.mrb[0].mxu0
      %4499 = vmatprep.mubr.bf16.mxu0 0
      %4500 = vmatmul.mubr.bf16.gmra.mrb[0].mxu0 %v4113
      %v4501 = vpop.f32.mrb[0].mxu0
      %v4502 = vadd.f32 0.0, %v4501
      %v4503 = vpop.f32.mrb[0].mxu0
      %v4504 = vpop.f32.mrb[0].mxu0
      %v4505 = vadd.f32 0.0, %v4504
      %v4506 = vpop.f32.mrb[0].mxu0
      %4507 = vmatprep.mubr.bf16.mxu0 0
      %4508 = vmatmul.mubr.bf16.gmra.mrb[0].mxu0 %v4116
      %v4509 = vpop.f32.mrb[0].mxu0
      %v4510 = vadd.f32 0.0, %v4509
      %v4511 = vpop.f32.mrb[0].mxu0
      %v4512 = vpop.f32.mrb[0].mxu0
      %v4513 = vadd.f32 0.0, %v4512
      %v4514 = vpop.f32.mrb[0].mxu0
      %4515 = vmatprep.mubr.bf16.mxu0 0
      %4516 = vmatmul.mubr.bf16.gmra.mrb[0].mxu0 %v4119
      %v4517 = vpop.f32.mrb[0].mxu0
      %v4518 = vadd.f32 0.0, %v4517
      %v4519 = vpop.f32.mrb[0].mxu0
      %v4520 = vpop.f32.mrb[0].mxu0
      %v4521 = vadd.f32 0.0, %v4520
      %v4522 = vpop.f32.mrb[0].mxu0
      %4523 = vmatprep.mubr.bf16.mxu0 0
      %4524 = vmatmul.mubr.bf16.gmra.mrb[0].mxu0 %v4122
      %v4525 = vpop.f32.mrb[0].mxu0
      %v4526 = vadd.f32 0.0, %v4525
      %v4527 = vpop.f32.mrb[0].mxu0
      %v4528 = vpop.f32.mrb[0].mxu0
      %v4529 = vadd.f32 0.0, %v4528
      %v4530 = vpop.f32.mrb[0].mxu0
      %4531 = vmatprep.mubr.bf16.mxu0 0
      %4532 = vmatmul.mubr.bf16.gmra.mrb[0].mxu0 %v4125
      %v4533 = vpop.f32.mrb[0].mxu0
      %v4534 = vadd.f32 0.0, %v4533
      %v4535 = vpop.f32.mrb[0].mxu0
      %v4536 = vpop.f32.mrb[0].mxu0
      %v4537 = vadd.f32 0.0, %v4536
      %v4538 = vpop.f32.mrb[0].mxu0
      %4539 = vmatprep.mubr.bf16.mxu0 0
      %4540 = vmatmul.mubr.bf16.gmra.mrb[0].mxu0 %v4128
      %v4541 = vpop.f32.mrb[0].mxu0
      %v4542 = vadd.f32 0.0, %v4541
      %v4543 = vpop.f32.mrb[0].mxu0
      %v4544 = vpop.f32.mrb[0].mxu0
      %v4545 = vadd.f32 0.0, %v4544
      %v4546 = vpop.f32.mrb[0].mxu0
      %4547 = vmatprep.mubr.bf16.mxu0 0
      %4548 = vmatmul.mubr.bf16.gmra.mrb[0].mxu0 %v4131
      %v4549 = vpop.f32.mrb[0].mxu0
      %v4550 = vadd.f32 0.0, %v4549
      %v4551 = vpop.f32.mrb[0].mxu0
      %v4552 = vpop.f32.mrb[0].mxu0
      %v4553 = vadd.f32 0.0, %v4552
      %v4554 = vpop.f32.mrb[0].mxu0
      %4555 = vmatprep.mubr.bf16.mxu0 0
      %4556 = vmatmul.mubr.bf16.gmra.mrb[0].mxu0 %v4134
      %v4557 = vpop.f32.mrb[0].mxu0
      %v4558 = vadd.f32 0.0, %v4557
      %v4559 = vpop.f32.mrb[0].mxu0
      %v4560 = vpop.f32.mrb[0].mxu0
      %v4561 = vadd.f32 0.0, %v4560
      %v4562 = vpop.f32.mrb[0].mxu0
      %4563 = vmatprep.mubr.bf16.mxu0 0
      %4564 = vmatmul.mubr.bf16.gmra.mrb[0].mxu0 %v4137
      %v4565 = vpop.f32.mrb[0].mxu0
      %v4566 = vadd.f32 0.0, %v4565
      %v4567 = vpop.f32.mrb[0].mxu0
      %v4568 = vpop.f32.mrb[0].mxu0
      %v4569 = vadd.f32 0.0, %v4568
      %v4570 = vpop.f32.mrb[0].mxu0
      %4571 = vmatprep.mubr.bf16.mxu0 0
      %4572 = vmatmul.mubr.bf16.gmra.mrb[0].mxu0 %v4140
      %v4573 = vpop.f32.mrb[0].mxu0
      %v4574 = vadd.f32 0.0, %v4573
      %v4575 = vpop.f32.mrb[0].mxu0
      %v4576 = vpop.f32.mrb[0].mxu0
      %v4577 = vadd.f32 0.0, %v4576
      %v4578 = vpop.f32.mrb[0].mxu0
      %4579 = vmatprep.mubr.bf16.mxu0 0
      %4580 = vmatmul.mubr.bf16.gmra.mrb[0].mxu0 %v4143
      %v4581 = vpop.f32.mrb[0].mxu0
      %v4582 = vadd.f32 0.0, %v4581
      %v4583 = vpop.f32.mrb[0].mxu0
      %v4584 = vpop.f32.mrb[0].mxu0
      %v4585 = vadd.f32 0.0, %v4584
      %v4586 = vpop.f32.mrb[0].mxu0
      %4587 = vmatprep.mubr.bf16.mxu0 0
      %4588 = vmatmul.mubr.bf16.gmra.mrb[0].mxu0 %v4146
      %v4589 = vpop.f32.mrb[0].mxu0
      %v4590 = vadd.f32 0.0, %v4589
      %v4591 = vpop.f32.mrb[0].mxu0
      %v4592 = vpop.f32.mrb[0].mxu0
      %v4593 = vadd.f32 0.0, %v4592
      %v4594 = vpop.f32.mrb[0].mxu0
      %4595 = vmatprep.mubr.bf16.mxu0 0
      %4596 = vmatmul.mubr.bf16.gmra.mrb[0].mxu0 %v4149
      %v4597 = vpop.f32.mrb[0].mxu0
      %v4598 = vadd.f32 0.0, %v4597
      %v4599 = vpop.f32.mrb[0].mxu0
      %v4600 = vpop.f32.mrb[0].mxu0
      %v4601 = vadd.f32 0.0, %v4600
      %v4602 = vpop.f32.mrb[0].mxu0
      %4603 = vmatprep.mubr.bf16.mxu0 0
      %4604 = vmatmul.mubr.bf16.gmra.mrb[0].mxu0 %v4152
      %v4605 = vpop.f32.mrb[0].mxu0
      %v4606 = vadd.f32 0.0, %v4605
      %v4607 = vpop.f32.mrb[0].mxu0
      %v4608 = vpop.f32.mrb[0].mxu0
      %v4609 = vadd.f32 0.0, %v4608
      %v4610 = vpop.f32.mrb[0].mxu0
      %4611 = vmatprep.mubr.bf16.mxu0 0
      %4612 = vmatmul.mubr.bf16.gmra.mrb[0].mxu0 %v4155
      %v4613 = vpop.f32.mrb[0].mxu0
      %v4614 = vadd.f32 0.0, %v4613
      %v4615 = vpop.f32.mrb[0].mxu0
      %v4616 = vpop.f32.mrb[0].mxu0
      %v4617 = vadd.f32 0.0, %v4616
      %v4618 = vpop.f32.mrb[0].mxu0
      %4619 = vmatprep.mubr.bf16.mxu0 0
      %4620 = vmatmul.mubr.bf16.gmra.mrb[0].mxu0 %v4158
      %v4621 = vpop.f32.mrb[0].mxu0
      %v4622 = vadd.f32 0.0, %v4621
      %v4623 = vpop.f32.mrb[0].mxu0
      %v4624 = vpop.f32.mrb[0].mxu0
      %v4625 = vadd.f32 0.0, %v4624
      %v4626 = vpop.f32.mrb[0].mxu0
      %4627 = vmatprep.mubr.bf16.mxu0 0
      %4628 = vmatmul.mubr.bf16.gmra.mrb[0].mxu0 %v4454
      %v4629 = vpop.f32.mrb[0].mxu0
      %v4630 = vadd.f32 0.0, %v4629
      %v4631 = vpop.f32.mrb[0].mxu0
      %v4632 = vpop.f32.mrb[0].mxu0
      %v4633 = vadd.f32 0.0, %v4632
      %v4634 = vpop.f32.mrb[0].mxu0
      %4635 = vdwg.mxu0
      %v4636 = vadd.f32 %v4412, %v4494
      %v4637 = vadd.f32 %v4413, %v4497
      %v4638 = vadd.f32 %v4414, %v4502
      %v4639 = vadd.f32 %v4415, %v4505
      %v4640 = vadd.f32 %v4416, %v4510
      %v4641 = vadd.f32 %v4417, %v4513
      %v4642 = vadd.f32 %v4418, %v4518
      %v4643 = vadd.f32 %v4419, %v4521
      %v4644 = vadd.f32 %v4420, %v4526
      %v4645 = vadd.f32 %v4421, %v4529
      %v4646 = vadd.f32 %v4422, %v4534
      %v4647 = vadd.f32 %v4423, %v4537
      %v4648 = vadd.f32 %v4424, %v4542
      %v4649 = vadd.f32 %v4425, %v4545
      %v4650 = vadd.f32 %v4426, %v4550
      %v4651 = vadd.f32 %v4427, %v4553
      %v4652 = vadd.f32 %v4428, %v4558
      %v4653 = vadd.f32 %v4429, %v4561
      %v4654 = vadd.f32 %v4430, %v4566
      %v4655 = vadd.f32 %v4431, %v4569
      %v4656 = vadd.f32 %v4432, %v4574
      %v4657 = vadd.f32 %v4433, %v4577
      %v4658 = vadd.f32 %v4434, %v4582
      %v4659 = vadd.f32 %v4435, %v4585
      %v4660 = vadd.f32 %v4436, %v4590
      %v4661 = vadd.f32 %v4437, %v4593
      %v4662 = vadd.f32 %v4438, %v4598
      %v4663 = vadd.f32 %v4439, %v4601
      %v4664 = vadd.f32 %v4440, %v4606
      %v4665 = vadd.f32 %v4441, %v4609
      %v4666 = vadd.f32 %v4442, %v4614
      %v4667 = vadd.f32 %v4443, %v4617
      %v4668 = vadd.f32 %v4444, %v4622
      %v4669 = vadd.f32 %v4445, %v4625
      %v4670 = vadd.f32 %v4446, %v4630
      %v4671 = vadd.f32 %v4447, %v4633
      %4672 = vst.msk [vmem:[#allocation2] sm:$0xff] %vm2050, %v4636
      %4673 = vst.msk [vmem:[#allocation2 + $0x8] sm:$0xff] %vm2050, %v4637
      %4674 = vst.msk [vmem:[#allocation2 + $0x10] sm:$0xff] %vm2050, %v4638
      %4675 = vst.msk [vmem:[#allocation2 + $0x18] sm:$0xff] %vm2050, %v4639
      %4676 = vst.msk [vmem:[#allocation2 + $0x20] sm:$0xff] %vm2050, %v4640
      %4677 = vst.msk [vmem:[#allocation2 + $0x28] sm:$0xff] %vm2050, %v4641
      %4678 = vst.msk [vmem:[#allocation2 + $0x30] sm:$0xff] %vm2050, %v4642
      %4679 = vst.msk [vmem:[#allocation2 + $0x38] sm:$0xff] %vm2050, %v4643
      %4680 = vst.msk [vmem:[#allocation2 + $0x40] sm:$0xff] %vm2050, %v4644
      %4681 = vst.msk [vmem:[#allocation2 + $0x48] sm:$0xff] %vm2050, %v4645
      %4682 = vst.msk [vmem:[#allocation2 + $0x50] sm:$0xff] %vm2050, %v4646
      %4683 = vst.msk [vmem:[#allocation2 + $0x58] sm:$0xff] %vm2050, %v4647
      %4684 = vst.msk [vmem:[#allocation2 + $0x60] sm:$0xff] %vm2050, %v4648
      %4685 = vst.msk [vmem:[#allocation2 + $0x68] sm:$0xff] %vm2050, %v4649
      %4686 = vst.msk [vmem:[#allocation2 + $0x70] sm:$0xff] %vm2050, %v4650
      %4687 = vst.msk [vmem:[#allocation2 + $0x78] sm:$0xff] %vm2050, %v4651
      %4688 = vst.msk [vmem:[#allocation2 + $0x80] sm:$0xff] %vm2050, %v4652
      %4689 = vst.msk [vmem:[#allocation2 + $0x88] sm:$0xff] %vm2050, %v4653
      %4690 = vst.msk [vmem:[#allocation2 + $0x90] sm:$0xff] %vm2050, %v4654
      %4691 = vst.msk [vmem:[#allocation2 + $0x98] sm:$0xff] %vm2050, %v4655
      %4692 = vst.msk [vmem:[#allocation2 + $0xa0] sm:$0xff] %vm2050, %v4656
      %4693 = vst.msk [vmem:[#allocation2 + $0xa8] sm:$0xff] %vm2050, %v4657
      %4694 = vst.msk [vmem:[#allocation2 + $0xb0] sm:$0xff] %vm2050, %v4658
      %4695 = vst.msk [vmem:[#allocation2 + $0xb8] sm:$0xff] %vm2050, %v4659
      %4696 = vst.msk [vmem:[#allocation2 + $0xc0] sm:$0xff] %vm2050, %v4660
      %4697 = vst.msk [vmem:[#allocation2 + $0xc8] sm:$0xff] %vm2050, %v4661
      %4698 = vst.msk [vmem:[#allocation2 + $0xd0] sm:$0xff] %vm2050, %v4662
      %4699 = vst.msk [vmem:[#allocation2 + $0xd8] sm:$0xff] %vm2050, %v4663
      %4700 = vst.msk [vmem:[#allocation2 + $0xe0] sm:$0xff] %vm2050, %v4664
      %4701 = vst.msk [vmem:[#allocation2 + $0xe8] sm:$0xff] %vm2050, %v4665
      %4702 = vst.msk [vmem:[#allocation2 + $0xf0] sm:$0xff] %vm2050, %v4666
      %4703 = vst.msk [vmem:[#allocation2 + $0xf8] sm:$0xff] %vm2050, %v4667
      %4704 = vst.msk [vmem:[#allocation2 + $0x100] sm:$0xff] %vm2050, %v4668
      %4705 = vst.msk [vmem:[#allocation2 + $0x108] sm:$0xff] %vm2050, %v4669
      %4706 = vst.msk [vmem:[#allocation2 + $0x110] sm:$0xff] %vm2050, %v4670
      %4707 = vst.msk [vmem:[#allocation2 + $0x118] sm:$0xff] %vm2050, %v4671
      %v4708 = vld [vmem:[#allocation2] sm:$0xff]
      %v4709 = vld [vmem:[#allocation2 + $0x8] sm:$0xff]
      %v4710 = vld [vmem:[#allocation2 + $0x10] sm:$0xff]
      %v4711 = vld [vmem:[#allocation2 + $0x18] sm:$0xff]
      %v4712 = vld [vmem:[#allocation2 + $0x20] sm:$0xff]
      %v4713 = vld [vmem:[#allocation2 + $0x28] sm:$0xff]
      %v4714 = vld [vmem:[#allocation2 + $0x30] sm:$0xff]
      %v4715 = vld [vmem:[#allocation2 + $0x38] sm:$0xff]
      %v4716 = vld [vmem:[#allocation2 + $0x40] sm:$0xff]
      %v4717 = vld [vmem:[#allocation2 + $0x48] sm:$0xff]
      %v4718 = vld [vmem:[#allocation2 + $0x50] sm:$0xff]
      %v4719 = vld [vmem:[#allocation2 + $0x58] sm:$0xff]
      %v4720 = vld [vmem:[#allocation2 + $0x60] sm:$0xff]
      %v4721 = vld [vmem:[#allocation2 + $0x68] sm:$0xff]
      %v4722 = vld [vmem:[#allocation2 + $0x70] sm:$0xff]
      %v4723 = vld [vmem:[#allocation2 + $0x78] sm:$0xff]
      %v4724 = vld [vmem:[#allocation2 + $0x80] sm:$0xff]
      %v4725 = vld [vmem:[#allocation2 + $0x88] sm:$0xff]
      %v4726 = vld [vmem:[#allocation2 + $0x90] sm:$0xff]
      %v4727 = vld [vmem:[#allocation2 + $0x98] sm:$0xff]
      %v4728 = vld [vmem:[#allocation2 + $0xa0] sm:$0xff]
      %v4729 = vld [vmem:[#allocation2 + $0xa8] sm:$0xff]
      %v4730 = vld [vmem:[#allocation2 + $0xb0] sm:$0xff]
      %v4731 = vld [vmem:[#allocation2 + $0xb8] sm:$0xff]
      %v4732 = vld [vmem:[#allocation2 + $0xc0] sm:$0xff]
      %v4733 = vld [vmem:[#allocation2 + $0xc8] sm:$0xff]
      %v4734 = vld [vmem:[#allocation2 + $0xd0] sm:$0xff]
      %v4735 = vld [vmem:[#allocation2 + $0xd8] sm:$0xff]
      %v4736 = vld [vmem:[#allocation2 + $0xe0] sm:$0xff]
      %v4737 = vld [vmem:[#allocation2 + $0xe8] sm:$0xff]
      %v4738 = vld [vmem:[#allocation2 + $0xf0] sm:$0xff]
      %v4739 = vld [vmem:[#allocation2 + $0xf8] sm:$0xff]
      %v4740 = vld [vmem:[#allocation2 + $0x100] sm:$0xff]
      %v4741 = vld [vmem:[#allocation2 + $0x108] sm:$0xff]
      %v4742 = vld [vmem:[#allocation2 + $0x110] sm:$0xff]
      %v4743 = vld [vmem:[#allocation2 + $0x118] sm:$0xff]
      %s4744 = scalar_lea.vmem %s3, 14
      %v4745 = vld [vmem:[%s4744] sm:$0x3]
      %vm4746 = vsmask.f32 5376
      %v4747 = vrot.slane %v2487, 2
      %v4748 = vrot.slane %v2483, 3
      %v4749 = vor.u32 %v4747, %v4748
      %v4750 = vrot.slane %v2494, 2
      %v4751 = vrot.slane %v2490, 3
      %v4752 = vor.u32 %v4750, %v4751
      %v4753 = vsel %vm4746, %v4749, %v4752
      %v4754 = vrot.slane %v2501, 2
      %v4755 = vrot.slane %v2497, 3
      %v4756 = vor.u32 %v4754, %v4755
      %v4757 = vsel %vm4746, %v4752, %v4756
      %v4758 = vrot.slane %v2508, 2
      %v4759 = vrot.slane %v2504, 3
      %v4760 = vor.u32 %v4758, %v4759
      %v4761 = vsel %vm4746, %v4756, %v4760
      %v4762 = vrot.slane %v2515, 2
      %v4763 = vrot.slane %v2511, 3
      %v4764 = vor.u32 %v4762, %v4763
      %v4765 = vsel %vm4746, %v4760, %v4764
      %v4766 = vrot.slane %v2522, 2
      %v4767 = vrot.slane %v2518, 3
      %v4768 = vor.u32 %v4766, %v4767
      %v4769 = vsel %vm4746, %v4764, %v4768
      %v4770 = vrot.slane %v2529, 2
      %v4771 = vrot.slane %v2525, 3
      %v4772 = vor.u32 %v4770, %v4771
      %v4773 = vsel %vm4746, %v4768, %v4772
      %v4774 = vrot.slane %v2536, 2
      %v4775 = vrot.slane %v2532, 3
      %v4776 = vor.u32 %v4774, %v4775
      %v4777 = vsel %vm4746, %v4772, %v4776
      %v4778 = vrot.slane %v2543, 2
      %v4779 = vrot.slane %v2539, 3
      %v4780 = vor.u32 %v4778, %v4779
      %v4781 = vsel %vm4746, %v4776, %v4780
      %v4782 = vrot.slane %v2550, 2
      %v4783 = vrot.slane %v2546, 3
      %v4784 = vor.u32 %v4782, %v4783
      %v4785 = vsel %vm4746, %v4780, %v4784
      %v4786 = vrot.slane %v2557, 2
      %v4787 = vrot.slane %v2553, 3
      %v4788 = vor.u32 %v4786, %v4787
      %v4789 = vsel %vm4746, %v4784, %v4788
      %v4790 = vrot.slane %v2564, 2
      %v4791 = vrot.slane %v2560, 3
      %v4792 = vor.u32 %v4790, %v4791
      %v4793 = vsel %vm4746, %v4788, %v4792
      %v4794 = vrot.slane %v2571, 2
      %v4795 = vrot.slane %v2567, 3
      %v4796 = vor.u32 %v4794, %v4795
      %v4797 = vsel %vm4746, %v4792, %v4796
      %v4798 = vrot.slane %v2578, 2
      %v4799 = vrot.slane %v2574, 3
      %v4800 = vor.u32 %v4798, %v4799
      %v4801 = vsel %vm4746, %v4796, %v4800
      %v4802 = vrot.slane %v2585, 2
      %v4803 = vrot.slane %v2581, 3
      %v4804 = vor.u32 %v4802, %v4803
      %v4805 = vsel %vm4746, %v4800, %v4804
      %v4806 = vrot.slane %v2592, 2
      %v4807 = vrot.slane %v2588, 3
      %v4808 = vor.u32 %v4806, %v4807
      %v4809 = vsel %vm4746, %v4804, %v4808
      %v4810 = vrot.slane %v3709, 2
      %v4811 = vrot.slane %v2596, 3
      %v4812 = vor.u32 %v4810, %v4811
      %v4813 = vsel %vm4746, %v4808, %v4812
      %v4814 = vrot.slane %v3716, 2
      %v4815 = vrot.slane %v3719, 3
      %v4816 = vor.u32 %v4814, %v4815
      %v4817 = vsel %vm4746, %v4812, %v4816
      %v4819 = vshrl.u32 %v2049, 16
      %v4821 = vrot.slane %v4819, 2
      %v4822 = vshll.u32 %v2049, 16
      %v4824 = vrot.slane %v4822, 3
      %v4825 = vor.u32 %v4821, %v4824
      %v4826 = vsel %vm4746, %v4816, %v4825
      %v4828 = vsel %vm2050, %v4753, 0
      %v4831 = vsel %vm2050, %v4757, 0
      %v4834 = vsel %vm2050, %v4761, 0
      %v4837 = vsel %vm2050, %v4765, 0
      %v4840 = vsel %vm2050, %v4769, 0
      %v4843 = vsel %vm2050, %v4773, 0
      %v4846 = vsel %vm2050, %v4777, 0
      %v4849 = vsel %vm2050, %v4781, 0
      %v4852 = vsel %vm2050, %v4785, 0
      %v4855 = vsel %vm2050, %v4789, 0
      %v4858 = vsel %vm2050, %v4793, 0
      %v4861 = vsel %vm2050, %v4797, 0
      %v4864 = vsel %vm2050, %v4801, 0
      %v4867 = vsel %vm2050, %v4805, 0
      %v4870 = vsel %vm2050, %v4809, 0
      %v4873 = vsel %vm2050, %v4813, 0
      %v4876 = vsel %vm2050, %v4817, 0
      %v4879 = vsel %vm2050, %v4826, 0
      %v4882 = vsel %vm2178, %v4745, 0
      %4884 = vmatprep.subr.bf16.mxu0 0
      %4885 = vmatpush1.bf16.msra.mxu0 %v4882
      %4886 = vmatprep.subr.bf16.mxu0 0
      %4887 = vmatpush1.bf16.msra.mxu0 0
      %4888 = vmatprep.subr.bf16.mxu0 0
      %4889 = vmatpush1.bf16.msra.mxu0 0
      %4890 = vmatprep.subr.bf16.mxu0 0
      %4891 = vmatpush1.bf16.msra.mxu0 0
      %4892 = vmatprep.subr.bf16.mxu0 0
      %4893 = vmatpush1.bf16.msra.mxu0 0
      %4894 = vmatprep.subr.bf16.mxu0 0
      %4895 = vmatpush1.bf16.msra.mxu0 0
      %4896 = vmatprep.subr.bf16.mxu0 0
      %4897 = vmatpush1.bf16.msra.mxu0 0
      %4898 = vmatprep.subr.bf16.mxu0 0
      %4899 = vmatpush1.bf16.msra.mxu0 0
      %4900 = vmatprep.subr.bf16.mxu0 0
      %4901 = vmatpush1.bf16.msra.mxu0 0
      %4902 = vmatprep.subr.bf16.mxu0 0
      %4903 = vmatpush1.bf16.msra.mxu0 0
      %4904 = vmatprep.subr.bf16.mxu0 0
      %4905 = vmatpush1.bf16.msra.mxu0 0
      %4906 = vmatprep.subr.bf16.mxu0 0
      %4907 = vmatpush1.bf16.msra.mxu0 0
      %4908 = vmatprep.subr.bf16.mxu0 0
      %4909 = vmatpush1.bf16.msra.mxu0 0
      %4910 = vmatprep.subr.bf16.mxu0 0
      %4911 = vmatpush1.bf16.msra.mxu0 0
      %4912 = vmatprep.subr.bf16.mxu0 0
      %4913 = vmatpush1.bf16.msra.mxu0 0
      %4914 = vmatprep.subr.bf16.mxu0 0
      %4915 = vmatpush1.bf16.msra.mxu0 0
      %4916 = vmatprep.mubr.bf16.mxu0 0
      %4917 = vmatmul.mubr.bf16.gmra.mrb[0].mxu0 %v4828
      %v4918 = vpop.f32.mrb[0].mxu0
      %v4919 = vadd.f32 0.0, %v4918
      %v4920 = vpop.f32.mrb[0].mxu0
      %v4921 = vpop.f32.mrb[0].mxu0
      %v4922 = vadd.f32 0.0, %v4921
      %v4923 = vpop.f32.mrb[0].mxu0
      %4924 = vmatprep.mubr.bf16.mxu0 0
      %4925 = vmatmul.mubr.bf16.gmra.mrb[0].mxu0 %v4831
      %v4926 = vpop.f32.mrb[0].mxu0
      %v4927 = vadd.f32 0.0, %v4926
      %v4928 = vpop.f32.mrb[0].mxu0
      %v4929 = vpop.f32.mrb[0].mxu0
      %v4930 = vadd.f32 0.0, %v4929
      %v4931 = vpop.f32.mrb[0].mxu0
      %4932 = vmatprep.mubr.bf16.mxu0 0
      %4933 = vmatmul.mubr.bf16.gmra.mrb[0].mxu0 %v4834
      %v4934 = vpop.f32.mrb[0].mxu0
      %v4935 = vadd.f32 0.0, %v4934
      %v4936 = vpop.f32.mrb[0].mxu0
      %v4937 = vpop.f32.mrb[0].mxu0
      %v4938 = vadd.f32 0.0, %v4937
      %v4939 = vpop.f32.mrb[0].mxu0
      %4940 = vmatprep.mubr.bf16.mxu0 0
      %4941 = vmatmul.mubr.bf16.gmra.mrb[0].mxu0 %v4837
      %v4942 = vpop.f32.mrb[0].mxu0
      %v4943 = vadd.f32 0.0, %v4942
      %v4944 = vpop.f32.mrb[0].mxu0
      %v4945 = vpop.f32.mrb[0].mxu0
      %v4946 = vadd.f32 0.0, %v4945
      %v4947 = vpop.f32.mrb[0].mxu0
      %4948 = vmatprep.mubr.bf16.mxu0 0
      %4949 = vmatmul.mubr.bf16.gmra.mrb[0].mxu0 %v4840
      %v4950 = vpop.f32.mrb[0].mxu0
      %v4951 = vadd.f32 0.0, %v4950
      %v4952 = vpop.f32.mrb[0].mxu0
      %v4953 = vpop.f32.mrb[0].mxu0
      %v4954 = vadd.f32 0.0, %v4953
      %v4955 = vpop.f32.mrb[0].mxu0
      %4956 = vmatprep.mubr.bf16.mxu0 0
      %4957 = vmatmul.mubr.bf16.gmra.mrb[0].mxu0 %v4843
      %v4958 = vpop.f32.mrb[0].mxu0
      %v4959 = vadd.f32 0.0, %v4958
      %v4960 = vpop.f32.mrb[0].mxu0
      %v4961 = vpop.f32.mrb[0].mxu0
      %v4962 = vadd.f32 0.0, %v4961
      %v4963 = vpop.f32.mrb[0].mxu0
      %4964 = vmatprep.mubr.bf16.mxu0 0
      %4965 = vmatmul.mubr.bf16.gmra.mrb[0].mxu0 %v4846
      %v4966 = vpop.f32.mrb[0].mxu0
      %v4967 = vadd.f32 0.0, %v4966
      %v4968 = vpop.f32.mrb[0].mxu0
      %v4969 = vpop.f32.mrb[0].mxu0
      %v4970 = vadd.f32 0.0, %v4969
      %v4971 = vpop.f32.mrb[0].mxu0
      %4972 = vmatprep.mubr.bf16.mxu0 0
      %4973 = vmatmul.mubr.bf16.gmra.mrb[0].mxu0 %v4849
      %v4974 = vpop.f32.mrb[0].mxu0
      %v4975 = vadd.f32 0.0, %v4974
      %v4976 = vpop.f32.mrb[0].mxu0
      %v4977 = vpop.f32.mrb[0].mxu0
      %v4978 = vadd.f32 0.0, %v4977
      %v4979 = vpop.f32.mrb[0].mxu0
      %4980 = vmatprep.mubr.bf16.mxu0 0
      %4981 = vmatmul.mubr.bf16.gmra.mrb[0].mxu0 %v4852
      %v4982 = vpop.f32.mrb[0].mxu0
      %v4983 = vadd.f32 0.0, %v4982
      %v4984 = vpop.f32.mrb[0].mxu0
      %v4985 = vpop.f32.mrb[0].mxu0
      %v4986 = vadd.f32 0.0, %v4985
      %v4987 = vpop.f32.mrb[0].mxu0
      %4988 = vmatprep.mubr.bf16.mxu0 0
      %4989 = vmatmul.mubr.bf16.gmra.mrb[0].mxu0 %v4855
      %v4990 = vpop.f32.mrb[0].mxu0
      %v4991 = vadd.f32 0.0, %v4990
      %v4992 = vpop.f32.mrb[0].mxu0
      %v4993 = vpop.f32.mrb[0].mxu0
      %v4994 = vadd.f32 0.0, %v4993
      %v4995 = vpop.f32.mrb[0].mxu0
      %4996 = vmatprep.mubr.bf16.mxu0 0
      %4997 = vmatmul.mubr.bf16.gmra.mrb[0].mxu0 %v4858
      %v4998 = vpop.f32.mrb[0].mxu0
      %v4999 = vadd.f32 0.0, %v4998
      %v5000 = vpop.f32.mrb[0].mxu0
      %v5001 = vpop.f32.mrb[0].mxu0
      %v5002 = vadd.f32 0.0, %v5001
      %v5003 = vpop.f32.mrb[0].mxu0
      %5004 = vmatprep.mubr.bf16.mxu0 0
      %5005 = vmatmul.mubr.bf16.gmra.mrb[0].mxu0 %v4861
      %v5006 = vpop.f32.mrb[0].mxu0
      %v5007 = vadd.f32 0.0, %v5006
      %v5008 = vpop.f32.mrb[0].mxu0
      %v5009 = vpop.f32.mrb[0].mxu0
      %v5010 = vadd.f32 0.0, %v5009
      %v5011 = vpop.f32.mrb[0].mxu0
      %5012 = vmatprep.mubr.bf16.mxu0 0
      %5013 = vmatmul.mubr.bf16.gmra.mrb[0].mxu0 %v4864
      %v5014 = vpop.f32.mrb[0].mxu0
      %v5015 = vadd.f32 0.0, %v5014
      %v5016 = vpop.f32.mrb[0].mxu0
      %v5017 = vpop.f32.mrb[0].mxu0
      %v5018 = vadd.f32 0.0, %v5017
      %v5019 = vpop.f32.mrb[0].mxu0
      %5020 = vmatprep.mubr.bf16.mxu0 0
      %5021 = vmatmul.mubr.bf16.gmra.mrb[0].mxu0 %v4867
      %v5022 = vpop.f32.mrb[0].mxu0
      %v5023 = vadd.f32 0.0, %v5022
      %v5024 = vpop.f32.mrb[0].mxu0
      %v5025 = vpop.f32.mrb[0].mxu0
      %v5026 = vadd.f32 0.0, %v5025
      %v5027 = vpop.f32.mrb[0].mxu0
      %5028 = vmatprep.mubr.bf16.mxu0 0
      %5029 = vmatmul.mubr.bf16.gmra.mrb[0].mxu0 %v4870
      %v5030 = vpop.f32.mrb[0].mxu0
      %v5031 = vadd.f32 0.0, %v5030
      %v5032 = vpop.f32.mrb[0].mxu0
      %v5033 = vpop.f32.mrb[0].mxu0
      %v5034 = vadd.f32 0.0, %v5033
      %v5035 = vpop.f32.mrb[0].mxu0
      %5036 = vmatprep.mubr.bf16.mxu0 0
      %5037 = vmatmul.mubr.bf16.gmra.mrb[0].mxu0 %v4873
      %v5038 = vpop.f32.mrb[0].mxu0
      %v5039 = vadd.f32 0.0, %v5038
      %v5040 = vpop.f32.mrb[0].mxu0
      %v5041 = vpop.f32.mrb[0].mxu0
      %v5042 = vadd.f32 0.0, %v5041
      %v5043 = vpop.f32.mrb[0].mxu0
      %5044 = vmatprep.mubr.bf16.mxu0 0
      %5045 = vmatmul.mubr.bf16.gmra.mrb[0].mxu0 %v4876
      %v5046 = vpop.f32.mrb[0].mxu0
      %v5047 = vadd.f32 0.0, %v5046
      %v5048 = vpop.f32.mrb[0].mxu0
      %v5049 = vpop.f32.mrb[0].mxu0
      %v5050 = vadd.f32 0.0, %v5049
      %v5051 = vpop.f32.mrb[0].mxu0
      %5052 = vmatprep.mubr.bf16.mxu0 0
      %5053 = vmatmul.mubr.bf16.gmra.mrb[0].mxu0 %v4879
      %v5054 = vpop.f32.mrb[0].mxu0
      %v5055 = vadd.f32 0.0, %v5054
      %v5056 = vpop.f32.mrb[0].mxu0
      %v5057 = vpop.f32.mrb[0].mxu0
      %v5058 = vadd.f32 0.0, %v5057
      %v5059 = vpop.f32.mrb[0].mxu0
      %5060 = vdwg.mxu0
      %v5061 = vadd.f32 %v4708, %v4919
      %v5062 = vadd.f32 %v4709, %v4922
      %v5063 = vadd.f32 %v4710, %v4927
      %v5064 = vadd.f32 %v4711, %v4930
      %v5065 = vadd.f32 %v4712, %v4935
      %v5066 = vadd.f32 %v4713, %v4938
      %v5067 = vadd.f32 %v4714, %v4943
      %v5068 = vadd.f32 %v4715, %v4946
      %v5069 = vadd.f32 %v4716, %v4951
      %v5070 = vadd.f32 %v4717, %v4954
      %v5071 = vadd.f32 %v4718, %v4959
      %v5072 = vadd.f32 %v4719, %v4962
      %v5073 = vadd.f32 %v4720, %v4967
      %v5074 = vadd.f32 %v4721, %v4970
      %v5075 = vadd.f32 %v4722, %v4975
      %v5076 = vadd.f32 %v4723, %v4978
      %v5077 = vadd.f32 %v4724, %v4983
      %v5078 = vadd.f32 %v4725, %v4986
      %v5079 = vadd.f32 %v4726, %v4991
      %v5080 = vadd.f32 %v4727, %v4994
      %v5081 = vadd.f32 %v4728, %v4999
      %v5082 = vadd.f32 %v4729, %v5002
      %v5083 = vadd.f32 %v4730, %v5007
      %v5084 = vadd.f32 %v4731, %v5010
      %v5085 = vadd.f32 %v4732, %v5015
      %v5086 = vadd.f32 %v4733, %v5018
      %v5087 = vadd.f32 %v4734, %v5023
      %v5088 = vadd.f32 %v4735, %v5026
      %v5089 = vadd.f32 %v4736, %v5031
      %v5090 = vadd.f32 %v4737, %v5034
      %v5091 = vadd.f32 %v4738, %v5039
      %v5092 = vadd.f32 %v4739, %v5042
      %v5093 = vadd.f32 %v4740, %v5047
      %v5094 = vadd.f32 %v4741, %v5050
      %v5095 = vadd.f32 %v4742, %v5055
      %v5096 = vadd.f32 %v4743, %v5058
      %5097 = vst.msk [vmem:[#allocation2] sm:$0xff] %vm2050, %v5061
      %5098 = vst.msk [vmem:[#allocation2 + $0x8] sm:$0xff] %vm2050, %v5062
      %5099 = vst.msk [vmem:[#allocation2 + $0x10] sm:$0xff] %vm2050, %v5063
      %5100 = vst.msk [vmem:[#allocation2 + $0x18] sm:$0xff] %vm2050, %v5064
      %5101 = vst.msk [vmem:[#allocation2 + $0x20] sm:$0xff] %vm2050, %v5065
      %5102 = vst.msk [vmem:[#allocation2 + $0x28] sm:$0xff] %vm2050, %v5066
      %5103 = vst.msk [vmem:[#allocation2 + $0x30] sm:$0xff] %vm2050, %v5067
      %5104 = vst.msk [vmem:[#allocation2 + $0x38] sm:$0xff] %vm2050, %v5068
      %5105 = vst.msk [vmem:[#allocation2 + $0x40] sm:$0xff] %vm2050, %v5069
      %5106 = vst.msk [vmem:[#allocation2 + $0x48] sm:$0xff] %vm2050, %v5070
      %5107 = vst.msk [vmem:[#allocation2 + $0x50] sm:$0xff] %vm2050, %v5071
      %5108 = vst.msk [vmem:[#allocation2 + $0x58] sm:$0xff] %vm2050, %v5072
      %5109 = vst.msk [vmem:[#allocation2 + $0x60] sm:$0xff] %vm2050, %v5073
      %5110 = vst.msk [vmem:[#allocation2 + $0x68] sm:$0xff] %vm2050, %v5074
      %5111 = vst.msk [vmem:[#allocation2 + $0x70] sm:$0xff] %vm2050, %v5075
      %5112 = vst.msk [vmem:[#allocation2 + $0x78] sm:$0xff] %vm2050, %v5076
      %5113 = vst.msk [vmem:[#allocation2 + $0x80] sm:$0xff] %vm2050, %v5077
      %5114 = vst.msk [vmem:[#allocation2 + $0x88] sm:$0xff] %vm2050, %v5078
      %5115 = vst.msk [vmem:[#allocation2 + $0x90] sm:$0xff] %vm2050, %v5079
      %5116 = vst.msk [vmem:[#allocation2 + $0x98] sm:$0xff] %vm2050, %v5080
      %5117 = vst.msk [vmem:[#allocation2 + $0xa0] sm:$0xff] %vm2050, %v5081
      %5118 = vst.msk [vmem:[#allocation2 + $0xa8] sm:$0xff] %vm2050, %v5082
      %5119 = vst.msk [vmem:[#allocation2 + $0xb0] sm:$0xff] %vm2050, %v5083
      %5120 = vst.msk [vmem:[#allocation2 + $0xb8] sm:$0xff] %vm2050, %v5084
      %5121 = vst.msk [vmem:[#allocation2 + $0xc0] sm:$0xff] %vm2050, %v5085
      %5122 = vst.msk [vmem:[#allocation2 + $0xc8] sm:$0xff] %vm2050, %v5086
      %5123 = vst.msk [vmem:[#allocation2 + $0xd0] sm:$0xff] %vm2050, %v5087
      %5124 = vst.msk [vmem:[#allocation2 + $0xd8] sm:$0xff] %vm2050, %v5088
      %5125 = vst.msk [vmem:[#allocation2 + $0xe0] sm:$0xff] %vm2050, %v5089
      %5126 = vst.msk [vmem:[#allocation2 + $0xe8] sm:$0xff] %vm2050, %v5090
      %5127 = vst.msk [vmem:[#allocation2 + $0xf0] sm:$0xff] %vm2050, %v5091
      %5128 = vst.msk [vmem:[#allocation2 + $0xf8] sm:$0xff] %vm2050, %v5092
      %5129 = vst.msk [vmem:[#allocation2 + $0x100] sm:$0xff] %vm2050, %v5093
      %5130 = vst.msk [vmem:[#allocation2 + $0x108] sm:$0xff] %vm2050, %v5094
      %5131 = vst.msk [vmem:[#allocation2 + $0x110] sm:$0xff] %vm2050, %v5095
      %5132 = vst.msk [vmem:[#allocation2 + $0x118] sm:$0xff] %vm2050, %v5096
      %v5133 = vld [vmem:[#allocation2] sm:$0xff]
      %v5134 = vld [vmem:[#allocation2 + $0x8] sm:$0xff]
      %v5135 = vld [vmem:[#allocation2 + $0x10] sm:$0xff]
      %v5136 = vld [vmem:[#allocation2 + $0x18] sm:$0xff]
      %v5137 = vld [vmem:[#allocation2 + $0x20] sm:$0xff]
      %v5138 = vld [vmem:[#allocation2 + $0x28] sm:$0xff]
      %v5139 = vld [vmem:[#allocation2 + $0x30] sm:$0xff]
      %v5140 = vld [vmem:[#allocation2 + $0x38] sm:$0xff]
      %v5141 = vld [vmem:[#allocation2 + $0x40] sm:$0xff]
      %v5142 = vld [vmem:[#allocation2 + $0x48] sm:$0xff]
      %v5143 = vld [vmem:[#allocation2 + $0x50] sm:$0xff]
      %v5144 = vld [vmem:[#allocation2 + $0x58] sm:$0xff]
      %v5145 = vld [vmem:[#allocation2 + $0x60] sm:$0xff]
      %v5146 = vld [vmem:[#allocation2 + $0x68] sm:$0xff]
      %v5147 = vld [vmem:[#allocation2 + $0x70] sm:$0xff]
      %v5148 = vld [vmem:[#allocation2 + $0x78] sm:$0xff]
      %v5149 = vld [vmem:[#allocation2 + $0x80] sm:$0xff]
      %v5150 = vld [vmem:[#allocation2 + $0x88] sm:$0xff]
      %v5151 = vld [vmem:[#allocation2 + $0x90] sm:$0xff]
      %v5152 = vld [vmem:[#allocation2 + $0x98] sm:$0xff]
      %v5153 = vld [vmem:[#allocation2 + $0xa0] sm:$0xff]
      %v5154 = vld [vmem:[#allocation2 + $0xa8] sm:$0xff]
      %v5155 = vld [vmem:[#allocation2 + $0xb0] sm:$0xff]
      %v5156 = vld [vmem:[#allocation2 + $0xb8] sm:$0xff]
      %v5157 = vld [vmem:[#allocation2 + $0xc0] sm:$0xff]
      %v5158 = vld [vmem:[#allocation2 + $0xc8] sm:$0xff]
      %v5159 = vld [vmem:[#allocation2 + $0xd0] sm:$0xff]
      %v5160 = vld [vmem:[#allocation2 + $0xd8] sm:$0xff]
      %v5161 = vld [vmem:[#allocation2 + $0xe0] sm:$0xff]
      %v5162 = vld [vmem:[#allocation2 + $0xe8] sm:$0xff]
      %v5163 = vld [vmem:[#allocation2 + $0xf0] sm:$0xff]
      %v5164 = vld [vmem:[#allocation2 + $0xf8] sm:$0xff]
      %v5165 = vld [vmem:[#allocation2 + $0x100] sm:$0xff]
      %v5166 = vld [vmem:[#allocation2 + $0x108] sm:$0xff]
      %v5167 = vld [vmem:[#allocation2 + $0x110] sm:$0xff]
      %v5168 = vld [vmem:[#allocation2 + $0x118] sm:$0xff]
      %s5169 = scalar_lea.vmem %s3, 16
      %v5170 = vld [vmem:[%s5169] sm:$0x3]
      %vm5171 = vcmask 1044480
      %v5172 = vrot.slane %v2031, 3
      %v5173 = vrot.slane %v2032, 3
      %v5174 = vsel %vm5171, %v5172, %v5173
      %v5175 = vrot.slane %v2033, 3
      %v5176 = vsel %vm5171, %v5173, %v5175
      %v5177 = vrot.slane %v2034, 3
      %v5178 = vsel %vm5171, %v5175, %v5177
      %v5179 = vrot.slane %v2035, 3
      %v5180 = vsel %vm5171, %v5177, %v5179
      %v5181 = vrot.slane %v2036, 3
      %v5182 = vsel %vm5171, %v5179, %v5181
      %v5183 = vrot.slane %v2037, 3
      %v5184 = vsel %vm5171, %v5181, %v5183
      %v5185 = vrot.slane %v2038, 3
      %v5186 = vsel %vm5171, %v5183, %v5185
      %v5187 = vrot.slane %v2039, 3
      %v5188 = vsel %vm5171, %v5185, %v5187
      %v5189 = vrot.slane %v2040, 3
      %v5190 = vsel %vm5171, %v5187, %v5189
      %v5191 = vrot.slane %v2041, 3
      %v5192 = vsel %vm5171, %v5189, %v5191
      %v5193 = vrot.slane %v2042, 3
      %v5194 = vsel %vm5171, %v5191, %v5193
      %v5195 = vrot.slane %v2043, 3
      %v5196 = vsel %vm5171, %v5193, %v5195
      %v5197 = vrot.slane %v2044, 3
      %v5198 = vsel %vm5171, %v5195, %v5197
      %v5199 = vrot.slane %v2045, 3
      %v5200 = vsel %vm5171, %v5197, %v5199
      %v5201 = vrot.slane %v2046, 3
      %v5202 = vsel %vm5171, %v5199, %v5201
      %v5203 = vrot.slane %v2047, 3
      %v5204 = vsel %vm5171, %v5201, %v5203
      %v5205 = vrot.slane %v2048, 3
      %v5206 = vsel %vm5171, %v5203, %v5205
      %v5207 = vrot.slane %v2049, 3
      %v5208 = vsel %vm5171, %v5205, %v5207
      %v5210 = vsel %vm2050, %v5174, 0
      %v5213 = vsel %vm2050, %v5176, 0
      %v5216 = vsel %vm2050, %v5178, 0
      %v5219 = vsel %vm2050, %v5180, 0
      %v5222 = vsel %vm2050, %v5182, 0
      %v5225 = vsel %vm2050, %v5184, 0
      %v5228 = vsel %vm2050, %v5186, 0
      %v5231 = vsel %vm2050, %v5188, 0
      %v5234 = vsel %vm2050, %v5190, 0
      %v5237 = vsel %vm2050, %v5192, 0
      %v5240 = vsel %vm2050, %v5194, 0
      %v5243 = vsel %vm2050, %v5196, 0
      %v5246 = vsel %vm2050, %v5198, 0
      %v5249 = vsel %vm2050, %v5200, 0
      %v5252 = vsel %vm2050, %v5202, 0
      %v5255 = vsel %vm2050, %v5204, 0
      %v5258 = vsel %vm2050, %v5206, 0
      %v5261 = vsel %vm2050, %v5208, 0
      %v5264 = vsel %vm2178, %v5170, 0
      %5266 = vmatprep.subr.bf16.mxu0 0
      %5267 = vmatpush1.bf16.msra.mxu0 %v5264
      %5268 = vmatprep.subr.bf16.mxu0 0
      %5269 = vmatpush1.bf16.msra.mxu0 0
      %5270 = vmatprep.subr.bf16.mxu0 0
      %5271 = vmatpush1.bf16.msra.mxu0 0
      %5272 = vmatprep.subr.bf16.mxu0 0
      %5273 = vmatpush1.bf16.msra.mxu0 0
      %5274 = vmatprep.subr.bf16.mxu0 0
      %5275 = vmatpush1.bf16.msra.mxu0 0
      %5276 = vmatprep.subr.bf16.mxu0 0
      %5277 = vmatpush1.bf16.msra.mxu0 0
      %5278 = vmatprep.subr.bf16.mxu0 0
      %5279 = vmatpush1.bf16.msra.mxu0 0
      %5280 = vmatprep.subr.bf16.mxu0 0
      %5281 = vmatpush1.bf16.msra.mxu0 0
      %5282 = vmatprep.subr.bf16.mxu0 0
      %5283 = vmatpush1.bf16.msra.mxu0 0
      %5284 = vmatprep.subr.bf16.mxu0 0
      %5285 = vmatpush1.bf16.msra.mxu0 0
      %5286 = vmatprep.subr.bf16.mxu0 0
      %5287 = vmatpush1.bf16.msra.mxu0 0
      %5288 = vmatprep.subr.bf16.mxu0 0
      %5289 = vmatpush1.bf16.msra.mxu0 0
      %5290 = vmatprep.subr.bf16.mxu0 0
      %5291 = vmatpush1.bf16.msra.mxu0 0
      %5292 = vmatprep.subr.bf16.mxu0 0
      %5293 = vmatpush1.bf16.msra.mxu0 0
      %5294 = vmatprep.subr.bf16.mxu0 0
      %5295 = vmatpush1.bf16.msra.mxu0 0
      %5296 = vmatprep.subr.bf16.mxu0 0
      %5297 = vmatpush1.bf16.msra.mxu0 0
      %5298 = vmatprep.mubr.bf16.mxu0 0
      %5299 = vmatmul.mubr.bf16.gmra.mrb[0].mxu0 %v5210
      %v5300 = vpop.f32.mrb[0].mxu0
      %v5301 = vadd.f32 0.0, %v5300
      %v5302 = vpop.f32.mrb[0].mxu0
      %v5303 = vpop.f32.mrb[0].mxu0
      %v5304 = vadd.f32 0.0, %v5303
      %v5305 = vpop.f32.mrb[0].mxu0
      %5306 = vmatprep.mubr.bf16.mxu0 0
      %5307 = vmatmul.mubr.bf16.gmra.mrb[0].mxu0 %v5213
      %v5308 = vpop.f32.mrb[0].mxu0
      %v5309 = vadd.f32 0.0, %v5308
      %v5310 = vpop.f32.mrb[0].mxu0
      %v5311 = vpop.f32.mrb[0].mxu0
      %v5312 = vadd.f32 0.0, %v5311
      %v5313 = vpop.f32.mrb[0].mxu0
      %5314 = vmatprep.mubr.bf16.mxu0 0
      %5315 = vmatmul.mubr.bf16.gmra.mrb[0].mxu0 %v5216
      %v5316 = vpop.f32.mrb[0].mxu0
      %v5317 = vadd.f32 0.0, %v5316
      %v5318 = vpop.f32.mrb[0].mxu0
      %v5319 = vpop.f32.mrb[0].mxu0
      %v5320 = vadd.f32 0.0, %v5319
      %v5321 = vpop.f32.mrb[0].mxu0
      %5322 = vmatprep.mubr.bf16.mxu0 0
      %5323 = vmatmul.mubr.bf16.gmra.mrb[0].mxu0 %v5219
      %v5324 = vpop.f32.mrb[0].mxu0
      %v5325 = vadd.f32 0.0, %v5324
      %v5326 = vpop.f32.mrb[0].mxu0
      %v5327 = vpop.f32.mrb[0].mxu0
      %v5328 = vadd.f32 0.0, %v5327
      %v5329 = vpop.f32.mrb[0].mxu0
      %5330 = vmatprep.mubr.bf16.mxu0 0
      %5331 = vmatmul.mubr.bf16.gmra.mrb[0].mxu0 %v5222
      %v5332 = vpop.f32.mrb[0].mxu0
      %v5333 = vadd.f32 0.0, %v5332
      %v5334 = vpop.f32.mrb[0].mxu0
      %v5335 = vpop.f32.mrb[0].mxu0
      %v5336 = vadd.f32 0.0, %v5335
      %v5337 = vpop.f32.mrb[0].mxu0
      %5338 = vmatprep.mubr.bf16.mxu0 0
      %5339 = vmatmul.mubr.bf16.gmra.mrb[0].mxu0 %v5225
      %v5340 = vpop.f32.mrb[0].mxu0
      %v5341 = vadd.f32 0.0, %v5340
      %v5342 = vpop.f32.mrb[0].mxu0
      %v5343 = vpop.f32.mrb[0].mxu0
      %v5344 = vadd.f32 0.0, %v5343
      %v5345 = vpop.f32.mrb[0].mxu0
      %5346 = vmatprep.mubr.bf16.mxu0 0
      %5347 = vmatmul.mubr.bf16.gmra.mrb[0].mxu0 %v5228
      %v5348 = vpop.f32.mrb[0].mxu0
      %v5349 = vadd.f32 0.0, %v5348
      %v5350 = vpop.f32.mrb[0].mxu0
      %v5351 = vpop.f32.mrb[0].mxu0
      %v5352 = vadd.f32 0.0, %v5351
      %v5353 = vpop.f32.mrb[0].mxu0
      %5354 = vmatprep.mubr.bf16.mxu0 0
      %5355 = vmatmul.mubr.bf16.gmra.mrb[0].mxu0 %v5231
      %v5356 = vpop.f32.mrb[0].mxu0
      %v5357 = vadd.f32 0.0, %v5356
      %v5358 = vpop.f32.mrb[0].mxu0
      %v5359 = vpop.f32.mrb[0].mxu0
      %v5360 = vadd.f32 0.0, %v5359
      %v5361 = vpop.f32.mrb[0].mxu0
      %5362 = vmatprep.mubr.bf16.mxu0 0
      %5363 = vmatmul.mubr.bf16.gmra.mrb[0].mxu0 %v5234
      %v5364 = vpop.f32.mrb[0].mxu0
      %v5365 = vadd.f32 0.0, %v5364
      %v5366 = vpop.f32.mrb[0].mxu0
      %v5367 = vpop.f32.mrb[0].mxu0
      %v5368 = vadd.f32 0.0, %v5367
      %v5369 = vpop.f32.mrb[0].mxu0
      %5370 = vmatprep.mubr.bf16.mxu0 0
      %5371 = vmatmul.mubr.bf16.gmra.mrb[0].mxu0 %v5237
      %v5372 = vpop.f32.mrb[0].mxu0
      %v5373 = vadd.f32 0.0, %v5372
      %v5374 = vpop.f32.mrb[0].mxu0
      %v5375 = vpop.f32.mrb[0].mxu0
      %v5376 = vadd.f32 0.0, %v5375
      %v5377 = vpop.f32.mrb[0].mxu0
      %5378 = vmatprep.mubr.bf16.mxu0 0
      %5379 = vmatmul.mubr.bf16.gmra.mrb[0].mxu0 %v5240
      %v5380 = vpop.f32.mrb[0].mxu0
      %v5381 = vadd.f32 0.0, %v5380
      %v5382 = vpop.f32.mrb[0].mxu0
      %v5383 = vpop.f32.mrb[0].mxu0
      %v5384 = vadd.f32 0.0, %v5383
      %v5385 = vpop.f32.mrb[0].mxu0
      %5386 = vmatprep.mubr.bf16.mxu0 0
      %5387 = vmatmul.mubr.bf16.gmra.mrb[0].mxu0 %v5243
      %v5388 = vpop.f32.mrb[0].mxu0
      %v5389 = vadd.f32 0.0, %v5388
      %v5390 = vpop.f32.mrb[0].mxu0
      %v5391 = vpop.f32.mrb[0].mxu0
      %v5392 = vadd.f32 0.0, %v5391
      %v5393 = vpop.f32.mrb[0].mxu0
      %5394 = vmatprep.mubr.bf16.mxu0 0
      %5395 = vmatmul.mubr.bf16.gmra.mrb[0].mxu0 %v5246
      %v5396 = vpop.f32.mrb[0].mxu0
      %v5397 = vadd.f32 0.0, %v5396
      %v5398 = vpop.f32.mrb[0].mxu0
      %v5399 = vpop.f32.mrb[0].mxu0
      %v5400 = vadd.f32 0.0, %v5399
      %v5401 = vpop.f32.mrb[0].mxu0
      %5402 = vmatprep.mubr.bf16.mxu0 0
      %5403 = vmatmul.mubr.bf16.gmra.mrb[0].mxu0 %v5249
      %v5404 = vpop.f32.mrb[0].mxu0
      %v5405 = vadd.f32 0.0, %v5404
      %v5406 = vpop.f32.mrb[0].mxu0
      %v5407 = vpop.f32.mrb[0].mxu0
      %v5408 = vadd.f32 0.0, %v5407
      %v5409 = vpop.f32.mrb[0].mxu0
      %5410 = vmatprep.mubr.bf16.mxu0 0
      %5411 = vmatmul.mubr.bf16.gmra.mrb[0].mxu0 %v5252
      %v5412 = vpop.f32.mrb[0].mxu0
      %v5413 = vadd.f32 0.0, %v5412
      %v5414 = vpop.f32.mrb[0].mxu0
      %v5415 = vpop.f32.mrb[0].mxu0
      %v5416 = vadd.f32 0.0, %v5415
      %v5417 = vpop.f32.mrb[0].mxu0
      %5418 = vmatprep.mubr.bf16.mxu0 0
      %5419 = vmatmul.mubr.bf16.gmra.mrb[0].mxu0 %v5255
      %v5420 = vpop.f32.mrb[0].mxu0
      %v5421 = vadd.f32 0.0, %v5420
      %v5422 = vpop.f32.mrb[0].mxu0
      %v5423 = vpop.f32.mrb[0].mxu0
      %v5424 = vadd.f32 0.0, %v5423
      %v5425 = vpop.f32.mrb[0].mxu0
      %5426 = vmatprep.mubr.bf16.mxu0 0
      %5427 = vmatmul.mubr.bf16.gmra.mrb[0].mxu0 %v5258
      %v5428 = vpop.f32.mrb[0].mxu0
      %v5429 = vadd.f32 0.0, %v5428
      %v5430 = vpop.f32.mrb[0].mxu0
      %v5431 = vpop.f32.mrb[0].mxu0
      %v5432 = vadd.f32 0.0, %v5431
      %v5433 = vpop.f32.mrb[0].mxu0
      %5434 = vmatprep.mubr.bf16.mxu0 0
      %5435 = vmatmul.mubr.bf16.gmra.mrb[0].mxu0 %v5261
      %v5436 = vpop.f32.mrb[0].mxu0
      %v5437 = vadd.f32 0.0, %v5436
      %v5438 = vpop.f32.mrb[0].mxu0
      %v5439 = vpop.f32.mrb[0].mxu0
      %v5440 = vadd.f32 0.0, %v5439
      %v5441 = vpop.f32.mrb[0].mxu0
      %5442 = vdwg.mxu0
      %v5443 = vadd.f32 %v5133, %v5301
      %v5444 = vadd.f32 %v5134, %v5304
      %v5445 = vadd.f32 %v5135, %v5309
      %v5446 = vadd.f32 %v5136, %v5312
      %v5447 = vadd.f32 %v5137, %v5317
      %v5448 = vadd.f32 %v5138, %v5320
      %v5449 = vadd.f32 %v5139, %v5325
      %v5450 = vadd.f32 %v5140, %v5328
      %v5451 = vadd.f32 %v5141, %v5333
      %v5452 = vadd.f32 %v5142, %v5336
      %v5453 = vadd.f32 %v5143, %v5341
      %v5454 = vadd.f32 %v5144, %v5344
      %v5455 = vadd.f32 %v5145, %v5349
      %v5456 = vadd.f32 %v5146, %v5352
      %v5457 = vadd.f32 %v5147, %v5357
      %v5458 = vadd.f32 %v5148, %v5360
      %v5459 = vadd.f32 %v5149, %v5365
      %v5460 = vadd.f32 %v5150, %v5368
      %v5461 = vadd.f32 %v5151, %v5373
      %v5462 = vadd.f32 %v5152, %v5376
      %v5463 = vadd.f32 %v5153, %v5381
      %v5464 = vadd.f32 %v5154, %v5384
      %v5465 = vadd.f32 %v5155, %v5389
      %v5466 = vadd.f32 %v5156, %v5392
      %v5467 = vadd.f32 %v5157, %v5397
      %v5468 = vadd.f32 %v5158, %v5400
      %v5469 = vadd.f32 %v5159, %v5405
      %v5470 = vadd.f32 %v5160, %v5408
      %v5471 = vadd.f32 %v5161, %v5413
      %v5472 = vadd.f32 %v5162, %v5416
      %v5473 = vadd.f32 %v5163, %v5421
      %v5474 = vadd.f32 %v5164, %v5424
      %v5475 = vadd.f32 %v5165, %v5429
      %v5476 = vadd.f32 %v5166, %v5432
      %v5477 = vadd.f32 %v5167, %v5437
      %v5478 = vadd.f32 %v5168, %v5440
      %5479 = vst.msk [vmem:[#allocation2] sm:$0xff] %vm2050, %v5443
      %5480 = vst.msk [vmem:[#allocation2 + $0x8] sm:$0xff] %vm2050, %v5444
      %5481 = vst.msk [vmem:[#allocation2 + $0x10] sm:$0xff] %vm2050, %v5445
      %5482 = vst.msk [vmem:[#allocation2 + $0x18] sm:$0xff] %vm2050, %v5446
      %5483 = vst.msk [vmem:[#allocation2 + $0x20] sm:$0xff] %vm2050, %v5447
      %5484 = vst.msk [vmem:[#allocation2 + $0x28] sm:$0xff] %vm2050, %v5448
      %5485 = vst.msk [vmem:[#allocation2 + $0x30] sm:$0xff] %vm2050, %v5449
      %5486 = vst.msk [vmem:[#allocation2 + $0x38] sm:$0xff] %vm2050, %v5450
      %5487 = vst.msk [vmem:[#allocation2 + $0x40] sm:$0xff] %vm2050, %v5451
      %5488 = vst.msk [vmem:[#allocation2 + $0x48] sm:$0xff] %vm2050, %v5452
      %5489 = vst.msk [vmem:[#allocation2 + $0x50] sm:$0xff] %vm2050, %v5453
      %5490 = vst.msk [vmem:[#allocation2 + $0x58] sm:$0xff] %vm2050, %v5454
      %5491 = vst.msk [vmem:[#allocation2 + $0x60] sm:$0xff] %vm2050, %v5455
      %5492 = vst.msk [vmem:[#allocation2 + $0x68] sm:$0xff] %vm2050, %v5456
      %5493 = vst.msk [vmem:[#allocation2 + $0x70] sm:$0xff] %vm2050, %v5457
      %5494 = vst.msk [vmem:[#allocation2 + $0x78] sm:$0xff] %vm2050, %v5458
      %5495 = vst.msk [vmem:[#allocation2 + $0x80] sm:$0xff] %vm2050, %v5459
      %5496 = vst.msk [vmem:[#allocation2 + $0x88] sm:$0xff] %vm2050, %v5460
      %5497 = vst.msk [vmem:[#allocation2 + $0x90] sm:$0xff] %vm2050, %v5461
      %5498 = vst.msk [vmem:[#allocation2 + $0x98] sm:$0xff] %vm2050, %v5462
      %5499 = vst.msk [vmem:[#allocation2 + $0xa0] sm:$0xff] %vm2050, %v5463
      %5500 = vst.msk [vmem:[#allocation2 + $0xa8] sm:$0xff] %vm2050, %v5464
      %5501 = vst.msk [vmem:[#allocation2 + $0xb0] sm:$0xff] %vm2050, %v5465
      %5502 = vst.msk [vmem:[#allocation2 + $0xb8] sm:$0xff] %vm2050, %v5466
      %5503 = vst.msk [vmem:[#allocation2 + $0xc0] sm:$0xff] %vm2050, %v5467
      %5504 = vst.msk [vmem:[#allocation2 + $0xc8] sm:$0xff] %vm2050, %v5468
      %5505 = vst.msk [vmem:[#allocation2 + $0xd0] sm:$0xff] %vm2050, %v5469
      %5506 = vst.msk [vmem:[#allocation2 + $0xd8] sm:$0xff] %vm2050, %v5470
      %5507 = vst.msk [vmem:[#allocation2 + $0xe0] sm:$0xff] %vm2050, %v5471
      %5508 = vst.msk [vmem:[#allocation2 + $0xe8] sm:$0xff] %vm2050, %v5472
      %5509 = vst.msk [vmem:[#allocation2 + $0xf0] sm:$0xff] %vm2050, %v5473
      %5510 = vst.msk [vmem:[#allocation2 + $0xf8] sm:$0xff] %vm2050, %v5474
      %5511 = vst.msk [vmem:[#allocation2 + $0x100] sm:$0xff] %vm2050, %v5475
      %5512 = vst.msk [vmem:[#allocation2 + $0x108] sm:$0xff] %vm2050, %v5476
      %5513 = vst.msk [vmem:[#allocation2 + $0x110] sm:$0xff] %vm2050, %v5477
      %5514 = vst.msk [vmem:[#allocation2 + $0x118] sm:$0xff] %vm2050, %v5478
      %v5515 = vld [vmem:[#allocation2] sm:$0xff]
      %v5516 = vld [vmem:[#allocation2 + $0x8] sm:$0xff]
      %v5517 = vld [vmem:[#allocation2 + $0x10] sm:$0xff]
      %v5518 = vld [vmem:[#allocation2 + $0x18] sm:$0xff]
      %v5519 = vld [vmem:[#allocation2 + $0x20] sm:$0xff]
      %v5520 = vld [vmem:[#allocation2 + $0x28] sm:$0xff]
      %v5521 = vld [vmem:[#allocation2 + $0x30] sm:$0xff]
      %v5522 = vld [vmem:[#allocation2 + $0x38] sm:$0xff]
      %v5523 = vld [vmem:[#allocation2 + $0x40] sm:$0xff]
      %v5524 = vld [vmem:[#allocation2 + $0x48] sm:$0xff]
      %v5525 = vld [vmem:[#allocation2 + $0x50] sm:$0xff]
      %v5526 = vld [vmem:[#allocation2 + $0x58] sm:$0xff]
      %v5527 = vld [vmem:[#allocation2 + $0x60] sm:$0xff]
      %v5528 = vld [vmem:[#allocation2 + $0x68] sm:$0xff]
      %v5529 = vld [vmem:[#allocation2 + $0x70] sm:$0xff]
      %v5530 = vld [vmem:[#allocation2 + $0x78] sm:$0xff]
      %v5531 = vld [vmem:[#allocation2 + $0x80] sm:$0xff]
      %v5532 = vld [vmem:[#allocation2 + $0x88] sm:$0xff]
      %v5533 = vld [vmem:[#allocation2 + $0x90] sm:$0xff]
      %v5534 = vld [vmem:[#allocation2 + $0x98] sm:$0xff]
      %v5535 = vld [vmem:[#allocation2 + $0xa0] sm:$0xff]
      %v5536 = vld [vmem:[#allocation2 + $0xa8] sm:$0xff]
      %v5537 = vld [vmem:[#allocation2 + $0xb0] sm:$0xff]
      %v5538 = vld [vmem:[#allocation2 + $0xb8] sm:$0xff]
      %v5539 = vld [vmem:[#allocation2 + $0xc0] sm:$0xff]
      %v5540 = vld [vmem:[#allocation2 + $0xc8] sm:$0xff]
      %v5541 = vld [vmem:[#allocation2 + $0xd0] sm:$0xff]
      %v5542 = vld [vmem:[#allocation2 + $0xd8] sm:$0xff]
      %v5543 = vld [vmem:[#allocation2 + $0xe0] sm:$0xff]
      %v5544 = vld [vmem:[#allocation2 + $0xe8] sm:$0xff]
      %v5545 = vld [vmem:[#allocation2 + $0xf0] sm:$0xff]
      %v5546 = vld [vmem:[#allocation2 + $0xf8] sm:$0xff]
      %v5547 = vld [vmem:[#allocation2 + $0x100] sm:$0xff]
      %v5548 = vld [vmem:[#allocation2 + $0x108] sm:$0xff]
      %v5549 = vld [vmem:[#allocation2 + $0x110] sm:$0xff]
      %v5550 = vld [vmem:[#allocation2 + $0x118] sm:$0xff]
      %v5551 = vld [vmem:[%s4] sm:$0x1]
      %v5553 = vlaneseq
      %v5554 = vshrl.u32 %v5553, 7
      %v5555 = vsub.s32 0, %v5554
      %v5556 = vrot.slane %v5551, %v5555
      %v5558 = vadd.f32 %v5515, %v5556
      %v5559 = vadd.f32 %v5516, %v5556
      %v5560 = vadd.f32 %v5517, %v5556
      %v5561 = vadd.f32 %v5518, %v5556
      %v5562 = vadd.f32 %v5519, %v5556
      %v5563 = vadd.f32 %v5520, %v5556
      %v5564 = vadd.f32 %v5521, %v5556
      %v5565 = vadd.f32 %v5522, %v5556
      %v5566 = vadd.f32 %v5523, %v5556
      %v5567 = vadd.f32 %v5524, %v5556
      %v5568 = vadd.f32 %v5525, %v5556
      %v5569 = vadd.f32 %v5526, %v5556
      %v5570 = vadd.f32 %v5527, %v5556
      %v5571 = vadd.f32 %v5528, %v5556
      %v5572 = vadd.f32 %v5529, %v5556
      %v5573 = vadd.f32 %v5530, %v5556
      %v5574 = vadd.f32 %v5531, %v5556
      %v5575 = vadd.f32 %v5532, %v5556
      %v5576 = vadd.f32 %v5533, %v5556
      %v5577 = vadd.f32 %v5534, %v5556
      %v5578 = vadd.f32 %v5535, %v5556
      %v5579 = vadd.f32 %v5536, %v5556
      %v5580 = vadd.f32 %v5537, %v5556
      %v5581 = vadd.f32 %v5538, %v5556
      %v5582 = vadd.f32 %v5539, %v5556
      %v5583 = vadd.f32 %v5540, %v5556
      %v5584 = vadd.f32 %v5541, %v5556
      %v5585 = vadd.f32 %v5542, %v5556
      %v5586 = vadd.f32 %v5543, %v5556
      %v5587 = vadd.f32 %v5544, %v5556
      %v5588 = vadd.f32 %v5545, %v5556
      %v5589 = vadd.f32 %v5546, %v5556
      %v5590 = vadd.f32 %v5547, %v5556
      %v5591 = vadd.f32 %v5548, %v5556
      %v5592 = vadd.f32 %v5549, %v5556
      %v5593 = vadd.f32 %v5550, %v5556
      %v5594 = vld [vmem:[%s5] sm:$0x1]
      %v5596 = vlaneseq
      %v5597 = vshrl.u32 %v5596, 7
      %v5598 = vsub.s32 0, %v5597
      %v5599 = vrot.slane %v5594, %v5598
      %v5601 = vmul.f32 %v5558, %v5599
      %v5602 = vmul.f32 %v5559, %v5599
      %v5603 = vmul.f32 %v5560, %v5599
      %v5604 = vmul.f32 %v5561, %v5599
      %v5605 = vmul.f32 %v5562, %v5599
      %v5606 = vmul.f32 %v5563, %v5599
      %v5607 = vmul.f32 %v5564, %v5599
      %v5608 = vmul.f32 %v5565, %v5599
      %v5609 = vmul.f32 %v5566, %v5599
      %v5610 = vmul.f32 %v5567, %v5599
      %v5611 = vmul.f32 %v5568, %v5599
      %v5612 = vmul.f32 %v5569, %v5599
      %v5613 = vmul.f32 %v5570, %v5599
      %v5614 = vmul.f32 %v5571, %v5599
      %v5615 = vmul.f32 %v5572, %v5599
      %v5616 = vmul.f32 %v5573, %v5599
      %v5617 = vmul.f32 %v5574, %v5599
      %v5618 = vmul.f32 %v5575, %v5599
      %v5619 = vmul.f32 %v5576, %v5599
      %v5620 = vmul.f32 %v5577, %v5599
      %v5621 = vmul.f32 %v5578, %v5599
      %v5622 = vmul.f32 %v5579, %v5599
      %v5623 = vmul.f32 %v5580, %v5599
      %v5624 = vmul.f32 %v5581, %v5599
      %v5625 = vmul.f32 %v5582, %v5599
      %v5626 = vmul.f32 %v5583, %v5599
      %v5627 = vmul.f32 %v5584, %v5599
      %v5628 = vmul.f32 %v5585, %v5599
      %v5629 = vmul.f32 %v5586, %v5599
      %v5630 = vmul.f32 %v5587, %v5599
      %v5631 = vmul.f32 %v5588, %v5599
      %v5632 = vmul.f32 %v5589, %v5599
      %v5633 = vmul.f32 %v5590, %v5599
      %v5634 = vmul.f32 %v5591, %v5599
      %v5635 = vmul.f32 %v5592, %v5599
      %v5636 = vmul.f32 %v5593, %v5599
      %v5637 = vld [vmem:[%s6] sm:$0x1]
      %v5639 = vlaneseq
      %v5640 = vshrl.u32 %v5639, 7
      %v5641 = vsub.s32 0, %v5640
      %v5642 = vrot.slane %v5637, %v5641
      %v5644 = vadd.f32 %v5601, %v5642
      %v5645 = vadd.f32 %v5602, %v5642
      %v5646 = vadd.f32 %v5603, %v5642
      %v5647 = vadd.f32 %v5604, %v5642
      %v5648 = vadd.f32 %v5605, %v5642
      %v5649 = vadd.f32 %v5606, %v5642
      %v5650 = vadd.f32 %v5607, %v5642
      %v5651 = vadd.f32 %v5608, %v5642
      %v5652 = vadd.f32 %v5609, %v5642
      %v5653 = vadd.f32 %v5610, %v5642
      %v5654 = vadd.f32 %v5611, %v5642
      %v5655 = vadd.f32 %v5612, %v5642
      %v5656 = vadd.f32 %v5613, %v5642
      %v5657 = vadd.f32 %v5614, %v5642
      %v5658 = vadd.f32 %v5615, %v5642
      %v5659 = vadd.f32 %v5616, %v5642
      %v5660 = vadd.f32 %v5617, %v5642
      %v5661 = vadd.f32 %v5618, %v5642
      %v5662 = vadd.f32 %v5619, %v5642
      %v5663 = vadd.f32 %v5620, %v5642
      %v5664 = vadd.f32 %v5621, %v5642
      %v5665 = vadd.f32 %v5622, %v5642
      %v5666 = vadd.f32 %v5623, %v5642
      %v5667 = vadd.f32 %v5624, %v5642
      %v5668 = vadd.f32 %v5625, %v5642
      %v5669 = vadd.f32 %v5626, %v5642
      %v5670 = vadd.f32 %v5627, %v5642
      %v5671 = vadd.f32 %v5628, %v5642
      %v5672 = vadd.f32 %v5629, %v5642
      %v5673 = vadd.f32 %v5630, %v5642
      %v5674 = vadd.f32 %v5631, %v5642
      %v5675 = vadd.f32 %v5632, %v5642
      %v5676 = vadd.f32 %v5633, %v5642
      %v5677 = vadd.f32 %v5634, %v5642
      %v5678 = vadd.f32 %v5635, %v5642
      %v5679 = vadd.f32 %v5636, %v5642
      %v5680 = vmax.f32 %v5644, 0.0
      %v5681 = vmax.f32 %v5645, 0.0
      %v5682 = vmax.f32 %v5646, 0.0
      %v5683 = vmax.f32 %v5647, 0.0
      %v5684 = vmax.f32 %v5648, 0.0
      %v5685 = vmax.f32 %v5649, 0.0
      %v5686 = vmax.f32 %v5650, 0.0
      %v5687 = vmax.f32 %v5651, 0.0
      %v5688 = vmax.f32 %v5652, 0.0
      %v5689 = vmax.f32 %v5653, 0.0
      %v5690 = vmax.f32 %v5654, 0.0
      %v5691 = vmax.f32 %v5655, 0.0
      %v5692 = vmax.f32 %v5656, 0.0
      %v5693 = vmax.f32 %v5657, 0.0
      %v5694 = vmax.f32 %v5658, 0.0
      %v5695 = vmax.f32 %v5659, 0.0
      %v5696 = vmax.f32 %v5660, 0.0
      %v5697 = vmax.f32 %v5661, 0.0
      %v5698 = vmax.f32 %v5662, 0.0
      %v5699 = vmax.f32 %v5663, 0.0
      %v5700 = vmax.f32 %v5664, 0.0
      %v5701 = vmax.f32 %v5665, 0.0
      %v5702 = vmax.f32 %v5666, 0.0
      %v5703 = vmax.f32 %v5667, 0.0
      %v5704 = vmax.f32 %v5668, 0.0
      %v5705 = vmax.f32 %v5669, 0.0
      %v5706 = vmax.f32 %v5670, 0.0
      %v5707 = vmax.f32 %v5671, 0.0
      %v5708 = vmax.f32 %v5672, 0.0
      %v5709 = vmax.f32 %v5673, 0.0
      %v5710 = vmax.f32 %v5674, 0.0
      %v5711 = vmax.f32 %v5675, 0.0
      %v5712 = vmax.f32 %v5676, 0.0
      %v5713 = vmax.f32 %v5677, 0.0
      %v5714 = vmax.f32 %v5678, 0.0
      %v5715 = vmax.f32 %v5679, 0.0
      %v5716 = vpack.c.bf16 %v5681, %v5680
      %v5717 = vpack.c.bf16 %v5683, %v5682
      %v5718 = vpack.c.bf16 %v5685, %v5684
      %v5719 = vpack.c.bf16 %v5687, %v5686
      %v5720 = vpack.c.bf16 %v5689, %v5688
      %v5721 = vpack.c.bf16 %v5691, %v5690
      %v5722 = vpack.c.bf16 %v5693, %v5692
      %v5723 = vpack.c.bf16 %v5695, %v5694
      %v5724 = vpack.c.bf16 %v5697, %v5696
      %v5725 = vpack.c.bf16 %v5699, %v5698
      %v5726 = vpack.c.bf16 %v5701, %v5700
      %v5727 = vpack.c.bf16 %v5703, %v5702
      %v5728 = vpack.c.bf16 %v5705, %v5704
      %v5729 = vpack.c.bf16 %v5707, %v5706
      %v5730 = vpack.c.bf16 %v5709, %v5708
      %v5731 = vpack.c.bf16 %v5711, %v5710
      %v5732 = vpack.c.bf16 %v5713, %v5712
      %v5733 = vpack.c.bf16 %v5715, %v5714
      %v5734 = vsub.f32 0.0, %v5558
      %v5735 = vsub.f32 0.0, %v5559
      %v5736 = vsub.f32 0.0, %v5560
      %v5737 = vsub.f32 0.0, %v5561
      %v5738 = vsub.f32 0.0, %v5562
      %v5739 = vsub.f32 0.0, %v5563
      %v5740 = vsub.f32 0.0, %v5564
      %v5741 = vsub.f32 0.0, %v5565
      %v5742 = vsub.f32 0.0, %v5566
      %v5743 = vsub.f32 0.0, %v5567
      %v5744 = vsub.f32 0.0, %v5568
      %v5745 = vsub.f32 0.0, %v5569
      %v5746 = vsub.f32 0.0, %v5570
      %v5747 = vsub.f32 0.0, %v5571
      %v5748 = vsub.f32 0.0, %v5572
      %v5749 = vsub.f32 0.0, %v5573
      %v5750 = vsub.f32 0.0, %v5574
      %v5751 = vsub.f32 0.0, %v5575
      %v5752 = vsub.f32 0.0, %v5576
      %v5753 = vsub.f32 0.0, %v5577
      %v5754 = vsub.f32 0.0, %v5578
      %v5755 = vsub.f32 0.0, %v5579
      %v5756 = vsub.f32 0.0, %v5580
      %v5757 = vsub.f32 0.0, %v5581
      %v5758 = vsub.f32 0.0, %v5582
      %v5759 = vsub.f32 0.0, %v5583
      %v5760 = vsub.f32 0.0, %v5584
      %v5761 = vsub.f32 0.0, %v5585
      %v5762 = vsub.f32 0.0, %v5586
      %v5763 = vsub.f32 0.0, %v5587
      %v5764 = vsub.f32 0.0, %v5588
      %v5765 = vsub.f32 0.0, %v5589
      %v5766 = vsub.f32 0.0, %v5590
      %v5767 = vsub.f32 0.0, %v5591
      %v5768 = vsub.f32 0.0, %v5592
      %v5769 = vsub.f32 0.0, %v5593
      %v5770 = vld [vmem:[%s7] sm:$0x1]
      %v5772 = vlaneseq
      %v5773 = vshrl.u32 %v5772, 7
      %v5774 = vsub.s32 0, %v5773
      %v5775 = vrot.slane %v5770, %v5774
      %v5777 = vmul.f32 %v5734, %v5775
      %v5778 = vmul.f32 %v5735, %v5775
      %v5779 = vmul.f32 %v5736, %v5775
      %v5780 = vmul.f32 %v5737, %v5775
      %v5781 = vmul.f32 %v5738, %v5775
      %v5782 = vmul.f32 %v5739, %v5775
      %v5783 = vmul.f32 %v5740, %v5775
      %v5784 = vmul.f32 %v5741, %v5775
      %v5785 = vmul.f32 %v5742, %v5775
      %v5786 = vmul.f32 %v5743, %v5775
      %v5787 = vmul.f32 %v5744, %v5775
      %v5788 = vmul.f32 %v5745, %v5775
      %v5789 = vmul.f32 %v5746, %v5775
      %v5790 = vmul.f32 %v5747, %v5775
      %v5791 = vmul.f32 %v5748, %v5775
      %v5792 = vmul.f32 %v5749, %v5775
      %v5793 = vmul.f32 %v5750, %v5775
      %v5794 = vmul.f32 %v5751, %v5775
      %v5795 = vmul.f32 %v5752, %v5775
      %v5796 = vmul.f32 %v5753, %v5775
      %v5797 = vmul.f32 %v5754, %v5775
      %v5798 = vmul.f32 %v5755, %v5775
      %v5799 = vmul.f32 %v5756, %v5775
      %v5800 = vmul.f32 %v5757, %v5775
      %v5801 = vmul.f32 %v5758, %v5775
      %v5802 = vmul.f32 %v5759, %v5775
      %v5803 = vmul.f32 %v5760, %v5775
      %v5804 = vmul.f32 %v5761, %v5775
      %v5805 = vmul.f32 %v5762, %v5775
      %v5806 = vmul.f32 %v5763, %v5775
      %v5807 = vmul.f32 %v5764, %v5775
      %v5808 = vmul.f32 %v5765, %v5775
      %v5809 = vmul.f32 %v5766, %v5775
      %v5810 = vmul.f32 %v5767, %v5775
      %v5811 = vmul.f32 %v5768, %v5775
      %v5812 = vmul.f32 %v5769, %v5775
      %v5813 = vld [vmem:[%s8] sm:$0x1]
      %v5815 = vlaneseq
      %v5816 = vshrl.u32 %v5815, 7
      %v5817 = vsub.s32 0, %v5816
      %v5818 = vrot.slane %v5813, %v5817
      %v5820 = vadd.f32 %v5777, %v5818
      %v5821 = vadd.f32 %v5778, %v5818
      %v5822 = vadd.f32 %v5779, %v5818
      %v5823 = vadd.f32 %v5780, %v5818
      %v5824 = vadd.f32 %v5781, %v5818
      %v5825 = vadd.f32 %v5782, %v5818
      %v5826 = vadd.f32 %v5783, %v5818
      %v5827 = vadd.f32 %v5784, %v5818
      %v5828 = vadd.f32 %v5785, %v5818
      %v5829 = vadd.f32 %v5786, %v5818
      %v5830 = vadd.f32 %v5787, %v5818
      %v5831 = vadd.f32 %v5788, %v5818
      %v5832 = vadd.f32 %v5789, %v5818
      %v5833 = vadd.f32 %v5790, %v5818
      %v5834 = vadd.f32 %v5791, %v5818
      %v5835 = vadd.f32 %v5792, %v5818
      %v5836 = vadd.f32 %v5793, %v5818
      %v5837 = vadd.f32 %v5794, %v5818
      %v5838 = vadd.f32 %v5795, %v5818
      %v5839 = vadd.f32 %v5796, %v5818
      %v5840 = vadd.f32 %v5797, %v5818
      %v5841 = vadd.f32 %v5798, %v5818
      %v5842 = vadd.f32 %v5799, %v5818
      %v5843 = vadd.f32 %v5800, %v5818
      %v5844 = vadd.f32 %v5801, %v5818
      %v5845 = vadd.f32 %v5802, %v5818
      %v5846 = vadd.f32 %v5803, %v5818
      %v5847 = vadd.f32 %v5804, %v5818
      %v5848 = vadd.f32 %v5805, %v5818
      %v5849 = vadd.f32 %v5806, %v5818
      %v5850 = vadd.f32 %v5807, %v5818
      %v5851 = vadd.f32 %v5808, %v5818
      %v5852 = vadd.f32 %v5809, %v5818
      %v5853 = vadd.f32 %v5810, %v5818
      %v5854 = vadd.f32 %v5811, %v5818
      %v5855 = vadd.f32 %v5812, %v5818
      %v5856 = vmax.f32 %v5820, 0.0
      %v5857 = vmax.f32 %v5821, 0.0
      %v5858 = vmax.f32 %v5822, 0.0
      %v5859 = vmax.f32 %v5823, 0.0
      %v5860 = vmax.f32 %v5824, 0.0
      %v5861 = vmax.f32 %v5825, 0.0
      %v5862 = vmax.f32 %v5826, 0.0
      %v5863 = vmax.f32 %v5827, 0.0
      %v5864 = vmax.f32 %v5828, 0.0
      %v5865 = vmax.f32 %v5829, 0.0
      %v5866 = vmax.f32 %v5830, 0.0
      %v5867 = vmax.f32 %v5831, 0.0
      %v5868 = vmax.f32 %v5832, 0.0
      %v5869 = vmax.f32 %v5833, 0.0
      %v5870 = vmax.f32 %v5834, 0.0
      %v5871 = vmax.f32 %v5835, 0.0
      %v5872 = vmax.f32 %v5836, 0.0
      %v5873 = vmax.f32 %v5837, 0.0
      %v5874 = vmax.f32 %v5838, 0.0
      %v5875 = vmax.f32 %v5839, 0.0
      %v5876 = vmax.f32 %v5840, 0.0
      %v5877 = vmax.f32 %v5841, 0.0
      %v5878 = vmax.f32 %v5842, 0.0
      %v5879 = vmax.f32 %v5843, 0.0
      %v5880 = vmax.f32 %v5844, 0.0
      %v5881 = vmax.f32 %v5845, 0.0
      %v5882 = vmax.f32 %v5846, 0.0
      %v5883 = vmax.f32 %v5847, 0.0
      %v5884 = vmax.f32 %v5848, 0.0
      %v5885 = vmax.f32 %v5849, 0.0
      %v5886 = vmax.f32 %v5850, 0.0
      %v5887 = vmax.f32 %v5851, 0.0
      %v5888 = vmax.f32 %v5852, 0.0
      %v5889 = vmax.f32 %v5853, 0.0
      %v5890 = vmax.f32 %v5854, 0.0
      %v5891 = vmax.f32 %v5855, 0.0
      %v5892 = vpack.c.bf16 %v5857, %v5856
      %v5893 = vpack.c.bf16 %v5859, %v5858
      %v5894 = vpack.c.bf16 %v5861, %v5860
      %v5895 = vpack.c.bf16 %v5863, %v5862
      %v5896 = vpack.c.bf16 %v5865, %v5864
      %v5897 = vpack.c.bf16 %v5867, %v5866
      %v5898 = vpack.c.bf16 %v5869, %v5868
      %v5899 = vpack.c.bf16 %v5871, %v5870
      %v5900 = vpack.c.bf16 %v5873, %v5872
      %v5901 = vpack.c.bf16 %v5875, %v5874
      %v5902 = vpack.c.bf16 %v5877, %v5876
      %v5903 = vpack.c.bf16 %v5879, %v5878
      %v5904 = vpack.c.bf16 %v5881, %v5880
      %v5905 = vpack.c.bf16 %v5883, %v5882
      %v5906 = vpack.c.bf16 %v5885, %v5884
      %v5907 = vpack.c.bf16 %v5887, %v5886
      %v5908 = vpack.c.bf16 %v5889, %v5888
      %v5909 = vpack.c.bf16 %v5891, %v5890
      %v5910 = vld [vmem:[%s9] sm:$0x3]
      %v5911 = vld [vmem:[%s10] sm:$0x3]
      %v5913 = vsel %vm2050, %v5892, 0
      %v5916 = vsel %vm2050, %v5893, 0
      %v5919 = vsel %vm2050, %v5894, 0
      %v5922 = vsel %vm2050, %v5895, 0
      %v5925 = vsel %vm2050, %v5896, 0
      %v5928 = vsel %vm2050, %v5897, 0
      %v5931 = vsel %vm2050, %v5898, 0
      %v5934 = vsel %vm2050, %v5899, 0
      %v5937 = vsel %vm2050, %v5900, 0
      %v5940 = vsel %vm2050, %v5901, 0
      %v5943 = vsel %vm2050, %v5902, 0
      %v5946 = vsel %vm2050, %v5903, 0
      %v5949 = vsel %vm2050, %v5904, 0
      %v5952 = vsel %vm2050, %v5905, 0
      %v5955 = vsel %vm2050, %v5906, 0
      %v5958 = vsel %vm2050, %v5907, 0
      %v5961 = vsel %vm2050, %v5908, 0
      %v5964 = vsel %vm2050, %v5909, 0
      %v5967 = vsel %vm2178, %v5911, 0
      %5969 = vmatprep.subr.bf16.mxu0 0
      %5970 = vmatpush1.bf16.msra.mxu0 %v5967
      %5971 = vmatprep.subr.bf16.mxu0 0
      %5972 = vmatpush1.bf16.msra.mxu0 0
      %5973 = vmatprep.subr.bf16.mxu0 0
      %5974 = vmatpush1.bf16.msra.mxu0 0
      %5975 = vmatprep.subr.bf16.mxu0 0
      %5976 = vmatpush1.bf16.msra.mxu0 0
      %5977 = vmatprep.subr.bf16.mxu0 0
      %5978 = vmatpush1.bf16.msra.mxu0 0
      %5979 = vmatprep.subr.bf16.mxu0 0
      %5980 = vmatpush1.bf16.msra.mxu0 0
      %5981 = vmatprep.subr.bf16.mxu0 0
      %5982 = vmatpush1.bf16.msra.mxu0 0
      %5983 = vmatprep.subr.bf16.mxu0 0
      %5984 = vmatpush1.bf16.msra.mxu0 0
      %5985 = vmatprep.subr.bf16.mxu0 0
      %5986 = vmatpush1.bf16.msra.mxu0 0
      %5987 = vmatprep.subr.bf16.mxu0 0
      %5988 = vmatpush1.bf16.msra.mxu0 0
      %5989 = vmatprep.subr.bf16.mxu0 0
      %5990 = vmatpush1.bf16.msra.mxu0 0
      %5991 = vmatprep.subr.bf16.mxu0 0
      %5992 = vmatpush1.bf16.msra.mxu0 0
      %5993 = vmatprep.subr.bf16.mxu0 0
      %5994 = vmatpush1.bf16.msra.mxu0 0
      %5995 = vmatprep.subr.bf16.mxu0 0
      %5996 = vmatpush1.bf16.msra.mxu0 0
      %5997 = vmatprep.subr.bf16.mxu0 0
      %5998 = vmatpush1.bf16.msra.mxu0 0
      %5999 = vmatprep.subr.bf16.mxu0 0
      %6000 = vmatpush1.bf16.msra.mxu0 0
      %6001 = vmatprep.mubr.bf16.mxu0 0
      %6002 = vmatmul.mubr.bf16.gmra.mrb[0].mxu0 %v5913
      %v6003 = vpop.f32.mrb[0].mxu0
      %v6004 = vadd.f32 0.0, %v6003
      %v6005 = vpop.f32.mrb[0].mxu0
      %v6006 = vpop.f32.mrb[0].mxu0
      %v6007 = vadd.f32 0.0, %v6006
      %v6008 = vpop.f32.mrb[0].mxu0
      %6009 = vmatprep.mubr.bf16.mxu0 0
      %6010 = vmatmul.mubr.bf16.gmra.mrb[0].mxu0 %v5916
      %v6011 = vpop.f32.mrb[0].mxu0
      %v6012 = vadd.f32 0.0, %v6011
      %v6013 = vpop.f32.mrb[0].mxu0
      %v6014 = vpop.f32.mrb[0].mxu0
      %v6015 = vadd.f32 0.0, %v6014
      %v6016 = vpop.f32.mrb[0].mxu0
      %6017 = vmatprep.mubr.bf16.mxu0 0
      %6018 = vmatmul.mubr.bf16.gmra.mrb[0].mxu0 %v5919
      %v6019 = vpop.f32.mrb[0].mxu0
      %v6020 = vadd.f32 0.0, %v6019
      %v6021 = vpop.f32.mrb[0].mxu0
      %v6022 = vpop.f32.mrb[0].mxu0
      %v6023 = vadd.f32 0.0, %v6022
      %v6024 = vpop.f32.mrb[0].mxu0
      %6025 = vmatprep.mubr.bf16.mxu0 0
      %6026 = vmatmul.mubr.bf16.gmra.mrb[0].mxu0 %v5922
      %v6027 = vpop.f32.mrb[0].mxu0
      %v6028 = vadd.f32 0.0, %v6027
      %v6029 = vpop.f32.mrb[0].mxu0
      %v6030 = vpop.f32.mrb[0].mxu0
      %v6031 = vadd.f32 0.0, %v6030
      %v6032 = vpop.f32.mrb[0].mxu0
      %6033 = vmatprep.mubr.bf16.mxu0 0
      %6034 = vmatmul.mubr.bf16.gmra.mrb[0].mxu0 %v5925
      %v6035 = vpop.f32.mrb[0].mxu0
      %v6036 = vadd.f32 0.0, %v6035
      %v6037 = vpop.f32.mrb[0].mxu0
      %v6038 = vpop.f32.mrb[0].mxu0
      %v6039 = vadd.f32 0.0, %v6038
      %v6040 = vpop.f32.mrb[0].mxu0
      %6041 = vmatprep.mubr.bf16.mxu0 0
      %6042 = vmatmul.mubr.bf16.gmra.mrb[0].mxu0 %v5928
      %v6043 = vpop.f32.mrb[0].mxu0
      %v6044 = vadd.f32 0.0, %v6043
      %v6045 = vpop.f32.mrb[0].mxu0
      %v6046 = vpop.f32.mrb[0].mxu0
      %v6047 = vadd.f32 0.0, %v6046
      %v6048 = vpop.f32.mrb[0].mxu0
      %6049 = vmatprep.mubr.bf16.mxu0 0
      %6050 = vmatmul.mubr.bf16.gmra.mrb[0].mxu0 %v5931
      %v6051 = vpop.f32.mrb[0].mxu0
      %v6052 = vadd.f32 0.0, %v6051
      %v6053 = vpop.f32.mrb[0].mxu0
      %v6054 = vpop.f32.mrb[0].mxu0
      %v6055 = vadd.f32 0.0, %v6054
      %v6056 = vpop.f32.mrb[0].mxu0
      %6057 = vmatprep.mubr.bf16.mxu0 0
      %6058 = vmatmul.mubr.bf16.gmra.mrb[0].mxu0 %v5934
      %v6059 = vpop.f32.mrb[0].mxu0
      %v6060 = vadd.f32 0.0, %v6059
      %v6061 = vpop.f32.mrb[0].mxu0
      %v6062 = vpop.f32.mrb[0].mxu0
      %v6063 = vadd.f32 0.0, %v6062
      %v6064 = vpop.f32.mrb[0].mxu0
      %6065 = vmatprep.mubr.bf16.mxu0 0
      %6066 = vmatmul.mubr.bf16.gmra.mrb[0].mxu0 %v5937
      %v6067 = vpop.f32.mrb[0].mxu0
      %v6068 = vadd.f32 0.0, %v6067
      %v6069 = vpop.f32.mrb[0].mxu0
      %v6070 = vpop.f32.mrb[0].mxu0
      %v6071 = vadd.f32 0.0, %v6070
      %v6072 = vpop.f32.mrb[0].mxu0
      %6073 = vmatprep.mubr.bf16.mxu0 0
      %6074 = vmatmul.mubr.bf16.gmra.mrb[0].mxu0 %v5940
      %v6075 = vpop.f32.mrb[0].mxu0
      %v6076 = vadd.f32 0.0, %v6075
      %v6077 = vpop.f32.mrb[0].mxu0
      %v6078 = vpop.f32.mrb[0].mxu0
      %v6079 = vadd.f32 0.0, %v6078
      %v6080 = vpop.f32.mrb[0].mxu0
      %6081 = vmatprep.mubr.bf16.mxu0 0
      %6082 = vmatmul.mubr.bf16.gmra.mrb[0].mxu0 %v5943
      %v6083 = vpop.f32.mrb[0].mxu0
      %v6084 = vadd.f32 0.0, %v6083
      %v6085 = vpop.f32.mrb[0].mxu0
      %v6086 = vpop.f32.mrb[0].mxu0
      %v6087 = vadd.f32 0.0, %v6086
      %v6088 = vpop.f32.mrb[0].mxu0
      %6089 = vmatprep.mubr.bf16.mxu0 0
      %6090 = vmatmul.mubr.bf16.gmra.mrb[0].mxu0 %v5946
      %v6091 = vpop.f32.mrb[0].mxu0
      %v6092 = vadd.f32 0.0, %v6091
      %v6093 = vpop.f32.mrb[0].mxu0
      %v6094 = vpop.f32.mrb[0].mxu0
      %v6095 = vadd.f32 0.0, %v6094
      %v6096 = vpop.f32.mrb[0].mxu0
      %6097 = vmatprep.mubr.bf16.mxu0 0
      %6098 = vmatmul.mubr.bf16.gmra.mrb[0].mxu0 %v5949
      %v6099 = vpop.f32.mrb[0].mxu0
      %v6100 = vadd.f32 0.0, %v6099
      %v6101 = vpop.f32.mrb[0].mxu0
      %v6102 = vpop.f32.mrb[0].mxu0
      %v6103 = vadd.f32 0.0, %v6102
      %v6104 = vpop.f32.mrb[0].mxu0
      %6105 = vmatprep.mubr.bf16.mxu0 0
      %6106 = vmatmul.mubr.bf16.gmra.mrb[0].mxu0 %v5952
      %v6107 = vpop.f32.mrb[0].mxu0
      %v6108 = vadd.f32 0.0, %v6107
      %v6109 = vpop.f32.mrb[0].mxu0
      %v6110 = vpop.f32.mrb[0].mxu0
      %v6111 = vadd.f32 0.0, %v6110
      %v6112 = vpop.f32.mrb[0].mxu0
      %6113 = vmatprep.mubr.bf16.mxu0 0
      %6114 = vmatmul.mubr.bf16.gmra.mrb[0].mxu0 %v5955
      %v6115 = vpop.f32.mrb[0].mxu0
      %v6116 = vadd.f32 0.0, %v6115
      %v6117 = vpop.f32.mrb[0].mxu0
      %v6118 = vpop.f32.mrb[0].mxu0
      %v6119 = vadd.f32 0.0, %v6118
      %v6120 = vpop.f32.mrb[0].mxu0
      %6121 = vmatprep.mubr.bf16.mxu0 0
      %6122 = vmatmul.mubr.bf16.gmra.mrb[0].mxu0 %v5958
      %v6123 = vpop.f32.mrb[0].mxu0
      %v6124 = vadd.f32 0.0, %v6123
      %v6125 = vpop.f32.mrb[0].mxu0
      %v6126 = vpop.f32.mrb[0].mxu0
      %v6127 = vadd.f32 0.0, %v6126
      %v6128 = vpop.f32.mrb[0].mxu0
      %6129 = vmatprep.mubr.bf16.mxu0 0
      %6130 = vmatmul.mubr.bf16.gmra.mrb[0].mxu0 %v5961
      %v6131 = vpop.f32.mrb[0].mxu0
      %v6132 = vadd.f32 0.0, %v6131
      %v6133 = vpop.f32.mrb[0].mxu0
      %v6134 = vpop.f32.mrb[0].mxu0
      %v6135 = vadd.f32 0.0, %v6134
      %v6136 = vpop.f32.mrb[0].mxu0
      %6137 = vmatprep.mubr.bf16.mxu0 0
      %6138 = vmatmul.mubr.bf16.gmra.mrb[0].mxu0 %v5964
      %v6139 = vpop.f32.mrb[0].mxu0
      %v6140 = vadd.f32 0.0, %v6139
      %v6141 = vpop.f32.mrb[0].mxu0
      %v6142 = vpop.f32.mrb[0].mxu0
      %v6143 = vadd.f32 0.0, %v6142
      %v6144 = vpop.f32.mrb[0].mxu0
      %6145 = vdwg.mxu0
      %v6147 = vsel %vm2050, %v5716, 0
      %v6150 = vsel %vm2050, %v5717, 0
      %v6153 = vsel %vm2050, %v5718, 0
      %v6156 = vsel %vm2050, %v5719, 0
      %v6159 = vsel %vm2050, %v5720, 0
      %v6162 = vsel %vm2050, %v5721, 0
      %v6165 = vsel %vm2050, %v5722, 0
      %v6168 = vsel %vm2050, %v5723, 0
      %v6171 = vsel %vm2050, %v5724, 0
      %v6174 = vsel %vm2050, %v5725, 0
      %v6177 = vsel %vm2050, %v5726, 0
      %v6180 = vsel %vm2050, %v5727, 0
      %v6183 = vsel %vm2050, %v5728, 0
      %v6186 = vsel %vm2050, %v5729, 0
      %v6189 = vsel %vm2050, %v5730, 0
      %v6192 = vsel %vm2050, %v5731, 0
      %v6195 = vsel %vm2050, %v5732, 0
      %v6198 = vsel %vm2050, %v5733, 0
      %v6201 = vsel %vm2178, %v5910, 0
      %6203 = vmatprep.subr.bf16.mxu0 0
      %6204 = vmatpush1.bf16.msra.mxu0 %v6201
      %6205 = vmatprep.subr.bf16.mxu0 0
      %6206 = vmatpush1.bf16.msra.mxu0 0
      %6207 = vmatprep.subr.bf16.mxu0 0
      %6208 = vmatpush1.bf16.msra.mxu0 0
      %6209 = vmatprep.subr.bf16.mxu0 0
      %6210 = vmatpush1.bf16.msra.mxu0 0
      %6211 = vmatprep.subr.bf16.mxu0 0
      %6212 = vmatpush1.bf16.msra.mxu0 0
      %6213 = vmatprep.subr.bf16.mxu0 0
      %6214 = vmatpush1.bf16.msra.mxu0 0
      %6215 = vmatprep.subr.bf16.mxu0 0
      %6216 = vmatpush1.bf16.msra.mxu0 0
      %6217 = vmatprep.subr.bf16.mxu0 0
      %6218 = vmatpush1.bf16.msra.mxu0 0
      %6219 = vmatprep.subr.bf16.mxu0 0
      %6220 = vmatpush1.bf16.msra.mxu0 0
      %6221 = vmatprep.subr.bf16.mxu0 0
      %6222 = vmatpush1.bf16.msra.mxu0 0
      %6223 = vmatprep.subr.bf16.mxu0 0
      %6224 = vmatpush1.bf16.msra.mxu0 0
      %6225 = vmatprep.subr.bf16.mxu0 0
      %6226 = vmatpush1.bf16.msra.mxu0 0
      %6227 = vmatprep.subr.bf16.mxu0 0
      %6228 = vmatpush1.bf16.msra.mxu0 0
      %6229 = vmatprep.subr.bf16.mxu0 0
      %6230 = vmatpush1.bf16.msra.mxu0 0
      %6231 = vmatprep.subr.bf16.mxu0 0
      %6232 = vmatpush1.bf16.msra.mxu0 0
      %6233 = vmatprep.subr.bf16.mxu0 0
      %6234 = vmatpush1.bf16.msra.mxu0 0
      %6235 = vmatprep.mubr.bf16.mxu0 0
      %6236 = vmatmul.mubr.bf16.gmra.mrb[0].mxu0 %v6147
      %v6237 = vpop.f32.mrb[0].mxu0
      %v6238 = vadd.f32 %v6004, %v6237
      %v6239 = vpop.f32.mrb[0].mxu0
      %v6240 = vpop.f32.mrb[0].mxu0
      %v6241 = vadd.f32 %v6007, %v6240
      %v6242 = vpop.f32.mrb[0].mxu0
      %6243 = vmatprep.mubr.bf16.mxu0 0
      %6244 = vmatmul.mubr.bf16.gmra.mrb[0].mxu0 %v6150
      %v6245 = vpop.f32.mrb[0].mxu0
      %v6246 = vadd.f32 %v6012, %v6245
      %v6247 = vpop.f32.mrb[0].mxu0
      %v6248 = vpop.f32.mrb[0].mxu0
      %v6249 = vadd.f32 %v6015, %v6248
      %v6250 = vpop.f32.mrb[0].mxu0
      %6251 = vmatprep.mubr.bf16.mxu0 0
      %6252 = vmatmul.mubr.bf16.gmra.mrb[0].mxu0 %v6153
      %v6253 = vpop.f32.mrb[0].mxu0
      %v6254 = vadd.f32 %v6020, %v6253
      %v6255 = vpop.f32.mrb[0].mxu0
      %v6256 = vpop.f32.mrb[0].mxu0
      %v6257 = vadd.f32 %v6023, %v6256
      %v6258 = vpop.f32.mrb[0].mxu0
      %6259 = vmatprep.mubr.bf16.mxu0 0
      %6260 = vmatmul.mubr.bf16.gmra.mrb[0].mxu0 %v6156
      %v6261 = vpop.f32.mrb[0].mxu0
      %v6262 = vadd.f32 %v6028, %v6261
      %v6263 = vpop.f32.mrb[0].mxu0
      %v6264 = vpop.f32.mrb[0].mxu0
      %v6265 = vadd.f32 %v6031, %v6264
      %v6266 = vpop.f32.mrb[0].mxu0
      %6267 = vmatprep.mubr.bf16.mxu0 0
      %6268 = vmatmul.mubr.bf16.gmra.mrb[0].mxu0 %v6159
      %v6269 = vpop.f32.mrb[0].mxu0
      %v6270 = vadd.f32 %v6036, %v6269
      %v6271 = vpop.f32.mrb[0].mxu0
      %v6272 = vpop.f32.mrb[0].mxu0
      %v6273 = vadd.f32 %v6039, %v6272
      %v6274 = vpop.f32.mrb[0].mxu0
      %6275 = vmatprep.mubr.bf16.mxu0 0
      %6276 = vmatmul.mubr.bf16.gmra.mrb[0].mxu0 %v6162
      %v6277 = vpop.f32.mrb[0].mxu0
      %v6278 = vadd.f32 %v6044, %v6277
      %v6279 = vpop.f32.mrb[0].mxu0
      %v6280 = vpop.f32.mrb[0].mxu0
      %v6281 = vadd.f32 %v6047, %v6280
      %v6282 = vpop.f32.mrb[0].mxu0
      %6283 = vmatprep.mubr.bf16.mxu0 0
      %6284 = vmatmul.mubr.bf16.gmra.mrb[0].mxu0 %v6165
      %v6285 = vpop.f32.mrb[0].mxu0
      %v6286 = vadd.f32 %v6052, %v6285
      %v6287 = vpop.f32.mrb[0].mxu0
      %v6288 = vpop.f32.mrb[0].mxu0
      %v6289 = vadd.f32 %v6055, %v6288
      %v6290 = vpop.f32.mrb[0].mxu0
      %6291 = vmatprep.mubr.bf16.mxu0 0
      %6292 = vmatmul.mubr.bf16.gmra.mrb[0].mxu0 %v6168
      %v6293 = vpop.f32.mrb[0].mxu0
      %v6294 = vadd.f32 %v6060, %v6293
      %v6295 = vpop.f32.mrb[0].mxu0
      %v6296 = vpop.f32.mrb[0].mxu0
      %v6297 = vadd.f32 %v6063, %v6296
      %v6298 = vpop.f32.mrb[0].mxu0
      %6299 = vmatprep.mubr.bf16.mxu0 0
      %6300 = vmatmul.mubr.bf16.gmra.mrb[0].mxu0 %v6171
      %v6301 = vpop.f32.mrb[0].mxu0
      %v6302 = vadd.f32 %v6068, %v6301
      %v6303 = vpop.f32.mrb[0].mxu0
      %v6304 = vpop.f32.mrb[0].mxu0
      %v6305 = vadd.f32 %v6071, %v6304
      %v6306 = vpop.f32.mrb[0].mxu0
      %6307 = vmatprep.mubr.bf16.mxu0 0
      %6308 = vmatmul.mubr.bf16.gmra.mrb[0].mxu0 %v6174
      %v6309 = vpop.f32.mrb[0].mxu0
      %v6310 = vadd.f32 %v6076, %v6309
      %v6311 = vpop.f32.mrb[0].mxu0
      %v6312 = vpop.f32.mrb[0].mxu0
      %v6313 = vadd.f32 %v6079, %v6312
      %v6314 = vpop.f32.mrb[0].mxu0
      %6315 = vmatprep.mubr.bf16.mxu0 0
      %6316 = vmatmul.mubr.bf16.gmra.mrb[0].mxu0 %v6177
      %v6317 = vpop.f32.mrb[0].mxu0
      %v6318 = vadd.f32 %v6084, %v6317
      %v6319 = vpop.f32.mrb[0].mxu0
      %v6320 = vpop.f32.mrb[0].mxu0
      %v6321 = vadd.f32 %v6087, %v6320
      %v6322 = vpop.f32.mrb[0].mxu0
      %6323 = vmatprep.mubr.bf16.mxu0 0
      %6324 = vmatmul.mubr.bf16.gmra.mrb[0].mxu0 %v6180
      %v6325 = vpop.f32.mrb[0].mxu0
      %v6326 = vadd.f32 %v6092, %v6325
      %v6327 = vpop.f32.mrb[0].mxu0
      %v6328 = vpop.f32.mrb[0].mxu0
      %v6329 = vadd.f32 %v6095, %v6328
      %v6330 = vpop.f32.mrb[0].mxu0
      %6331 = vmatprep.mubr.bf16.mxu0 0
      %6332 = vmatmul.mubr.bf16.gmra.mrb[0].mxu0 %v6183
      %v6333 = vpop.f32.mrb[0].mxu0
      %v6334 = vadd.f32 %v6100, %v6333
      %v6335 = vpop.f32.mrb[0].mxu0
      %v6336 = vpop.f32.mrb[0].mxu0
      %v6337 = vadd.f32 %v6103, %v6336
      %v6338 = vpop.f32.mrb[0].mxu0
      %6339 = vmatprep.mubr.bf16.mxu0 0
      %6340 = vmatmul.mubr.bf16.gmra.mrb[0].mxu0 %v6186
      %v6341 = vpop.f32.mrb[0].mxu0
      %v6342 = vadd.f32 %v6108, %v6341
      %v6343 = vpop.f32.mrb[0].mxu0
      %v6344 = vpop.f32.mrb[0].mxu0
      %v6345 = vadd.f32 %v6111, %v6344
      %v6346 = vpop.f32.mrb[0].mxu0
      %6347 = vmatprep.mubr.bf16.mxu0 0
      %6348 = vmatmul.mubr.bf16.gmra.mrb[0].mxu0 %v6189
      %v6349 = vpop.f32.mrb[0].mxu0
      %v6350 = vadd.f32 %v6116, %v6349
      %v6351 = vpop.f32.mrb[0].mxu0
      %v6352 = vpop.f32.mrb[0].mxu0
      %v6353 = vadd.f32 %v6119, %v6352
      %v6354 = vpop.f32.mrb[0].mxu0
      %6355 = vmatprep.mubr.bf16.mxu0 0
      %6356 = vmatmul.mubr.bf16.gmra.mrb[0].mxu0 %v6192
      %v6357 = vpop.f32.mrb[0].mxu0
      %v6358 = vadd.f32 %v6124, %v6357
      %v6359 = vpop.f32.mrb[0].mxu0
      %v6360 = vpop.f32.mrb[0].mxu0
      %v6361 = vadd.f32 %v6127, %v6360
      %v6362 = vpop.f32.mrb[0].mxu0
      %6363 = vmatprep.mubr.bf16.mxu0 0
      %6364 = vmatmul.mubr.bf16.gmra.mrb[0].mxu0 %v6195
      %v6365 = vpop.f32.mrb[0].mxu0
      %v6366 = vadd.f32 %v6132, %v6365
      %v6367 = vpop.f32.mrb[0].mxu0
      %v6368 = vpop.f32.mrb[0].mxu0
      %v6369 = vadd.f32 %v6135, %v6368
      %v6370 = vpop.f32.mrb[0].mxu0
      %6371 = vmatprep.mubr.bf16.mxu0 0
      %6372 = vmatmul.mubr.bf16.gmra.mrb[0].mxu0 %v6198
      %v6373 = vpop.f32.mrb[0].mxu0
      %v6374 = vadd.f32 %v6140, %v6373
      %v6375 = vpop.f32.mrb[0].mxu0
      %v6376 = vpop.f32.mrb[0].mxu0
      %v6377 = vadd.f32 %v6143, %v6376
      %v6378 = vpop.f32.mrb[0].mxu0
      %6379 = vdwg.mxu0
      %v6380 = vld [vmem:[%s11] sm:$0x1]
      %v6382 = vlaneseq
      %v6383 = vshrl.u32 %v6382, 7
      %v6384 = vsub.s32 0, %v6383
      %v6385 = vrot.slane %v6380, %v6384
      %v6387 = vadd.f32 %v6238, %v6385
      %v6388 = vadd.f32 %v6241, %v6385
      %v6389 = vadd.f32 %v6246, %v6385
      %v6390 = vadd.f32 %v6249, %v6385
      %v6391 = vadd.f32 %v6254, %v6385
      %v6392 = vadd.f32 %v6257, %v6385
      %v6393 = vadd.f32 %v6262, %v6385
      %v6394 = vadd.f32 %v6265, %v6385
      %v6395 = vadd.f32 %v6270, %v6385
      %v6396 = vadd.f32 %v6273, %v6385
      %v6397 = vadd.f32 %v6278, %v6385
      %v6398 = vadd.f32 %v6281, %v6385
      %v6399 = vadd.f32 %v6286, %v6385
      %v6400 = vadd.f32 %v6289, %v6385
      %v6401 = vadd.f32 %v6294, %v6385
      %v6402 = vadd.f32 %v6297, %v6385
      %v6403 = vadd.f32 %v6302, %v6385
      %v6404 = vadd.f32 %v6305, %v6385
      %v6405 = vadd.f32 %v6310, %v6385
      %v6406 = vadd.f32 %v6313, %v6385
      %v6407 = vadd.f32 %v6318, %v6385
      %v6408 = vadd.f32 %v6321, %v6385
      %v6409 = vadd.f32 %v6326, %v6385
      %v6410 = vadd.f32 %v6329, %v6385
      %v6411 = vadd.f32 %v6334, %v6385
      %v6412 = vadd.f32 %v6337, %v6385
      %v6413 = vadd.f32 %v6342, %v6385
      %v6414 = vadd.f32 %v6345, %v6385
      %v6415 = vadd.f32 %v6350, %v6385
      %v6416 = vadd.f32 %v6353, %v6385
      %v6417 = vadd.f32 %v6358, %v6385
      %v6418 = vadd.f32 %v6361, %v6385
      %v6419 = vadd.f32 %v6366, %v6385
      %v6420 = vadd.f32 %v6369, %v6385
      %v6421 = vadd.f32 %v6374, %v6385
      %v6422 = vadd.f32 %v6377, %v6385
      %v6423 = vmax.f32 %v6387, 0.0
      %v6424 = vmax.f32 %v6388, 0.0
      %v6425 = vmax.f32 %v6389, 0.0
      %v6426 = vmax.f32 %v6390, 0.0
      %v6427 = vmax.f32 %v6391, 0.0
      %v6428 = vmax.f32 %v6392, 0.0
      %v6429 = vmax.f32 %v6393, 0.0
      %v6430 = vmax.f32 %v6394, 0.0
      %v6431 = vmax.f32 %v6395, 0.0
      %v6432 = vmax.f32 %v6396, 0.0
      %v6433 = vmax.f32 %v6397, 0.0
      %v6434 = vmax.f32 %v6398, 0.0
      %v6435 = vmax.f32 %v6399, 0.0
      %v6436 = vmax.f32 %v6400, 0.0
      %v6437 = vmax.f32 %v6401, 0.0
      %v6438 = vmax.f32 %v6402, 0.0
      %v6439 = vmax.f32 %v6403, 0.0
      %v6440 = vmax.f32 %v6404, 0.0
      %v6441 = vmax.f32 %v6405, 0.0
      %v6442 = vmax.f32 %v6406, 0.0
      %v6443 = vmax.f32 %v6407, 0.0
      %v6444 = vmax.f32 %v6408, 0.0
      %v6445 = vmax.f32 %v6409, 0.0
      %v6446 = vmax.f32 %v6410, 0.0
      %v6447 = vmax.f32 %v6411, 0.0
      %v6448 = vmax.f32 %v6412, 0.0
      %v6449 = vmax.f32 %v6413, 0.0
      %v6450 = vmax.f32 %v6414, 0.0
      %v6451 = vmax.f32 %v6415, 0.0
      %v6452 = vmax.f32 %v6416, 0.0
      %v6453 = vmax.f32 %v6417, 0.0
      %v6454 = vmax.f32 %v6418, 0.0
      %v6455 = vmax.f32 %v6419, 0.0
      %v6456 = vmax.f32 %v6420, 0.0
      %v6457 = vmax.f32 %v6421, 0.0
      %v6458 = vmax.f32 %v6422, 0.0
      %v6459 = vunpack.c.l.bf16 %v417
      %v6460 = vunpack.c.l.bf16 %v418
      %v6461 = vunpack.c.l.bf16 %v419
      %v6462 = vunpack.c.l.bf16 %v420
      %v6463 = vunpack.c.l.bf16 %v421
      %v6464 = vunpack.c.l.bf16 %v422
      %v6465 = vunpack.c.l.bf16 %v423
      %v6466 = vunpack.c.l.bf16 %v424
      %v6467 = vunpack.c.l.bf16 %v425
      %v6468 = vunpack.c.l.bf16 %v426
      %v6469 = vunpack.c.l.bf16 %v427
      %v6470 = vunpack.c.l.bf16 %v428
      %v6471 = vunpack.c.l.bf16 %v429
      %v6472 = vunpack.c.l.bf16 %v430
      %v6473 = vunpack.c.l.bf16 %v431
      %v6474 = vunpack.c.l.bf16 %v432
      %v6475 = vunpack.c.l.bf16 %v433
      %v6476 = vunpack.c.l.bf16 %v434
      %v6477 = vunpack.c.l.bf16 %v435
      %v6478 = vunpack.c.l.bf16 %v436
      %v6479 = vunpack.c.l.bf16 %v437
      %v6480 = vunpack.c.l.bf16 %v438
      %v6481 = vunpack.c.l.bf16 %v439
      %v6482 = vunpack.c.l.bf16 %v440
      %v6483 = vunpack.c.l.bf16 %v441
      %v6484 = vunpack.c.l.bf16 %v442
      %v6485 = vunpack.c.l.bf16 %v443
      %v6486 = vunpack.c.l.bf16 %v444
      %v6487 = vunpack.c.l.bf16 %v445
      %v6488 = vunpack.c.l.bf16 %v446
      %v6489 = vunpack.c.l.bf16 %v447
      %v6490 = vunpack.c.l.bf16 %v448
      %v6491 = vunpack.c.l.bf16 %v449
      %v6492 = vunpack.c.l.bf16 %v450
      %v6493 = vunpack.c.l.bf16 %v451
      %v6494 = vunpack.c.l.bf16 %v452
      %v6495 = vunpack.c.l.bf16 %v453
      %vm6533 = vcmask 1044480
      %v6534 = vrot.slane %v6459, 3
      %v6535 = vrot.slane %v6460, 3
      %v6536 = vsel %vm6533, %v6534, %v6535
      %v6537 = vrot.slane %v6461, 3
      %v6538 = vsel %vm6533, %v6535, %v6537
      %v6539 = vrot.slane %v6462, 3
      %v6540 = vsel %vm6533, %v6537, %v6539
      %v6541 = vrot.slane %v6463, 3
      %v6542 = vsel %vm6533, %v6539, %v6541
      %v6543 = vrot.slane %v6464, 3
      %v6544 = vsel %vm6533, %v6541, %v6543
      %v6545 = vrot.slane %v6465, 3
      %v6546 = vsel %vm6533, %v6543, %v6545
      %v6547 = vrot.slane %v6466, 3
      %v6548 = vsel %vm6533, %v6545, %v6547
      %v6549 = vrot.slane %v6467, 3
      %v6550 = vsel %vm6533, %v6547, %v6549
      %v6551 = vrot.slane %v6468, 3
      %v6552 = vsel %vm6533, %v6549, %v6551
      %v6553 = vrot.slane %v6469, 3
      %v6554 = vsel %vm6533, %v6551, %v6553
      %v6555 = vrot.slane %v6470, 3
      %v6556 = vsel %vm6533, %v6553, %v6555
      %v6557 = vrot.slane %v6471, 3
      %v6558 = vsel %vm6533, %v6555, %v6557
      %v6559 = vrot.slane %v6472, 3
      %v6560 = vsel %vm6533, %v6557, %v6559
      %v6561 = vrot.slane %v6473, 3
      %v6562 = vsel %vm6533, %v6559, %v6561
      %v6563 = vrot.slane %v6474, 3
      %v6564 = vsel %vm6533, %v6561, %v6563
      %v6565 = vrot.slane %v6475, 3
      %v6566 = vsel %vm6533, %v6563, %v6565
      %v6567 = vrot.slane %v6476, 3
      %v6568 = vsel %vm6533, %v6565, %v6567
      %v6569 = vrot.slane %v6477, 3
      %v6570 = vsel %vm6533, %v6567, %v6569
      %v6571 = vrot.slane %v6478, 3
      %v6572 = vsel %vm6533, %v6569, %v6571
      %v6573 = vrot.slane %v6479, 3
      %v6574 = vsel %vm6533, %v6571, %v6573
      %v6575 = vrot.slane %v6480, 3
      %v6576 = vsel %vm6533, %v6573, %v6575
      %v6577 = vrot.slane %v6481, 3
      %v6578 = vsel %vm6533, %v6575, %v6577
      %v6579 = vrot.slane %v6482, 3
      %v6580 = vsel %vm6533, %v6577, %v6579
      %v6581 = vrot.slane %v6483, 3
      %v6582 = vsel %vm6533, %v6579, %v6581
      %v6583 = vrot.slane %v6484, 3
      %v6584 = vsel %vm6533, %v6581, %v6583
      %v6585 = vrot.slane %v6485, 3
      %v6586 = vsel %vm6533, %v6583, %v6585
      %v6587 = vrot.slane %v6486, 3
      %v6588 = vsel %vm6533, %v6585, %v6587
      %v6589 = vrot.slane %v6487, 3
      %v6590 = vsel %vm6533, %v6587, %v6589
      %v6591 = vrot.slane %v6488, 3
      %v6592 = vsel %vm6533, %v6589, %v6591
      %v6593 = vrot.slane %v6489, 3
      %v6594 = vsel %vm6533, %v6591, %v6593
      %v6595 = vrot.slane %v6490, 3
      %v6596 = vsel %vm6533, %v6593, %v6595
      %v6597 = vrot.slane %v6491, 3
      %v6598 = vsel %vm6533, %v6595, %v6597
      %v6599 = vrot.slane %v6492, 3
      %v6600 = vsel %vm6533, %v6597, %v6599
      %v6601 = vrot.slane %v6493, 3
      %v6602 = vsel %vm6533, %v6599, %v6601
      %v6603 = vrot.slane %v6494, 3
      %v6604 = vsel %vm6533, %v6601, %v6603
      %v6605 = vrot.slane %v6495, 3
      %v6606 = vsel %vm6533, %v6603, %v6605
      %v6643 = vadd.f32 %v6423, %v6536
      %v6644 = vadd.f32 %v6424, %v6538
      %v6645 = vadd.f32 %v6425, %v6540
      %v6646 = vadd.f32 %v6426, %v6542
      %v6647 = vadd.f32 %v6427, %v6544
      %v6648 = vadd.f32 %v6428, %v6546
      %v6649 = vadd.f32 %v6429, %v6548
      %v6650 = vadd.f32 %v6430, %v6550
      %v6651 = vadd.f32 %v6431, %v6552
      %v6652 = vadd.f32 %v6432, %v6554
      %v6653 = vadd.f32 %v6433, %v6556
      %v6654 = vadd.f32 %v6434, %v6558
      %v6655 = vadd.f32 %v6435, %v6560
      %v6656 = vadd.f32 %v6436, %v6562
      %v6657 = vadd.f32 %v6437, %v6564
      %v6658 = vadd.f32 %v6438, %v6566
      %v6659 = vadd.f32 %v6439, %v6568
      %v6660 = vadd.f32 %v6440, %v6570
      %v6661 = vadd.f32 %v6441, %v6572
      %v6662 = vadd.f32 %v6442, %v6574
      %v6663 = vadd.f32 %v6443, %v6576
      %v6664 = vadd.f32 %v6444, %v6578
      %v6665 = vadd.f32 %v6445, %v6580
      %v6666 = vadd.f32 %v6446, %v6582
      %v6667 = vadd.f32 %v6447, %v6584
      %v6668 = vadd.f32 %v6448, %v6586
      %v6669 = vadd.f32 %v6449, %v6588
      %v6670 = vadd.f32 %v6450, %v6590
      %v6671 = vadd.f32 %v6451, %v6592
      %v6672 = vadd.f32 %v6452, %v6594
      %v6673 = vadd.f32 %v6453, %v6596
      %v6674 = vadd.f32 %v6454, %v6598
      %v6675 = vadd.f32 %v6455, %v6600
      %v6676 = vadd.f32 %v6456, %v6602
      %v6677 = vadd.f32 %v6457, %v6604
      %v6678 = vadd.f32 %v6458, %v6606
      %6679 = vst.msk [vmem:[%s413] sm:$0xff] %vm574, %v6643
      %6680 = vst.msk [vmem:[%s413 + $0x8] sm:$0xff] %vm574, %v6644
      %6681 = vst.msk [vmem:[%s413 + $0x10] sm:$0xff] %vm574, %v6645
      %6682 = vst.msk [vmem:[%s413 + $0x18] sm:$0xff] %vm574, %v6646
      %6683 = vst.msk [vmem:[%s413 + $0x20] sm:$0xff] %vm574, %v6647
      %6684 = vst.msk [vmem:[%s413 + $0x28] sm:$0xff] %vm574, %v6648
      %6685 = vst.msk [vmem:[%s413 + $0x30] sm:$0xff] %vm574, %v6649
      %6686 = vst.msk [vmem:[%s413 + $0x38] sm:$0xff] %vm574, %v6650
      %6687 = vst.msk [vmem:[%s413 + $0x40] sm:$0xff] %vm574, %v6651
      %6688 = vst.msk [vmem:[%s413 + $0x48] sm:$0xff] %vm574, %v6652
      %6689 = vst.msk [vmem:[%s413 + $0x50] sm:$0xff] %vm574, %v6653
      %6690 = vst.msk [vmem:[%s413 + $0x58] sm:$0xff] %vm574, %v6654
      %6691 = vst.msk [vmem:[%s413 + $0x60] sm:$0xff] %vm574, %v6655
      %6692 = vst.msk [vmem:[%s413 + $0x68] sm:$0xff] %vm574, %v6656
      %6693 = vst.msk [vmem:[%s413 + $0x70] sm:$0xff] %vm574, %v6657
      %6694 = vst.msk [vmem:[%s413 + $0x78] sm:$0xff] %vm574, %v6658
      %6695 = vst.msk [vmem:[%s413 + $0x80] sm:$0xff] %vm574, %v6659
      %6696 = vst.msk [vmem:[%s413 + $0x88] sm:$0xff] %vm574, %v6660
      %6697 = vst.msk [vmem:[%s413 + $0x90] sm:$0xff] %vm574, %v6661
      %6698 = vst.msk [vmem:[%s413 + $0x98] sm:$0xff] %vm574, %v6662
      %6699 = vst.msk [vmem:[%s413 + $0xa0] sm:$0xff] %vm574, %v6663
      %6700 = vst.msk [vmem:[%s413 + $0xa8] sm:$0xff] %vm574, %v6664
      %6701 = vst.msk [vmem:[%s413 + $0xb0] sm:$0xff] %vm574, %v6665
      %6702 = vst.msk [vmem:[%s413 + $0xb8] sm:$0xff] %vm574, %v6666
      %6703 = vst.msk [vmem:[%s413 + $0xc0] sm:$0xff] %vm574, %v6667
      %6704 = vst.msk [vmem:[%s413 + $0xc8] sm:$0xff] %vm574, %v6668
      %6705 = vst.msk [vmem:[%s413 + $0xd0] sm:$0xff] %vm574, %v6669
      %6706 = vst.msk [vmem:[%s413 + $0xd8] sm:$0xff] %vm574, %v6670
      %6707 = vst.msk [vmem:[%s413 + $0xe0] sm:$0xff] %vm574, %v6671
      %6708 = vst.msk [vmem:[%s413 + $0xe8] sm:$0xff] %vm574, %v6672
      %6709 = vst.msk [vmem:[%s413 + $0xf0] sm:$0xff] %vm574, %v6673
      %6710 = vst.msk [vmem:[%s413 + $0xf8] sm:$0xff] %vm574, %v6674
      %6711 = vst.msk [vmem:[%s413 + $0x100] sm:$0xff] %vm574, %v6675
      %6712 = vst.msk [vmem:[%s413 + $0x108] sm:$0xff] %vm574, %v6676
      %6713 = vst.msk [vmem:[%s413 + $0x110] sm:$0xff] %vm574, %v6677
      %6714 = vst.msk [vmem:[%s413 + $0x118] sm:$0xff] %vm574, %v6678
      %p6715 = scmp.lt.s32.totalorder %s23, 1
      %s6716 = scalar_select %p6715, %s23, 1
      %s6717 = smul.addr %s6716, 36
      %s6718 = smul.addr %s6717, 8
      %s6719 = scalar_lea.vmem %s12, %s6718
      // Predicated region
      $region69: #{tpu_custom_call.1} parent=67 // pred_check
        %p6720 = pneg %p298
      $region70: #{tpu_custom_call.1} parent=67 // pred_check_branch
        %6722 = sbr.rel (%p6720) target = $region72
      $region71: #{tpu_custom_call.1} parent=67 // pred_region
        _
      $region72: #{tpu_custom_call.1} parent=67 // pred_fallthru
        _
    $region68: #{tpu_custom_call.1} parent=5 // pred_fallthru
      _
    %p6723 = scmp.le.s32.totalorder 2, %s18
    // Predicated region
    $region73: #{tpu_custom_call.1} parent=5 // pred_check
      %p6724 = pneg %p6723
    $region74: #{tpu_custom_call.1} parent=5 // pred_check_branch
      %6726 = sbr.rel (%p6724) target = $region76
    $region75: #{tpu_custom_call.1} parent=5 // pred_region
      %s6727 = ssub.s32 %s18, 2
      // Predicated region
      $region77: #{tpu_custom_call.1} parent=75 // pred_check
        %p6728 = pneg %p304
      $region78: #{tpu_custom_call.1} parent=75 // pred_check_branch
        %6730 = sbr.rel (%p6728) target = $region80
      $region79: #{tpu_custom_call.1} parent=75 // pred_region
        %p6731 = scmp.lt.s32.totalorder %s24, 1
        %s6732 = scalar_select %p6731, %s24, 1
        %s6733 = smul.addr %s6732, 36
        %s6734 = smul.addr %s6733, 8
        %s6735 = scalar_lea.vmem %s12, %s6734
      $region80: #{tpu_custom_call.1} parent=75 // pred_fallthru
        _
    $region76: #{tpu_custom_call.1} parent=5 // pred_fallthru
      _
  $region6: #{tpu_custom_call.1} parent=0 // loop_footer
    %s22 = sadd.s32 1, %s18
  $region7: #{tpu_custom_call.1} parent=0 // loop_footer_branch
    %17 = sbr.rel target = $region3
  $region8: #{tpu_custom_call.1} parent=0 // loop_exit
    _

</llo_original>
